<compile_context>
chip_gen: v7x
topology: tpu7x:2x2x1
jax: 0.10.0
libtpu: 0.0.40
codegen_flags: <defaults>
</compile_context>

<pallas_src>
import functools

import jax
import jax.numpy as jnp
from jax.experimental import pallas as pl
from jax.experimental.pallas import tpu as pltpu

LANES = 128        # padded FC output width (100 / num_classes -> 128)
K1PAD = 128        # conv1 im2col contraction depth (25*cin <= 75, zero padded)
C1OUT = 32         # conv1 output channels (real, unpadded in scratch/weights)
C2OUT = 48         # conv2 output channels (real, unpadded in scratch/weights)
FC_HIDDEN = 100


# ------------------------------- fused kernel -------------------------------

def _fused_forward_kernel(x_ref, w1_ref, b1_ref, w2_ref, b2_ref,
                          fc1w_ref, fc1b_ref, fc2w_ref, fc2b_ref,
                          fc3w_ref, fc3b_ref,
                          o_ref,
                          p1_ref, p2_ref):
    """Whole MnistClassifier forward for one batch block (im2col'd 28x28 input)."""
    bb = x_ref.shape[0]            # batch block size (<= 4)
    f32 = jnp.float32
    bf16 = jnp.bfloat16

    # ---- conv1: im2col matmul + bias + ReLU + fused 2x2 max-pool (registers)
    hb = 8 // bb                   # output rows per chunk: rows <= 192, even, | 24
    w1 = w1_ref[...]               # [128, 32] bf16 (hoisted out of the chunk loop)
    b1 = b1_ref[...]               # [1, 32] f32   (hoisted)
    for ho0 in range(0, 24, hb):   # statically unrolled chunks
        rows = bb * hb * 24
        xs = x_ref[:, ho0 * 24:(ho0 + hb) * 24, :].reshape(rows, K1PAD)   # bf16
        y = jnp.dot(xs, w1, preferred_element_type=f32)                   # [rows, 32]
        y = jnp.maximum(y + b1, 0.0)                                      # bias+ReLU
        y = y.reshape(bb, hb // 2, 2, 12, 2, C1OUT)
        y = jnp.maximum(y[:, :, 0], y[:, :, 1])                           # H-pool
        y = jnp.maximum(y[:, :, :, 0, :], y[:, :, :, 1, :])               # W-pool
        p1_ref[:, ho0 // 2:ho0 // 2 + hb // 2] = y.astype(bf16)

    # ---- conv2 (5x5, 32->48): 25-tap accumulation + bias + ReLU + 2x2 pool --
    ch2 = 8 if bb <= 2 else 4      # output rows per chunk: rows2 <= 128
    b2 = b2_ref[...]               # [1, 48] f32 (hoisted)
    for ho2 in range(0, 8, ch2):
        rows2 = bb * ch2 * 8
        acc = jnp.zeros((rows2, C2OUT), f32)
        for t in range(25):        # statically unrolled taps, K = 32 (no padding)
            kh, kw = divmod(t, 5)
            xs = p1_ref[:, ho2 + kh:ho2 + kh + ch2, kw:kw + 8, :]         # bf16
            xs = xs.reshape(rows2, C1OUT)
            acc = acc + jnp.dot(xs, w2_ref[t], preferred_element_type=f32)
        y2 = jnp.maximum(acc + b2, 0.0)
        y2 = y2.reshape(bb, ch2 // 2, 2, 4, 2, C2OUT)
        y2 = jnp.maximum(y2[:, :, 0], y2[:, :, 1])                        # H-pool
        y2 = jnp.maximum(y2[:, :, :, 0, :], y2[:, :, :, 1, :])            # W-pool
        p2_ref[:, ho2 // 2:ho2 // 2 + ch2 // 2] = y2.astype(bf16)

    # ---- shared FCs: (4*4*48 ->) 100 -> 100 -> num_classes (outs padded 128)
    # 16 tiny dots split over 4 independent partial accumulators (pipelined MXU).
    part = [jnp.zeros((bb, LANES), f32) for _ in range(4)]
    for h in range(4):
        for w in range(4):
            part[h] = part[h] + jnp.dot(p2_ref[:, h, w, :], fc1w_ref[h, w],
                                        preferred_element_type=f32)
    acc3 = (part[0] + part[1]) + (part[2] + part[3])
    h1 = jnp.maximum(acc3 + fc1b_ref[...], 0.0)
    h2 = jnp.dot(h1.astype(bf16), fc2w_ref[...], preferred_element_type=f32)
    h2 = jnp.maximum(h2 + fc2b_ref[...], 0.0)
    logits = jnp.dot(h2.astype(bf16), fc3w_ref[...], preferred_element_type=f32)
    o_ref[...] = (logits + fc3b_ref[...]).reshape(bb, 1, LANES)


# ------------------------------ kernel wrapper ------------------------------

def _pick_bb(B):
    """Largest bb in {4,2,1} dividing B with a >=2-step grid (v7x 2-TC split)."""
    for cand in (4, 2, 1):
        if B % cand == 0 and B // cand >= 2:
            return cand
    return B       # B == 1


def _forward_pallas(patches, w1, b1, w2, b2, fc1w, fc1b, fc2w, fc2b, fc3w, fc3b):
    B = patches.shape[0]
    bb = _pick_bb(B)
    grid = (B // bb,)

    def full_spec(a):
        nd = a.ndim
        return pl.BlockSpec(a.shape, lambda i, nd=nd: (0,) * nd)

    weights = (w1, b1, w2, b2, fc1w, fc1b, fc2w, fc2b, fc3w, fc3b)
    in_specs = [pl.BlockSpec((bb, 576, K1PAD), lambda i: (i, 0, 0))]
    in_specs += [full_spec(a) for a in weights]

    scratch = [
        pltpu.VMEM((bb, 12, 12, C1OUT), jnp.bfloat16),   # pooled conv1 map (bf16)
        pltpu.VMEM((bb, 4, 4, C2OUT), jnp.bfloat16),     # pooled conv2 map (bf16)
    ]

    flops = 2 * B * (576 * K1PAD * C1OUT
                     + 64 * 25 * C1OUT * C2OUT
                     + 16 * C2OUT * LANES
                     + LANES * LANES + LANES * LANES)
    bytes_accessed = int(sum(int(a.size) * a.dtype.itemsize
                             for a in (patches,) + weights) + B * LANES * 4)

    out = pl.pallas_call(
        _fused_forward_kernel,
        out_shape=jax.ShapeDtypeStruct((B, 1, LANES), jnp.float32),
        grid_spec=pltpu.PrefetchScalarGridSpec(
            num_scalar_prefetch=0,
            grid=grid,
            in_specs=in_specs,
            out_specs=pl.BlockSpec((bb, 1, LANES), lambda i: (i, 0, 0)),
            scratch_shapes=scratch,
        ),
        compiler_params=pltpu.CompilerParams(dimension_semantics=("parallel",)),
        cost_estimate=pl.CostEstimate(flops=flops, transcendentals=0,
                                      bytes_accessed=bytes_accessed),
    )(patches, *weights)
    return out[:, 0, :]


def _im2col_conv1(x_nhwc):
    """[B,28,28,cin] -> [B, 576, 128] bf16 patch matrix (tap-major, cin-minor)."""
    B, H, W, cin = x_nhwc.shape
    assert H == 28 and W == 28, "MnistClassifier expects 28x28 inputs"
    assert 25 * cin <= K1PAD
    patches = jnp.stack([x_nhwc[:, kh:kh + 24, kw:kw + 24, :]
                         for kh in range(5) for kw in range(5)], axis=3)
    patches = patches.reshape(B, 576, 25 * cin)
    patches = jnp.pad(patches, ((0, 0), (0, 0), (0, K1PAD - 25 * cin)))
    return patches.astype(jnp.bfloat16)


# ------------------------- parameter init / preparation ---------------------

def _uniform(key, shape, fan_in):
    bound = 1.0 / float(fan_in) ** 0.5
    return jax.random.uniform(key, shape, jnp.float32, -bound, bound)


def init_raw_params(key, source_channels, target_channels, num_classes):
    """PyTorch-layout params (Conv2d [Cout,Cin,KH,KW], Linear [out,in])."""
    ks = jax.random.split(key, 12)
    p = {}
    p["src_conv_w"] = _uniform(ks[0], (C1OUT, source_channels, 5, 5), source_channels * 25)
    p["src_conv_b"] = _uniform(ks[1], (C1OUT,), source_channels * 25)
    p["tgt_conv_w"] = _uniform(ks[2], (C1OUT, target_channels, 5, 5), target_channels * 25)
    p["tgt_conv_b"] = _uniform(ks[3], (C1OUT,), target_channels * 25)
    p["shared_conv_w"] = _uniform(ks[4], (C2OUT, C1OUT, 5, 5), C1OUT * 25)
    p["shared_conv_b"] = _uniform(ks[5], (C2OUT,), C1OUT * 25)
    p["fc1_w"] = _uniform(ks[6], (FC_HIDDEN, 16 * C2OUT), 16 * C2OUT)
    p["fc1_b"] = _uniform(ks[7], (FC_HIDDEN,), 16 * C2OUT)
    p["fc2_w"] = _uniform(ks[8], (FC_HIDDEN, FC_HIDDEN), FC_HIDDEN)
    p["fc2_b"] = _uniform(ks[9], (FC_HIDDEN,), FC_HIDDEN)
    p["fc3_w"] = _uniform(ks[10], (num_classes, FC_HIDDEN), FC_HIDDEN)
    p["fc3_b"] = _uniform(ks[11], (num_classes,), FC_HIDDEN)
    return p


def _prep_conv1(w, b):
    # [32, cin, 5, 5] -> im2col weight [128, 32] bf16 (rows ordered kh,kw,cin).
    cout, cin, kh, kw = w.shape
    wk = jnp.transpose(w, (2, 3, 1, 0)).reshape(kh * kw * cin, cout)
    wk = jnp.pad(wk, ((0, K1PAD - kh * kw * cin), (0, 0))).astype(jnp.bfloat16)
    return wk, b.reshape(1, cout).astype(jnp.float32)


def _prep_conv2(w, b):
    # [48, 32, 5, 5] -> [25 taps, 32, 48] bf16 (no K / N zero padding).
    cout, cin, kh, kw = w.shape
    wk = jnp.transpose(w, (2, 3, 1, 0)).reshape(kh * kw, cin, cout).astype(jnp.bfloat16)
    return wk, b.reshape(1, cout).astype(jnp.float32)


def _prep_fc1(w, b):
    # fc1 [100, 768]; PyTorch flattens NCHW (c,h,w).  Kernel activations are
    # NHWC with 48 real channels -> [4, 4, 48, 128] = (h, w, c, out_pad) bf16.
    out_f = w.shape[0]
    wk = w.reshape(out_f, C2OUT, 4, 4)            # [o, c, h, w]
    wk = jnp.transpose(wk, (2, 3, 1, 0))          # [h, w, c, o]
    wk = jnp.pad(wk, ((0, 0), (0, 0), (0, 0), (0, LANES - out_f))).astype(jnp.bfloat16)
    bk = jnp.pad(b, (0, LANES - out_f)).reshape(1, LANES).astype(jnp.float32)
    return wk, bk


def _prep_linear(w, b):
    # Linear [out, in] -> [128, 128] bf16 (in-major, zero-padded).
    out_f, in_f = w.shape
    wk = jnp.pad(w.T, ((0, LANES - in_f), (0, LANES - out_f))).astype(jnp.bfloat16)
    bk = jnp.pad(b, (0, LANES - out_f)).reshape(1, LANES).astype(jnp.float32)
    return wk, bk


def prepare_params(raw):
    """One-time conversion of PyTorch-layout params to kernel layout."""
    kp = {}
    kp["src_w1"], kp["src_b1"] = _prep_conv1(raw["src_conv_w"], raw["src_conv_b"])
    kp["tgt_w1"], kp["tgt_b1"] = _prep_conv1(raw["tgt_conv_w"], raw["tgt_conv_b"])
    kp["w2"], kp["b2"] = _prep_conv2(raw["shared_conv_w"], raw["shared_conv_b"])
    kp["fc1_w"], kp["fc1_b"] = _prep_fc1(raw["fc1_w"], raw["fc1_b"])
    kp["fc2_w"], kp["fc2_b"] = _prep_linear(raw["fc2_w"], raw["fc2_b"])
    kp["fc3_w"], kp["fc3_b"] = _prep_linear(raw["fc3_w"], raw["fc3_b"])
    return kp


# ---------------------------------- forward ---------------------------------

def mnist_classifier_forward(kparams, x, dataset="target", num_classes=10):
    """Mirrors MnistClassifier.forward (single-device path); x is NCHW float32."""
    # TODO(synk): the nn.parallel.data_parallel multi-GPU branch is a CUDA-only
    # dispatch detail with identical math; only the single-device path is kept.
    if dataset == "target":
        w1, b1 = kparams["tgt_w1"], kparams["tgt_b1"]
    else:
        w1, b1 = kparams["src_w1"], kparams["src_b1"]
    x_nhwc = jnp.transpose(x, (0, 2, 3, 1))
    patches = _im2col_conv1(x_nhwc)       # tiny fused XLA gather outside the kernel
    logits_padded = _forward_pallas(
        patches, w1, b1,
        kparams["w2"], kparams["b2"],
        kparams["fc1_w"], kparams["fc1_b"],
        kparams["fc2_w"], kparams["fc2_b"],
        kparams["fc3_w"], kparams["fc3_b"])
    return logits_padded[:, :num_classes]


if __name__ == "__main__":
    source_channels, target_channels, num_classes = 1, 3, 10
    B = 2
    key = jax.random.PRNGKey(0)
    pkey, xkey = jax.random.split(key)

    raw_params = init_raw_params(pkey, source_channels, target_channels, num_classes)
    kparams = prepare_params(raw_params)

    # MNIST-M-like target input: NCHW, 3 channels, 28x28 (required by 16*48 FC).
    x = jax.random.normal(xkey, (B, target_channels, 28, 28), jnp.float32)

    fwd = jax.jit(functools.partial(mnist_classifier_forward,
                                    dataset="target", num_classes=num_classes))
    logits = jax.block_until_ready(fwd(kparams, x))

    assert logits.shape == (B, num_classes), logits.shape
    assert bool(jnp.all(jnp.isfinite(logits)))
    print("KERNEL_OK")
</pallas_src>

<mosaic_0001>
module attributes {stable_mosaic.version = 11 : i64} {
  func.func @_fused_forward_kernel(%arg0: i32, %arg1: memref<1x576x128xbf16, #tpu.memory_space<vmem>>, %arg2: memref<128x32xbf16, #tpu.memory_space<vmem>>, %arg3: memref<1x32xf32, #tpu.memory_space<vmem>>, %arg4: memref<25x32x48xbf16, #tpu.memory_space<vmem>>, %arg5: memref<1x48xf32, #tpu.memory_space<vmem>>, %arg6: memref<4x4x48x128xbf16, #tpu.memory_space<vmem>>, %arg7: memref<1x128xf32, #tpu.memory_space<vmem>>, %arg8: memref<128x128xbf16, #tpu.memory_space<vmem>>, %arg9: memref<1x128xf32, #tpu.memory_space<vmem>>, %arg10: memref<128x128xbf16, #tpu.memory_space<vmem>>, %arg11: memref<1x128xf32, #tpu.memory_space<vmem>>, %arg12: memref<1x1x128xf32, #tpu.memory_space<vmem>>, %arg13: memref<1x12x12x32xbf16, #tpu.memory_space<vmem>>, %arg14: memref<1x4x4x48xbf16, #tpu.memory_space<vmem>>) attributes {dimension_semantics = [#tpu.dimension_semantics<parallel>], iteration_bounds = array<i64: 2>, scalar_prefetch = 0 : i64, scratch_operands = 2 : i64, tpu.core_type = #tpu.core_type<tc>, window_params = [{transform_indices = @transform_0, window_bounds = array<i64: 1, 576, 128>}, {pipeline_mode = #tpu.pipeline_mode<synchronous>, transform_indices = @transform_1, window_bounds = array<i64: 128, 32>}, {pipeline_mode = #tpu.pipeline_mode<synchronous>, transform_indices = @transform_2, window_bounds = array<i64: 1, 32>}, {pipeline_mode = #tpu.pipeline_mode<synchronous>, transform_indices = @transform_3, window_bounds = array<i64: 25, 32, 48>}, {pipeline_mode = #tpu.pipeline_mode<synchronous>, transform_indices = @transform_4, window_bounds = array<i64: 1, 48>}, {pipeline_mode = #tpu.pipeline_mode<synchronous>, transform_indices = @transform_5, window_bounds = array<i64: 4, 4, 48, 128>}, {pipeline_mode = #tpu.pipeline_mode<synchronous>, transform_indices = @transform_6, window_bounds = array<i64: 1, 128>}, {pipeline_mode = #tpu.pipeline_mode<synchronous>, transform_indices = @transform_7, window_bounds = array<i64: 128, 128>}, {pipeline_mode = #tpu.pipeline_mode<synchronous>, transform_indices = @transform_8, window_bounds = array<i64: 1, 128>}, {pipeline_mode = #tpu.pipeline_mode<synchronous>, transform_indices = @transform_9, window_bounds = array<i64: 128, 128>}, {pipeline_mode = #tpu.pipeline_mode<synchronous>, transform_indices = @transform_10, window_bounds = array<i64: 1, 128>}, {transform_indices = @transform_11, window_bounds = array<i64: 1, 1, 128>}]} {
    %c0 = arith.constant 0 : index
    %c0_0 = arith.constant 0 : index
    %0 = vector.load %arg2[%c0, %c0_0] : memref<128x32xbf16, #tpu.memory_space<vmem>>, vector<128x32xbf16>
    %c0_1 = arith.constant 0 : index
    %c0_2 = arith.constant 0 : index
    %1 = vector.load %arg3[%c0_1, %c0_2] : memref<1x32xf32, #tpu.memory_space<vmem>>, vector<1x32xf32>
    %c0_3 = arith.constant 0 : index
    %c0_4 = arith.constant 0 : index
    %c0_5 = arith.constant 0 : index
    %2 = vector.load %arg1[%c0_3, %c0_4, %c0_5] : memref<1x576x128xbf16, #tpu.memory_space<vmem>>, vector<1x192x128xbf16>
    %3 = vector.shape_cast %2 : vector<1x192x128xbf16> to vector<192x128xbf16>
    %cst = arith.constant dense<0.000000e+00> : vector<192x32xf32>
    %4 = tpu.matmul %3, %0, %cst {dimension_numbers = #tpu.dot_dimension_numbers<[1], [0], [0], [1], [0, 0, 1, 1], [], []>} : vector<192x128xbf16>, vector<128x32xbf16>, vector<192x32xf32> -> vector<192x32xf32>
    %5 = vector.broadcast %1 : vector<1x32xf32> to vector<192x32xf32>
    %6 = arith.addf %4, %5 : vector<192x32xf32>
    %cst_6 = arith.constant 0.000000e+00 : f32
    %7 = vector.broadcast %cst_6 : f32 to vector<192x32xf32>
    %8 = arith.maximumf %6, %7 : vector<192x32xf32>
    %9 = vector.shape_cast %8 : vector<192x32xf32> to vector<1x4x2x12x2x32xf32>
    %10 = vector.extract_strided_slice %9 {offsets = [0, 0, 0, 0, 0, 0], sizes = [1, 4, 1, 12, 2, 32], strides = [1, 1, 1, 1, 1, 1]} : vector<1x4x2x12x2x32xf32> to vector<1x4x1x12x2x32xf32>
    %11 = vector.shape_cast %10 : vector<1x4x1x12x2x32xf32> to vector<1x4x12x2x32xf32>
    %12 = vector.extract_strided_slice %9 {offsets = [0, 0, 1, 0, 0, 0], sizes = [1, 4, 1, 12, 2, 32], strides = [1, 1, 1, 1, 1, 1]} : vector<1x4x2x12x2x32xf32> to vector<1x4x1x12x2x32xf32>
    %13 = vector.shape_cast %12 : vector<1x4x1x12x2x32xf32> to vector<1x4x12x2x32xf32>
    %14 = arith.maximumf %11, %13 : vector<1x4x12x2x32xf32>
    %15 = vector.extract_strided_slice %14 {offsets = [0, 0, 0, 0, 0], sizes = [1, 4, 12, 1, 32], strides = [1, 1, 1, 1, 1]} : vector<1x4x12x2x32xf32> to vector<1x4x12x1x32xf32>
    %16 = vector.shape_cast %15 : vector<1x4x12x1x32xf32> to vector<1x4x12x32xf32>
    %17 = vector.extract_strided_slice %14 {offsets = [0, 0, 0, 1, 0], sizes = [1, 4, 12, 1, 32], strides = [1, 1, 1, 1, 1]} : vector<1x4x12x2x32xf32> to vector<1x4x12x1x32xf32>
    %18 = vector.shape_cast %17 : vector<1x4x12x1x32xf32> to vector<1x4x12x32xf32>
    %19 = arith.maximumf %16, %18 : vector<1x4x12x32xf32>
    %20 = arith.truncf %19 : vector<1x4x12x32xf32> to vector<1x4x12x32xbf16>
    %c0_7 = arith.constant 0 : index
    %c0_8 = arith.constant 0 : index
    %c0_9 = arith.constant 0 : index
    %c0_10 = arith.constant 0 : index
    %21 = vector.load %arg13[%c0_7, %c0_8, %c0_9, %c0_10] : memref<1x12x12x32xbf16, #tpu.memory_space<vmem>>, vector<1x4x12x32xbf16>
    tpu.vector_store %arg13[%c0_7, %c0_8, %c0_9, %c0_10], %20 {strides = array<i32>} : memref<1x12x12x32xbf16, #tpu.memory_space<vmem>>, vector<1x4x12x32xbf16>,
    %c0_11 = arith.constant 0 : index
    %c192 = arith.constant 192 : index
    %c0_12 = arith.constant 0 : index
    %22 = vector.load %arg1[%c0_11, %c192, %c0_12] : memref<1x576x128xbf16, #tpu.memory_space<vmem>>, vector<1x192x128xbf16>
    %23 = vector.shape_cast %22 : vector<1x192x128xbf16> to vector<192x128xbf16>
    %cst_13 = arith.constant dense<0.000000e+00> : vector<192x32xf32>
    %24 = tpu.matmul %23, %0, %cst_13 {dimension_numbers = #tpu.dot_dimension_numbers<[1], [0], [0], [1], [0, 0, 1, 1], [], []>} : vector<192x128xbf16>, vector<128x32xbf16>, vector<192x32xf32> -> vector<192x32xf32>
    %25 = vector.broadcast %1 : vector<1x32xf32> to vector<192x32xf32>
    %26 = arith.addf %24, %25 : vector<192x32xf32>
    %cst_14 = arith.constant 0.000000e+00 : f32
    %27 = vector.broadcast %cst_14 : f32 to vector<192x32xf32>
    %28 = arith.maximumf %26, %27 : vector<192x32xf32>
    %29 = vector.shape_cast %28 : vector<192x32xf32> to vector<1x4x2x12x2x32xf32>
    %30 = vector.extract_strided_slice %29 {offsets = [0, 0, 0, 0, 0, 0], sizes = [1, 4, 1, 12, 2, 32], strides = [1, 1, 1, 1, 1, 1]} : vector<1x4x2x12x2x32xf32> to vector<1x4x1x12x2x32xf32>
    %31 = vector.shape_cast %30 : vector<1x4x1x12x2x32xf32> to vector<1x4x12x2x32xf32>
    %32 = vector.extract_strided_slice %29 {offsets = [0, 0, 1, 0, 0, 0], sizes = [1, 4, 1, 12, 2, 32], strides = [1, 1, 1, 1, 1, 1]} : vector<1x4x2x12x2x32xf32> to vector<1x4x1x12x2x32xf32>
    %33 = vector.shape_cast %32 : vector<1x4x1x12x2x32xf32> to vector<1x4x12x2x32xf32>
    %34 = arith.maximumf %31, %33 : vector<1x4x12x2x32xf32>
    %35 = vector.extract_strided_slice %34 {offsets = [0, 0, 0, 0, 0], sizes = [1, 4, 12, 1, 32], strides = [1, 1, 1, 1, 1]} : vector<1x4x12x2x32xf32> to vector<1x4x12x1x32xf32>
    %36 = vector.shape_cast %35 : vector<1x4x12x1x32xf32> to vector<1x4x12x32xf32>
    %37 = vector.extract_strided_slice %34 {offsets = [0, 0, 0, 1, 0], sizes = [1, 4, 12, 1, 32], strides = [1, 1, 1, 1, 1]} : vector<1x4x12x2x32xf32> to vector<1x4x12x1x32xf32>
    %38 = vector.shape_cast %37 : vector<1x4x12x1x32xf32> to vector<1x4x12x32xf32>
    %39 = arith.maximumf %36, %38 : vector<1x4x12x32xf32>
    %40 = arith.truncf %39 : vector<1x4x12x32xf32> to vector<1x4x12x32xbf16>
    %c0_15 = arith.constant 0 : index
    %c4 = arith.constant 4 : index
    %c0_16 = arith.constant 0 : index
    %c0_17 = arith.constant 0 : index
    %41 = vector.load %arg13[%c0_15, %c4, %c0_16, %c0_17] : memref<1x12x12x32xbf16, #tpu.memory_space<vmem>>, vector<1x4x12x32xbf16>
    tpu.vector_store %arg13[%c0_15, %c4, %c0_16, %c0_17], %40 {strides = array<i32>} : memref<1x12x12x32xbf16, #tpu.memory_space<vmem>>, vector<1x4x12x32xbf16>,
    %c0_18 = arith.constant 0 : index
    %c384 = arith.constant 384 : index
    %c0_19 = arith.constant 0 : index
    %42 = vector.load %arg1[%c0_18, %c384, %c0_19] : memref<1x576x128xbf16, #tpu.memory_space<vmem>>, vector<1x192x128xbf16>
    %43 = vector.shape_cast %42 : vector<1x192x128xbf16> to vector<192x128xbf16>
    %cst_20 = arith.constant dense<0.000000e+00> : vector<192x32xf32>
    %44 = tpu.matmul %43, %0, %cst_20 {dimension_numbers = #tpu.dot_dimension_numbers<[1], [0], [0], [1], [0, 0, 1, 1], [], []>} : vector<192x128xbf16>, vector<128x32xbf16>, vector<192x32xf32> -> vector<192x32xf32>
    %45 = vector.broadcast %1 : vector<1x32xf32> to vector<192x32xf32>
    %46 = arith.addf %44, %45 : vector<192x32xf32>
    %cst_21 = arith.constant 0.000000e+00 : f32
    %47 = vector.broadcast %cst_21 : f32 to vector<192x32xf32>
    %48 = arith.maximumf %46, %47 : vector<192x32xf32>
    %49 = vector.shape_cast %48 : vector<192x32xf32> to vector<1x4x2x12x2x32xf32>
    %50 = vector.extract_strided_slice %49 {offsets = [0, 0, 0, 0, 0, 0], sizes = [1, 4, 1, 12, 2, 32], strides = [1, 1, 1, 1, 1, 1]} : vector<1x4x2x12x2x32xf32> to vector<1x4x1x12x2x32xf32>
    %51 = vector.shape_cast %50 : vector<1x4x1x12x2x32xf32> to vector<1x4x12x2x32xf32>
    %52 = vector.extract_strided_slice %49 {offsets = [0, 0, 1, 0, 0, 0], sizes = [1, 4, 1, 12, 2, 32], strides = [1, 1, 1, 1, 1, 1]} : vector<1x4x2x12x2x32xf32> to vector<1x4x1x12x2x32xf32>
    %53 = vector.shape_cast %52 : vector<1x4x1x12x2x32xf32> to vector<1x4x12x2x32xf32>
    %54 = arith.maximumf %51, %53 : vector<1x4x12x2x32xf32>
    %55 = vector.extract_strided_slice %54 {offsets = [0, 0, 0, 0, 0], sizes = [1, 4, 12, 1, 32], strides = [1, 1, 1, 1, 1]} : vector<1x4x12x2x32xf32> to vector<1x4x12x1x32xf32>
    %56 = vector.shape_cast %55 : vector<1x4x12x1x32xf32> to vector<1x4x12x32xf32>
    %57 = vector.extract_strided_slice %54 {offsets = [0, 0, 0, 1, 0], sizes = [1, 4, 12, 1, 32], strides = [1, 1, 1, 1, 1]} : vector<1x4x12x2x32xf32> to vector<1x4x12x1x32xf32>
    %58 = vector.shape_cast %57 : vector<1x4x12x1x32xf32> to vector<1x4x12x32xf32>
    %59 = arith.maximumf %56, %58 : vector<1x4x12x32xf32>
    %60 = arith.truncf %59 : vector<1x4x12x32xf32> to vector<1x4x12x32xbf16>
    %c0_22 = arith.constant 0 : index
    %c8 = arith.constant 8 : index
    %c0_23 = arith.constant 0 : index
    %c0_24 = arith.constant 0 : index
    %61 = vector.load %arg13[%c0_22, %c8, %c0_23, %c0_24] : memref<1x12x12x32xbf16, #tpu.memory_space<vmem>>, vector<1x4x12x32xbf16>
    tpu.vector_store %arg13[%c0_22, %c8, %c0_23, %c0_24], %60 {strides = array<i32>} : memref<1x12x12x32xbf16, #tpu.memory_space<vmem>>, vector<1x4x12x32xbf16>,
    %c0_25 = arith.constant 0 : index
    %c0_26 = arith.constant 0 : index
    %62 = vector.load %arg5[%c0_25, %c0_26] : memref<1x48xf32, #tpu.memory_space<vmem>>, vector<1x48xf32>
    %cst_27 = arith.constant 0.000000e+00 : f32
    %63 = vector.broadcast %cst_27 : f32 to vector<64x48xf32>
    %c0_28 = arith.constant 0 : index
    %c0_29 = arith.constant 0 : index
    %c0_30 = arith.constant 0 : index
    %c0_31 = arith.constant 0 : index
    %64 = vector.load %arg13[%c0_28, %c0_29, %c0_30, %c0_31] : memref<1x12x12x32xbf16, #tpu.memory_space<vmem>>, vector<1x8x8x32xbf16>
    %65 = vector.shape_cast %64 : vector<1x8x8x32xbf16> to vector<64x32xbf16>
    %c0_32 = arith.constant 0 : index
    %c0_33 = arith.constant 0 : index
    %c0_34 = arith.constant 0 : index
    %66 = vector.load %arg4[%c0_32, %c0_33, %c0_34] : memref<25x32x48xbf16, #tpu.memory_space<vmem>>, vector<1x32x48xbf16>
    %67 = vector.shape_cast %66 : vector<1x32x48xbf16> to vector<32x48xbf16>
    %cst_35 = arith.constant dense<0.000000e+00> : vector<64x48xf32>
    %68 = tpu.matmul %65, %67, %cst_35 {dimension_numbers = #tpu.dot_dimension_numbers<[1], [0], [0], [1], [0, 0, 1, 1], [], []>} : vector<64x32xbf16>, vector<32x48xbf16>, vector<64x48xf32> -> vector<64x48xf32>
    %69 = arith.addf %63, %68 : vector<64x48xf32>
    %c0_36 = arith.constant 0 : index
    %c0_37 = arith.constant 0 : index
    %c1 = arith.constant 1 : index
    %c0_38 = arith.constant 0 : index
    %70 = vector.load %arg13[%c0_36, %c0_37, %c1, %c0_38] : memref<1x12x12x32xbf16, #tpu.memory_space<vmem>>, vector<1x8x8x32xbf16>
    %71 = vector.shape_cast %70 : vector<1x8x8x32xbf16> to vector<64x32xbf16>
    %c1_39 = arith.constant 1 : index
    %c0_40 = arith.constant 0 : index
    %c0_41 = arith.constant 0 : index
    %72 = vector.load %arg4[%c1_39, %c0_40, %c0_41] : memref<25x32x48xbf16, #tpu.memory_space<vmem>>, vector<1x32x48xbf16>
    %73 = vector.shape_cast %72 : vector<1x32x48xbf16> to vector<32x48xbf16>
    %cst_42 = arith.constant dense<0.000000e+00> : vector<64x48xf32>
    %74 = tpu.matmul %71, %73, %cst_42 {dimension_numbers = #tpu.dot_dimension_numbers<[1], [0], [0], [1], [0, 0, 1, 1], [], []>} : vector<64x32xbf16>, vector<32x48xbf16>, vector<64x48xf32> -> vector<64x48xf32>
    %75 = arith.addf %69, %74 : vector<64x48xf32>
    %c0_43 = arith.constant 0 : index
    %c0_44 = arith.constant 0 : index
    %c2 = arith.constant 2 : index
    %c0_45 = arith.constant 0 : index
    %76 = vector.load %arg13[%c0_43, %c0_44, %c2, %c0_45] : memref<1x12x12x32xbf16, #tpu.memory_space<vmem>>, vector<1x8x8x32xbf16>
    %77 = vector.shape_cast %76 : vector<1x8x8x32xbf16> to vector<64x32xbf16>
    %c2_46 = arith.constant 2 : index
    %c0_47 = arith.constant 0 : index
    %c0_48 = arith.constant 0 : index
    %78 = vector.load %arg4[%c2_46, %c0_47, %c0_48] : memref<25x32x48xbf16, #tpu.memory_space<vmem>>, vector<1x32x48xbf16>
    %79 = vector.shape_cast %78 : vector<1x32x48xbf16> to vector<32x48xbf16>
    %cst_49 = arith.constant dense<0.000000e+00> : vector<64x48xf32>
    %80 = tpu.matmul %77, %79, %cst_49 {dimension_numbers = #tpu.dot_dimension_numbers<[1], [0], [0], [1], [0, 0, 1, 1], [], []>} : vector<64x32xbf16>, vector<32x48xbf16>, vector<64x48xf32> -> vector<64x48xf32>
    %81 = arith.addf %75, %80 : vector<64x48xf32>
    %c0_50 = arith.constant 0 : index
    %c0_51 = arith.constant 0 : index
    %c3 = arith.constant 3 : index
    %c0_52 = arith.constant 0 : index
    %82 = vector.load %arg13[%c0_50, %c0_51, %c3, %c0_52] : memref<1x12x12x32xbf16, #tpu.memory_space<vmem>>, vector<1x8x8x32xbf16>
    %83 = vector.shape_cast %82 : vector<1x8x8x32xbf16> to vector<64x32xbf16>
    %c3_53 = arith.constant 3 : index
    %c0_54 = arith.constant 0 : index
    %c0_55 = arith.constant 0 : index
    %84 = vector.load %arg4[%c3_53, %c0_54, %c0_55] : memref<25x32x48xbf16, #tpu.memory_space<vmem>>, vector<1x32x48xbf16>
    %85 = vector.shape_cast %84 : vector<1x32x48xbf16> to vector<32x48xbf16>
    %cst_56 = arith.constant dense<0.000000e+00> : vector<64x48xf32>
    %86 = tpu.matmul %83, %85, %cst_56 {dimension_numbers = #tpu.dot_dimension_numbers<[1], [0], [0], [1], [0, 0, 1, 1], [], []>} : vector<64x32xbf16>, vector<32x48xbf16>, vector<64x48xf32> -> vector<64x48xf32>
    %87 = arith.addf %81, %86 : vector<64x48xf32>
    %c0_57 = arith.constant 0 : index
    %c0_58 = arith.constant 0 : index
    %c4_59 = arith.constant 4 : index
    %c0_60 = arith.constant 0 : index
    %88 = vector.load %arg13[%c0_57, %c0_58, %c4_59, %c0_60] : memref<1x12x12x32xbf16, #tpu.memory_space<vmem>>, vector<1x8x8x32xbf16>
    %89 = vector.shape_cast %88 : vector<1x8x8x32xbf16> to vector<64x32xbf16>
    %c4_61 = arith.constant 4 : index
    %c0_62 = arith.constant 0 : index
    %c0_63 = arith.constant 0 : index
    %90 = vector.load %arg4[%c4_61, %c0_62, %c0_63] : memref<25x32x48xbf16, #tpu.memory_space<vmem>>, vector<1x32x48xbf16>
    %91 = vector.shape_cast %90 : vector<1x32x48xbf16> to vector<32x48xbf16>
    %cst_64 = arith.constant dense<0.000000e+00> : vector<64x48xf32>
    %92 = tpu.matmul %89, %91, %cst_64 {dimension_numbers = #tpu.dot_dimension_numbers<[1], [0], [0], [1], [0, 0, 1, 1], [], []>} : vector<64x32xbf16>, vector<32x48xbf16>, vector<64x48xf32> -> vector<64x48xf32>
    %93 = arith.addf %87, %92 : vector<64x48xf32>
    %c0_65 = arith.constant 0 : index
    %c1_66 = arith.constant 1 : index
    %c0_67 = arith.constant 0 : index
    %c0_68 = arith.constant 0 : index
    %94 = vector.load %arg13[%c0_65, %c1_66, %c0_67, %c0_68] : memref<1x12x12x32xbf16, #tpu.memory_space<vmem>>, vector<1x8x8x32xbf16>
    %95 = vector.shape_cast %94 : vector<1x8x8x32xbf16> to vector<64x32xbf16>
    %c5 = arith.constant 5 : index
    %c0_69 = arith.constant 0 : index
    %c0_70 = arith.constant 0 : index
    %96 = vector.load %arg4[%c5, %c0_69, %c0_70] : memref<25x32x48xbf16, #tpu.memory_space<vmem>>, vector<1x32x48xbf16>
    %97 = vector.shape_cast %96 : vector<1x32x48xbf16> to vector<32x48xbf16>
    %cst_71 = arith.constant dense<0.000000e+00> : vector<64x48xf32>
    %98 = tpu.matmul %95, %97, %cst_71 {dimension_numbers = #tpu.dot_dimension_numbers<[1], [0], [0], [1], [0, 0, 1, 1], [], []>} : vector<64x32xbf16>, vector<32x48xbf16>, vector<64x48xf32> -> vector<64x48xf32>
    %99 = arith.addf %93, %98 : vector<64x48xf32>
    %c0_72 = arith.constant 0 : index
    %c1_73 = arith.constant 1 : index
    %c1_74 = arith.constant 1 : index
    %c0_75 = arith.constant 0 : index
    %100 = vector.load %arg13[%c0_72, %c1_73, %c1_74, %c0_75] : memref<1x12x12x32xbf16, #tpu.memory_space<vmem>>, vector<1x8x8x32xbf16>
    %101 = vector.shape_cast %100 : vector<1x8x8x32xbf16> to vector<64x32xbf16>
    %c6 = arith.constant 6 : index
    %c0_76 = arith.constant 0 : index
    %c0_77 = arith.constant 0 : index
    %102 = vector.load %arg4[%c6, %c0_76, %c0_77] : memref<25x32x48xbf16, #tpu.memory_space<vmem>>, vector<1x32x48xbf16>
    %103 = vector.shape_cast %102 : vector<1x32x48xbf16> to vector<32x48xbf16>
    %cst_78 = arith.constant dense<0.000000e+00> : vector<64x48xf32>
    %104 = tpu.matmul %101, %103, %cst_78 {dimension_numbers = #tpu.dot_dimension_numbers<[1], [0], [0], [1], [0, 0, 1, 1], [], []>} : vector<64x32xbf16>, vector<32x48xbf16>, vector<64x48xf32> -> vector<64x48xf32>
    %105 = arith.addf %99, %104 : vector<64x48xf32>
    %c0_79 = arith.constant 0 : index
    %c1_80 = arith.constant 1 : index
    %c2_81 = arith.constant 2 : index
    %c0_82 = arith.constant 0 : index
    %106 = vector.load %arg13[%c0_79, %c1_80, %c2_81, %c0_82] : memref<1x12x12x32xbf16, #tpu.memory_space<vmem>>, vector<1x8x8x32xbf16>
    %107 = vector.shape_cast %106 : vector<1x8x8x32xbf16> to vector<64x32xbf16>
    %c7 = arith.constant 7 : index
    %c0_83 = arith.constant 0 : index
    %c0_84 = arith.constant 0 : index
    %108 = vector.load %arg4[%c7, %c0_83, %c0_84] : memref<25x32x48xbf16, #tpu.memory_space<vmem>>, vector<1x32x48xbf16>
    %109 = vector.shape_cast %108 : vector<1x32x48xbf16> to vector<32x48xbf16>
    %cst_85 = arith.constant dense<0.000000e+00> : vector<64x48xf32>
    %110 = tpu.matmul %107, %109, %cst_85 {dimension_numbers = #tpu.dot_dimension_numbers<[1], [0], [0], [1], [0, 0, 1, 1], [], []>} : vector<64x32xbf16>, vector<32x48xbf16>, vector<64x48xf32> -> vector<64x48xf32>
    %111 = arith.addf %105, %110 : vector<64x48xf32>
    %c0_86 = arith.constant 0 : index
    %c1_87 = arith.constant 1 : index
    %c3_88 = arith.constant 3 : index
    %c0_89 = arith.constant 0 : index
    %112 = vector.load %arg13[%c0_86, %c1_87, %c3_88, %c0_89] : memref<1x12x12x32xbf16, #tpu.memory_space<vmem>>, vector<1x8x8x32xbf16>
    %113 = vector.shape_cast %112 : vector<1x8x8x32xbf16> to vector<64x32xbf16>
    %c8_90 = arith.constant 8 : index
    %c0_91 = arith.constant 0 : index
    %c0_92 = arith.constant 0 : index
    %114 = vector.load %arg4[%c8_90, %c0_91, %c0_92] : memref<25x32x48xbf16, #tpu.memory_space<vmem>>, vector<1x32x48xbf16>
    %115 = vector.shape_cast %114 : vector<1x32x48xbf16> to vector<32x48xbf16>
    %cst_93 = arith.constant dense<0.000000e+00> : vector<64x48xf32>
    %116 = tpu.matmul %113, %115, %cst_93 {dimension_numbers = #tpu.dot_dimension_numbers<[1], [0], [0], [1], [0, 0, 1, 1], [], []>} : vector<64x32xbf16>, vector<32x48xbf16>, vector<64x48xf32> -> vector<64x48xf32>
    %117 = arith.addf %111, %116 : vector<64x48xf32>
    %c0_94 = arith.constant 0 : index
    %c1_95 = arith.constant 1 : index
    %c4_96 = arith.constant 4 : index
    %c0_97 = arith.constant 0 : index
    %118 = vector.load %arg13[%c0_94, %c1_95, %c4_96, %c0_97] : memref<1x12x12x32xbf16, #tpu.memory_space<vmem>>, vector<1x8x8x32xbf16>
    %119 = vector.shape_cast %118 : vector<1x8x8x32xbf16> to vector<64x32xbf16>
    %c9 = arith.constant 9 : index
    %c0_98 = arith.constant 0 : index
    %c0_99 = arith.constant 0 : index
    %120 = vector.load %arg4[%c9, %c0_98, %c0_99] : memref<25x32x48xbf16, #tpu.memory_space<vmem>>, vector<1x32x48xbf16>
    %121 = vector.shape_cast %120 : vector<1x32x48xbf16> to vector<32x48xbf16>
    %cst_100 = arith.constant dense<0.000000e+00> : vector<64x48xf32>
    %122 = tpu.matmul %119, %121, %cst_100 {dimension_numbers = #tpu.dot_dimension_numbers<[1], [0], [0], [1], [0, 0, 1, 1], [], []>} : vector<64x32xbf16>, vector<32x48xbf16>, vector<64x48xf32> -> vector<64x48xf32>
    %123 = arith.addf %117, %122 : vector<64x48xf32>
    %c0_101 = arith.constant 0 : index
    %c2_102 = arith.constant 2 : index
    %c0_103 = arith.constant 0 : index
    %c0_104 = arith.constant 0 : index
    %124 = vector.load %arg13[%c0_101, %c2_102, %c0_103, %c0_104] : memref<1x12x12x32xbf16, #tpu.memory_space<vmem>>, vector<1x8x8x32xbf16>
    %125 = vector.shape_cast %124 : vector<1x8x8x32xbf16> to vector<64x32xbf16>
    %c10 = arith.constant 10 : index
    %c0_105 = arith.constant 0 : index
    %c0_106 = arith.constant 0 : index
    %126 = vector.load %arg4[%c10, %c0_105, %c0_106] : memref<25x32x48xbf16, #tpu.memory_space<vmem>>, vector<1x32x48xbf16>
    %127 = vector.shape_cast %126 : vector<1x32x48xbf16> to vector<32x48xbf16>
    %cst_107 = arith.constant dense<0.000000e+00> : vector<64x48xf32>
    %128 = tpu.matmul %125, %127, %cst_107 {dimension_numbers = #tpu.dot_dimension_numbers<[1], [0], [0], [1], [0, 0, 1, 1], [], []>} : vector<64x32xbf16>, vector<32x48xbf16>, vector<64x48xf32> -> vector<64x48xf32>
    %129 = arith.addf %123, %128 : vector<64x48xf32>
    %c0_108 = arith.constant 0 : index
    %c2_109 = arith.constant 2 : index
    %c1_110 = arith.constant 1 : index
    %c0_111 = arith.constant 0 : index
    %130 = vector.load %arg13[%c0_108, %c2_109, %c1_110, %c0_111] : memref<1x12x12x32xbf16, #tpu.memory_space<vmem>>, vector<1x8x8x32xbf16>
    %131 = vector.shape_cast %130 : vector<1x8x8x32xbf16> to vector<64x32xbf16>
    %c11 = arith.constant 11 : index
    %c0_112 = arith.constant 0 : index
    %c0_113 = arith.constant 0 : index
    %132 = vector.load %arg4[%c11, %c0_112, %c0_113] : memref<25x32x48xbf16, #tpu.memory_space<vmem>>, vector<1x32x48xbf16>
    %133 = vector.shape_cast %132 : vector<1x32x48xbf16> to vector<32x48xbf16>
    %cst_114 = arith.constant dense<0.000000e+00> : vector<64x48xf32>
    %134 = tpu.matmul %131, %133, %cst_114 {dimension_numbers = #tpu.dot_dimension_numbers<[1], [0], [0], [1], [0, 0, 1, 1], [], []>} : vector<64x32xbf16>, vector<32x48xbf16>, vector<64x48xf32> -> vector<64x48xf32>
    %135 = arith.addf %129, %134 : vector<64x48xf32>
    %c0_115 = arith.constant 0 : index
    %c2_116 = arith.constant 2 : index
    %c2_117 = arith.constant 2 : index
    %c0_118 = arith.constant 0 : index
    %136 = vector.load %arg13[%c0_115, %c2_116, %c2_117, %c0_118] : memref<1x12x12x32xbf16, #tpu.memory_space<vmem>>, vector<1x8x8x32xbf16>
    %137 = vector.shape_cast %136 : vector<1x8x8x32xbf16> to vector<64x32xbf16>
    %c12 = arith.constant 12 : index
    %c0_119 = arith.constant 0 : index
    %c0_120 = arith.constant 0 : index
    %138 = vector.load %arg4[%c12, %c0_119, %c0_120] : memref<25x32x48xbf16, #tpu.memory_space<vmem>>, vector<1x32x48xbf16>
    %139 = vector.shape_cast %138 : vector<1x32x48xbf16> to vector<32x48xbf16>
    %cst_121 = arith.constant dense<0.000000e+00> : vector<64x48xf32>
    %140 = tpu.matmul %137, %139, %cst_121 {dimension_numbers = #tpu.dot_dimension_numbers<[1], [0], [0], [1], [0, 0, 1, 1], [], []>} : vector<64x32xbf16>, vector<32x48xbf16>, vector<64x48xf32> -> vector<64x48xf32>
    %141 = arith.addf %135, %140 : vector<64x48xf32>
    %c0_122 = arith.constant 0 : index
    %c2_123 = arith.constant 2 : index
    %c3_124 = arith.constant 3 : index
    %c0_125 = arith.constant 0 : index
    %142 = vector.load %arg13[%c0_122, %c2_123, %c3_124, %c0_125] : memref<1x12x12x32xbf16, #tpu.memory_space<vmem>>, vector<1x8x8x32xbf16>
    %143 = vector.shape_cast %142 : vector<1x8x8x32xbf16> to vector<64x32xbf16>
    %c13 = arith.constant 13 : index
    %c0_126 = arith.constant 0 : index
    %c0_127 = arith.constant 0 : index
    %144 = vector.load %arg4[%c13, %c0_126, %c0_127] : memref<25x32x48xbf16, #tpu.memory_space<vmem>>, vector<1x32x48xbf16>
    %145 = vector.shape_cast %144 : vector<1x32x48xbf16> to vector<32x48xbf16>
    %cst_128 = arith.constant dense<0.000000e+00> : vector<64x48xf32>
    %146 = tpu.matmul %143, %145, %cst_128 {dimension_numbers = #tpu.dot_dimension_numbers<[1], [0], [0], [1], [0, 0, 1, 1], [], []>} : vector<64x32xbf16>, vector<32x48xbf16>, vector<64x48xf32> -> vector<64x48xf32>
    %147 = arith.addf %141, %146 : vector<64x48xf32>
    %c0_129 = arith.constant 0 : index
    %c2_130 = arith.constant 2 : index
    %c4_131 = arith.constant 4 : index
    %c0_132 = arith.constant 0 : index
    %148 = vector.load %arg13[%c0_129, %c2_130, %c4_131, %c0_132] : memref<1x12x12x32xbf16, #tpu.memory_space<vmem>>, vector<1x8x8x32xbf16>
    %149 = vector.shape_cast %148 : vector<1x8x8x32xbf16> to vector<64x32xbf16>
    %c14 = arith.constant 14 : index
    %c0_133 = arith.constant 0 : index
    %c0_134 = arith.constant 0 : index
    %150 = vector.load %arg4[%c14, %c0_133, %c0_134] : memref<25x32x48xbf16, #tpu.memory_space<vmem>>, vector<1x32x48xbf16>
    %151 = vector.shape_cast %150 : vector<1x32x48xbf16> to vector<32x48xbf16>
    %cst_135 = arith.constant dense<0.000000e+00> : vector<64x48xf32>
    %152 = tpu.matmul %149, %151, %cst_135 {dimension_numbers = #tpu.dot_dimension_numbers<[1], [0], [0], [1], [0, 0, 1, 1], [], []>} : vector<64x32xbf16>, vector<32x48xbf16>, vector<64x48xf32> -> vector<64x48xf32>
    %153 = arith.addf %147, %152 : vector<64x48xf32>
    %c0_136 = arith.constant 0 : index
    %c3_137 = arith.constant 3 : index
    %c0_138 = arith.constant 0 : index
    %c0_139 = arith.constant 0 : index
    %154 = vector.load %arg13[%c0_136, %c3_137, %c0_138, %c0_139] : memref<1x12x12x32xbf16, #tpu.memory_space<vmem>>, vector<1x8x8x32xbf16>
    %155 = vector.shape_cast %154 : vector<1x8x8x32xbf16> to vector<64x32xbf16>
    %c15 = arith.constant 15 : index
    %c0_140 = arith.constant 0 : index
    %c0_141 = arith.constant 0 : index
    %156 = vector.load %arg4[%c15, %c0_140, %c0_141] : memref<25x32x48xbf16, #tpu.memory_space<vmem>>, vector<1x32x48xbf16>
    %157 = vector.shape_cast %156 : vector<1x32x48xbf16> to vector<32x48xbf16>
    %cst_142 = arith.constant dense<0.000000e+00> : vector<64x48xf32>
    %158 = tpu.matmul %155, %157, %cst_142 {dimension_numbers = #tpu.dot_dimension_numbers<[1], [0], [0], [1], [0, 0, 1, 1], [], []>} : vector<64x32xbf16>, vector<32x48xbf16>, vector<64x48xf32> -> vector<64x48xf32>
    %159 = arith.addf %153, %158 : vector<64x48xf32>
    %c0_143 = arith.constant 0 : index
    %c3_144 = arith.constant 3 : index
    %c1_145 = arith.constant 1 : index
    %c0_146 = arith.constant 0 : index
    %160 = vector.load %arg13[%c0_143, %c3_144, %c1_145, %c0_146] : memref<1x12x12x32xbf16, #tpu.memory_space<vmem>>, vector<1x8x8x32xbf16>
    %161 = vector.shape_cast %160 : vector<1x8x8x32xbf16> to vector<64x32xbf16>
    %c16 = arith.constant 16 : index
    %c0_147 = arith.constant 0 : index
    %c0_148 = arith.constant 0 : index
    %162 = vector.load %arg4[%c16, %c0_147, %c0_148] : memref<25x32x48xbf16, #tpu.memory_space<vmem>>, vector<1x32x48xbf16>
    %163 = vector.shape_cast %162 : vector<1x32x48xbf16> to vector<32x48xbf16>
    %cst_149 = arith.constant dense<0.000000e+00> : vector<64x48xf32>
    %164 = tpu.matmul %161, %163, %cst_149 {dimension_numbers = #tpu.dot_dimension_numbers<[1], [0], [0], [1], [0, 0, 1, 1], [], []>} : vector<64x32xbf16>, vector<32x48xbf16>, vector<64x48xf32> -> vector<64x48xf32>
    %165 = arith.addf %159, %164 : vector<64x48xf32>
    %c0_150 = arith.constant 0 : index
    %c3_151 = arith.constant 3 : index
    %c2_152 = arith.constant 2 : index
    %c0_153 = arith.constant 0 : index
    %166 = vector.load %arg13[%c0_150, %c3_151, %c2_152, %c0_153] : memref<1x12x12x32xbf16, #tpu.memory_space<vmem>>, vector<1x8x8x32xbf16>
    %167 = vector.shape_cast %166 : vector<1x8x8x32xbf16> to vector<64x32xbf16>
    %c17 = arith.constant 17 : index
    %c0_154 = arith.constant 0 : index
    %c0_155 = arith.constant 0 : index
    %168 = vector.load %arg4[%c17, %c0_154, %c0_155] : memref<25x32x48xbf16, #tpu.memory_space<vmem>>, vector<1x32x48xbf16>
    %169 = vector.shape_cast %168 : vector<1x32x48xbf16> to vector<32x48xbf16>
    %cst_156 = arith.constant dense<0.000000e+00> : vector<64x48xf32>
    %170 = tpu.matmul %167, %169, %cst_156 {dimension_numbers = #tpu.dot_dimension_numbers<[1], [0], [0], [1], [0, 0, 1, 1], [], []>} : vector<64x32xbf16>, vector<32x48xbf16>, vector<64x48xf32> -> vector<64x48xf32>
    %171 = arith.addf %165, %170 : vector<64x48xf32>
    %c0_157 = arith.constant 0 : index
    %c3_158 = arith.constant 3 : index
    %c3_159 = arith.constant 3 : index
    %c0_160 = arith.constant 0 : index
    %172 = vector.load %arg13[%c0_157, %c3_158, %c3_159, %c0_160] : memref<1x12x12x32xbf16, #tpu.memory_space<vmem>>, vector<1x8x8x32xbf16>
    %173 = vector.shape_cast %172 : vector<1x8x8x32xbf16> to vector<64x32xbf16>
    %c18 = arith.constant 18 : index
    %c0_161 = arith.constant 0 : index
    %c0_162 = arith.constant 0 : index
    %174 = vector.load %arg4[%c18, %c0_161, %c0_162] : memref<25x32x48xbf16, #tpu.memory_space<vmem>>, vector<1x32x48xbf16>
    %175 = vector.shape_cast %174 : vector<1x32x48xbf16> to vector<32x48xbf16>
    %cst_163 = arith.constant dense<0.000000e+00> : vector<64x48xf32>
    %176 = tpu.matmul %173, %175, %cst_163 {dimension_numbers = #tpu.dot_dimension_numbers<[1], [0], [0], [1], [0, 0, 1, 1], [], []>} : vector<64x32xbf16>, vector<32x48xbf16>, vector<64x48xf32> -> vector<64x48xf32>
    %177 = arith.addf %171, %176 : vector<64x48xf32>
    %c0_164 = arith.constant 0 : index
    %c3_165 = arith.constant 3 : index
    %c4_166 = arith.constant 4 : index
    %c0_167 = arith.constant 0 : index
    %178 = vector.load %arg13[%c0_164, %c3_165, %c4_166, %c0_167] : memref<1x12x12x32xbf16, #tpu.memory_space<vmem>>, vector<1x8x8x32xbf16>
    %179 = vector.shape_cast %178 : vector<1x8x8x32xbf16> to vector<64x32xbf16>
    %c19 = arith.constant 19 : index
    %c0_168 = arith.constant 0 : index
    %c0_169 = arith.constant 0 : index
    %180 = vector.load %arg4[%c19, %c0_168, %c0_169] : memref<25x32x48xbf16, #tpu.memory_space<vmem>>, vector<1x32x48xbf16>
    %181 = vector.shape_cast %180 : vector<1x32x48xbf16> to vector<32x48xbf16>
    %cst_170 = arith.constant dense<0.000000e+00> : vector<64x48xf32>
    %182 = tpu.matmul %179, %181, %cst_170 {dimension_numbers = #tpu.dot_dimension_numbers<[1], [0], [0], [1], [0, 0, 1, 1], [], []>} : vector<64x32xbf16>, vector<32x48xbf16>, vector<64x48xf32> -> vector<64x48xf32>
    %183 = arith.addf %177, %182 : vector<64x48xf32>
    %c0_171 = arith.constant 0 : index
    %c4_172 = arith.constant 4 : index
    %c0_173 = arith.constant 0 : index
    %c0_174 = arith.constant 0 : index
    %184 = vector.load %arg13[%c0_171, %c4_172, %c0_173, %c0_174] : memref<1x12x12x32xbf16, #tpu.memory_space<vmem>>, vector<1x8x8x32xbf16>
    %185 = vector.shape_cast %184 : vector<1x8x8x32xbf16> to vector<64x32xbf16>
    %c20 = arith.constant 20 : index
    %c0_175 = arith.constant 0 : index
    %c0_176 = arith.constant 0 : index
    %186 = vector.load %arg4[%c20, %c0_175, %c0_176] : memref<25x32x48xbf16, #tpu.memory_space<vmem>>, vector<1x32x48xbf16>
    %187 = vector.shape_cast %186 : vector<1x32x48xbf16> to vector<32x48xbf16>
    %cst_177 = arith.constant dense<0.000000e+00> : vector<64x48xf32>
    %188 = tpu.matmul %185, %187, %cst_177 {dimension_numbers = #tpu.dot_dimension_numbers<[1], [0], [0], [1], [0, 0, 1, 1], [], []>} : vector<64x32xbf16>, vector<32x48xbf16>, vector<64x48xf32> -> vector<64x48xf32>
    %189 = arith.addf %183, %188 : vector<64x48xf32>
    %c0_178 = arith.constant 0 : index
    %c4_179 = arith.constant 4 : index
    %c1_180 = arith.constant 1 : index
    %c0_181 = arith.constant 0 : index
    %190 = vector.load %arg13[%c0_178, %c4_179, %c1_180, %c0_181] : memref<1x12x12x32xbf16, #tpu.memory_space<vmem>>, vector<1x8x8x32xbf16>
    %191 = vector.shape_cast %190 : vector<1x8x8x32xbf16> to vector<64x32xbf16>
    %c21 = arith.constant 21 : index
    %c0_182 = arith.constant 0 : index
    %c0_183 = arith.constant 0 : index
    %192 = vector.load %arg4[%c21, %c0_182, %c0_183] : memref<25x32x48xbf16, #tpu.memory_space<vmem>>, vector<1x32x48xbf16>
    %193 = vector.shape_cast %192 : vector<1x32x48xbf16> to vector<32x48xbf16>
    %cst_184 = arith.constant dense<0.000000e+00> : vector<64x48xf32>
    %194 = tpu.matmul %191, %193, %cst_184 {dimension_numbers = #tpu.dot_dimension_numbers<[1], [0], [0], [1], [0, 0, 1, 1], [], []>} : vector<64x32xbf16>, vector<32x48xbf16>, vector<64x48xf32> -> vector<64x48xf32>
    %195 = arith.addf %189, %194 : vector<64x48xf32>
    %c0_185 = arith.constant 0 : index
    %c4_186 = arith.constant 4 : index
    %c2_187 = arith.constant 2 : index
    %c0_188 = arith.constant 0 : index
    %196 = vector.load %arg13[%c0_185, %c4_186, %c2_187, %c0_188] : memref<1x12x12x32xbf16, #tpu.memory_space<vmem>>, vector<1x8x8x32xbf16>
    %197 = vector.shape_cast %196 : vector<1x8x8x32xbf16> to vector<64x32xbf16>
    %c22 = arith.constant 22 : index
    %c0_189 = arith.constant 0 : index
    %c0_190 = arith.constant 0 : index
    %198 = vector.load %arg4[%c22, %c0_189, %c0_190] : memref<25x32x48xbf16, #tpu.memory_space<vmem>>, vector<1x32x48xbf16>
    %199 = vector.shape_cast %198 : vector<1x32x48xbf16> to vector<32x48xbf16>
    %cst_191 = arith.constant dense<0.000000e+00> : vector<64x48xf32>
    %200 = tpu.matmul %197, %199, %cst_191 {dimension_numbers = #tpu.dot_dimension_numbers<[1], [0], [0], [1], [0, 0, 1, 1], [], []>} : vector<64x32xbf16>, vector<32x48xbf16>, vector<64x48xf32> -> vector<64x48xf32>
    %201 = arith.addf %195, %200 : vector<64x48xf32>
    %c0_192 = arith.constant 0 : index
    %c4_193 = arith.constant 4 : index
    %c3_194 = arith.constant 3 : index
    %c0_195 = arith.constant 0 : index
    %202 = vector.load %arg13[%c0_192, %c4_193, %c3_194, %c0_195] : memref<1x12x12x32xbf16, #tpu.memory_space<vmem>>, vector<1x8x8x32xbf16>
    %203 = vector.shape_cast %202 : vector<1x8x8x32xbf16> to vector<64x32xbf16>
    %c23 = arith.constant 23 : index
    %c0_196 = arith.constant 0 : index
    %c0_197 = arith.constant 0 : index
    %204 = vector.load %arg4[%c23, %c0_196, %c0_197] : memref<25x32x48xbf16, #tpu.memory_space<vmem>>, vector<1x32x48xbf16>
    %205 = vector.shape_cast %204 : vector<1x32x48xbf16> to vector<32x48xbf16>
    %cst_198 = arith.constant dense<0.000000e+00> : vector<64x48xf32>
    %206 = tpu.matmul %203, %205, %cst_198 {dimension_numbers = #tpu.dot_dimension_numbers<[1], [0], [0], [1], [0, 0, 1, 1], [], []>} : vector<64x32xbf16>, vector<32x48xbf16>, vector<64x48xf32> -> vector<64x48xf32>
    %207 = arith.addf %201, %206 : vector<64x48xf32>
    %c0_199 = arith.constant 0 : index
    %c4_200 = arith.constant 4 : index
    %c4_201 = arith.constant 4 : index
    %c0_202 = arith.constant 0 : index
    %208 = vector.load %arg13[%c0_199, %c4_200, %c4_201, %c0_202] : memref<1x12x12x32xbf16, #tpu.memory_space<vmem>>, vector<1x8x8x32xbf16>
    %209 = vector.shape_cast %208 : vector<1x8x8x32xbf16> to vector<64x32xbf16>
    %c24 = arith.constant 24 : index
    %c0_203 = arith.constant 0 : index
    %c0_204 = arith.constant 0 : index
    %210 = vector.load %arg4[%c24, %c0_203, %c0_204] : memref<25x32x48xbf16, #tpu.memory_space<vmem>>, vector<1x32x48xbf16>
    %211 = vector.shape_cast %210 : vector<1x32x48xbf16> to vector<32x48xbf16>
    %cst_205 = arith.constant dense<0.000000e+00> : vector<64x48xf32>
    %212 = tpu.matmul %209, %211, %cst_205 {dimension_numbers = #tpu.dot_dimension_numbers<[1], [0], [0], [1], [0, 0, 1, 1], [], []>} : vector<64x32xbf16>, vector<32x48xbf16>, vector<64x48xf32> -> vector<64x48xf32>
    %213 = arith.addf %207, %212 : vector<64x48xf32>
    %214 = vector.broadcast %62 : vector<1x48xf32> to vector<64x48xf32>
    %215 = arith.addf %213, %214 : vector<64x48xf32>
    %cst_206 = arith.constant 0.000000e+00 : f32
    %216 = vector.broadcast %cst_206 : f32 to vector<64x48xf32>
    %217 = arith.maximumf %215, %216 : vector<64x48xf32>
    %218 = vector.shape_cast %217 : vector<64x48xf32> to vector<1x4x2x4x2x48xf32>
    %219 = vector.extract_strided_slice %218 {offsets = [0, 0, 0, 0, 0, 0], sizes = [1, 4, 1, 4, 2, 48], strides = [1, 1, 1, 1, 1, 1]} : vector<1x4x2x4x2x48xf32> to vector<1x4x1x4x2x48xf32>
    %220 = vector.shape_cast %219 : vector<1x4x1x4x2x48xf32> to vector<1x4x4x2x48xf32>
    %221 = vector.extract_strided_slice %218 {offsets = [0, 0, 1, 0, 0, 0], sizes = [1, 4, 1, 4, 2, 48], strides = [1, 1, 1, 1, 1, 1]} : vector<1x4x2x4x2x48xf32> to vector<1x4x1x4x2x48xf32>
    %222 = vector.shape_cast %221 : vector<1x4x1x4x2x48xf32> to vector<1x4x4x2x48xf32>
    %223 = arith.maximumf %220, %222 : vector<1x4x4x2x48xf32>
    %224 = vector.extract_strided_slice %223 {offsets = [0, 0, 0, 0, 0], sizes = [1, 4, 4, 1, 48], strides = [1, 1, 1, 1, 1]} : vector<1x4x4x2x48xf32> to vector<1x4x4x1x48xf32>
    %225 = vector.shape_cast %224 : vector<1x4x4x1x48xf32> to vector<1x4x4x48xf32>
    %226 = vector.extract_strided_slice %223 {offsets = [0, 0, 0, 1, 0], sizes = [1, 4, 4, 1, 48], strides = [1, 1, 1, 1, 1]} : vector<1x4x4x2x48xf32> to vector<1x4x4x1x48xf32>
    %227 = vector.shape_cast %226 : vector<1x4x4x1x48xf32> to vector<1x4x4x48xf32>
    %228 = arith.maximumf %225, %227 : vector<1x4x4x48xf32>
    %229 = arith.truncf %228 : vector<1x4x4x48xf32> to vector<1x4x4x48xbf16>
    %c0_207 = arith.constant 0 : index
    %c0_208 = arith.constant 0 : index
    %c0_209 = arith.constant 0 : index
    %c0_210 = arith.constant 0 : index
    %230 = vector.load %arg14[%c0_207, %c0_208, %c0_209, %c0_210] : memref<1x4x4x48xbf16, #tpu.memory_space<vmem>>, vector<1x4x4x48xbf16>
    tpu.vector_store %arg14[%c0_207, %c0_208, %c0_209, %c0_210], %229 {strides = array<i32>} : memref<1x4x4x48xbf16, #tpu.memory_space<vmem>>, vector<1x4x4x48xbf16>,
    %cst_211 = arith.constant 0.000000e+00 : f32
    %231 = vector.broadcast %cst_211 : f32 to vector<1x128xf32>
    %cst_212 = arith.constant 0.000000e+00 : f32
    %232 = vector.broadcast %cst_212 : f32 to vector<1x128xf32>
    %cst_213 = arith.constant 0.000000e+00 : f32
    %233 = vector.broadcast %cst_213 : f32 to vector<1x128xf32>
    %cst_214 = arith.constant 0.000000e+00 : f32
    %234 = vector.broadcast %cst_214 : f32 to vector<1x128xf32>
    %c0_215 = arith.constant 0 : index
    %c0_216 = arith.constant 0 : index
    %c0_217 = arith.constant 0 : index
    %c0_218 = arith.constant 0 : index
    %235 = vector.load %arg14[%c0_215, %c0_216, %c0_217, %c0_218] : memref<1x4x4x48xbf16, #tpu.memory_space<vmem>>, vector<1x1x1x48xbf16>
    %236 = vector.shape_cast %235 : vector<1x1x1x48xbf16> to vector<1x48xbf16>
    %c0_219 = arith.constant 0 : index
    %c0_220 = arith.constant 0 : index
    %c0_221 = arith.constant 0 : index
    %c0_222 = arith.constant 0 : index
    %237 = vector.load %arg6[%c0_219, %c0_220, %c0_221, %c0_222] : memref<4x4x48x128xbf16, #tpu.memory_space<vmem>>, vector<1x1x48x128xbf16>
    %238 = vector.shape_cast %237 : vector<1x1x48x128xbf16> to vector<48x128xbf16>
    %cst_223 = arith.constant dense<0.000000e+00> : vector<1x128xf32>
    %239 = tpu.matmul %236, %238, %cst_223 {dimension_numbers = #tpu.dot_dimension_numbers<[1], [0], [0], [1], [0, 0, 1, 1], [], []>} : vector<1x48xbf16>, vector<48x128xbf16>, vector<1x128xf32> -> vector<1x128xf32>
    %240 = arith.addf %231, %239 : vector<1x128xf32>
    %c0_224 = arith.constant 0 : index
    %c0_225 = arith.constant 0 : index
    %c1_226 = arith.constant 1 : index
    %c0_227 = arith.constant 0 : index
    %241 = vector.load %arg14[%c0_224, %c0_225, %c1_226, %c0_227] : memref<1x4x4x48xbf16, #tpu.memory_space<vmem>>, vector<1x1x1x48xbf16>
    %242 = vector.shape_cast %241 : vector<1x1x1x48xbf16> to vector<1x48xbf16>
    %c0_228 = arith.constant 0 : index
    %c1_229 = arith.constant 1 : index
    %c0_230 = arith.constant 0 : index
    %c0_231 = arith.constant 0 : index
    %243 = vector.load %arg6[%c0_228, %c1_229, %c0_230, %c0_231] : memref<4x4x48x128xbf16, #tpu.memory_space<vmem>>, vector<1x1x48x128xbf16>
    %244 = vector.shape_cast %243 : vector<1x1x48x128xbf16> to vector<48x128xbf16>
    %cst_232 = arith.constant dense<0.000000e+00> : vector<1x128xf32>
    %245 = tpu.matmul %242, %244, %cst_232 {dimension_numbers = #tpu.dot_dimension_numbers<[1], [0], [0], [1], [0, 0, 1, 1], [], []>} : vector<1x48xbf16>, vector<48x128xbf16>, vector<1x128xf32> -> vector<1x128xf32>
    %246 = arith.addf %240, %245 : vector<1x128xf32>
    %c0_233 = arith.constant 0 : index
    %c0_234 = arith.constant 0 : index
    %c2_235 = arith.constant 2 : index
    %c0_236 = arith.constant 0 : index
    %247 = vector.load %arg14[%c0_233, %c0_234, %c2_235, %c0_236] : memref<1x4x4x48xbf16, #tpu.memory_space<vmem>>, vector<1x1x1x48xbf16>
    %248 = vector.shape_cast %247 : vector<1x1x1x48xbf16> to vector<1x48xbf16>
    %c0_237 = arith.constant 0 : index
    %c2_238 = arith.constant 2 : index
    %c0_239 = arith.constant 0 : index
    %c0_240 = arith.constant 0 : index
    %249 = vector.load %arg6[%c0_237, %c2_238, %c0_239, %c0_240] : memref<4x4x48x128xbf16, #tpu.memory_space<vmem>>, vector<1x1x48x128xbf16>
    %250 = vector.shape_cast %249 : vector<1x1x48x128xbf16> to vector<48x128xbf16>
    %cst_241 = arith.constant dense<0.000000e+00> : vector<1x128xf32>
    %251 = tpu.matmul %248, %250, %cst_241 {dimension_numbers = #tpu.dot_dimension_numbers<[1], [0], [0], [1], [0, 0, 1, 1], [], []>} : vector<1x48xbf16>, vector<48x128xbf16>, vector<1x128xf32> -> vector<1x128xf32>
    %252 = arith.addf %246, %251 : vector<1x128xf32>
    %c0_242 = arith.constant 0 : index
    %c0_243 = arith.constant 0 : index
    %c3_244 = arith.constant 3 : index
    %c0_245 = arith.constant 0 : index
    %253 = vector.load %arg14[%c0_242, %c0_243, %c3_244, %c0_245] : memref<1x4x4x48xbf16, #tpu.memory_space<vmem>>, vector<1x1x1x48xbf16>
    %254 = vector.shape_cast %253 : vector<1x1x1x48xbf16> to vector<1x48xbf16>
    %c0_246 = arith.constant 0 : index
    %c3_247 = arith.constant 3 : index
    %c0_248 = arith.constant 0 : index
    %c0_249 = arith.constant 0 : index
    %255 = vector.load %arg6[%c0_246, %c3_247, %c0_248, %c0_249] : memref<4x4x48x128xbf16, #tpu.memory_space<vmem>>, vector<1x1x48x128xbf16>
    %256 = vector.shape_cast %255 : vector<1x1x48x128xbf16> to vector<48x128xbf16>
    %cst_250 = arith.constant dense<0.000000e+00> : vector<1x128xf32>
    %257 = tpu.matmul %254, %256, %cst_250 {dimension_numbers = #tpu.dot_dimension_numbers<[1], [0], [0], [1], [0, 0, 1, 1], [], []>} : vector<1x48xbf16>, vector<48x128xbf16>, vector<1x128xf32> -> vector<1x128xf32>
    %258 = arith.addf %252, %257 : vector<1x128xf32>
    %c0_251 = arith.constant 0 : index
    %c1_252 = arith.constant 1 : index
    %c0_253 = arith.constant 0 : index
    %c0_254 = arith.constant 0 : index
    %259 = vector.load %arg14[%c0_251, %c1_252, %c0_253, %c0_254] : memref<1x4x4x48xbf16, #tpu.memory_space<vmem>>, vector<1x1x1x48xbf16>
    %260 = vector.shape_cast %259 : vector<1x1x1x48xbf16> to vector<1x48xbf16>
    %c1_255 = arith.constant 1 : index
    %c0_256 = arith.constant 0 : index
    %c0_257 = arith.constant 0 : index
    %c0_258 = arith.constant 0 : index
    %261 = vector.load %arg6[%c1_255, %c0_256, %c0_257, %c0_258] : memref<4x4x48x128xbf16, #tpu.memory_space<vmem>>, vector<1x1x48x128xbf16>
    %262 = vector.shape_cast %261 : vector<1x1x48x128xbf16> to vector<48x128xbf16>
    %cst_259 = arith.constant dense<0.000000e+00> : vector<1x128xf32>
    %263 = tpu.matmul %260, %262, %cst_259 {dimension_numbers = #tpu.dot_dimension_numbers<[1], [0], [0], [1], [0, 0, 1, 1], [], []>} : vector<1x48xbf16>, vector<48x128xbf16>, vector<1x128xf32> -> vector<1x128xf32>
    %264 = arith.addf %232, %263 : vector<1x128xf32>
    %c0_260 = arith.constant 0 : index
    %c1_261 = arith.constant 1 : index
    %c1_262 = arith.constant 1 : index
    %c0_263 = arith.constant 0 : index
    %265 = vector.load %arg14[%c0_260, %c1_261, %c1_262, %c0_263] : memref<1x4x4x48xbf16, #tpu.memory_space<vmem>>, vector<1x1x1x48xbf16>
    %266 = vector.shape_cast %265 : vector<1x1x1x48xbf16> to vector<1x48xbf16>
    %c1_264 = arith.constant 1 : index
    %c1_265 = arith.constant 1 : index
    %c0_266 = arith.constant 0 : index
    %c0_267 = arith.constant 0 : index
    %267 = vector.load %arg6[%c1_264, %c1_265, %c0_266, %c0_267] : memref<4x4x48x128xbf16, #tpu.memory_space<vmem>>, vector<1x1x48x128xbf16>
    %268 = vector.shape_cast %267 : vector<1x1x48x128xbf16> to vector<48x128xbf16>
    %cst_268 = arith.constant dense<0.000000e+00> : vector<1x128xf32>
    %269 = tpu.matmul %266, %268, %cst_268 {dimension_numbers = #tpu.dot_dimension_numbers<[1], [0], [0], [1], [0, 0, 1, 1], [], []>} : vector<1x48xbf16>, vector<48x128xbf16>, vector<1x128xf32> -> vector<1x128xf32>
    %270 = arith.addf %264, %269 : vector<1x128xf32>
    %c0_269 = arith.constant 0 : index
    %c1_270 = arith.constant 1 : index
    %c2_271 = arith.constant 2 : index
    %c0_272 = arith.constant 0 : index
    %271 = vector.load %arg14[%c0_269, %c1_270, %c2_271, %c0_272] : memref<1x4x4x48xbf16, #tpu.memory_space<vmem>>, vector<1x1x1x48xbf16>
    %272 = vector.shape_cast %271 : vector<1x1x1x48xbf16> to vector<1x48xbf16>
    %c1_273 = arith.constant 1 : index
    %c2_274 = arith.constant 2 : index
    %c0_275 = arith.constant 0 : index
    %c0_276 = arith.constant 0 : index
    %273 = vector.load %arg6[%c1_273, %c2_274, %c0_275, %c0_276] : memref<4x4x48x128xbf16, #tpu.memory_space<vmem>>, vector<1x1x48x128xbf16>
    %274 = vector.shape_cast %273 : vector<1x1x48x128xbf16> to vector<48x128xbf16>
    %cst_277 = arith.constant dense<0.000000e+00> : vector<1x128xf32>
    %275 = tpu.matmul %272, %274, %cst_277 {dimension_numbers = #tpu.dot_dimension_numbers<[1], [0], [0], [1], [0, 0, 1, 1], [], []>} : vector<1x48xbf16>, vector<48x128xbf16>, vector<1x128xf32> -> vector<1x128xf32>
    %276 = arith.addf %270, %275 : vector<1x128xf32>
    %c0_278 = arith.constant 0 : index
    %c1_279 = arith.constant 1 : index
    %c3_280 = arith.constant 3 : index
    %c0_281 = arith.constant 0 : index
    %277 = vector.load %arg14[%c0_278, %c1_279, %c3_280, %c0_281] : memref<1x4x4x48xbf16, #tpu.memory_space<vmem>>, vector<1x1x1x48xbf16>
    %278 = vector.shape_cast %277 : vector<1x1x1x48xbf16> to vector<1x48xbf16>
    %c1_282 = arith.constant 1 : index
    %c3_283 = arith.constant 3 : index
    %c0_284 = arith.constant 0 : index
    %c0_285 = arith.constant 0 : index
    %279 = vector.load %arg6[%c1_282, %c3_283, %c0_284, %c0_285] : memref<4x4x48x128xbf16, #tpu.memory_space<vmem>>, vector<1x1x48x128xbf16>
    %280 = vector.shape_cast %279 : vector<1x1x48x128xbf16> to vector<48x128xbf16>
    %cst_286 = arith.constant dense<0.000000e+00> : vector<1x128xf32>
    %281 = tpu.matmul %278, %280, %cst_286 {dimension_numbers = #tpu.dot_dimension_numbers<[1], [0], [0], [1], [0, 0, 1, 1], [], []>} : vector<1x48xbf16>, vector<48x128xbf16>, vector<1x128xf32> -> vector<1x128xf32>
    %282 = arith.addf %276, %281 : vector<1x128xf32>
    %c0_287 = arith.constant 0 : index
    %c2_288 = arith.constant 2 : index
    %c0_289 = arith.constant 0 : index
    %c0_290 = arith.constant 0 : index
    %283 = vector.load %arg14[%c0_287, %c2_288, %c0_289, %c0_290] : memref<1x4x4x48xbf16, #tpu.memory_space<vmem>>, vector<1x1x1x48xbf16>
    %284 = vector.shape_cast %283 : vector<1x1x1x48xbf16> to vector<1x48xbf16>
    %c2_291 = arith.constant 2 : index
    %c0_292 = arith.constant 0 : index
    %c0_293 = arith.constant 0 : index
    %c0_294 = arith.constant 0 : index
    %285 = vector.load %arg6[%c2_291, %c0_292, %c0_293, %c0_294] : memref<4x4x48x128xbf16, #tpu.memory_space<vmem>>, vector<1x1x48x128xbf16>
    %286 = vector.shape_cast %285 : vector<1x1x48x128xbf16> to vector<48x128xbf16>
    %cst_295 = arith.constant dense<0.000000e+00> : vector<1x128xf32>
    %287 = tpu.matmul %284, %286, %cst_295 {dimension_numbers = #tpu.dot_dimension_numbers<[1], [0], [0], [1], [0, 0, 1, 1], [], []>} : vector<1x48xbf16>, vector<48x128xbf16>, vector<1x128xf32> -> vector<1x128xf32>
    %288 = arith.addf %233, %287 : vector<1x128xf32>
    %c0_296 = arith.constant 0 : index
    %c2_297 = arith.constant 2 : index
    %c1_298 = arith.constant 1 : index
    %c0_299 = arith.constant 0 : index
    %289 = vector.load %arg14[%c0_296, %c2_297, %c1_298, %c0_299] : memref<1x4x4x48xbf16, #tpu.memory_space<vmem>>, vector<1x1x1x48xbf16>
    %290 = vector.shape_cast %289 : vector<1x1x1x48xbf16> to vector<1x48xbf16>
    %c2_300 = arith.constant 2 : index
    %c1_301 = arith.constant 1 : index
    %c0_302 = arith.constant 0 : index
    %c0_303 = arith.constant 0 : index
    %291 = vector.load %arg6[%c2_300, %c1_301, %c0_302, %c0_303] : memref<4x4x48x128xbf16, #tpu.memory_space<vmem>>, vector<1x1x48x128xbf16>
    %292 = vector.shape_cast %291 : vector<1x1x48x128xbf16> to vector<48x128xbf16>
    %cst_304 = arith.constant dense<0.000000e+00> : vector<1x128xf32>
    %293 = tpu.matmul %290, %292, %cst_304 {dimension_numbers = #tpu.dot_dimension_numbers<[1], [0], [0], [1], [0, 0, 1, 1], [], []>} : vector<1x48xbf16>, vector<48x128xbf16>, vector<1x128xf32> -> vector<1x128xf32>
    %294 = arith.addf %288, %293 : vector<1x128xf32>
    %c0_305 = arith.constant 0 : index
    %c2_306 = arith.constant 2 : index
    %c2_307 = arith.constant 2 : index
    %c0_308 = arith.constant 0 : index
    %295 = vector.load %arg14[%c0_305, %c2_306, %c2_307, %c0_308] : memref<1x4x4x48xbf16, #tpu.memory_space<vmem>>, vector<1x1x1x48xbf16>
    %296 = vector.shape_cast %295 : vector<1x1x1x48xbf16> to vector<1x48xbf16>
    %c2_309 = arith.constant 2 : index
    %c2_310 = arith.constant 2 : index
    %c0_311 = arith.constant 0 : index
    %c0_312 = arith.constant 0 : index
    %297 = vector.load %arg6[%c2_309, %c2_310, %c0_311, %c0_312] : memref<4x4x48x128xbf16, #tpu.memory_space<vmem>>, vector<1x1x48x128xbf16>
    %298 = vector.shape_cast %297 : vector<1x1x48x128xbf16> to vector<48x128xbf16>
    %cst_313 = arith.constant dense<0.000000e+00> : vector<1x128xf32>
    %299 = tpu.matmul %296, %298, %cst_313 {dimension_numbers = #tpu.dot_dimension_numbers<[1], [0], [0], [1], [0, 0, 1, 1], [], []>} : vector<1x48xbf16>, vector<48x128xbf16>, vector<1x128xf32> -> vector<1x128xf32>
    %300 = arith.addf %294, %299 : vector<1x128xf32>
    %c0_314 = arith.constant 0 : index
    %c2_315 = arith.constant 2 : index
    %c3_316 = arith.constant 3 : index
    %c0_317 = arith.constant 0 : index
    %301 = vector.load %arg14[%c0_314, %c2_315, %c3_316, %c0_317] : memref<1x4x4x48xbf16, #tpu.memory_space<vmem>>, vector<1x1x1x48xbf16>
    %302 = vector.shape_cast %301 : vector<1x1x1x48xbf16> to vector<1x48xbf16>
    %c2_318 = arith.constant 2 : index
    %c3_319 = arith.constant 3 : index
    %c0_320 = arith.constant 0 : index
    %c0_321 = arith.constant 0 : index
    %303 = vector.load %arg6[%c2_318, %c3_319, %c0_320, %c0_321] : memref<4x4x48x128xbf16, #tpu.memory_space<vmem>>, vector<1x1x48x128xbf16>
    %304 = vector.shape_cast %303 : vector<1x1x48x128xbf16> to vector<48x128xbf16>
    %cst_322 = arith.constant dense<0.000000e+00> : vector<1x128xf32>
    %305 = tpu.matmul %302, %304, %cst_322 {dimension_numbers = #tpu.dot_dimension_numbers<[1], [0], [0], [1], [0, 0, 1, 1], [], []>} : vector<1x48xbf16>, vector<48x128xbf16>, vector<1x128xf32> -> vector<1x128xf32>
    %306 = arith.addf %300, %305 : vector<1x128xf32>
    %c0_323 = arith.constant 0 : index
    %c3_324 = arith.constant 3 : index
    %c0_325 = arith.constant 0 : index
    %c0_326 = arith.constant 0 : index
    %307 = vector.load %arg14[%c0_323, %c3_324, %c0_325, %c0_326] : memref<1x4x4x48xbf16, #tpu.memory_space<vmem>>, vector<1x1x1x48xbf16>
    %308 = vector.shape_cast %307 : vector<1x1x1x48xbf16> to vector<1x48xbf16>
    %c3_327 = arith.constant 3 : index
    %c0_328 = arith.constant 0 : index
    %c0_329 = arith.constant 0 : index
    %c0_330 = arith.constant 0 : index
    %309 = vector.load %arg6[%c3_327, %c0_328, %c0_329, %c0_330] : memref<4x4x48x128xbf16, #tpu.memory_space<vmem>>, vector<1x1x48x128xbf16>
    %310 = vector.shape_cast %309 : vector<1x1x48x128xbf16> to vector<48x128xbf16>
    %cst_331 = arith.constant dense<0.000000e+00> : vector<1x128xf32>
    %311 = tpu.matmul %308, %310, %cst_331 {dimension_numbers = #tpu.dot_dimension_numbers<[1], [0], [0], [1], [0, 0, 1, 1], [], []>} : vector<1x48xbf16>, vector<48x128xbf16>, vector<1x128xf32> -> vector<1x128xf32>
    %312 = arith.addf %234, %311 : vector<1x128xf32>
    %c0_332 = arith.constant 0 : index
    %c3_333 = arith.constant 3 : index
    %c1_334 = arith.constant 1 : index
    %c0_335 = arith.constant 0 : index
    %313 = vector.load %arg14[%c0_332, %c3_333, %c1_334, %c0_335] : memref<1x4x4x48xbf16, #tpu.memory_space<vmem>>, vector<1x1x1x48xbf16>
    %314 = vector.shape_cast %313 : vector<1x1x1x48xbf16> to vector<1x48xbf16>
    %c3_336 = arith.constant 3 : index
    %c1_337 = arith.constant 1 : index
    %c0_338 = arith.constant 0 : index
    %c0_339 = arith.constant 0 : index
    %315 = vector.load %arg6[%c3_336, %c1_337, %c0_338, %c0_339] : memref<4x4x48x128xbf16, #tpu.memory_space<vmem>>, vector<1x1x48x128xbf16>
    %316 = vector.shape_cast %315 : vector<1x1x48x128xbf16> to vector<48x128xbf16>
    %cst_340 = arith.constant dense<0.000000e+00> : vector<1x128xf32>
    %317 = tpu.matmul %314, %316, %cst_340 {dimension_numbers = #tpu.dot_dimension_numbers<[1], [0], [0], [1], [0, 0, 1, 1], [], []>} : vector<1x48xbf16>, vector<48x128xbf16>, vector<1x128xf32> -> vector<1x128xf32>
    %318 = arith.addf %312, %317 : vector<1x128xf32>
    %c0_341 = arith.constant 0 : index
    %c3_342 = arith.constant 3 : index
    %c2_343 = arith.constant 2 : index
    %c0_344 = arith.constant 0 : index
    %319 = vector.load %arg14[%c0_341, %c3_342, %c2_343, %c0_344] : memref<1x4x4x48xbf16, #tpu.memory_space<vmem>>, vector<1x1x1x48xbf16>
    %320 = vector.shape_cast %319 : vector<1x1x1x48xbf16> to vector<1x48xbf16>
    %c3_345 = arith.constant 3 : index
    %c2_346 = arith.constant 2 : index
    %c0_347 = arith.constant 0 : index
    %c0_348 = arith.constant 0 : index
    %321 = vector.load %arg6[%c3_345, %c2_346, %c0_347, %c0_348] : memref<4x4x48x128xbf16, #tpu.memory_space<vmem>>, vector<1x1x48x128xbf16>
    %322 = vector.shape_cast %321 : vector<1x1x48x128xbf16> to vector<48x128xbf16>
    %cst_349 = arith.constant dense<0.000000e+00> : vector<1x128xf32>
    %323 = tpu.matmul %320, %322, %cst_349 {dimension_numbers = #tpu.dot_dimension_numbers<[1], [0], [0], [1], [0, 0, 1, 1], [], []>} : vector<1x48xbf16>, vector<48x128xbf16>, vector<1x128xf32> -> vector<1x128xf32>
    %324 = arith.addf %318, %323 : vector<1x128xf32>
    %c0_350 = arith.constant 0 : index
    %c3_351 = arith.constant 3 : index
    %c3_352 = arith.constant 3 : index
    %c0_353 = arith.constant 0 : index
    %325 = vector.load %arg14[%c0_350, %c3_351, %c3_352, %c0_353] : memref<1x4x4x48xbf16, #tpu.memory_space<vmem>>, vector<1x1x1x48xbf16>
    %326 = vector.shape_cast %325 : vector<1x1x1x48xbf16> to vector<1x48xbf16>
    %c3_354 = arith.constant 3 : index
    %c3_355 = arith.constant 3 : index
    %c0_356 = arith.constant 0 : index
    %c0_357 = arith.constant 0 : index
    %327 = vector.load %arg6[%c3_354, %c3_355, %c0_356, %c0_357] : memref<4x4x48x128xbf16, #tpu.memory_space<vmem>>, vector<1x1x48x128xbf16>
    %328 = vector.shape_cast %327 : vector<1x1x48x128xbf16> to vector<48x128xbf16>
    %cst_358 = arith.constant dense<0.000000e+00> : vector<1x128xf32>
    %329 = tpu.matmul %326, %328, %cst_358 {dimension_numbers = #tpu.dot_dimension_numbers<[1], [0], [0], [1], [0, 0, 1, 1], [], []>} : vector<1x48xbf16>, vector<48x128xbf16>, vector<1x128xf32> -> vector<1x128xf32>
    %330 = arith.addf %324, %329 : vector<1x128xf32>
    %331 = arith.addf %258, %282 : vector<1x128xf32>
    %332 = arith.addf %306, %330 : vector<1x128xf32>
    %333 = arith.addf %331, %332 : vector<1x128xf32>
    %c0_359 = arith.constant 0 : index
    %c0_360 = arith.constant 0 : index
    %334 = vector.load %arg7[%c0_359, %c0_360] : memref<1x128xf32, #tpu.memory_space<vmem>>, vector<1x128xf32>
    %335 = arith.addf %333, %334 : vector<1x128xf32>
    %cst_361 = arith.constant 0.000000e+00 : f32
    %336 = vector.broadcast %cst_361 : f32 to vector<1x128xf32>
    %337 = arith.maximumf %335, %336 : vector<1x128xf32>
    %338 = arith.truncf %337 : vector<1x128xf32> to vector<1x128xbf16>
    %c0_362 = arith.constant 0 : index
    %c0_363 = arith.constant 0 : index
    %339 = vector.load %arg8[%c0_362, %c0_363] : memref<128x128xbf16, #tpu.memory_space<vmem>>, vector<128x128xbf16>
    %cst_364 = arith.constant dense<0.000000e+00> : vector<1x128xf32>
    %340 = tpu.matmul %338, %339, %cst_364 {dimension_numbers = #tpu.dot_dimension_numbers<[1], [0], [0], [1], [0, 0, 1, 1], [], []>} : vector<1x128xbf16>, vector<128x128xbf16>, vector<1x128xf32> -> vector<1x128xf32>
    %c0_365 = arith.constant 0 : index
    %c0_366 = arith.constant 0 : index
    %341 = vector.load %arg9[%c0_365, %c0_366] : memref<1x128xf32, #tpu.memory_space<vmem>>, vector<1x128xf32>
    %342 = arith.addf %340, %341 : vector<1x128xf32>
    %cst_367 = arith.constant 0.000000e+00 : f32
    %343 = vector.broadcast %cst_367 : f32 to vector<1x128xf32>
    %344 = arith.maximumf %342, %343 : vector<1x128xf32>
    %345 = arith.truncf %344 : vector<1x128xf32> to vector<1x128xbf16>
    %c0_368 = arith.constant 0 : index
    %c0_369 = arith.constant 0 : index
    %346 = vector.load %arg10[%c0_368, %c0_369] : memref<128x128xbf16, #tpu.memory_space<vmem>>, vector<128x128xbf16>
    %cst_370 = arith.constant dense<0.000000e+00> : vector<1x128xf32>
    %347 = tpu.matmul %345, %346, %cst_370 {dimension_numbers = #tpu.dot_dimension_numbers<[1], [0], [0], [1], [0, 0, 1, 1], [], []>} : vector<1x128xbf16>, vector<128x128xbf16>, vector<1x128xf32> -> vector<1x128xf32>
    %c0_371 = arith.constant 0 : index
    %c0_372 = arith.constant 0 : index
    %348 = vector.load %arg11[%c0_371, %c0_372] : memref<1x128xf32, #tpu.memory_space<vmem>>, vector<1x128xf32>
    %349 = arith.addf %347, %348 : vector<1x128xf32>
    %350 = vector.shape_cast %349 : vector<1x128xf32> to vector<1x1x128xf32>
    %c0_373 = arith.constant 0 : index
    %c0_374 = arith.constant 0 : index
    %c0_375 = arith.constant 0 : index
    %351 = vector.load %arg12[%c0_373, %c0_374, %c0_375] : memref<1x1x128xf32, #tpu.memory_space<vmem>>, vector<1x1x128xf32>
    tpu.vector_store %arg12[%c0_373, %c0_374, %c0_375], %350 {strides = array<i32>} : memref<1x1x128xf32, #tpu.memory_space<vmem>>, vector<1x1x128xf32>,
    return
  }
  func.func @transform_0(%arg0: i32) -> (i32, i32, i32) {
    %c0_i32 = arith.constant 0 : i32
    %c0_i32_0 = arith.constant 0 : i32
    %c0_i32_1 = arith.constant 0 : i32
    return %arg0, %c0_i32, %c0_i32_0 : i32, i32, i32
  }
  func.func @transform_1(%arg0: i32) -> (i32, i32) {
    %c0_i32 = arith.constant 0 : i32
    %c0_i32_0 = arith.constant 0 : i32
    %c0_i32_1 = arith.constant 0 : i32
    return %c0_i32, %c0_i32_0 : i32, i32
  }
  func.func @transform_2(%arg0: i32) -> (i32, i32) {
    %c0_i32 = arith.constant 0 : i32
    %c0_i32_0 = arith.constant 0 : i32
    %c0_i32_1 = arith.constant 0 : i32
    return %c0_i32, %c0_i32_0 : i32, i32
  }
  func.func @transform_3(%arg0: i32) -> (i32, i32, i32) {
    %c0_i32 = arith.constant 0 : i32
    %c0_i32_0 = arith.constant 0 : i32
    %c0_i32_1 = arith.constant 0 : i32
    %c0_i32_2 = arith.constant 0 : i32
    return %c0_i32, %c0_i32_0, %c0_i32_1 : i32, i32, i32
  }
  func.func @transform_4(%arg0: i32) -> (i32, i32) {
    %c0_i32 = arith.constant 0 : i32
    %c0_i32_0 = arith.constant 0 : i32
    %c0_i32_1 = arith.constant 0 : i32
    return %c0_i32, %c0_i32_0 : i32, i32
  }
  func.func @transform_5(%arg0: i32) -> (i32, i32, i32, i32) {
    %c0_i32 = arith.constant 0 : i32
    %c0_i32_0 = arith.constant 0 : i32
    %c0_i32_1 = arith.constant 0 : i32
    %c0_i32_2 = arith.constant 0 : i32
    %c0_i32_3 = arith.constant 0 : i32
    return %c0_i32, %c0_i32_0, %c0_i32_1, %c0_i32_2 : i32, i32, i32, i32
  }
  func.func @transform_6(%arg0: i32) -> (i32, i32) {
    %c0_i32 = arith.constant 0 : i32
    %c0_i32_0 = arith.constant 0 : i32
    %c0_i32_1 = arith.constant 0 : i32
    return %c0_i32, %c0_i32_0 : i32, i32
  }
  func.func @transform_7(%arg0: i32) -> (i32, i32) {
    %c0_i32 = arith.constant 0 : i32
    %c0_i32_0 = arith.constant 0 : i32
    %c0_i32_1 = arith.constant 0 : i32
    return %c0_i32, %c0_i32_0 : i32, i32
  }
  func.func @transform_8(%arg0: i32) -> (i32, i32) {
    %c0_i32 = arith.constant 0 : i32
    %c0_i32_0 = arith.constant 0 : i32
    %c0_i32_1 = arith.constant 0 : i32
    return %c0_i32, %c0_i32_0 : i32, i32
  }
  func.func @transform_9(%arg0: i32) -> (i32, i32) {
    %c0_i32 = arith.constant 0 : i32
    %c0_i32_0 = arith.constant 0 : i32
    %c0_i32_1 = arith.constant 0 : i32
    return %c0_i32, %c0_i32_0 : i32, i32
  }
  func.func @transform_10(%arg0: i32) -> (i32, i32) {
    %c0_i32 = arith.constant 0 : i32
    %c0_i32_0 = arith.constant 0 : i32
    %c0_i32_1 = arith.constant 0 : i32
    return %c0_i32, %c0_i32_0 : i32, i32
  }
  func.func @transform_11(%arg0: i32) -> (i32, i32, i32) {
    %c0_i32 = arith.constant 0 : i32
    %c0_i32_0 = arith.constant 0 : i32
    %c0_i32_1 = arith.constant 0 : i32
    return %arg0, %c0_i32, %c0_i32_0 : i32, i32, i32
  }
}

</mosaic_0001>

<llo_original>
// kernel: mnist_classifier_forward.1
$region0: #{mnist_classifier_forward.1}
  #allocation0 [shape = 'u32[]', space=smem, size = 0x4, offset = 0x4, fixed_abs, tag = 'smem constant byte address 0x4 - core index']
  #allocation1 [shape = 'u32[144,128]{1,0:T(1,128)}', space=vmem, size = 0x12000, scoped, tag = 'internal scratch']
  #allocation2 [shape = 'bf16[1,12,12,32]{3,2,1,0:T(8,128)(2,1)}', space=vmem, size = 0xc000, scoped, tag = 'scratch operand']
  #allocation3 [shape = 'bf16[1,4,4,48]{3,2,1,0:T(4,128)(2,1)}', space=vmem, size = 0x1000, scoped, tag = 'scratch operand']
  %s0 = inlined_call_operand.vmem [shape: bf16[2,576,128], index: 0, kind: input, shape index: {}]
  %s1 = inlined_call_operand.vmem [shape: bf16[128,32], index: 1, kind: input, shape index: {}]
  %s2 = inlined_call_operand.vmem [shape: f32[1,32], index: 2, kind: input, shape index: {}]
  %s3 = inlined_call_operand.vmem [shape: bf16[25,32,48], index: 3, kind: input, shape index: {}]
  %s4 = inlined_call_operand.vmem [shape: f32[1,48], index: 4, kind: input, shape index: {}]
  %s5 = inlined_call_operand.vmem [shape: bf16[4,4,48,128], index: 5, kind: input, shape index: {}]
  %s6 = inlined_call_operand.vmem [shape: f32[1,128], index: 6, kind: input, shape index: {}]
  %s7 = inlined_call_operand.vmem [shape: bf16[128,128], index: 7, kind: input, shape index: {}]
  %s8 = inlined_call_operand.vmem [shape: f32[1,128], index: 8, kind: input, shape index: {}]
  %s9 = inlined_call_operand.vmem [shape: bf16[128,128], index: 9, kind: input, shape index: {}]
  %s10 = inlined_call_operand.vmem [shape: f32[1,128], index: 10, kind: input, shape index: {}]
  %s11 = inlined_call_operand.hbm [shape: f32[2,1,128], index: 11, kind: output, shape index: {}]
  %s12 = sld [smem:[#allocation0]]
  $region77: #{mnist_classifier_forward.1} parent=0
    _
  %s14 = ssub.s32 1, %s12
  %s15 = scalar_select 0, %s14, %s12
  $region1: #{mnist_classifier_forward.1} parent=0
    #allocation4 [shape = 'u8[1024]{0}', space=vmem, size = 0x400, scoped, tag = 'output window, operand 0']
    #allocation5 [shape = 's32[2]{0}', space=sflag, size = 0x8, scoped, tag = 'scoped memory for mnist_classifier_forward.1']
    %16 = vsyncpa [#allocation5], 0
    %s17 = scalar_lea.sflag [#allocation5], 1
    %18 = vsyncpa %s17, 0
    loop: start=0, step=1, limit=4
    $region2: #{mnist_classifier_forward.1} parent=1 // loop_pre_header
      _
    $region3: #{mnist_classifier_forward.1} parent=1 // loop_header
      %s20 = sphi 0, %s24
      %p21 = scmp.ge.s32.totalorder %s20, 4
      %s30 = sphi 0, %s32
      %s33 = sphi 0, %s30
      %s34 = sphi 0, %s33
      %s50 = sphi 0, %s34
      %s54 = sphi 0, %s54
      %s56 = sphi 0, %s54
      %s57 = sphi 0, %s56
      %s71 = sphi 0, %s57
      %s75 = sphi 0, %s75
      %s77 = sphi 0, %s75
      %s78 = sphi 0, %s77
      %s92 = sphi 0, %s78
      %s96 = sphi 0, %s96
      %s98 = sphi 0, %s96
      %s99 = sphi 0, %s98
      %s113 = sphi 0, %s99
      %s117 = sphi 0, %s117
      %s119 = sphi 0, %s117
      %s120 = sphi 0, %s119
      %s134 = sphi 0, %s120
      %s138 = sphi 0, %s138
      %s140 = sphi 0, %s138
      %s141 = sphi 0, %s140
      %s155 = sphi 0, %s141
      %s159 = sphi 0, %s159
      %s161 = sphi 0, %s159
      %s162 = sphi 0, %s161
      %s176 = sphi 0, %s162
      %s180 = sphi 0, %s180
      %s182 = sphi 0, %s180
      %s183 = sphi 0, %s182
      %s197 = sphi 0, %s183
      %s201 = sphi 0, %s201
      %s203 = sphi 0, %s201
      %s204 = sphi 0, %s203
      %s218 = sphi 0, %s204
      %s222 = sphi 0, %s222
      %s224 = sphi 0, %s222
      %s225 = sphi 0, %s224
      %s239 = sphi 0, %s225
      %s243 = sphi 0, %s243
      %s245 = sphi 0, %s243
      %s246 = sphi 0, %s245
      %s260 = sphi 0, %s246
      %s266 = sphi 0, %s268
      %s269 = sphi 0, %s266
      %s270 = sphi 0, %s269
      %s286 = sphi 0, %s270
    $region4: #{mnist_classifier_forward.1} parent=1 // loop_header_branch
      %23 = sbr.rel (%p21) target = $region8
    $region5: #{mnist_classifier_forward.1} parent=1 // loop_body
      %s25 = ssub.s32 %s20, 1
      %s26 = ssub.s32 %s20, 2
      %s27 = sadd.s32 %s20, 1
      %s28 = ssub.s32 %s20, %s27
      %p29 = scmp.eq.s32.totalorder %s28, 0
      %s31 = sadd.s32 %s30, 1
      %s32 = scalar_select %p29, %s30, %s31
      %p35 = pneg %p29
      %p36 = scmp.eq.s32.totalorder %s20, 1
      %p37 = por %p35, %p36
      %p38 = scmp.ne.s32.totalorder %s30, %s33
      %p39 = scmp.eq.s32.totalorder %s20, 0
      %p40 = por %p38, %p39
      %p41 = scmp.ne.s32.totalorder %s30, %s33
      %p42 = scmp.eq.s32.totalorder %s25, 1
      %p43 = por %p41, %p42
      %p44 = scmp.ne.s32.totalorder %s33, %s34
      %p45 = scmp.eq.s32.totalorder %s25, 0
      %p46 = por %p44, %p45
      %p47 = scmp.ne.s32.totalorder %s33, %s34
      %p48 = scmp.eq.s32.totalorder %s26, 1
      %p49 = por %p47, %p48
      %p51 = scmp.ne.s32.totalorder %s34, %s50
      %p52 = scmp.eq.s32.totalorder %s26, 0
      %p53 = por %p51, %p52
      %s55 = sadd.s32 %s54, 1
      %p58 = scmp.eq.s32.totalorder %s20, 1
      %p59 = scmp.ne.s32.totalorder %s54, %s56
      %p60 = scmp.eq.s32.totalorder %s20, 0
      %p61 = por %p59, %p60
      %p62 = scmp.ne.s32.totalorder %s54, %s56
      %p63 = scmp.eq.s32.totalorder %s25, 1
      %p64 = por %p62, %p63
      %p65 = scmp.ne.s32.totalorder %s56, %s57
      %p66 = scmp.eq.s32.totalorder %s25, 0
      %p67 = por %p65, %p66
      %p68 = scmp.ne.s32.totalorder %s56, %s57
      %p69 = scmp.eq.s32.totalorder %s26, 1
      %p70 = por %p68, %p69
      %p72 = scmp.ne.s32.totalorder %s57, %s71
      %p73 = scmp.eq.s32.totalorder %s26, 0
      %p74 = por %p72, %p73
      %s76 = sadd.s32 %s75, 1
      %p79 = scmp.eq.s32.totalorder %s20, 1
      %p80 = scmp.ne.s32.totalorder %s75, %s77
      %p81 = scmp.eq.s32.totalorder %s20, 0
      %p82 = por %p80, %p81
      %p83 = scmp.ne.s32.totalorder %s75, %s77
      %p84 = scmp.eq.s32.totalorder %s25, 1
      %p85 = por %p83, %p84
      %p86 = scmp.ne.s32.totalorder %s77, %s78
      %p87 = scmp.eq.s32.totalorder %s25, 0
      %p88 = por %p86, %p87
      %p89 = scmp.ne.s32.totalorder %s77, %s78
      %p90 = scmp.eq.s32.totalorder %s26, 1
      %p91 = por %p89, %p90
      %p93 = scmp.ne.s32.totalorder %s78, %s92
      %p94 = scmp.eq.s32.totalorder %s26, 0
      %p95 = por %p93, %p94
      %s97 = sadd.s32 %s96, 1
      %p100 = scmp.eq.s32.totalorder %s20, 1
      %p101 = scmp.ne.s32.totalorder %s96, %s98
      %p102 = scmp.eq.s32.totalorder %s20, 0
      %p103 = por %p101, %p102
      %p104 = scmp.ne.s32.totalorder %s96, %s98
      %p105 = scmp.eq.s32.totalorder %s25, 1
      %p106 = por %p104, %p105
      %p107 = scmp.ne.s32.totalorder %s98, %s99
      %p108 = scmp.eq.s32.totalorder %s25, 0
      %p109 = por %p107, %p108
      %p110 = scmp.ne.s32.totalorder %s98, %s99
      %p111 = scmp.eq.s32.totalorder %s26, 1
      %p112 = por %p110, %p111
      %p114 = scmp.ne.s32.totalorder %s99, %s113
      %p115 = scmp.eq.s32.totalorder %s26, 0
      %p116 = por %p114, %p115
      %s118 = sadd.s32 %s117, 1
      %p121 = scmp.eq.s32.totalorder %s20, 1
      %p122 = scmp.ne.s32.totalorder %s117, %s119
      %p123 = scmp.eq.s32.totalorder %s20, 0
      %p124 = por %p122, %p123
      %p125 = scmp.ne.s32.totalorder %s117, %s119
      %p126 = scmp.eq.s32.totalorder %s25, 1
      %p127 = por %p125, %p126
      %p128 = scmp.ne.s32.totalorder %s119, %s120
      %p129 = scmp.eq.s32.totalorder %s25, 0
      %p130 = por %p128, %p129
      %p131 = scmp.ne.s32.totalorder %s119, %s120
      %p132 = scmp.eq.s32.totalorder %s26, 1
      %p133 = por %p131, %p132
      %p135 = scmp.ne.s32.totalorder %s120, %s134
      %p136 = scmp.eq.s32.totalorder %s26, 0
      %p137 = por %p135, %p136
      %s139 = sadd.s32 %s138, 1
      %p142 = scmp.eq.s32.totalorder %s20, 1
      %p143 = scmp.ne.s32.totalorder %s138, %s140
      %p144 = scmp.eq.s32.totalorder %s20, 0
      %p145 = por %p143, %p144
      %p146 = scmp.ne.s32.totalorder %s138, %s140
      %p147 = scmp.eq.s32.totalorder %s25, 1
      %p148 = por %p146, %p147
      %p149 = scmp.ne.s32.totalorder %s140, %s141
      %p150 = scmp.eq.s32.totalorder %s25, 0
      %p151 = por %p149, %p150
      %p152 = scmp.ne.s32.totalorder %s140, %s141
      %p153 = scmp.eq.s32.totalorder %s26, 1
      %p154 = por %p152, %p153
      %p156 = scmp.ne.s32.totalorder %s141, %s155
      %p157 = scmp.eq.s32.totalorder %s26, 0
      %p158 = por %p156, %p157
      %s160 = sadd.s32 %s159, 1
      %p163 = scmp.eq.s32.totalorder %s20, 1
      %p164 = scmp.ne.s32.totalorder %s159, %s161
      %p165 = scmp.eq.s32.totalorder %s20, 0
      %p166 = por %p164, %p165
      %p167 = scmp.ne.s32.totalorder %s159, %s161
      %p168 = scmp.eq.s32.totalorder %s25, 1
      %p169 = por %p167, %p168
      %p170 = scmp.ne.s32.totalorder %s161, %s162
      %p171 = scmp.eq.s32.totalorder %s25, 0
      %p172 = por %p170, %p171
      %p173 = scmp.ne.s32.totalorder %s161, %s162
      %p174 = scmp.eq.s32.totalorder %s26, 1
      %p175 = por %p173, %p174
      %p177 = scmp.ne.s32.totalorder %s162, %s176
      %p178 = scmp.eq.s32.totalorder %s26, 0
      %p179 = por %p177, %p178
      %s181 = sadd.s32 %s180, 1
      %p184 = scmp.eq.s32.totalorder %s20, 1
      %p185 = scmp.ne.s32.totalorder %s180, %s182
      %p186 = scmp.eq.s32.totalorder %s20, 0
      %p187 = por %p185, %p186
      %p188 = scmp.ne.s32.totalorder %s180, %s182
      %p189 = scmp.eq.s32.totalorder %s25, 1
      %p190 = por %p188, %p189
      %p191 = scmp.ne.s32.totalorder %s182, %s183
      %p192 = scmp.eq.s32.totalorder %s25, 0
      %p193 = por %p191, %p192
      %p194 = scmp.ne.s32.totalorder %s182, %s183
      %p195 = scmp.eq.s32.totalorder %s26, 1
      %p196 = por %p194, %p195
      %p198 = scmp.ne.s32.totalorder %s183, %s197
      %p199 = scmp.eq.s32.totalorder %s26, 0
      %p200 = por %p198, %p199
      %s202 = sadd.s32 %s201, 1
      %p205 = scmp.eq.s32.totalorder %s20, 1
      %p206 = scmp.ne.s32.totalorder %s201, %s203
      %p207 = scmp.eq.s32.totalorder %s20, 0
      %p208 = por %p206, %p207
      %p209 = scmp.ne.s32.totalorder %s201, %s203
      %p210 = scmp.eq.s32.totalorder %s25, 1
      %p211 = por %p209, %p210
      %p212 = scmp.ne.s32.totalorder %s203, %s204
      %p213 = scmp.eq.s32.totalorder %s25, 0
      %p214 = por %p212, %p213
      %p215 = scmp.ne.s32.totalorder %s203, %s204
      %p216 = scmp.eq.s32.totalorder %s26, 1
      %p217 = por %p215, %p216
      %p219 = scmp.ne.s32.totalorder %s204, %s218
      %p220 = scmp.eq.s32.totalorder %s26, 0
      %p221 = por %p219, %p220
      %s223 = sadd.s32 %s222, 1
      %p226 = scmp.eq.s32.totalorder %s20, 1
      %p227 = scmp.ne.s32.totalorder %s222, %s224
      %p228 = scmp.eq.s32.totalorder %s20, 0
      %p229 = por %p227, %p228
      %p230 = scmp.ne.s32.totalorder %s222, %s224
      %p231 = scmp.eq.s32.totalorder %s25, 1
      %p232 = por %p230, %p231
      %p233 = scmp.ne.s32.totalorder %s224, %s225
      %p234 = scmp.eq.s32.totalorder %s25, 0
      %p235 = por %p233, %p234
      %p236 = scmp.ne.s32.totalorder %s224, %s225
      %p237 = scmp.eq.s32.totalorder %s26, 1
      %p238 = por %p236, %p237
      %p240 = scmp.ne.s32.totalorder %s225, %s239
      %p241 = scmp.eq.s32.totalorder %s26, 0
      %p242 = por %p240, %p241
      %s244 = sadd.s32 %s243, 1
      %p247 = scmp.eq.s32.totalorder %s20, 1
      %p248 = scmp.ne.s32.totalorder %s243, %s245
      %p249 = scmp.eq.s32.totalorder %s20, 0
      %p250 = por %p248, %p249
      %p251 = scmp.ne.s32.totalorder %s243, %s245
      %p252 = scmp.eq.s32.totalorder %s25, 1
      %p253 = por %p251, %p252
      %p254 = scmp.ne.s32.totalorder %s245, %s246
      %p255 = scmp.eq.s32.totalorder %s25, 0
      %p256 = por %p254, %p255
      %p257 = scmp.ne.s32.totalorder %s245, %s246
      %p258 = scmp.eq.s32.totalorder %s26, 1
      %p259 = por %p257, %p258
      %p261 = scmp.ne.s32.totalorder %s246, %s260
      %p262 = scmp.eq.s32.totalorder %s26, 0
      %p263 = por %p261, %p262
      %s264 = ssub.s32 %s20, %s27
      %p265 = scmp.eq.s32.totalorder %s264, 0
      %s267 = sadd.s32 %s266, 1
      %s268 = scalar_select %p265, %s266, %s267
      %p271 = pneg %p265
      %p272 = scmp.eq.s32.totalorder %s20, 1
      %p273 = por %p271, %p272
      %p274 = scmp.ne.s32.totalorder %s266, %s269
      %p275 = scmp.eq.s32.totalorder %s20, 0
      %p276 = por %p274, %p275
      %p277 = scmp.ne.s32.totalorder %s266, %s269
      %p278 = scmp.eq.s32.totalorder %s25, 1
      %p279 = por %p277, %p278
      %p280 = scmp.ne.s32.totalorder %s269, %s270
      %p281 = scmp.eq.s32.totalorder %s25, 0
      %p282 = por %p280, %p281
      %p283 = scmp.ne.s32.totalorder %s269, %s270
      %p284 = scmp.eq.s32.totalorder %s26, 1
      %p285 = por %p283, %p284
      %p287 = scmp.ne.s32.totalorder %s270, %s286
      %p288 = scmp.eq.s32.totalorder %s26, 0
      %p289 = por %p287, %p288
      %p290 = scmp.le.s32.totalorder 1, %s20
      %p291 = scmp.lt.s32.totalorder %s20, 3
      %p292 = pnand %p290, %p291
      %p293 = pneg %p292
      // Predicated region
      $region9: #{mnist_classifier_forward.1} parent=5 // pred_check
        _
      $region10: #{mnist_classifier_forward.1} parent=5 // pred_check_branch
        %295 = sbr.rel (%p292) target = $region12
      $region11: #{mnist_classifier_forward.1} parent=5 // pred_region
        %s296 = ssub.s32 %s20, 1
        // Predicated region
        $region13: #{mnist_classifier_forward.1} parent=11 // pred_check
          %p297 = pneg %p67
        $region14: #{mnist_classifier_forward.1} parent=11 // pred_check_branch
          %299 = sbr.rel (%p297) target = $region16
        $region15: #{mnist_classifier_forward.1} parent=11 // pred_region
          _
        $region16: #{mnist_classifier_forward.1} parent=11 // pred_fallthru
          _
        // Predicated region
        $region17: #{mnist_classifier_forward.1} parent=11 // pred_check
          %p300 = pneg %p88
        $region18: #{mnist_classifier_forward.1} parent=11 // pred_check_branch
          %302 = sbr.rel (%p300) target = $region20
        $region19: #{mnist_classifier_forward.1} parent=11 // pred_region
          _
        $region20: #{mnist_classifier_forward.1} parent=11 // pred_fallthru
          _
        // Predicated region
        $region21: #{mnist_classifier_forward.1} parent=11 // pred_check
          %p303 = pneg %p109
        $region22: #{mnist_classifier_forward.1} parent=11 // pred_check_branch
          %305 = sbr.rel (%p303) target = $region24
        $region23: #{mnist_classifier_forward.1} parent=11 // pred_region
          _
        $region24: #{mnist_classifier_forward.1} parent=11 // pred_fallthru
          _
        // Predicated region
        $region25: #{mnist_classifier_forward.1} parent=11 // pred_check
          %p306 = pneg %p130
        $region26: #{mnist_classifier_forward.1} parent=11 // pred_check_branch
          %308 = sbr.rel (%p306) target = $region28
        $region27: #{mnist_classifier_forward.1} parent=11 // pred_region
          _
        $region28: #{mnist_classifier_forward.1} parent=11 // pred_fallthru
          _
        // Predicated region
        $region29: #{mnist_classifier_forward.1} parent=11 // pred_check
          %p309 = pneg %p151
        $region30: #{mnist_classifier_forward.1} parent=11 // pred_check_branch
          %311 = sbr.rel (%p309) target = $region32
        $region31: #{mnist_classifier_forward.1} parent=11 // pred_region
          _
        $region32: #{mnist_classifier_forward.1} parent=11 // pred_fallthru
          _
        // Predicated region
        $region33: #{mnist_classifier_forward.1} parent=11 // pred_check
          %p312 = pneg %p172
        $region34: #{mnist_classifier_forward.1} parent=11 // pred_check_branch
          %314 = sbr.rel (%p312) target = $region36
        $region35: #{mnist_classifier_forward.1} parent=11 // pred_region
          _
        $region36: #{mnist_classifier_forward.1} parent=11 // pred_fallthru
          _
        // Predicated region
        $region37: #{mnist_classifier_forward.1} parent=11 // pred_check
          %p315 = pneg %p193
        $region38: #{mnist_classifier_forward.1} parent=11 // pred_check_branch
          %317 = sbr.rel (%p315) target = $region40
        $region39: #{mnist_classifier_forward.1} parent=11 // pred_region
          _
        $region40: #{mnist_classifier_forward.1} parent=11 // pred_fallthru
          _
        // Predicated region
        $region41: #{mnist_classifier_forward.1} parent=11 // pred_check
          %p318 = pneg %p214
        $region42: #{mnist_classifier_forward.1} parent=11 // pred_check_branch
          %320 = sbr.rel (%p318) target = $region44
        $region43: #{mnist_classifier_forward.1} parent=11 // pred_region
          _
        $region44: #{mnist_classifier_forward.1} parent=11 // pred_fallthru
          _
        // Predicated region
        $region45: #{mnist_classifier_forward.1} parent=11 // pred_check
          %p321 = pneg %p235
        $region46: #{mnist_classifier_forward.1} parent=11 // pred_check_branch
          %323 = sbr.rel (%p321) target = $region48
        $region47: #{mnist_classifier_forward.1} parent=11 // pred_region
          _
        $region48: #{mnist_classifier_forward.1} parent=11 // pred_fallthru
          _
        // Predicated region
        $region49: #{mnist_classifier_forward.1} parent=11 // pred_check
          %p324 = pneg %p256
        $region50: #{mnist_classifier_forward.1} parent=11 // pred_check_branch
          %326 = sbr.rel (%p324) target = $region52
        $region51: #{mnist_classifier_forward.1} parent=11 // pred_region
          _
        $region52: #{mnist_classifier_forward.1} parent=11 // pred_fallthru
          _
      $region12: #{mnist_classifier_forward.1} parent=5 // pred_fallthru
        _
      %p327 = scmp.lt.s32.totalorder %s20, 2
      // Predicated region
      $region53: #{mnist_classifier_forward.1} parent=5 // pred_check
        %p328 = pneg %p327
      $region54: #{mnist_classifier_forward.1} parent=5 // pred_check_branch
        %330 = sbr.rel (%p328) target = $region56
      $region55: #{mnist_classifier_forward.1} parent=5 // pred_region
        // Predicated region
        $region57: #{mnist_classifier_forward.1} parent=55 // pred_check
          %p331 = pneg %p40
        $region58: #{mnist_classifier_forward.1} parent=55 // pred_check_branch
          %333 = sbr.rel (%p331) target = $region60
        $region59: #{mnist_classifier_forward.1} parent=55 // pred_region
          %p334 = scmp.lt.s32.totalorder %s20, 1
          %s335 = scalar_select %p334, %s20, 1
          %s336 = smul.addr %s335, 72
          %s337 = smul.addr %s336, 4
          %s338 = scalar_lea.vmem %s0, %s337
        $region60: #{mnist_classifier_forward.1} parent=55 // pred_fallthru
          _
      $region56: #{mnist_classifier_forward.1} parent=5 // pred_fallthru
        _
      %p339 = scmp.le.s32.totalorder 1, %s20
      %p340 = scmp.lt.s32.totalorder %s20, 3
      %p341 = pnand %p339, %p340
      %p342 = pneg %p341
      // Predicated region
      $region61: #{mnist_classifier_forward.1} parent=5 // pred_check
        _
      $region62: #{mnist_classifier_forward.1} parent=5 // pred_check_branch
        %344 = sbr.rel (%p341) target = $region64
      $region63: #{mnist_classifier_forward.1} parent=5 // pred_region
        %s345 = ssub.s32 %s20, 1
        %p346 = scmp.lt.s32.totalorder %s25, 1
        %s347 = scalar_select %p346, %s25, 1
        %s348 = smul.addr %s347, 72
        %s349 = smul.addr %s348, 4
        %s350 = scalar_lea.vmem %s0, %s349
        %p351 = pneg %p46
        %p352 = pneg %p43
        %p353 = pneg %p67
        %p354 = pneg %p64
        %p355 = pneg %p88
        %p356 = pneg %p85
        %p357 = pneg %p109
        %p358 = pneg %p106
        %p359 = pneg %p130
        %p360 = pneg %p127
        %p361 = pneg %p151
        %p362 = pneg %p148
        %p363 = pneg %p172
        %p364 = pneg %p169
        %p365 = pneg %p193
        %p366 = pneg %p190
        %p367 = pneg %p214
        %p368 = pneg %p211
        %p369 = pneg %p235
        %p370 = pneg %p232
        %p371 = pneg %p256
        %p372 = pneg %p253
        %p373 = pneg %p282
        %p374 = pneg %p279
        %s375 = sand.u32 %s269, 1
        %s376 = scalar_lea.sflag [#allocation5], %s375
        %s377 = sand.u32 %s269, 1
        %s378 = scalar_lea.vmem [#allocation4], %s377
        %p379 = scmp.lt.s32.totalorder %s25, 1
        %s380 = scalar_select %p379, %s25, 1
        %s381 = smul.addr %s380, 72
        %s382 = smul.addr %s381, 4
        %s383 = scalar_lea.vmem %s0, %s382
        %v385 = vld [vmem:[%s1] sm:$0xf]
        %v386 = vld [vmem:[%s1 + $0x4] sm:$0xf]
        %v387 = vld [vmem:[%s1 + $0x8] sm:$0xf]
        %v388 = vld [vmem:[%s1 + $0xc] sm:$0xf]
        %v389 = vld [vmem:[%s1 + $0x10] sm:$0xf]
        %v390 = vld [vmem:[%s1 + $0x14] sm:$0xf]
        %v391 = vld [vmem:[%s1 + $0x18] sm:$0xf]
        %v392 = vld [vmem:[%s1 + $0x1c] sm:$0xf]
        %v393 = vld [vmem:[%s1 + $0x20] sm:$0xf]
        %v394 = vld [vmem:[%s1 + $0x24] sm:$0xf]
        %v395 = vld [vmem:[%s1 + $0x28] sm:$0xf]
        %v396 = vld [vmem:[%s1 + $0x2c] sm:$0xf]
        %v397 = vld [vmem:[%s1 + $0x30] sm:$0xf]
        %v398 = vld [vmem:[%s1 + $0x34] sm:$0xf]
        %v399 = vld [vmem:[%s1 + $0x38] sm:$0xf]
        %v400 = vld [vmem:[%s1 + $0x3c] sm:$0xf]
        %v401 = vld [vmem:[%s2] sm:$0x1]
        %v402 = vld [vmem:[%s383] sm:$0xf]
        %v403 = vld [vmem:[%s383 + $0x4] sm:$0xf]
        %v404 = vld [vmem:[%s383 + $0x8] sm:$0xf]
        %v405 = vld [vmem:[%s383 + $0xc] sm:$0xf]
        %v406 = vld [vmem:[%s383 + $0x10] sm:$0xf]
        %v407 = vld [vmem:[%s383 + $0x14] sm:$0xf]
        %v408 = vld [vmem:[%s383 + $0x18] sm:$0xf]
        %v409 = vld [vmem:[%s383 + $0x1c] sm:$0xf]
        %v410 = vld [vmem:[%s383 + $0x20] sm:$0xf]
        %v411 = vld [vmem:[%s383 + $0x24] sm:$0xf]
        %v412 = vld [vmem:[%s383 + $0x28] sm:$0xf]
        %v413 = vld [vmem:[%s383 + $0x2c] sm:$0xf]
        %v414 = vld [vmem:[%s383 + $0x30] sm:$0xf]
        %v415 = vld [vmem:[%s383 + $0x34] sm:$0xf]
        %v416 = vld [vmem:[%s383 + $0x38] sm:$0xf]
        %v417 = vld [vmem:[%s383 + $0x3c] sm:$0xf]
        %v418 = vld [vmem:[%s383 + $0x40] sm:$0xf]
        %v419 = vld [vmem:[%s383 + $0x44] sm:$0xf]
        %v420 = vld [vmem:[%s383 + $0x48] sm:$0xf]
        %v421 = vld [vmem:[%s383 + $0x4c] sm:$0xf]
        %v422 = vld [vmem:[%s383 + $0x50] sm:$0xf]
        %v423 = vld [vmem:[%s383 + $0x54] sm:$0xf]
        %v424 = vld [vmem:[%s383 + $0x58] sm:$0xf]
        %v425 = vld [vmem:[%s383 + $0x5c] sm:$0xf]
        %v427 = vlaneseq
        %v428 = vshrl.u32 %v427, 7
        %v429 = vsub.s32 0, %v428
        %v430 = vrot.slane %v401, %v429
        %v456 = vunpack.c.l.b16 %v402
        %v457 = vunpack.c.l.b16 %v403
        %v458 = vunpack.c.l.b16 %v404
        %v459 = vunpack.c.l.b16 %v405
        %v460 = vunpack.c.l.b16 %v406
        %v461 = vunpack.c.l.b16 %v407
        %v462 = vunpack.c.l.b16 %v408
        %v463 = vunpack.c.l.b16 %v409
        %v464 = vunpack.c.l.b16 %v410
        %v465 = vunpack.c.l.b16 %v411
        %v466 = vunpack.c.l.b16 %v412
        %v467 = vunpack.c.l.b16 %v413
        %v468 = vunpack.c.l.b16 %v414
        %v469 = vunpack.c.l.b16 %v415
        %v470 = vunpack.c.l.b16 %v416
        %v471 = vunpack.c.l.b16 %v417
        %v472 = vunpack.c.l.b16 %v418
        %v473 = vunpack.c.l.b16 %v419
        %v474 = vunpack.c.l.b16 %v420
        %v475 = vunpack.c.l.b16 %v421
        %v476 = vunpack.c.l.b16 %v422
        %v477 = vunpack.c.l.b16 %v423
        %v478 = vunpack.c.l.b16 %v424
        %v479 = vunpack.c.l.b16 %v425
        %v480 = vpack.c.b16 %v457, %v456
        %v481 = vpack.c.b16 %v459, %v458
        %v482 = vpack.c.b16 %v461, %v460
        %v483 = vpack.c.b16 %v463, %v462
        %v484 = vpack.c.b16 %v465, %v464
        %v485 = vpack.c.b16 %v467, %v466
        %v486 = vpack.c.b16 %v469, %v468
        %v487 = vpack.c.b16 %v471, %v470
        %v488 = vpack.c.b16 %v473, %v472
        %v489 = vpack.c.b16 %v475, %v474
        %v490 = vpack.c.b16 %v477, %v476
        %v491 = vpack.c.b16 %v479, %v478
        %v520 = vunpack.c.l.b16 %v385
        %v521 = vunpack.c.l.b16 %v386
        %v522 = vunpack.c.l.b16 %v387
        %v523 = vunpack.c.l.b16 %v388
        %v524 = vunpack.c.l.b16 %v389
        %v525 = vunpack.c.l.b16 %v390
        %v526 = vunpack.c.l.b16 %v391
        %v527 = vunpack.c.l.b16 %v392
        %v528 = vunpack.c.l.b16 %v393
        %v529 = vunpack.c.l.b16 %v394
        %v530 = vunpack.c.l.b16 %v395
        %v531 = vunpack.c.l.b16 %v396
        %v532 = vunpack.c.l.b16 %v397
        %v533 = vunpack.c.l.b16 %v398
        %v534 = vunpack.c.l.b16 %v399
        %v535 = vunpack.c.l.b16 %v400
        %v536 = vpack.c.b16 %v521, %v520
        %v537 = vpack.c.b16 %v523, %v522
        %v538 = vpack.c.b16 %v525, %v524
        %v539 = vpack.c.b16 %v527, %v526
        %v540 = vpack.c.b16 %v529, %v528
        %v541 = vpack.c.b16 %v531, %v530
        %v542 = vpack.c.b16 %v533, %v532
        %v543 = vpack.c.b16 %v535, %v534
        %552 = vmatprep.subr.bf16.mxu0 0
        %553 = vmatpush1.bf16.msra.mxu0 %v536
        %554 = vmatprep.subr.bf16.mxu0 0
        %555 = vmatpush1.bf16.msra.mxu0 %v537
        %556 = vmatprep.subr.bf16.mxu0 0
        %557 = vmatpush1.bf16.msra.mxu0 %v538
        %558 = vmatprep.subr.bf16.mxu0 0
        %559 = vmatpush1.bf16.msra.mxu0 %v539
        %560 = vmatprep.subr.bf16.mxu0 0
        %561 = vmatpush1.bf16.msra.mxu0 %v540
        %562 = vmatprep.subr.bf16.mxu0 0
        %563 = vmatpush1.bf16.msra.mxu0 %v541
        %564 = vmatprep.subr.bf16.mxu0 0
        %565 = vmatpush1.bf16.msra.mxu0 %v542
        %566 = vmatprep.subr.bf16.mxu0 0
        %567 = vmatpush1.bf16.msra.mxu0 %v543
        %568 = vmatprep.subr.bf16.mxu0 0
        %569 = vmatpush1.bf16.msra.mxu0 0
        %570 = vmatprep.subr.bf16.mxu0 0
        %571 = vmatpush1.bf16.msra.mxu0 0
        %572 = vmatprep.subr.bf16.mxu0 0
        %573 = vmatpush1.bf16.msra.mxu0 0
        %574 = vmatprep.subr.bf16.mxu0 0
        %575 = vmatpush1.bf16.msra.mxu0 0
        %576 = vmatprep.subr.bf16.mxu0 0
        %577 = vmatpush1.bf16.msra.mxu0 0
        %578 = vmatprep.subr.bf16.mxu0 0
        %579 = vmatpush1.bf16.msra.mxu0 0
        %580 = vmatprep.subr.bf16.mxu0 0
        %581 = vmatpush1.bf16.msra.mxu0 0
        %582 = vmatprep.subr.bf16.mxu0 0
        %583 = vmatpush1.bf16.msra.mxu0 0
        %584 = vmatprep.mubr.bf16.mxu0 0
        %585 = vmatmul.mubr.bf16.gmra.mrb[0].mxu0 %v480
        %v586 = vpop.f32.mrb[0].mxu0
        %v587 = vadd.f32 %v430, %v586
        %v588 = vpop.f32.mrb[0].mxu0
        %v589 = vpop.f32.mrb[0].mxu0
        %v590 = vadd.f32 %v430, %v589
        %v591 = vpop.f32.mrb[0].mxu0
        %592 = vmatprep.mubr.bf16.mxu0 0
        %593 = vmatmul.mubr.bf16.gmra.mrb[0].mxu0 %v481
        %v594 = vpop.f32.mrb[0].mxu0
        %v595 = vadd.f32 %v430, %v594
        %v596 = vpop.f32.mrb[0].mxu0
        %v597 = vpop.f32.mrb[0].mxu0
        %v598 = vadd.f32 %v430, %v597
        %v599 = vpop.f32.mrb[0].mxu0
        %600 = vmatprep.mubr.bf16.mxu0 0
        %601 = vmatmul.mubr.bf16.gmra.mrb[0].mxu0 %v482
        %v602 = vpop.f32.mrb[0].mxu0
        %v603 = vadd.f32 %v430, %v602
        %v604 = vpop.f32.mrb[0].mxu0
        %v605 = vpop.f32.mrb[0].mxu0
        %v606 = vadd.f32 %v430, %v605
        %v607 = vpop.f32.mrb[0].mxu0
        %608 = vmatprep.mubr.bf16.mxu0 0
        %609 = vmatmul.mubr.bf16.gmra.mrb[0].mxu0 %v483
        %v610 = vpop.f32.mrb[0].mxu0
        %v611 = vadd.f32 %v430, %v610
        %v612 = vpop.f32.mrb[0].mxu0
        %v613 = vpop.f32.mrb[0].mxu0
        %v614 = vadd.f32 %v430, %v613
        %v615 = vpop.f32.mrb[0].mxu0
        %616 = vmatprep.mubr.bf16.mxu0 0
        %617 = vmatmul.mubr.bf16.gmra.mrb[0].mxu0 %v484
        %v618 = vpop.f32.mrb[0].mxu0
        %v619 = vadd.f32 %v430, %v618
        %v620 = vpop.f32.mrb[0].mxu0
        %v621 = vpop.f32.mrb[0].mxu0
        %v622 = vadd.f32 %v430, %v621
        %v623 = vpop.f32.mrb[0].mxu0
        %624 = vmatprep.mubr.bf16.mxu0 0
        %625 = vmatmul.mubr.bf16.gmra.mrb[0].mxu0 %v485
        %v626 = vpop.f32.mrb[0].mxu0
        %v627 = vadd.f32 %v430, %v626
        %v628 = vpop.f32.mrb[0].mxu0
        %v629 = vpop.f32.mrb[0].mxu0
        %v630 = vadd.f32 %v430, %v629
        %v631 = vpop.f32.mrb[0].mxu0
        %632 = vmatprep.mubr.bf16.mxu0 0
        %633 = vmatmul.mubr.bf16.gmra.mrb[0].mxu0 %v486
        %v634 = vpop.f32.mrb[0].mxu0
        %v635 = vadd.f32 %v430, %v634
        %v636 = vpop.f32.mrb[0].mxu0
        %v637 = vpop.f32.mrb[0].mxu0
        %v638 = vadd.f32 %v430, %v637
        %v639 = vpop.f32.mrb[0].mxu0
        %640 = vmatprep.mubr.bf16.mxu0 0
        %641 = vmatmul.mubr.bf16.gmra.mrb[0].mxu0 %v487
        %v642 = vpop.f32.mrb[0].mxu0
        %v643 = vadd.f32 %v430, %v642
        %v644 = vpop.f32.mrb[0].mxu0
        %v645 = vpop.f32.mrb[0].mxu0
        %v646 = vadd.f32 %v430, %v645
        %v647 = vpop.f32.mrb[0].mxu0
        %648 = vmatprep.mubr.bf16.mxu0 0
        %649 = vmatmul.mubr.bf16.gmra.mrb[0].mxu0 %v488
        %v650 = vpop.f32.mrb[0].mxu0
        %v651 = vadd.f32 %v430, %v650
        %v652 = vpop.f32.mrb[0].mxu0
        %v653 = vpop.f32.mrb[0].mxu0
        %v654 = vadd.f32 %v430, %v653
        %v655 = vpop.f32.mrb[0].mxu0
        %656 = vmatprep.mubr.bf16.mxu0 0
        %657 = vmatmul.mubr.bf16.gmra.mrb[0].mxu0 %v489
        %v658 = vpop.f32.mrb[0].mxu0
        %v659 = vadd.f32 %v430, %v658
        %v660 = vpop.f32.mrb[0].mxu0
        %v661 = vpop.f32.mrb[0].mxu0
        %v662 = vadd.f32 %v430, %v661
        %v663 = vpop.f32.mrb[0].mxu0
        %664 = vmatprep.mubr.bf16.mxu0 0
        %665 = vmatmul.mubr.bf16.gmra.mrb[0].mxu0 %v490
        %v666 = vpop.f32.mrb[0].mxu0
        %v667 = vadd.f32 %v430, %v666
        %v668 = vpop.f32.mrb[0].mxu0
        %v669 = vpop.f32.mrb[0].mxu0
        %v670 = vadd.f32 %v430, %v669
        %v671 = vpop.f32.mrb[0].mxu0
        %672 = vmatprep.mubr.bf16.mxu0 0
        %673 = vmatmul.mubr.bf16.gmra.mrb[0].mxu0 %v491
        %v674 = vpop.f32.mrb[0].mxu0
        %v675 = vadd.f32 %v430, %v674
        %v676 = vpop.f32.mrb[0].mxu0
        %v677 = vpop.f32.mrb[0].mxu0
        %v678 = vadd.f32 %v430, %v677
        %v679 = vpop.f32.mrb[0].mxu0
        %680 = vdwg.mxu0
        %v681 = vmax.f32 %v587, 0.0
        %v682 = vmax.f32 %v590, 0.0
        %v683 = vmax.f32 %v595, 0.0
        %v684 = vmax.f32 %v598, 0.0
        %v685 = vmax.f32 %v603, 0.0
        %v686 = vmax.f32 %v606, 0.0
        %v687 = vmax.f32 %v611, 0.0
        %v688 = vmax.f32 %v614, 0.0
        %v689 = vmax.f32 %v619, 0.0
        %v690 = vmax.f32 %v622, 0.0
        %v691 = vmax.f32 %v627, 0.0
        %v692 = vmax.f32 %v630, 0.0
        %v693 = vmax.f32 %v635, 0.0
        %v694 = vmax.f32 %v638, 0.0
        %v695 = vmax.f32 %v643, 0.0
        %v696 = vmax.f32 %v646, 0.0
        %v697 = vmax.f32 %v651, 0.0
        %v698 = vmax.f32 %v654, 0.0
        %v699 = vmax.f32 %v659, 0.0
        %v700 = vmax.f32 %v662, 0.0
        %v701 = vmax.f32 %v667, 0.0
        %v702 = vmax.f32 %v670, 0.0
        %v703 = vmax.f32 %v675, 0.0
        %v704 = vmax.f32 %v678, 0.0
        %v729 = vcombine.high %v681, %v681
        %v731 = vunpack.c.l.s4 1983009808
        %v732 = vunpack.c.0.s8 %v731
        %v733 = vlaneseq
        %v734 = vshrl.u32 %v733, 7
        %v735 = vsub.s32 %v732, %v734
        %v736 = vrot.slane %v681, %v735
        %v738 = vunpack.c.l.s4 1983009808
        %v739 = vunpack.c.0.s8 %v738
        %v740 = vlaneseq
        %v741 = vshrl.u32 %v740, 7
        %v742 = vsub.s32 %v739, %v741
        %v743 = vrot.slane %v729, %v742
        %v744 = vcombine.high %v736, %v736
        %v745 = vcombine.high %v743, %v743
        %v746 = vcombine.high %v682, %v682
        %v748 = vunpack.c.l.s4 1983009808
        %v749 = vunpack.c.0.s8 %v748
        %v750 = vlaneseq
        %v751 = vshrl.u32 %v750, 7
        %v752 = vsub.s32 %v749, %v751
        %v753 = vrot.slane %v682, %v752
        %v755 = vunpack.c.l.s4 1983009808
        %v756 = vunpack.c.0.s8 %v755
        %v757 = vlaneseq
        %v758 = vshrl.u32 %v757, 7
        %v759 = vsub.s32 %v756, %v758
        %v760 = vrot.slane %v746, %v759
        %v761 = vcombine.high %v753, %v753
        %v762 = vcombine.high %v760, %v760
        %v763 = vcombine.high %v683, %v683
        %v765 = vunpack.c.l.s4 1983009808
        %v766 = vunpack.c.0.s8 %v765
        %v767 = vlaneseq
        %v768 = vshrl.u32 %v767, 7
        %v769 = vsub.s32 %v766, %v768
        %v770 = vrot.slane %v683, %v769
        %v772 = vunpack.c.l.s4 1983009808
        %v773 = vunpack.c.0.s8 %v772
        %v774 = vlaneseq
        %v775 = vshrl.u32 %v774, 7
        %v776 = vsub.s32 %v773, %v775
        %v777 = vrot.slane %v763, %v776
        %v778 = vcombine.high %v770, %v770
        %v779 = vcombine.high %v777, %v777
        %v780 = vcombine.high %v684, %v684
        %v782 = vunpack.c.l.s4 1983009808
        %v783 = vunpack.c.0.s8 %v782
        %v784 = vlaneseq
        %v785 = vshrl.u32 %v784, 7
        %v786 = vsub.s32 %v783, %v785
        %v787 = vrot.slane %v684, %v786
        %v789 = vunpack.c.l.s4 1983009808
        %v790 = vunpack.c.0.s8 %v789
        %v791 = vlaneseq
        %v792 = vshrl.u32 %v791, 7
        %v793 = vsub.s32 %v790, %v792
        %v794 = vrot.slane %v780, %v793
        %v795 = vcombine.high %v787, %v787
        %v796 = vcombine.high %v794, %v794
        %v797 = vcombine.high %v685, %v685
        %v799 = vunpack.c.l.s4 1983009808
        %v800 = vunpack.c.0.s8 %v799
        %v801 = vlaneseq
        %v802 = vshrl.u32 %v801, 7
        %v803 = vsub.s32 %v800, %v802
        %v804 = vrot.slane %v685, %v803
        %v806 = vunpack.c.l.s4 1983009808
        %v807 = vunpack.c.0.s8 %v806
        %v808 = vlaneseq
        %v809 = vshrl.u32 %v808, 7
        %v810 = vsub.s32 %v807, %v809
        %v811 = vrot.slane %v797, %v810
        %v812 = vcombine.high %v804, %v804
        %v813 = vcombine.high %v811, %v811
        %v814 = vcombine.high %v686, %v686
        %v816 = vunpack.c.l.s4 1983009808
        %v817 = vunpack.c.0.s8 %v816
        %v818 = vlaneseq
        %v819 = vshrl.u32 %v818, 7
        %v820 = vsub.s32 %v817, %v819
        %v821 = vrot.slane %v686, %v820
        %v823 = vunpack.c.l.s4 1983009808
        %v824 = vunpack.c.0.s8 %v823
        %v825 = vlaneseq
        %v826 = vshrl.u32 %v825, 7
        %v827 = vsub.s32 %v824, %v826
        %v828 = vrot.slane %v814, %v827
        %v829 = vcombine.high %v821, %v821
        %v830 = vcombine.high %v828, %v828
        %v831 = vcombine.high %v687, %v687
        %v833 = vunpack.c.l.s4 1983009808
        %v834 = vunpack.c.0.s8 %v833
        %v835 = vlaneseq
        %v836 = vshrl.u32 %v835, 7
        %v837 = vsub.s32 %v834, %v836
        %v838 = vrot.slane %v687, %v837
        %v840 = vunpack.c.l.s4 1983009808
        %v841 = vunpack.c.0.s8 %v840
        %v842 = vlaneseq
        %v843 = vshrl.u32 %v842, 7
        %v844 = vsub.s32 %v841, %v843
        %v845 = vrot.slane %v831, %v844
        %v846 = vcombine.high %v838, %v838
        %v847 = vcombine.high %v845, %v845
        %v848 = vcombine.high %v688, %v688
        %v850 = vunpack.c.l.s4 1983009808
        %v851 = vunpack.c.0.s8 %v850
        %v852 = vlaneseq
        %v853 = vshrl.u32 %v852, 7
        %v854 = vsub.s32 %v851, %v853
        %v855 = vrot.slane %v688, %v854
        %v857 = vunpack.c.l.s4 1983009808
        %v858 = vunpack.c.0.s8 %v857
        %v859 = vlaneseq
        %v860 = vshrl.u32 %v859, 7
        %v861 = vsub.s32 %v858, %v860
        %v862 = vrot.slane %v848, %v861
        %v863 = vcombine.high %v855, %v855
        %v864 = vcombine.high %v862, %v862
        %v865 = vcombine.high %v689, %v689
        %v867 = vunpack.c.l.s4 1983009808
        %v868 = vunpack.c.0.s8 %v867
        %v869 = vlaneseq
        %v870 = vshrl.u32 %v869, 7
        %v871 = vsub.s32 %v868, %v870
        %v872 = vrot.slane %v689, %v871
        %v874 = vunpack.c.l.s4 1983009808
        %v875 = vunpack.c.0.s8 %v874
        %v876 = vlaneseq
        %v877 = vshrl.u32 %v876, 7
        %v878 = vsub.s32 %v875, %v877
        %v879 = vrot.slane %v865, %v878
        %v880 = vcombine.high %v872, %v872
        %v881 = vcombine.high %v879, %v879
        %v882 = vcombine.high %v690, %v690
        %v884 = vunpack.c.l.s4 1983009808
        %v885 = vunpack.c.0.s8 %v884
        %v886 = vlaneseq
        %v887 = vshrl.u32 %v886, 7
        %v888 = vsub.s32 %v885, %v887
        %v889 = vrot.slane %v690, %v888
        %v891 = vunpack.c.l.s4 1983009808
        %v892 = vunpack.c.0.s8 %v891
        %v893 = vlaneseq
        %v894 = vshrl.u32 %v893, 7
        %v895 = vsub.s32 %v892, %v894
        %v896 = vrot.slane %v882, %v895
        %v897 = vcombine.high %v889, %v889
        %v898 = vcombine.high %v896, %v896
        %v899 = vcombine.high %v691, %v691
        %v901 = vunpack.c.l.s4 1983009808
        %v902 = vunpack.c.0.s8 %v901
        %v903 = vlaneseq
        %v904 = vshrl.u32 %v903, 7
        %v905 = vsub.s32 %v902, %v904
        %v906 = vrot.slane %v691, %v905
        %v908 = vunpack.c.l.s4 1983009808
        %v909 = vunpack.c.0.s8 %v908
        %v910 = vlaneseq
        %v911 = vshrl.u32 %v910, 7
        %v912 = vsub.s32 %v909, %v911
        %v913 = vrot.slane %v899, %v912
        %v914 = vcombine.high %v906, %v906
        %v915 = vcombine.high %v913, %v913
        %v916 = vcombine.high %v692, %v692
        %v918 = vunpack.c.l.s4 1983009808
        %v919 = vunpack.c.0.s8 %v918
        %v920 = vlaneseq
        %v921 = vshrl.u32 %v920, 7
        %v922 = vsub.s32 %v919, %v921
        %v923 = vrot.slane %v692, %v922
        %v925 = vunpack.c.l.s4 1983009808
        %v926 = vunpack.c.0.s8 %v925
        %v927 = vlaneseq
        %v928 = vshrl.u32 %v927, 7
        %v929 = vsub.s32 %v926, %v928
        %v930 = vrot.slane %v916, %v929
        %v931 = vcombine.high %v923, %v923
        %v932 = vcombine.high %v930, %v930
        %v933 = vcombine.high %v693, %v693
        %v935 = vunpack.c.l.s4 1983009808
        %v936 = vunpack.c.0.s8 %v935
        %v937 = vlaneseq
        %v938 = vshrl.u32 %v937, 7
        %v939 = vsub.s32 %v936, %v938
        %v940 = vrot.slane %v693, %v939
        %v942 = vunpack.c.l.s4 1983009808
        %v943 = vunpack.c.0.s8 %v942
        %v944 = vlaneseq
        %v945 = vshrl.u32 %v944, 7
        %v946 = vsub.s32 %v943, %v945
        %v947 = vrot.slane %v933, %v946
        %v948 = vcombine.high %v940, %v940
        %v949 = vcombine.high %v947, %v947
        %v950 = vcombine.high %v694, %v694
        %v952 = vunpack.c.l.s4 1983009808
        %v953 = vunpack.c.0.s8 %v952
        %v954 = vlaneseq
        %v955 = vshrl.u32 %v954, 7
        %v956 = vsub.s32 %v953, %v955
        %v957 = vrot.slane %v694, %v956
        %v959 = vunpack.c.l.s4 1983009808
        %v960 = vunpack.c.0.s8 %v959
        %v961 = vlaneseq
        %v962 = vshrl.u32 %v961, 7
        %v963 = vsub.s32 %v960, %v962
        %v964 = vrot.slane %v950, %v963
        %v965 = vcombine.high %v957, %v957
        %v966 = vcombine.high %v964, %v964
        %v967 = vcombine.high %v695, %v695
        %v969 = vunpack.c.l.s4 1983009808
        %v970 = vunpack.c.0.s8 %v969
        %v971 = vlaneseq
        %v972 = vshrl.u32 %v971, 7
        %v973 = vsub.s32 %v970, %v972
        %v974 = vrot.slane %v695, %v973
        %v976 = vunpack.c.l.s4 1983009808
        %v977 = vunpack.c.0.s8 %v976
        %v978 = vlaneseq
        %v979 = vshrl.u32 %v978, 7
        %v980 = vsub.s32 %v977, %v979
        %v981 = vrot.slane %v967, %v980
        %v982 = vcombine.high %v974, %v974
        %v983 = vcombine.high %v981, %v981
        %v984 = vcombine.high %v696, %v696
        %v986 = vunpack.c.l.s4 1983009808
        %v987 = vunpack.c.0.s8 %v986
        %v988 = vlaneseq
        %v989 = vshrl.u32 %v988, 7
        %v990 = vsub.s32 %v987, %v989
        %v991 = vrot.slane %v696, %v990
        %v993 = vunpack.c.l.s4 1983009808
        %v994 = vunpack.c.0.s8 %v993
        %v995 = vlaneseq
        %v996 = vshrl.u32 %v995, 7
        %v997 = vsub.s32 %v994, %v996
        %v998 = vrot.slane %v984, %v997
        %v999 = vcombine.high %v991, %v991
        %v1000 = vcombine.high %v998, %v998
        %v1001 = vcombine.high %v697, %v697
        %v1003 = vunpack.c.l.s4 1983009808
        %v1004 = vunpack.c.0.s8 %v1003
        %v1005 = vlaneseq
        %v1006 = vshrl.u32 %v1005, 7
        %v1007 = vsub.s32 %v1004, %v1006
        %v1008 = vrot.slane %v697, %v1007
        %v1010 = vunpack.c.l.s4 1983009808
        %v1011 = vunpack.c.0.s8 %v1010
        %v1012 = vlaneseq
        %v1013 = vshrl.u32 %v1012, 7
        %v1014 = vsub.s32 %v1011, %v1013
        %v1015 = vrot.slane %v1001, %v1014
        %v1016 = vcombine.high %v1008, %v1008
        %v1017 = vcombine.high %v1015, %v1015
        %v1018 = vcombine.high %v698, %v698
        %v1020 = vunpack.c.l.s4 1983009808
        %v1021 = vunpack.c.0.s8 %v1020
        %v1022 = vlaneseq
        %v1023 = vshrl.u32 %v1022, 7
        %v1024 = vsub.s32 %v1021, %v1023
        %v1025 = vrot.slane %v698, %v1024
        %v1027 = vunpack.c.l.s4 1983009808
        %v1028 = vunpack.c.0.s8 %v1027
        %v1029 = vlaneseq
        %v1030 = vshrl.u32 %v1029, 7
        %v1031 = vsub.s32 %v1028, %v1030
        %v1032 = vrot.slane %v1018, %v1031
        %v1033 = vcombine.high %v1025, %v1025
        %v1034 = vcombine.high %v1032, %v1032
        %v1035 = vcombine.high %v699, %v699
        %v1037 = vunpack.c.l.s4 1983009808
        %v1038 = vunpack.c.0.s8 %v1037
        %v1039 = vlaneseq
        %v1040 = vshrl.u32 %v1039, 7
        %v1041 = vsub.s32 %v1038, %v1040
        %v1042 = vrot.slane %v699, %v1041
        %v1044 = vunpack.c.l.s4 1983009808
        %v1045 = vunpack.c.0.s8 %v1044
        %v1046 = vlaneseq
        %v1047 = vshrl.u32 %v1046, 7
        %v1048 = vsub.s32 %v1045, %v1047
        %v1049 = vrot.slane %v1035, %v1048
        %v1050 = vcombine.high %v1042, %v1042
        %v1051 = vcombine.high %v1049, %v1049
        %v1052 = vcombine.high %v700, %v700
        %v1054 = vunpack.c.l.s4 1983009808
        %v1055 = vunpack.c.0.s8 %v1054
        %v1056 = vlaneseq
        %v1057 = vshrl.u32 %v1056, 7
        %v1058 = vsub.s32 %v1055, %v1057
        %v1059 = vrot.slane %v700, %v1058
        %v1061 = vunpack.c.l.s4 1983009808
        %v1062 = vunpack.c.0.s8 %v1061
        %v1063 = vlaneseq
        %v1064 = vshrl.u32 %v1063, 7
        %v1065 = vsub.s32 %v1062, %v1064
        %v1066 = vrot.slane %v1052, %v1065
        %v1067 = vcombine.high %v1059, %v1059
        %v1068 = vcombine.high %v1066, %v1066
        %v1069 = vcombine.high %v701, %v701
        %v1071 = vunpack.c.l.s4 1983009808
        %v1072 = vunpack.c.0.s8 %v1071
        %v1073 = vlaneseq
        %v1074 = vshrl.u32 %v1073, 7
        %v1075 = vsub.s32 %v1072, %v1074
        %v1076 = vrot.slane %v701, %v1075
        %v1078 = vunpack.c.l.s4 1983009808
        %v1079 = vunpack.c.0.s8 %v1078
        %v1080 = vlaneseq
        %v1081 = vshrl.u32 %v1080, 7
        %v1082 = vsub.s32 %v1079, %v1081
        %v1083 = vrot.slane %v1069, %v1082
        %v1084 = vcombine.high %v1076, %v1076
        %v1085 = vcombine.high %v1083, %v1083
        %v1086 = vcombine.high %v702, %v702
        %v1088 = vunpack.c.l.s4 1983009808
        %v1089 = vunpack.c.0.s8 %v1088
        %v1090 = vlaneseq
        %v1091 = vshrl.u32 %v1090, 7
        %v1092 = vsub.s32 %v1089, %v1091
        %v1093 = vrot.slane %v702, %v1092
        %v1095 = vunpack.c.l.s4 1983009808
        %v1096 = vunpack.c.0.s8 %v1095
        %v1097 = vlaneseq
        %v1098 = vshrl.u32 %v1097, 7
        %v1099 = vsub.s32 %v1096, %v1098
        %v1100 = vrot.slane %v1086, %v1099
        %v1101 = vcombine.high %v1093, %v1093
        %v1102 = vcombine.high %v1100, %v1100
        %v1103 = vcombine.high %v703, %v703
        %v1105 = vunpack.c.l.s4 1983009808
        %v1106 = vunpack.c.0.s8 %v1105
        %v1107 = vlaneseq
        %v1108 = vshrl.u32 %v1107, 7
        %v1109 = vsub.s32 %v1106, %v1108
        %v1110 = vrot.slane %v703, %v1109
        %v1112 = vunpack.c.l.s4 1983009808
        %v1113 = vunpack.c.0.s8 %v1112
        %v1114 = vlaneseq
        %v1115 = vshrl.u32 %v1114, 7
        %v1116 = vsub.s32 %v1113, %v1115
        %v1117 = vrot.slane %v1103, %v1116
        %v1118 = vcombine.high %v1110, %v1110
        %v1119 = vcombine.high %v1117, %v1117
        %v1120 = vcombine.high %v704, %v704
        %v1122 = vunpack.c.l.s4 1983009808
        %v1123 = vunpack.c.0.s8 %v1122
        %v1124 = vlaneseq
        %v1125 = vshrl.u32 %v1124, 7
        %v1126 = vsub.s32 %v1123, %v1125
        %v1127 = vrot.slane %v704, %v1126
        %v1129 = vunpack.c.l.s4 1983009808
        %v1130 = vunpack.c.0.s8 %v1129
        %v1131 = vlaneseq
        %v1132 = vshrl.u32 %v1131, 7
        %v1133 = vsub.s32 %v1130, %v1132
        %v1134 = vrot.slane %v1120, %v1133
        %v1135 = vcombine.high %v1127, %v1127
        %v1136 = vcombine.high %v1134, %v1134
        %v1233 = vmax.f32 %v736, %v787
        %v1234 = vmax.f32 %v744, %v795
        %v1235 = vmax.f32 %v743, %v794
        %v1236 = vmax.f32 %v745, %v796
        %v1237 = vmax.f32 %v753, %v804
        %v1238 = vmax.f32 %v761, %v812
        %v1239 = vmax.f32 %v760, %v811
        %v1240 = vmax.f32 %v762, %v813
        %v1241 = vmax.f32 %v770, %v821
        %v1242 = vmax.f32 %v778, %v829
        %v1243 = vmax.f32 %v777, %v828
        %v1244 = vmax.f32 %v779, %v830
        %v1245 = vmax.f32 %v838, %v889
        %v1246 = vmax.f32 %v846, %v897
        %v1247 = vmax.f32 %v845, %v896
        %v1248 = vmax.f32 %v847, %v898
        %v1249 = vmax.f32 %v855, %v906
        %v1250 = vmax.f32 %v863, %v914
        %v1251 = vmax.f32 %v862, %v913
        %v1252 = vmax.f32 %v864, %v915
        %v1253 = vmax.f32 %v872, %v923
        %v1254 = vmax.f32 %v880, %v931
        %v1255 = vmax.f32 %v879, %v930
        %v1256 = vmax.f32 %v881, %v932
        %v1257 = vmax.f32 %v940, %v991
        %v1258 = vmax.f32 %v948, %v999
        %v1259 = vmax.f32 %v947, %v998
        %v1260 = vmax.f32 %v949, %v1000
        %v1261 = vmax.f32 %v957, %v1008
        %v1262 = vmax.f32 %v965, %v1016
        %v1263 = vmax.f32 %v964, %v1015
        %v1264 = vmax.f32 %v966, %v1017
        %v1265 = vmax.f32 %v974, %v1025
        %v1266 = vmax.f32 %v982, %v1033
        %v1267 = vmax.f32 %v981, %v1032
        %v1268 = vmax.f32 %v983, %v1034
        %v1269 = vmax.f32 %v1042, %v1093
        %v1270 = vmax.f32 %v1050, %v1101
        %v1271 = vmax.f32 %v1049, %v1100
        %v1272 = vmax.f32 %v1051, %v1102
        %v1273 = vmax.f32 %v1059, %v1110
        %v1274 = vmax.f32 %v1067, %v1118
        %v1275 = vmax.f32 %v1066, %v1117
        %v1276 = vmax.f32 %v1068, %v1119
        %v1277 = vmax.f32 %v1076, %v1127
        %v1278 = vmax.f32 %v1084, %v1135
        %v1279 = vmax.f32 %v1083, %v1134
        %v1280 = vmax.f32 %v1085, %v1136
        %v1329 = vrot.slane %v1233, 7
        %v1330 = vrot.slane %v1329, 2
        %v1331 = vrot.slane %v1234, 7
        %v1332 = vrot.slane %v1331, 2
        %v1333 = vrot.slane %v1235, 7
        %v1334 = vrot.slane %v1333, 2
        %v1335 = vrot.slane %v1236, 7
        %v1336 = vrot.slane %v1335, 2
        %v1337 = vrot.slane %v1237, 7
        %v1338 = vrot.slane %v1337, 2
        %v1339 = vrot.slane %v1238, 7
        %v1340 = vrot.slane %v1339, 2
        %v1341 = vrot.slane %v1239, 7
        %v1342 = vrot.slane %v1341, 2
        %v1343 = vrot.slane %v1240, 7
        %v1344 = vrot.slane %v1343, 2
        %v1345 = vrot.slane %v1241, 7
        %v1346 = vrot.slane %v1345, 2
        %v1347 = vrot.slane %v1242, 7
        %v1348 = vrot.slane %v1347, 2
        %v1349 = vrot.slane %v1243, 7
        %v1350 = vrot.slane %v1349, 2
        %v1351 = vrot.slane %v1244, 7
        %v1352 = vrot.slane %v1351, 2
        %v1353 = vrot.slane %v1245, 7
        %v1354 = vrot.slane %v1353, 2
        %v1355 = vrot.slane %v1246, 7
        %v1356 = vrot.slane %v1355, 2
        %v1357 = vrot.slane %v1247, 7
        %v1358 = vrot.slane %v1357, 2
        %v1359 = vrot.slane %v1248, 7
        %v1360 = vrot.slane %v1359, 2
        %v1361 = vrot.slane %v1249, 7
        %v1362 = vrot.slane %v1361, 2
        %v1363 = vrot.slane %v1250, 7
        %v1364 = vrot.slane %v1363, 2
        %v1365 = vrot.slane %v1251, 7
        %v1366 = vrot.slane %v1365, 2
        %v1367 = vrot.slane %v1252, 7
        %v1368 = vrot.slane %v1367, 2
        %v1369 = vrot.slane %v1253, 7
        %v1370 = vrot.slane %v1369, 2
        %v1371 = vrot.slane %v1254, 7
        %v1372 = vrot.slane %v1371, 2
        %v1373 = vrot.slane %v1255, 7
        %v1374 = vrot.slane %v1373, 2
        %v1375 = vrot.slane %v1256, 7
        %v1376 = vrot.slane %v1375, 2
        %v1377 = vrot.slane %v1257, 7
        %v1378 = vrot.slane %v1377, 2
        %v1379 = vrot.slane %v1258, 7
        %v1380 = vrot.slane %v1379, 2
        %v1381 = vrot.slane %v1259, 7
        %v1382 = vrot.slane %v1381, 2
        %v1383 = vrot.slane %v1260, 7
        %v1384 = vrot.slane %v1383, 2
        %v1385 = vrot.slane %v1261, 7
        %v1386 = vrot.slane %v1385, 2
        %v1387 = vrot.slane %v1262, 7
        %v1388 = vrot.slane %v1387, 2
        %v1389 = vrot.slane %v1263, 7
        %v1390 = vrot.slane %v1389, 2
        %v1391 = vrot.slane %v1264, 7
        %v1392 = vrot.slane %v1391, 2
        %v1393 = vrot.slane %v1265, 7
        %v1394 = vrot.slane %v1393, 2
        %v1395 = vrot.slane %v1266, 7
        %v1396 = vrot.slane %v1395, 2
        %v1397 = vrot.slane %v1267, 7
        %v1398 = vrot.slane %v1397, 2
        %v1399 = vrot.slane %v1268, 7
        %v1400 = vrot.slane %v1399, 2
        %v1401 = vrot.slane %v1269, 7
        %v1402 = vrot.slane %v1401, 2
        %v1403 = vrot.slane %v1270, 7
        %v1404 = vrot.slane %v1403, 2
        %v1405 = vrot.slane %v1271, 7
        %v1406 = vrot.slane %v1405, 2
        %v1407 = vrot.slane %v1272, 7
        %v1408 = vrot.slane %v1407, 2
        %v1409 = vrot.slane %v1273, 7
        %v1410 = vrot.slane %v1409, 2
        %v1411 = vrot.slane %v1274, 7
        %v1412 = vrot.slane %v1411, 2
        %v1413 = vrot.slane %v1275, 7
        %v1414 = vrot.slane %v1413, 2
        %v1415 = vrot.slane %v1276, 7
        %v1416 = vrot.slane %v1415, 2
        %v1417 = vrot.slane %v1277, 7
        %v1418 = vrot.slane %v1417, 2
        %v1419 = vrot.slane %v1278, 7
        %v1420 = vrot.slane %v1419, 2
        %v1421 = vrot.slane %v1279, 7
        %v1422 = vrot.slane %v1421, 2
        %v1423 = vrot.slane %v1280, 7
        %v1424 = vrot.slane %v1423, 2
        %v1473 = vmax.f32 %v1233, %v1330
        %v1474 = vmax.f32 %v1234, %v1332
        %v1475 = vmax.f32 %v1235, %v1334
        %v1476 = vmax.f32 %v1236, %v1336
        %v1477 = vmax.f32 %v1237, %v1338
        %v1478 = vmax.f32 %v1238, %v1340
        %v1479 = vmax.f32 %v1239, %v1342
        %v1480 = vmax.f32 %v1240, %v1344
        %v1481 = vmax.f32 %v1241, %v1346
        %v1482 = vmax.f32 %v1242, %v1348
        %v1483 = vmax.f32 %v1243, %v1350
        %v1484 = vmax.f32 %v1244, %v1352
        %v1485 = vmax.f32 %v1245, %v1354
        %v1486 = vmax.f32 %v1246, %v1356
        %v1487 = vmax.f32 %v1247, %v1358
        %v1488 = vmax.f32 %v1248, %v1360
        %v1489 = vmax.f32 %v1249, %v1362
        %v1490 = vmax.f32 %v1250, %v1364
        %v1491 = vmax.f32 %v1251, %v1366
        %v1492 = vmax.f32 %v1252, %v1368
        %v1493 = vmax.f32 %v1253, %v1370
        %v1494 = vmax.f32 %v1254, %v1372
        %v1495 = vmax.f32 %v1255, %v1374
        %v1496 = vmax.f32 %v1256, %v1376
        %v1497 = vmax.f32 %v1257, %v1378
        %v1498 = vmax.f32 %v1258, %v1380
        %v1499 = vmax.f32 %v1259, %v1382
        %v1500 = vmax.f32 %v1260, %v1384
        %v1501 = vmax.f32 %v1261, %v1386
        %v1502 = vmax.f32 %v1262, %v1388
        %v1503 = vmax.f32 %v1263, %v1390
        %v1504 = vmax.f32 %v1264, %v1392
        %v1505 = vmax.f32 %v1265, %v1394
        %v1506 = vmax.f32 %v1266, %v1396
        %v1507 = vmax.f32 %v1267, %v1398
        %v1508 = vmax.f32 %v1268, %v1400
        %v1509 = vmax.f32 %v1269, %v1402
        %v1510 = vmax.f32 %v1270, %v1404
        %v1511 = vmax.f32 %v1271, %v1406
        %v1512 = vmax.f32 %v1272, %v1408
        %v1513 = vmax.f32 %v1273, %v1410
        %v1514 = vmax.f32 %v1274, %v1412
        %v1515 = vmax.f32 %v1275, %v1414
        %v1516 = vmax.f32 %v1276, %v1416
        %v1517 = vmax.f32 %v1277, %v1418
        %v1518 = vmax.f32 %v1278, %v1420
        %v1519 = vmax.f32 %v1279, %v1422
        %v1520 = vmax.f32 %v1280, %v1424
        %v1521 = vpack.c.bf16 %v1473, %v1473
        %v1522 = vpack.c.bf16 %v1474, %v1474
        %v1523 = vpack.c.bf16 %v1475, %v1475
        %v1524 = vpack.c.bf16 %v1476, %v1476
        %v1525 = vpack.c.bf16 %v1477, %v1477
        %v1526 = vpack.c.bf16 %v1478, %v1478
        %v1527 = vpack.c.bf16 %v1479, %v1479
        %v1528 = vpack.c.bf16 %v1480, %v1480
        %v1529 = vpack.c.bf16 %v1481, %v1481
        %v1530 = vpack.c.bf16 %v1482, %v1482
        %v1531 = vpack.c.bf16 %v1483, %v1483
        %v1532 = vpack.c.bf16 %v1484, %v1484
        %v1533 = vpack.c.bf16 %v1485, %v1485
        %v1534 = vpack.c.bf16 %v1486, %v1486
        %v1535 = vpack.c.bf16 %v1487, %v1487
        %v1536 = vpack.c.bf16 %v1488, %v1488
        %v1537 = vpack.c.bf16 %v1489, %v1489
        %v1538 = vpack.c.bf16 %v1490, %v1490
        %v1539 = vpack.c.bf16 %v1491, %v1491
        %v1540 = vpack.c.bf16 %v1492, %v1492
        %v1541 = vpack.c.bf16 %v1493, %v1493
        %v1542 = vpack.c.bf16 %v1494, %v1494
        %v1543 = vpack.c.bf16 %v1495, %v1495
        %v1544 = vpack.c.bf16 %v1496, %v1496
        %v1545 = vpack.c.bf16 %v1497, %v1497
        %v1546 = vpack.c.bf16 %v1498, %v1498
        %v1547 = vpack.c.bf16 %v1499, %v1499
        %v1548 = vpack.c.bf16 %v1500, %v1500
        %v1549 = vpack.c.bf16 %v1501, %v1501
        %v1550 = vpack.c.bf16 %v1502, %v1502
        %v1551 = vpack.c.bf16 %v1503, %v1503
        %v1552 = vpack.c.bf16 %v1504, %v1504
        %v1553 = vpack.c.bf16 %v1505, %v1505
        %v1554 = vpack.c.bf16 %v1506, %v1506
        %v1555 = vpack.c.bf16 %v1507, %v1507
        %v1556 = vpack.c.bf16 %v1508, %v1508
        %v1557 = vpack.c.bf16 %v1509, %v1509
        %v1558 = vpack.c.bf16 %v1510, %v1510
        %v1559 = vpack.c.bf16 %v1511, %v1511
        %v1560 = vpack.c.bf16 %v1512, %v1512
        %v1561 = vpack.c.bf16 %v1513, %v1513
        %v1562 = vpack.c.bf16 %v1514, %v1514
        %v1563 = vpack.c.bf16 %v1515, %v1515
        %v1564 = vpack.c.bf16 %v1516, %v1516
        %v1565 = vpack.c.bf16 %v1517, %v1517
        %v1566 = vpack.c.bf16 %v1518, %v1518
        %v1567 = vpack.c.bf16 %v1519, %v1519
        %v1568 = vpack.c.bf16 %v1520, %v1520
        %v1617 = vunpack.c.l.b16 %v1521
        %v1618 = vunpack.c.l.b16 %v1522
        %v1619 = vunpack.c.l.b16 %v1523
        %v1620 = vunpack.c.l.b16 %v1524
        %v1621 = vunpack.c.l.b16 %v1525
        %v1622 = vunpack.c.l.b16 %v1526
        %v1623 = vunpack.c.l.b16 %v1527
        %v1624 = vunpack.c.l.b16 %v1528
        %v1625 = vunpack.c.l.b16 %v1529
        %v1626 = vunpack.c.l.b16 %v1530
        %v1627 = vunpack.c.l.b16 %v1531
        %v1628 = vunpack.c.l.b16 %v1532
        %v1629 = vunpack.c.l.b16 %v1533
        %v1630 = vunpack.c.l.b16 %v1534
        %v1631 = vunpack.c.l.b16 %v1535
        %v1632 = vunpack.c.l.b16 %v1536
        %v1633 = vunpack.c.l.b16 %v1537
        %v1634 = vunpack.c.l.b16 %v1538
        %v1635 = vunpack.c.l.b16 %v1539
        %v1636 = vunpack.c.l.b16 %v1540
        %v1637 = vunpack.c.l.b16 %v1541
        %v1638 = vunpack.c.l.b16 %v1542
        %v1639 = vunpack.c.l.b16 %v1543
        %v1640 = vunpack.c.l.b16 %v1544
        %v1641 = vunpack.c.l.b16 %v1545
        %v1642 = vunpack.c.l.b16 %v1546
        %v1643 = vunpack.c.l.b16 %v1547
        %v1644 = vunpack.c.l.b16 %v1548
        %v1645 = vunpack.c.l.b16 %v1549
        %v1646 = vunpack.c.l.b16 %v1550
        %v1647 = vunpack.c.l.b16 %v1551
        %v1648 = vunpack.c.l.b16 %v1552
        %v1649 = vunpack.c.l.b16 %v1553
        %v1650 = vunpack.c.l.b16 %v1554
        %v1651 = vunpack.c.l.b16 %v1555
        %v1652 = vunpack.c.l.b16 %v1556
        %v1653 = vunpack.c.l.b16 %v1557
        %v1654 = vunpack.c.l.b16 %v1558
        %v1655 = vunpack.c.l.b16 %v1559
        %v1656 = vunpack.c.l.b16 %v1560
        %v1657 = vunpack.c.l.b16 %v1561
        %v1658 = vunpack.c.l.b16 %v1562
        %v1659 = vunpack.c.l.b16 %v1563
        %v1660 = vunpack.c.l.b16 %v1564
        %v1661 = vunpack.c.l.b16 %v1565
        %v1662 = vunpack.c.l.b16 %v1566
        %v1663 = vunpack.c.l.b16 %v1567
        %v1664 = vunpack.c.l.b16 %v1568
        %v1665 = vpack.c.b16 %v1617, %v1617
        %v1666 = vpack.c.b16 %v1618, %v1618
        %v1667 = vpack.c.b16 %v1619, %v1619
        %v1668 = vpack.c.b16 %v1620, %v1620
        %v1669 = vpack.c.b16 %v1621, %v1621
        %v1670 = vpack.c.b16 %v1622, %v1622
        %v1671 = vpack.c.b16 %v1623, %v1623
        %v1672 = vpack.c.b16 %v1624, %v1624
        %v1673 = vpack.c.b16 %v1625, %v1625
        %v1674 = vpack.c.b16 %v1626, %v1626
        %v1675 = vpack.c.b16 %v1627, %v1627
        %v1676 = vpack.c.b16 %v1628, %v1628
        %v1677 = vpack.c.b16 %v1629, %v1629
        %v1678 = vpack.c.b16 %v1630, %v1630
        %v1679 = vpack.c.b16 %v1631, %v1631
        %v1680 = vpack.c.b16 %v1632, %v1632
        %v1681 = vpack.c.b16 %v1633, %v1633
        %v1682 = vpack.c.b16 %v1634, %v1634
        %v1683 = vpack.c.b16 %v1635, %v1635
        %v1684 = vpack.c.b16 %v1636, %v1636
        %v1685 = vpack.c.b16 %v1637, %v1637
        %v1686 = vpack.c.b16 %v1638, %v1638
        %v1687 = vpack.c.b16 %v1639, %v1639
        %v1688 = vpack.c.b16 %v1640, %v1640
        %v1689 = vpack.c.b16 %v1641, %v1641
        %v1690 = vpack.c.b16 %v1642, %v1642
        %v1691 = vpack.c.b16 %v1643, %v1643
        %v1692 = vpack.c.b16 %v1644, %v1644
        %v1693 = vpack.c.b16 %v1645, %v1645
        %v1694 = vpack.c.b16 %v1646, %v1646
        %v1695 = vpack.c.b16 %v1647, %v1647
        %v1696 = vpack.c.b16 %v1648, %v1648
        %v1697 = vpack.c.b16 %v1649, %v1649
        %v1698 = vpack.c.b16 %v1650, %v1650
        %v1699 = vpack.c.b16 %v1651, %v1651
        %v1700 = vpack.c.b16 %v1652, %v1652
        %v1701 = vpack.c.b16 %v1653, %v1653
        %v1702 = vpack.c.b16 %v1654, %v1654
        %v1703 = vpack.c.b16 %v1655, %v1655
        %v1704 = vpack.c.b16 %v1656, %v1656
        %v1705 = vpack.c.b16 %v1657, %v1657
        %v1706 = vpack.c.b16 %v1658, %v1658
        %v1707 = vpack.c.b16 %v1659, %v1659
        %v1708 = vpack.c.b16 %v1660, %v1660
        %v1709 = vpack.c.b16 %v1661, %v1661
        %v1710 = vpack.c.b16 %v1662, %v1662
        %v1711 = vpack.c.b16 %v1663, %v1663
        %v1712 = vpack.c.b16 %v1664, %v1664
        %v1713 = vunpack.c.l.b16 %v1665
        %v1714 = vunpack.c.l.b16 %v1666
        %v1715 = vunpack.c.l.b16 %v1667
        %v1716 = vunpack.c.l.b16 %v1668
        %v1717 = vunpack.c.l.b16 %v1669
        %v1718 = vunpack.c.l.b16 %v1670
        %v1719 = vunpack.c.l.b16 %v1671
        %v1720 = vunpack.c.l.b16 %v1672
        %v1721 = vunpack.c.l.b16 %v1673
        %v1722 = vunpack.c.l.b16 %v1674
        %v1723 = vunpack.c.l.b16 %v1675
        %v1724 = vunpack.c.l.b16 %v1676
        %v1725 = vunpack.c.l.b16 %v1677
        %v1726 = vunpack.c.l.b16 %v1678
        %v1727 = vunpack.c.l.b16 %v1679
        %v1728 = vunpack.c.l.b16 %v1680
        %v1729 = vunpack.c.l.b16 %v1681
        %v1730 = vunpack.c.l.b16 %v1682
        %v1731 = vunpack.c.l.b16 %v1683
        %v1732 = vunpack.c.l.b16 %v1684
        %v1733 = vunpack.c.l.b16 %v1685
        %v1734 = vunpack.c.l.b16 %v1686
        %v1735 = vunpack.c.l.b16 %v1687
        %v1736 = vunpack.c.l.b16 %v1688
        %v1737 = vunpack.c.l.b16 %v1689
        %v1738 = vunpack.c.l.b16 %v1690
        %v1739 = vunpack.c.l.b16 %v1691
        %v1740 = vunpack.c.l.b16 %v1692
        %v1741 = vunpack.c.l.b16 %v1693
        %v1742 = vunpack.c.l.b16 %v1694
        %v1743 = vunpack.c.l.b16 %v1695
        %v1744 = vunpack.c.l.b16 %v1696
        %v1745 = vunpack.c.l.b16 %v1697
        %v1746 = vunpack.c.l.b16 %v1698
        %v1747 = vunpack.c.l.b16 %v1699
        %v1748 = vunpack.c.l.b16 %v1700
        %v1749 = vunpack.c.l.b16 %v1701
        %v1750 = vunpack.c.l.b16 %v1702
        %v1751 = vunpack.c.l.b16 %v1703
        %v1752 = vunpack.c.l.b16 %v1704
        %v1753 = vunpack.c.l.b16 %v1705
        %v1754 = vunpack.c.l.b16 %v1706
        %v1755 = vunpack.c.l.b16 %v1707
        %v1756 = vunpack.c.l.b16 %v1708
        %v1757 = vunpack.c.l.b16 %v1709
        %v1758 = vunpack.c.l.b16 %v1710
        %v1759 = vunpack.c.l.b16 %v1711
        %v1760 = vunpack.c.l.b16 %v1712
        %v1761 = vrot.slane %v1714, 7
        %vm1762 = vcmask 1041409
        %v1763 = vsel %vm1762, %v1761, %v1713
        %v1764 = vrot.slane %v1715, 6
        %vm1765 = vcmask 1042434
        %v1766 = vsel %vm1765, %v1764, %v1763
        %v1767 = vrot.slane %v1716, 5
        %vm1768 = vcmask 1043459
        %v1769 = vsel %vm1768, %v1767, %v1766
        %v1770 = vrot.slane %v1717, 4
        %vm1771 = vcmask 1044484
        %v1772 = vsel %vm1771, %v1770, %v1769
        %v1773 = vrot.slane %v1718, 3
        %vm1774 = vcmask 1045509
        %v1775 = vsel %vm1774, %v1773, %v1772
        %v1776 = vrot.slane %v1719, 2
        %vm1777 = vcmask 1046534
        %v1778 = vsel %vm1777, %v1776, %v1775
        %v1779 = vrot.slane %v1720, 1
        %vm1780 = vcmask 1047559
        %v1781 = vsel %vm1780, %v1779, %v1778
        %v1782 = vrot.slane %v1722, 7
        %v1783 = vsel %vm1762, %v1782, %v1721
        %v1784 = vrot.slane %v1723, 6
        %v1785 = vsel %vm1765, %v1784, %v1783
        %v1786 = vrot.slane %v1724, 5
        %v1787 = vsel %vm1768, %v1786, %v1785
        %v1788 = vrot.slane %v1726, 7
        %v1789 = vsel %vm1762, %v1788, %v1725
        %v1790 = vrot.slane %v1727, 6
        %v1791 = vsel %vm1765, %v1790, %v1789
        %v1792 = vrot.slane %v1728, 5
        %v1793 = vsel %vm1768, %v1792, %v1791
        %v1794 = vrot.slane %v1729, 4
        %v1795 = vsel %vm1771, %v1794, %v1793
        %v1796 = vrot.slane %v1730, 3
        %v1797 = vsel %vm1774, %v1796, %v1795
        %v1798 = vrot.slane %v1731, 2
        %v1799 = vsel %vm1777, %v1798, %v1797
        %v1800 = vrot.slane %v1732, 1
        %v1801 = vsel %vm1780, %v1800, %v1799
        %v1802 = vrot.slane %v1734, 7
        %v1803 = vsel %vm1762, %v1802, %v1733
        %v1804 = vrot.slane %v1735, 6
        %v1805 = vsel %vm1765, %v1804, %v1803
        %v1806 = vrot.slane %v1736, 5
        %v1807 = vsel %vm1768, %v1806, %v1805
        %v1808 = vrot.slane %v1738, 7
        %v1809 = vsel %vm1762, %v1808, %v1737
        %v1810 = vrot.slane %v1739, 6
        %v1811 = vsel %vm1765, %v1810, %v1809
        %v1812 = vrot.slane %v1740, 5
        %v1813 = vsel %vm1768, %v1812, %v1811
        %v1814 = vrot.slane %v1741, 4
        %v1815 = vsel %vm1771, %v1814, %v1813
        %v1816 = vrot.slane %v1742, 3
        %v1817 = vsel %vm1774, %v1816, %v1815
        %v1818 = vrot.slane %v1743, 2
        %v1819 = vsel %vm1777, %v1818, %v1817
        %v1820 = vrot.slane %v1744, 1
        %v1821 = vsel %vm1780, %v1820, %v1819
        %v1822 = vrot.slane %v1746, 7
        %v1823 = vsel %vm1762, %v1822, %v1745
        %v1824 = vrot.slane %v1747, 6
        %v1825 = vsel %vm1765, %v1824, %v1823
        %v1826 = vrot.slane %v1748, 5
        %v1827 = vsel %vm1768, %v1826, %v1825
        %v1828 = vrot.slane %v1750, 7
        %v1829 = vsel %vm1762, %v1828, %v1749
        %v1830 = vrot.slane %v1751, 6
        %v1831 = vsel %vm1765, %v1830, %v1829
        %v1832 = vrot.slane %v1752, 5
        %v1833 = vsel %vm1768, %v1832, %v1831
        %v1834 = vrot.slane %v1753, 4
        %v1835 = vsel %vm1771, %v1834, %v1833
        %v1836 = vrot.slane %v1754, 3
        %v1837 = vsel %vm1774, %v1836, %v1835
        %v1838 = vrot.slane %v1755, 2
        %v1839 = vsel %vm1777, %v1838, %v1837
        %v1840 = vrot.slane %v1756, 1
        %v1841 = vsel %vm1780, %v1840, %v1839
        %v1842 = vrot.slane %v1758, 7
        %v1843 = vsel %vm1762, %v1842, %v1757
        %v1844 = vrot.slane %v1759, 6
        %v1845 = vsel %vm1765, %v1844, %v1843
        %v1846 = vrot.slane %v1760, 5
        %v1847 = vsel %vm1768, %v1846, %v1845
        %v1848 = vpack.c.b16 %v1781, %v1781
        %v1849 = vpack.c.b16 %v1787, %v1787
        %v1850 = vpack.c.b16 %v1801, %v1801
        %v1851 = vpack.c.b16 %v1807, %v1807
        %v1852 = vpack.c.b16 %v1821, %v1821
        %v1853 = vpack.c.b16 %v1827, %v1827
        %v1854 = vpack.c.b16 %v1841, %v1841
        %v1855 = vpack.c.b16 %v1847, %v1847
        %vm1864 = vcmask 257024
        %1865 = vst.msk [vmem:[#allocation2] sm:$0xf] %vm1864, %v1848
        %vm1866 = vcmask 254976
        %1867 = vst.msk [vmem:[#allocation2 + $0x4] sm:$0x3] %vm1866, %v1849
        %1868 = vst.msk [vmem:[#allocation2 + $0x8] sm:$0xf] %vm1864, %v1850
        %1869 = vst.msk [vmem:[#allocation2 + $0xc] sm:$0x3] %vm1866, %v1851
        %1870 = vst.msk [vmem:[#allocation2 + $0x10] sm:$0xf] %vm1864, %v1852
        %1871 = vst.msk [vmem:[#allocation2 + $0x14] sm:$0x3] %vm1866, %v1853
        %1872 = vst.msk [vmem:[#allocation2 + $0x18] sm:$0xf] %vm1864, %v1854
        %1873 = vst.msk [vmem:[#allocation2 + $0x1c] sm:$0x3] %vm1866, %v1855
        %v1874 = vld [vmem:[%s383 + $0x60] sm:$0xf]
        %v1875 = vld [vmem:[%s383 + $0x64] sm:$0xf]
        %v1876 = vld [vmem:[%s383 + $0x68] sm:$0xf]
        %v1877 = vld [vmem:[%s383 + $0x6c] sm:$0xf]
        %v1878 = vld [vmem:[%s383 + $0x70] sm:$0xf]
        %v1879 = vld [vmem:[%s383 + $0x74] sm:$0xf]
        %v1880 = vld [vmem:[%s383 + $0x78] sm:$0xf]
        %v1881 = vld [vmem:[%s383 + $0x7c] sm:$0xf]
        %v1882 = vld [vmem:[%s383 + $0x80] sm:$0xf]
        %v1883 = vld [vmem:[%s383 + $0x84] sm:$0xf]
        %v1884 = vld [vmem:[%s383 + $0x88] sm:$0xf]
        %v1885 = vld [vmem:[%s383 + $0x8c] sm:$0xf]
        %v1886 = vld [vmem:[%s383 + $0x90] sm:$0xf]
        %v1887 = vld [vmem:[%s383 + $0x94] sm:$0xf]
        %v1888 = vld [vmem:[%s383 + $0x98] sm:$0xf]
        %v1889 = vld [vmem:[%s383 + $0x9c] sm:$0xf]
        %v1890 = vld [vmem:[%s383 + $0xa0] sm:$0xf]
        %v1891 = vld [vmem:[%s383 + $0xa4] sm:$0xf]
        %v1892 = vld [vmem:[%s383 + $0xa8] sm:$0xf]
        %v1893 = vld [vmem:[%s383 + $0xac] sm:$0xf]
        %v1894 = vld [vmem:[%s383 + $0xb0] sm:$0xf]
        %v1895 = vld [vmem:[%s383 + $0xb4] sm:$0xf]
        %v1896 = vld [vmem:[%s383 + $0xb8] sm:$0xf]
        %v1897 = vld [vmem:[%s383 + $0xbc] sm:$0xf]
        %v1922 = vunpack.c.l.b16 %v1874
        %v1923 = vunpack.c.l.b16 %v1875
        %v1924 = vunpack.c.l.b16 %v1876
        %v1925 = vunpack.c.l.b16 %v1877
        %v1926 = vunpack.c.l.b16 %v1878
        %v1927 = vunpack.c.l.b16 %v1879
        %v1928 = vunpack.c.l.b16 %v1880
        %v1929 = vunpack.c.l.b16 %v1881
        %v1930 = vunpack.c.l.b16 %v1882
        %v1931 = vunpack.c.l.b16 %v1883
        %v1932 = vunpack.c.l.b16 %v1884
        %v1933 = vunpack.c.l.b16 %v1885
        %v1934 = vunpack.c.l.b16 %v1886
        %v1935 = vunpack.c.l.b16 %v1887
        %v1936 = vunpack.c.l.b16 %v1888
        %v1937 = vunpack.c.l.b16 %v1889
        %v1938 = vunpack.c.l.b16 %v1890
        %v1939 = vunpack.c.l.b16 %v1891
        %v1940 = vunpack.c.l.b16 %v1892
        %v1941 = vunpack.c.l.b16 %v1893
        %v1942 = vunpack.c.l.b16 %v1894
        %v1943 = vunpack.c.l.b16 %v1895
        %v1944 = vunpack.c.l.b16 %v1896
        %v1945 = vunpack.c.l.b16 %v1897
        %v1946 = vpack.c.b16 %v1923, %v1922
        %v1947 = vpack.c.b16 %v1925, %v1924
        %v1948 = vpack.c.b16 %v1927, %v1926
        %v1949 = vpack.c.b16 %v1929, %v1928
        %v1950 = vpack.c.b16 %v1931, %v1930
        %v1951 = vpack.c.b16 %v1933, %v1932
        %v1952 = vpack.c.b16 %v1935, %v1934
        %v1953 = vpack.c.b16 %v1937, %v1936
        %v1954 = vpack.c.b16 %v1939, %v1938
        %v1955 = vpack.c.b16 %v1941, %v1940
        %v1956 = vpack.c.b16 %v1943, %v1942
        %v1957 = vpack.c.b16 %v1945, %v1944
        %1970 = vmatprep.subr.bf16.mxu0 0
        %1971 = vmatpush1.bf16.msra.mxu0 %v536
        %1972 = vmatprep.subr.bf16.mxu0 0
        %1973 = vmatpush1.bf16.msra.mxu0 %v537
        %1974 = vmatprep.subr.bf16.mxu0 0
        %1975 = vmatpush1.bf16.msra.mxu0 %v538
        %1976 = vmatprep.subr.bf16.mxu0 0
        %1977 = vmatpush1.bf16.msra.mxu0 %v539
        %1978 = vmatprep.subr.bf16.mxu0 0
        %1979 = vmatpush1.bf16.msra.mxu0 %v540
        %1980 = vmatprep.subr.bf16.mxu0 0
        %1981 = vmatpush1.bf16.msra.mxu0 %v541
        %1982 = vmatprep.subr.bf16.mxu0 0
        %1983 = vmatpush1.bf16.msra.mxu0 %v542
        %1984 = vmatprep.subr.bf16.mxu0 0
        %1985 = vmatpush1.bf16.msra.mxu0 %v543
        %1986 = vmatprep.subr.bf16.mxu0 0
        %1987 = vmatpush1.bf16.msra.mxu0 0
        %1988 = vmatprep.subr.bf16.mxu0 0
        %1989 = vmatpush1.bf16.msra.mxu0 0
        %1990 = vmatprep.subr.bf16.mxu0 0
        %1991 = vmatpush1.bf16.msra.mxu0 0
        %1992 = vmatprep.subr.bf16.mxu0 0
        %1993 = vmatpush1.bf16.msra.mxu0 0
        %1994 = vmatprep.subr.bf16.mxu0 0
        %1995 = vmatpush1.bf16.msra.mxu0 0
        %1996 = vmatprep.subr.bf16.mxu0 0
        %1997 = vmatpush1.bf16.msra.mxu0 0
        %1998 = vmatprep.subr.bf16.mxu0 0
        %1999 = vmatpush1.bf16.msra.mxu0 0
        %2000 = vmatprep.subr.bf16.mxu0 0
        %2001 = vmatpush1.bf16.msra.mxu0 0
        %2002 = vmatprep.mubr.bf16.mxu0 0
        %2003 = vmatmul.mubr.bf16.gmra.mrb[0].mxu0 %v1946
        %v2004 = vpop.f32.mrb[0].mxu0
        %v2005 = vadd.f32 %v430, %v2004
        %v2006 = vpop.f32.mrb[0].mxu0
        %v2007 = vpop.f32.mrb[0].mxu0
        %v2008 = vadd.f32 %v430, %v2007
        %v2009 = vpop.f32.mrb[0].mxu0
        %2010 = vmatprep.mubr.bf16.mxu0 0
        %2011 = vmatmul.mubr.bf16.gmra.mrb[0].mxu0 %v1947
        %v2012 = vpop.f32.mrb[0].mxu0
        %v2013 = vadd.f32 %v430, %v2012
        %v2014 = vpop.f32.mrb[0].mxu0
        %v2015 = vpop.f32.mrb[0].mxu0
        %v2016 = vadd.f32 %v430, %v2015
        %v2017 = vpop.f32.mrb[0].mxu0
        %2018 = vmatprep.mubr.bf16.mxu0 0
        %2019 = vmatmul.mubr.bf16.gmra.mrb[0].mxu0 %v1948
        %v2020 = vpop.f32.mrb[0].mxu0
        %v2021 = vadd.f32 %v430, %v2020
        %v2022 = vpop.f32.mrb[0].mxu0
        %v2023 = vpop.f32.mrb[0].mxu0
        %v2024 = vadd.f32 %v430, %v2023
        %v2025 = vpop.f32.mrb[0].mxu0
        %2026 = vmatprep.mubr.bf16.mxu0 0
        %2027 = vmatmul.mubr.bf16.gmra.mrb[0].mxu0 %v1949
        %v2028 = vpop.f32.mrb[0].mxu0
        %v2029 = vadd.f32 %v430, %v2028
        %v2030 = vpop.f32.mrb[0].mxu0
        %v2031 = vpop.f32.mrb[0].mxu0
        %v2032 = vadd.f32 %v430, %v2031
        %v2033 = vpop.f32.mrb[0].mxu0
        %2034 = vmatprep.mubr.bf16.mxu0 0
        %2035 = vmatmul.mubr.bf16.gmra.mrb[0].mxu0 %v1950
        %v2036 = vpop.f32.mrb[0].mxu0
        %v2037 = vadd.f32 %v430, %v2036
        %v2038 = vpop.f32.mrb[0].mxu0
        %v2039 = vpop.f32.mrb[0].mxu0
        %v2040 = vadd.f32 %v430, %v2039
        %v2041 = vpop.f32.mrb[0].mxu0
        %2042 = vmatprep.mubr.bf16.mxu0 0
        %2043 = vmatmul.mubr.bf16.gmra.mrb[0].mxu0 %v1951
        %v2044 = vpop.f32.mrb[0].mxu0
        %v2045 = vadd.f32 %v430, %v2044
        %v2046 = vpop.f32.mrb[0].mxu0
        %v2047 = vpop.f32.mrb[0].mxu0
        %v2048 = vadd.f32 %v430, %v2047
        %v2049 = vpop.f32.mrb[0].mxu0
        %2050 = vmatprep.mubr.bf16.mxu0 0
        %2051 = vmatmul.mubr.bf16.gmra.mrb[0].mxu0 %v1952
        %v2052 = vpop.f32.mrb[0].mxu0
        %v2053 = vadd.f32 %v430, %v2052
        %v2054 = vpop.f32.mrb[0].mxu0
        %v2055 = vpop.f32.mrb[0].mxu0
        %v2056 = vadd.f32 %v430, %v2055
        %v2057 = vpop.f32.mrb[0].mxu0
        %2058 = vmatprep.mubr.bf16.mxu0 0
        %2059 = vmatmul.mubr.bf16.gmra.mrb[0].mxu0 %v1953
        %v2060 = vpop.f32.mrb[0].mxu0
        %v2061 = vadd.f32 %v430, %v2060
        %v2062 = vpop.f32.mrb[0].mxu0
        %v2063 = vpop.f32.mrb[0].mxu0
        %v2064 = vadd.f32 %v430, %v2063
        %v2065 = vpop.f32.mrb[0].mxu0
        %2066 = vmatprep.mubr.bf16.mxu0 0
        %2067 = vmatmul.mubr.bf16.gmra.mrb[0].mxu0 %v1954
        %v2068 = vpop.f32.mrb[0].mxu0
        %v2069 = vadd.f32 %v430, %v2068
        %v2070 = vpop.f32.mrb[0].mxu0
        %v2071 = vpop.f32.mrb[0].mxu0
        %v2072 = vadd.f32 %v430, %v2071
        %v2073 = vpop.f32.mrb[0].mxu0
        %2074 = vmatprep.mubr.bf16.mxu0 0
        %2075 = vmatmul.mubr.bf16.gmra.mrb[0].mxu0 %v1955
        %v2076 = vpop.f32.mrb[0].mxu0
        %v2077 = vadd.f32 %v430, %v2076
        %v2078 = vpop.f32.mrb[0].mxu0
        %v2079 = vpop.f32.mrb[0].mxu0
        %v2080 = vadd.f32 %v430, %v2079
        %v2081 = vpop.f32.mrb[0].mxu0
        %2082 = vmatprep.mubr.bf16.mxu0 0
        %2083 = vmatmul.mubr.bf16.gmra.mrb[0].mxu0 %v1956
        %v2084 = vpop.f32.mrb[0].mxu0
        %v2085 = vadd.f32 %v430, %v2084
        %v2086 = vpop.f32.mrb[0].mxu0
        %v2087 = vpop.f32.mrb[0].mxu0
        %v2088 = vadd.f32 %v430, %v2087
        %v2089 = vpop.f32.mrb[0].mxu0
        %2090 = vmatprep.mubr.bf16.mxu0 0
        %2091 = vmatmul.mubr.bf16.gmra.mrb[0].mxu0 %v1957
        %v2092 = vpop.f32.mrb[0].mxu0
        %v2093 = vadd.f32 %v430, %v2092
        %v2094 = vpop.f32.mrb[0].mxu0
        %v2095 = vpop.f32.mrb[0].mxu0
        %v2096 = vadd.f32 %v430, %v2095
        %v2097 = vpop.f32.mrb[0].mxu0
        %2098 = vdwg.mxu0
        %v2099 = vmax.f32 %v2005, 0.0
        %v2100 = vmax.f32 %v2008, 0.0
        %v2101 = vmax.f32 %v2013, 0.0
        %v2102 = vmax.f32 %v2016, 0.0
        %v2103 = vmax.f32 %v2021, 0.0
        %v2104 = vmax.f32 %v2024, 0.0
        %v2105 = vmax.f32 %v2029, 0.0
        %v2106 = vmax.f32 %v2032, 0.0
        %v2107 = vmax.f32 %v2037, 0.0
        %v2108 = vmax.f32 %v2040, 0.0
        %v2109 = vmax.f32 %v2045, 0.0
        %v2110 = vmax.f32 %v2048, 0.0
        %v2111 = vmax.f32 %v2053, 0.0
        %v2112 = vmax.f32 %v2056, 0.0
        %v2113 = vmax.f32 %v2061, 0.0
        %v2114 = vmax.f32 %v2064, 0.0
        %v2115 = vmax.f32 %v2069, 0.0
        %v2116 = vmax.f32 %v2072, 0.0
        %v2117 = vmax.f32 %v2077, 0.0
        %v2118 = vmax.f32 %v2080, 0.0
        %v2119 = vmax.f32 %v2085, 0.0
        %v2120 = vmax.f32 %v2088, 0.0
        %v2121 = vmax.f32 %v2093, 0.0
        %v2122 = vmax.f32 %v2096, 0.0
        %v2147 = vcombine.high %v2099, %v2099
        %v2149 = vunpack.c.l.s4 1983009808
        %v2150 = vunpack.c.0.s8 %v2149
        %v2151 = vlaneseq
        %v2152 = vshrl.u32 %v2151, 7
        %v2153 = vsub.s32 %v2150, %v2152
        %v2154 = vrot.slane %v2099, %v2153
        %v2156 = vunpack.c.l.s4 1983009808
        %v2157 = vunpack.c.0.s8 %v2156
        %v2158 = vlaneseq
        %v2159 = vshrl.u32 %v2158, 7
        %v2160 = vsub.s32 %v2157, %v2159
        %v2161 = vrot.slane %v2147, %v2160
        %v2162 = vcombine.high %v2154, %v2154
        %v2163 = vcombine.high %v2161, %v2161
        %v2164 = vcombine.high %v2100, %v2100
        %v2166 = vunpack.c.l.s4 1983009808
        %v2167 = vunpack.c.0.s8 %v2166
        %v2168 = vlaneseq
        %v2169 = vshrl.u32 %v2168, 7
        %v2170 = vsub.s32 %v2167, %v2169
        %v2171 = vrot.slane %v2100, %v2170
        %v2173 = vunpack.c.l.s4 1983009808
        %v2174 = vunpack.c.0.s8 %v2173
        %v2175 = vlaneseq
        %v2176 = vshrl.u32 %v2175, 7
        %v2177 = vsub.s32 %v2174, %v2176
        %v2178 = vrot.slane %v2164, %v2177
        %v2179 = vcombine.high %v2171, %v2171
        %v2180 = vcombine.high %v2178, %v2178
        %v2181 = vcombine.high %v2101, %v2101
        %v2183 = vunpack.c.l.s4 1983009808
        %v2184 = vunpack.c.0.s8 %v2183
        %v2185 = vlaneseq
        %v2186 = vshrl.u32 %v2185, 7
        %v2187 = vsub.s32 %v2184, %v2186
        %v2188 = vrot.slane %v2101, %v2187
        %v2190 = vunpack.c.l.s4 1983009808
        %v2191 = vunpack.c.0.s8 %v2190
        %v2192 = vlaneseq
        %v2193 = vshrl.u32 %v2192, 7
        %v2194 = vsub.s32 %v2191, %v2193
        %v2195 = vrot.slane %v2181, %v2194
        %v2196 = vcombine.high %v2188, %v2188
        %v2197 = vcombine.high %v2195, %v2195
        %v2198 = vcombine.high %v2102, %v2102
        %v2200 = vunpack.c.l.s4 1983009808
        %v2201 = vunpack.c.0.s8 %v2200
        %v2202 = vlaneseq
        %v2203 = vshrl.u32 %v2202, 7
        %v2204 = vsub.s32 %v2201, %v2203
        %v2205 = vrot.slane %v2102, %v2204
        %v2207 = vunpack.c.l.s4 1983009808
        %v2208 = vunpack.c.0.s8 %v2207
        %v2209 = vlaneseq
        %v2210 = vshrl.u32 %v2209, 7
        %v2211 = vsub.s32 %v2208, %v2210
        %v2212 = vrot.slane %v2198, %v2211
        %v2213 = vcombine.high %v2205, %v2205
        %v2214 = vcombine.high %v2212, %v2212
        %v2215 = vcombine.high %v2103, %v2103
        %v2217 = vunpack.c.l.s4 1983009808
        %v2218 = vunpack.c.0.s8 %v2217
        %v2219 = vlaneseq
        %v2220 = vshrl.u32 %v2219, 7
        %v2221 = vsub.s32 %v2218, %v2220
        %v2222 = vrot.slane %v2103, %v2221
        %v2224 = vunpack.c.l.s4 1983009808
        %v2225 = vunpack.c.0.s8 %v2224
        %v2226 = vlaneseq
        %v2227 = vshrl.u32 %v2226, 7
        %v2228 = vsub.s32 %v2225, %v2227
        %v2229 = vrot.slane %v2215, %v2228
        %v2230 = vcombine.high %v2222, %v2222
        %v2231 = vcombine.high %v2229, %v2229
        %v2232 = vcombine.high %v2104, %v2104
        %v2234 = vunpack.c.l.s4 1983009808
        %v2235 = vunpack.c.0.s8 %v2234
        %v2236 = vlaneseq
        %v2237 = vshrl.u32 %v2236, 7
        %v2238 = vsub.s32 %v2235, %v2237
        %v2239 = vrot.slane %v2104, %v2238
        %v2241 = vunpack.c.l.s4 1983009808
        %v2242 = vunpack.c.0.s8 %v2241
        %v2243 = vlaneseq
        %v2244 = vshrl.u32 %v2243, 7
        %v2245 = vsub.s32 %v2242, %v2244
        %v2246 = vrot.slane %v2232, %v2245
        %v2247 = vcombine.high %v2239, %v2239
        %v2248 = vcombine.high %v2246, %v2246
        %v2249 = vcombine.high %v2105, %v2105
        %v2251 = vunpack.c.l.s4 1983009808
        %v2252 = vunpack.c.0.s8 %v2251
        %v2253 = vlaneseq
        %v2254 = vshrl.u32 %v2253, 7
        %v2255 = vsub.s32 %v2252, %v2254
        %v2256 = vrot.slane %v2105, %v2255
        %v2258 = vunpack.c.l.s4 1983009808
        %v2259 = vunpack.c.0.s8 %v2258
        %v2260 = vlaneseq
        %v2261 = vshrl.u32 %v2260, 7
        %v2262 = vsub.s32 %v2259, %v2261
        %v2263 = vrot.slane %v2249, %v2262
        %v2264 = vcombine.high %v2256, %v2256
        %v2265 = vcombine.high %v2263, %v2263
        %v2266 = vcombine.high %v2106, %v2106
        %v2268 = vunpack.c.l.s4 1983009808
        %v2269 = vunpack.c.0.s8 %v2268
        %v2270 = vlaneseq
        %v2271 = vshrl.u32 %v2270, 7
        %v2272 = vsub.s32 %v2269, %v2271
        %v2273 = vrot.slane %v2106, %v2272
        %v2275 = vunpack.c.l.s4 1983009808
        %v2276 = vunpack.c.0.s8 %v2275
        %v2277 = vlaneseq
        %v2278 = vshrl.u32 %v2277, 7
        %v2279 = vsub.s32 %v2276, %v2278
        %v2280 = vrot.slane %v2266, %v2279
        %v2281 = vcombine.high %v2273, %v2273
        %v2282 = vcombine.high %v2280, %v2280
        %v2283 = vcombine.high %v2107, %v2107
        %v2285 = vunpack.c.l.s4 1983009808
        %v2286 = vunpack.c.0.s8 %v2285
        %v2287 = vlaneseq
        %v2288 = vshrl.u32 %v2287, 7
        %v2289 = vsub.s32 %v2286, %v2288
        %v2290 = vrot.slane %v2107, %v2289
        %v2292 = vunpack.c.l.s4 1983009808
        %v2293 = vunpack.c.0.s8 %v2292
        %v2294 = vlaneseq
        %v2295 = vshrl.u32 %v2294, 7
        %v2296 = vsub.s32 %v2293, %v2295
        %v2297 = vrot.slane %v2283, %v2296
        %v2298 = vcombine.high %v2290, %v2290
        %v2299 = vcombine.high %v2297, %v2297
        %v2300 = vcombine.high %v2108, %v2108
        %v2302 = vunpack.c.l.s4 1983009808
        %v2303 = vunpack.c.0.s8 %v2302
        %v2304 = vlaneseq
        %v2305 = vshrl.u32 %v2304, 7
        %v2306 = vsub.s32 %v2303, %v2305
        %v2307 = vrot.slane %v2108, %v2306
        %v2309 = vunpack.c.l.s4 1983009808
        %v2310 = vunpack.c.0.s8 %v2309
        %v2311 = vlaneseq
        %v2312 = vshrl.u32 %v2311, 7
        %v2313 = vsub.s32 %v2310, %v2312
        %v2314 = vrot.slane %v2300, %v2313
        %v2315 = vcombine.high %v2307, %v2307
        %v2316 = vcombine.high %v2314, %v2314
        %v2317 = vcombine.high %v2109, %v2109
        %v2319 = vunpack.c.l.s4 1983009808
        %v2320 = vunpack.c.0.s8 %v2319
        %v2321 = vlaneseq
        %v2322 = vshrl.u32 %v2321, 7
        %v2323 = vsub.s32 %v2320, %v2322
        %v2324 = vrot.slane %v2109, %v2323
        %v2326 = vunpack.c.l.s4 1983009808
        %v2327 = vunpack.c.0.s8 %v2326
        %v2328 = vlaneseq
        %v2329 = vshrl.u32 %v2328, 7
        %v2330 = vsub.s32 %v2327, %v2329
        %v2331 = vrot.slane %v2317, %v2330
        %v2332 = vcombine.high %v2324, %v2324
        %v2333 = vcombine.high %v2331, %v2331
        %v2334 = vcombine.high %v2110, %v2110
        %v2336 = vunpack.c.l.s4 1983009808
        %v2337 = vunpack.c.0.s8 %v2336
        %v2338 = vlaneseq
        %v2339 = vshrl.u32 %v2338, 7
        %v2340 = vsub.s32 %v2337, %v2339
        %v2341 = vrot.slane %v2110, %v2340
        %v2343 = vunpack.c.l.s4 1983009808
        %v2344 = vunpack.c.0.s8 %v2343
        %v2345 = vlaneseq
        %v2346 = vshrl.u32 %v2345, 7
        %v2347 = vsub.s32 %v2344, %v2346
        %v2348 = vrot.slane %v2334, %v2347
        %v2349 = vcombine.high %v2341, %v2341
        %v2350 = vcombine.high %v2348, %v2348
        %v2351 = vcombine.high %v2111, %v2111
        %v2353 = vunpack.c.l.s4 1983009808
        %v2354 = vunpack.c.0.s8 %v2353
        %v2355 = vlaneseq
        %v2356 = vshrl.u32 %v2355, 7
        %v2357 = vsub.s32 %v2354, %v2356
        %v2358 = vrot.slane %v2111, %v2357
        %v2360 = vunpack.c.l.s4 1983009808
        %v2361 = vunpack.c.0.s8 %v2360
        %v2362 = vlaneseq
        %v2363 = vshrl.u32 %v2362, 7
        %v2364 = vsub.s32 %v2361, %v2363
        %v2365 = vrot.slane %v2351, %v2364
        %v2366 = vcombine.high %v2358, %v2358
        %v2367 = vcombine.high %v2365, %v2365
        %v2368 = vcombine.high %v2112, %v2112
        %v2370 = vunpack.c.l.s4 1983009808
        %v2371 = vunpack.c.0.s8 %v2370
        %v2372 = vlaneseq
        %v2373 = vshrl.u32 %v2372, 7
        %v2374 = vsub.s32 %v2371, %v2373
        %v2375 = vrot.slane %v2112, %v2374
        %v2377 = vunpack.c.l.s4 1983009808
        %v2378 = vunpack.c.0.s8 %v2377
        %v2379 = vlaneseq
        %v2380 = vshrl.u32 %v2379, 7
        %v2381 = vsub.s32 %v2378, %v2380
        %v2382 = vrot.slane %v2368, %v2381
        %v2383 = vcombine.high %v2375, %v2375
        %v2384 = vcombine.high %v2382, %v2382
        %v2385 = vcombine.high %v2113, %v2113
        %v2387 = vunpack.c.l.s4 1983009808
        %v2388 = vunpack.c.0.s8 %v2387
        %v2389 = vlaneseq
        %v2390 = vshrl.u32 %v2389, 7
        %v2391 = vsub.s32 %v2388, %v2390
        %v2392 = vrot.slane %v2113, %v2391
        %v2394 = vunpack.c.l.s4 1983009808
        %v2395 = vunpack.c.0.s8 %v2394
        %v2396 = vlaneseq
        %v2397 = vshrl.u32 %v2396, 7
        %v2398 = vsub.s32 %v2395, %v2397
        %v2399 = vrot.slane %v2385, %v2398
        %v2400 = vcombine.high %v2392, %v2392
        %v2401 = vcombine.high %v2399, %v2399
        %v2402 = vcombine.high %v2114, %v2114
        %v2404 = vunpack.c.l.s4 1983009808
        %v2405 = vunpack.c.0.s8 %v2404
        %v2406 = vlaneseq
        %v2407 = vshrl.u32 %v2406, 7
        %v2408 = vsub.s32 %v2405, %v2407
        %v2409 = vrot.slane %v2114, %v2408
        %v2411 = vunpack.c.l.s4 1983009808
        %v2412 = vunpack.c.0.s8 %v2411
        %v2413 = vlaneseq
        %v2414 = vshrl.u32 %v2413, 7
        %v2415 = vsub.s32 %v2412, %v2414
        %v2416 = vrot.slane %v2402, %v2415
        %v2417 = vcombine.high %v2409, %v2409
        %v2418 = vcombine.high %v2416, %v2416
        %v2419 = vcombine.high %v2115, %v2115
        %v2421 = vunpack.c.l.s4 1983009808
        %v2422 = vunpack.c.0.s8 %v2421
        %v2423 = vlaneseq
        %v2424 = vshrl.u32 %v2423, 7
        %v2425 = vsub.s32 %v2422, %v2424
        %v2426 = vrot.slane %v2115, %v2425
        %v2428 = vunpack.c.l.s4 1983009808
        %v2429 = vunpack.c.0.s8 %v2428
        %v2430 = vlaneseq
        %v2431 = vshrl.u32 %v2430, 7
        %v2432 = vsub.s32 %v2429, %v2431
        %v2433 = vrot.slane %v2419, %v2432
        %v2434 = vcombine.high %v2426, %v2426
        %v2435 = vcombine.high %v2433, %v2433
        %v2436 = vcombine.high %v2116, %v2116
        %v2438 = vunpack.c.l.s4 1983009808
        %v2439 = vunpack.c.0.s8 %v2438
        %v2440 = vlaneseq
        %v2441 = vshrl.u32 %v2440, 7
        %v2442 = vsub.s32 %v2439, %v2441
        %v2443 = vrot.slane %v2116, %v2442
        %v2445 = vunpack.c.l.s4 1983009808
        %v2446 = vunpack.c.0.s8 %v2445
        %v2447 = vlaneseq
        %v2448 = vshrl.u32 %v2447, 7
        %v2449 = vsub.s32 %v2446, %v2448
        %v2450 = vrot.slane %v2436, %v2449
        %v2451 = vcombine.high %v2443, %v2443
        %v2452 = vcombine.high %v2450, %v2450
        %v2453 = vcombine.high %v2117, %v2117
        %v2455 = vunpack.c.l.s4 1983009808
        %v2456 = vunpack.c.0.s8 %v2455
        %v2457 = vlaneseq
        %v2458 = vshrl.u32 %v2457, 7
        %v2459 = vsub.s32 %v2456, %v2458
        %v2460 = vrot.slane %v2117, %v2459
        %v2462 = vunpack.c.l.s4 1983009808
        %v2463 = vunpack.c.0.s8 %v2462
        %v2464 = vlaneseq
        %v2465 = vshrl.u32 %v2464, 7
        %v2466 = vsub.s32 %v2463, %v2465
        %v2467 = vrot.slane %v2453, %v2466
        %v2468 = vcombine.high %v2460, %v2460
        %v2469 = vcombine.high %v2467, %v2467
        %v2470 = vcombine.high %v2118, %v2118
        %v2472 = vunpack.c.l.s4 1983009808
        %v2473 = vunpack.c.0.s8 %v2472
        %v2474 = vlaneseq
        %v2475 = vshrl.u32 %v2474, 7
        %v2476 = vsub.s32 %v2473, %v2475
        %v2477 = vrot.slane %v2118, %v2476
        %v2479 = vunpack.c.l.s4 1983009808
        %v2480 = vunpack.c.0.s8 %v2479
        %v2481 = vlaneseq
        %v2482 = vshrl.u32 %v2481, 7
        %v2483 = vsub.s32 %v2480, %v2482
        %v2484 = vrot.slane %v2470, %v2483
        %v2485 = vcombine.high %v2477, %v2477
        %v2486 = vcombine.high %v2484, %v2484
        %v2487 = vcombine.high %v2119, %v2119
        %v2489 = vunpack.c.l.s4 1983009808
        %v2490 = vunpack.c.0.s8 %v2489
        %v2491 = vlaneseq
        %v2492 = vshrl.u32 %v2491, 7
        %v2493 = vsub.s32 %v2490, %v2492
        %v2494 = vrot.slane %v2119, %v2493
        %v2496 = vunpack.c.l.s4 1983009808
        %v2497 = vunpack.c.0.s8 %v2496
        %v2498 = vlaneseq
        %v2499 = vshrl.u32 %v2498, 7
        %v2500 = vsub.s32 %v2497, %v2499
        %v2501 = vrot.slane %v2487, %v2500
        %v2502 = vcombine.high %v2494, %v2494
        %v2503 = vcombine.high %v2501, %v2501
        %v2504 = vcombine.high %v2120, %v2120
        %v2506 = vunpack.c.l.s4 1983009808
        %v2507 = vunpack.c.0.s8 %v2506
        %v2508 = vlaneseq
        %v2509 = vshrl.u32 %v2508, 7
        %v2510 = vsub.s32 %v2507, %v2509
        %v2511 = vrot.slane %v2120, %v2510
        %v2513 = vunpack.c.l.s4 1983009808
        %v2514 = vunpack.c.0.s8 %v2513
        %v2515 = vlaneseq
        %v2516 = vshrl.u32 %v2515, 7
        %v2517 = vsub.s32 %v2514, %v2516
        %v2518 = vrot.slane %v2504, %v2517
        %v2519 = vcombine.high %v2511, %v2511
        %v2520 = vcombine.high %v2518, %v2518
        %v2521 = vcombine.high %v2121, %v2121
        %v2523 = vunpack.c.l.s4 1983009808
        %v2524 = vunpack.c.0.s8 %v2523
        %v2525 = vlaneseq
        %v2526 = vshrl.u32 %v2525, 7
        %v2527 = vsub.s32 %v2524, %v2526
        %v2528 = vrot.slane %v2121, %v2527
        %v2530 = vunpack.c.l.s4 1983009808
        %v2531 = vunpack.c.0.s8 %v2530
        %v2532 = vlaneseq
        %v2533 = vshrl.u32 %v2532, 7
        %v2534 = vsub.s32 %v2531, %v2533
        %v2535 = vrot.slane %v2521, %v2534
        %v2536 = vcombine.high %v2528, %v2528
        %v2537 = vcombine.high %v2535, %v2535
        %v2538 = vcombine.high %v2122, %v2122
        %v2540 = vunpack.c.l.s4 1983009808
        %v2541 = vunpack.c.0.s8 %v2540
        %v2542 = vlaneseq
        %v2543 = vshrl.u32 %v2542, 7
        %v2544 = vsub.s32 %v2541, %v2543
        %v2545 = vrot.slane %v2122, %v2544
        %v2547 = vunpack.c.l.s4 1983009808
        %v2548 = vunpack.c.0.s8 %v2547
        %v2549 = vlaneseq
        %v2550 = vshrl.u32 %v2549, 7
        %v2551 = vsub.s32 %v2548, %v2550
        %v2552 = vrot.slane %v2538, %v2551
        %v2553 = vcombine.high %v2545, %v2545
        %v2554 = vcombine.high %v2552, %v2552
        %v2651 = vmax.f32 %v2154, %v2205
        %v2652 = vmax.f32 %v2162, %v2213
        %v2653 = vmax.f32 %v2161, %v2212
        %v2654 = vmax.f32 %v2163, %v2214
        %v2655 = vmax.f32 %v2171, %v2222
        %v2656 = vmax.f32 %v2179, %v2230
        %v2657 = vmax.f32 %v2178, %v2229
        %v2658 = vmax.f32 %v2180, %v2231
        %v2659 = vmax.f32 %v2188, %v2239
        %v2660 = vmax.f32 %v2196, %v2247
        %v2661 = vmax.f32 %v2195, %v2246
        %v2662 = vmax.f32 %v2197, %v2248
        %v2663 = vmax.f32 %v2256, %v2307
        %v2664 = vmax.f32 %v2264, %v2315
        %v2665 = vmax.f32 %v2263, %v2314
        %v2666 = vmax.f32 %v2265, %v2316
        %v2667 = vmax.f32 %v2273, %v2324
        %v2668 = vmax.f32 %v2281, %v2332
        %v2669 = vmax.f32 %v2280, %v2331
        %v2670 = vmax.f32 %v2282, %v2333
        %v2671 = vmax.f32 %v2290, %v2341
        %v2672 = vmax.f32 %v2298, %v2349
        %v2673 = vmax.f32 %v2297, %v2348
        %v2674 = vmax.f32 %v2299, %v2350
        %v2675 = vmax.f32 %v2358, %v2409
        %v2676 = vmax.f32 %v2366, %v2417
        %v2677 = vmax.f32 %v2365, %v2416
        %v2678 = vmax.f32 %v2367, %v2418
        %v2679 = vmax.f32 %v2375, %v2426
        %v2680 = vmax.f32 %v2383, %v2434
        %v2681 = vmax.f32 %v2382, %v2433
        %v2682 = vmax.f32 %v2384, %v2435
        %v2683 = vmax.f32 %v2392, %v2443
        %v2684 = vmax.f32 %v2400, %v2451
        %v2685 = vmax.f32 %v2399, %v2450
        %v2686 = vmax.f32 %v2401, %v2452
        %v2687 = vmax.f32 %v2460, %v2511
        %v2688 = vmax.f32 %v2468, %v2519
        %v2689 = vmax.f32 %v2467, %v2518
        %v2690 = vmax.f32 %v2469, %v2520
        %v2691 = vmax.f32 %v2477, %v2528
        %v2692 = vmax.f32 %v2485, %v2536
        %v2693 = vmax.f32 %v2484, %v2535
        %v2694 = vmax.f32 %v2486, %v2537
        %v2695 = vmax.f32 %v2494, %v2545
        %v2696 = vmax.f32 %v2502, %v2553
        %v2697 = vmax.f32 %v2501, %v2552
        %v2698 = vmax.f32 %v2503, %v2554
        %v2747 = vrot.slane %v2651, 7
        %v2748 = vrot.slane %v2747, 2
        %v2749 = vrot.slane %v2652, 7
        %v2750 = vrot.slane %v2749, 2
        %v2751 = vrot.slane %v2653, 7
        %v2752 = vrot.slane %v2751, 2
        %v2753 = vrot.slane %v2654, 7
        %v2754 = vrot.slane %v2753, 2
        %v2755 = vrot.slane %v2655, 7
        %v2756 = vrot.slane %v2755, 2
        %v2757 = vrot.slane %v2656, 7
        %v2758 = vrot.slane %v2757, 2
        %v2759 = vrot.slane %v2657, 7
        %v2760 = vrot.slane %v2759, 2
        %v2761 = vrot.slane %v2658, 7
        %v2762 = vrot.slane %v2761, 2
        %v2763 = vrot.slane %v2659, 7
        %v2764 = vrot.slane %v2763, 2
        %v2765 = vrot.slane %v2660, 7
        %v2766 = vrot.slane %v2765, 2
        %v2767 = vrot.slane %v2661, 7
        %v2768 = vrot.slane %v2767, 2
        %v2769 = vrot.slane %v2662, 7
        %v2770 = vrot.slane %v2769, 2
        %v2771 = vrot.slane %v2663, 7
        %v2772 = vrot.slane %v2771, 2
        %v2773 = vrot.slane %v2664, 7
        %v2774 = vrot.slane %v2773, 2
        %v2775 = vrot.slane %v2665, 7
        %v2776 = vrot.slane %v2775, 2
        %v2777 = vrot.slane %v2666, 7
        %v2778 = vrot.slane %v2777, 2
        %v2779 = vrot.slane %v2667, 7
        %v2780 = vrot.slane %v2779, 2
        %v2781 = vrot.slane %v2668, 7
        %v2782 = vrot.slane %v2781, 2
        %v2783 = vrot.slane %v2669, 7
        %v2784 = vrot.slane %v2783, 2
        %v2785 = vrot.slane %v2670, 7
        %v2786 = vrot.slane %v2785, 2
        %v2787 = vrot.slane %v2671, 7
        %v2788 = vrot.slane %v2787, 2
        %v2789 = vrot.slane %v2672, 7
        %v2790 = vrot.slane %v2789, 2
        %v2791 = vrot.slane %v2673, 7
        %v2792 = vrot.slane %v2791, 2
        %v2793 = vrot.slane %v2674, 7
        %v2794 = vrot.slane %v2793, 2
        %v2795 = vrot.slane %v2675, 7
        %v2796 = vrot.slane %v2795, 2
        %v2797 = vrot.slane %v2676, 7
        %v2798 = vrot.slane %v2797, 2
        %v2799 = vrot.slane %v2677, 7
        %v2800 = vrot.slane %v2799, 2
        %v2801 = vrot.slane %v2678, 7
        %v2802 = vrot.slane %v2801, 2
        %v2803 = vrot.slane %v2679, 7
        %v2804 = vrot.slane %v2803, 2
        %v2805 = vrot.slane %v2680, 7
        %v2806 = vrot.slane %v2805, 2
        %v2807 = vrot.slane %v2681, 7
        %v2808 = vrot.slane %v2807, 2
        %v2809 = vrot.slane %v2682, 7
        %v2810 = vrot.slane %v2809, 2
        %v2811 = vrot.slane %v2683, 7
        %v2812 = vrot.slane %v2811, 2
        %v2813 = vrot.slane %v2684, 7
        %v2814 = vrot.slane %v2813, 2
        %v2815 = vrot.slane %v2685, 7
        %v2816 = vrot.slane %v2815, 2
        %v2817 = vrot.slane %v2686, 7
        %v2818 = vrot.slane %v2817, 2
        %v2819 = vrot.slane %v2687, 7
        %v2820 = vrot.slane %v2819, 2
        %v2821 = vrot.slane %v2688, 7
        %v2822 = vrot.slane %v2821, 2
        %v2823 = vrot.slane %v2689, 7
        %v2824 = vrot.slane %v2823, 2
        %v2825 = vrot.slane %v2690, 7
        %v2826 = vrot.slane %v2825, 2
        %v2827 = vrot.slane %v2691, 7
        %v2828 = vrot.slane %v2827, 2
        %v2829 = vrot.slane %v2692, 7
        %v2830 = vrot.slane %v2829, 2
        %v2831 = vrot.slane %v2693, 7
        %v2832 = vrot.slane %v2831, 2
        %v2833 = vrot.slane %v2694, 7
        %v2834 = vrot.slane %v2833, 2
        %v2835 = vrot.slane %v2695, 7
        %v2836 = vrot.slane %v2835, 2
        %v2837 = vrot.slane %v2696, 7
        %v2838 = vrot.slane %v2837, 2
        %v2839 = vrot.slane %v2697, 7
        %v2840 = vrot.slane %v2839, 2
        %v2841 = vrot.slane %v2698, 7
        %v2842 = vrot.slane %v2841, 2
        %v2891 = vmax.f32 %v2651, %v2748
        %v2892 = vmax.f32 %v2652, %v2750
        %v2893 = vmax.f32 %v2653, %v2752
        %v2894 = vmax.f32 %v2654, %v2754
        %v2895 = vmax.f32 %v2655, %v2756
        %v2896 = vmax.f32 %v2656, %v2758
        %v2897 = vmax.f32 %v2657, %v2760
        %v2898 = vmax.f32 %v2658, %v2762
        %v2899 = vmax.f32 %v2659, %v2764
        %v2900 = vmax.f32 %v2660, %v2766
        %v2901 = vmax.f32 %v2661, %v2768
        %v2902 = vmax.f32 %v2662, %v2770
        %v2903 = vmax.f32 %v2663, %v2772
        %v2904 = vmax.f32 %v2664, %v2774
        %v2905 = vmax.f32 %v2665, %v2776
        %v2906 = vmax.f32 %v2666, %v2778
        %v2907 = vmax.f32 %v2667, %v2780
        %v2908 = vmax.f32 %v2668, %v2782
        %v2909 = vmax.f32 %v2669, %v2784
        %v2910 = vmax.f32 %v2670, %v2786
        %v2911 = vmax.f32 %v2671, %v2788
        %v2912 = vmax.f32 %v2672, %v2790
        %v2913 = vmax.f32 %v2673, %v2792
        %v2914 = vmax.f32 %v2674, %v2794
        %v2915 = vmax.f32 %v2675, %v2796
        %v2916 = vmax.f32 %v2676, %v2798
        %v2917 = vmax.f32 %v2677, %v2800
        %v2918 = vmax.f32 %v2678, %v2802
        %v2919 = vmax.f32 %v2679, %v2804
        %v2920 = vmax.f32 %v2680, %v2806
        %v2921 = vmax.f32 %v2681, %v2808
        %v2922 = vmax.f32 %v2682, %v2810
        %v2923 = vmax.f32 %v2683, %v2812
        %v2924 = vmax.f32 %v2684, %v2814
        %v2925 = vmax.f32 %v2685, %v2816
        %v2926 = vmax.f32 %v2686, %v2818
        %v2927 = vmax.f32 %v2687, %v2820
        %v2928 = vmax.f32 %v2688, %v2822
        %v2929 = vmax.f32 %v2689, %v2824
        %v2930 = vmax.f32 %v2690, %v2826
        %v2931 = vmax.f32 %v2691, %v2828
        %v2932 = vmax.f32 %v2692, %v2830
        %v2933 = vmax.f32 %v2693, %v2832
        %v2934 = vmax.f32 %v2694, %v2834
        %v2935 = vmax.f32 %v2695, %v2836
        %v2936 = vmax.f32 %v2696, %v2838
        %v2937 = vmax.f32 %v2697, %v2840
        %v2938 = vmax.f32 %v2698, %v2842
        %v2939 = vpack.c.bf16 %v2891, %v2891
        %v2940 = vpack.c.bf16 %v2892, %v2892
        %v2941 = vpack.c.bf16 %v2893, %v2893
        %v2942 = vpack.c.bf16 %v2894, %v2894
        %v2943 = vpack.c.bf16 %v2895, %v2895
        %v2944 = vpack.c.bf16 %v2896, %v2896
        %v2945 = vpack.c.bf16 %v2897, %v2897
        %v2946 = vpack.c.bf16 %v2898, %v2898
        %v2947 = vpack.c.bf16 %v2899, %v2899
        %v2948 = vpack.c.bf16 %v2900, %v2900
        %v2949 = vpack.c.bf16 %v2901, %v2901
        %v2950 = vpack.c.bf16 %v2902, %v2902
        %v2951 = vpack.c.bf16 %v2903, %v2903
        %v2952 = vpack.c.bf16 %v2904, %v2904
        %v2953 = vpack.c.bf16 %v2905, %v2905
        %v2954 = vpack.c.bf16 %v2906, %v2906
        %v2955 = vpack.c.bf16 %v2907, %v2907
        %v2956 = vpack.c.bf16 %v2908, %v2908
        %v2957 = vpack.c.bf16 %v2909, %v2909
        %v2958 = vpack.c.bf16 %v2910, %v2910
        %v2959 = vpack.c.bf16 %v2911, %v2911
        %v2960 = vpack.c.bf16 %v2912, %v2912
        %v2961 = vpack.c.bf16 %v2913, %v2913
        %v2962 = vpack.c.bf16 %v2914, %v2914
        %v2963 = vpack.c.bf16 %v2915, %v2915
        %v2964 = vpack.c.bf16 %v2916, %v2916
        %v2965 = vpack.c.bf16 %v2917, %v2917
        %v2966 = vpack.c.bf16 %v2918, %v2918
        %v2967 = vpack.c.bf16 %v2919, %v2919
        %v2968 = vpack.c.bf16 %v2920, %v2920
        %v2969 = vpack.c.bf16 %v2921, %v2921
        %v2970 = vpack.c.bf16 %v2922, %v2922
        %v2971 = vpack.c.bf16 %v2923, %v2923
        %v2972 = vpack.c.bf16 %v2924, %v2924
        %v2973 = vpack.c.bf16 %v2925, %v2925
        %v2974 = vpack.c.bf16 %v2926, %v2926
        %v2975 = vpack.c.bf16 %v2927, %v2927
        %v2976 = vpack.c.bf16 %v2928, %v2928
        %v2977 = vpack.c.bf16 %v2929, %v2929
        %v2978 = vpack.c.bf16 %v2930, %v2930
        %v2979 = vpack.c.bf16 %v2931, %v2931
        %v2980 = vpack.c.bf16 %v2932, %v2932
        %v2981 = vpack.c.bf16 %v2933, %v2933
        %v2982 = vpack.c.bf16 %v2934, %v2934
        %v2983 = vpack.c.bf16 %v2935, %v2935
        %v2984 = vpack.c.bf16 %v2936, %v2936
        %v2985 = vpack.c.bf16 %v2937, %v2937
        %v2986 = vpack.c.bf16 %v2938, %v2938
        %v3035 = vunpack.c.l.b16 %v2939
        %v3036 = vunpack.c.l.b16 %v2940
        %v3037 = vunpack.c.l.b16 %v2941
        %v3038 = vunpack.c.l.b16 %v2942
        %v3039 = vunpack.c.l.b16 %v2943
        %v3040 = vunpack.c.l.b16 %v2944
        %v3041 = vunpack.c.l.b16 %v2945
        %v3042 = vunpack.c.l.b16 %v2946
        %v3043 = vunpack.c.l.b16 %v2947
        %v3044 = vunpack.c.l.b16 %v2948
        %v3045 = vunpack.c.l.b16 %v2949
        %v3046 = vunpack.c.l.b16 %v2950
        %v3047 = vunpack.c.l.b16 %v2951
        %v3048 = vunpack.c.l.b16 %v2952
        %v3049 = vunpack.c.l.b16 %v2953
        %v3050 = vunpack.c.l.b16 %v2954
        %v3051 = vunpack.c.l.b16 %v2955
        %v3052 = vunpack.c.l.b16 %v2956
        %v3053 = vunpack.c.l.b16 %v2957
        %v3054 = vunpack.c.l.b16 %v2958
        %v3055 = vunpack.c.l.b16 %v2959
        %v3056 = vunpack.c.l.b16 %v2960
        %v3057 = vunpack.c.l.b16 %v2961
        %v3058 = vunpack.c.l.b16 %v2962
        %v3059 = vunpack.c.l.b16 %v2963
        %v3060 = vunpack.c.l.b16 %v2964
        %v3061 = vunpack.c.l.b16 %v2965
        %v3062 = vunpack.c.l.b16 %v2966
        %v3063 = vunpack.c.l.b16 %v2967
        %v3064 = vunpack.c.l.b16 %v2968
        %v3065 = vunpack.c.l.b16 %v2969
        %v3066 = vunpack.c.l.b16 %v2970
        %v3067 = vunpack.c.l.b16 %v2971
        %v3068 = vunpack.c.l.b16 %v2972
        %v3069 = vunpack.c.l.b16 %v2973
        %v3070 = vunpack.c.l.b16 %v2974
        %v3071 = vunpack.c.l.b16 %v2975
        %v3072 = vunpack.c.l.b16 %v2976
        %v3073 = vunpack.c.l.b16 %v2977
        %v3074 = vunpack.c.l.b16 %v2978
        %v3075 = vunpack.c.l.b16 %v2979
        %v3076 = vunpack.c.l.b16 %v2980
        %v3077 = vunpack.c.l.b16 %v2981
        %v3078 = vunpack.c.l.b16 %v2982
        %v3079 = vunpack.c.l.b16 %v2983
        %v3080 = vunpack.c.l.b16 %v2984
        %v3081 = vunpack.c.l.b16 %v2985
        %v3082 = vunpack.c.l.b16 %v2986
        %v3083 = vpack.c.b16 %v3035, %v3035
        %v3084 = vpack.c.b16 %v3036, %v3036
        %v3085 = vpack.c.b16 %v3037, %v3037
        %v3086 = vpack.c.b16 %v3038, %v3038
        %v3087 = vpack.c.b16 %v3039, %v3039
        %v3088 = vpack.c.b16 %v3040, %v3040
        %v3089 = vpack.c.b16 %v3041, %v3041
        %v3090 = vpack.c.b16 %v3042, %v3042
        %v3091 = vpack.c.b16 %v3043, %v3043
        %v3092 = vpack.c.b16 %v3044, %v3044
        %v3093 = vpack.c.b16 %v3045, %v3045
        %v3094 = vpack.c.b16 %v3046, %v3046
        %v3095 = vpack.c.b16 %v3047, %v3047
        %v3096 = vpack.c.b16 %v3048, %v3048
        %v3097 = vpack.c.b16 %v3049, %v3049
        %v3098 = vpack.c.b16 %v3050, %v3050
        %v3099 = vpack.c.b16 %v3051, %v3051
        %v3100 = vpack.c.b16 %v3052, %v3052
        %v3101 = vpack.c.b16 %v3053, %v3053
        %v3102 = vpack.c.b16 %v3054, %v3054
        %v3103 = vpack.c.b16 %v3055, %v3055
        %v3104 = vpack.c.b16 %v3056, %v3056
        %v3105 = vpack.c.b16 %v3057, %v3057
        %v3106 = vpack.c.b16 %v3058, %v3058
        %v3107 = vpack.c.b16 %v3059, %v3059
        %v3108 = vpack.c.b16 %v3060, %v3060
        %v3109 = vpack.c.b16 %v3061, %v3061
        %v3110 = vpack.c.b16 %v3062, %v3062
        %v3111 = vpack.c.b16 %v3063, %v3063
        %v3112 = vpack.c.b16 %v3064, %v3064
        %v3113 = vpack.c.b16 %v3065, %v3065
        %v3114 = vpack.c.b16 %v3066, %v3066
        %v3115 = vpack.c.b16 %v3067, %v3067
        %v3116 = vpack.c.b16 %v3068, %v3068
        %v3117 = vpack.c.b16 %v3069, %v3069
        %v3118 = vpack.c.b16 %v3070, %v3070
        %v3119 = vpack.c.b16 %v3071, %v3071
        %v3120 = vpack.c.b16 %v3072, %v3072
        %v3121 = vpack.c.b16 %v3073, %v3073
        %v3122 = vpack.c.b16 %v3074, %v3074
        %v3123 = vpack.c.b16 %v3075, %v3075
        %v3124 = vpack.c.b16 %v3076, %v3076
        %v3125 = vpack.c.b16 %v3077, %v3077
        %v3126 = vpack.c.b16 %v3078, %v3078
        %v3127 = vpack.c.b16 %v3079, %v3079
        %v3128 = vpack.c.b16 %v3080, %v3080
        %v3129 = vpack.c.b16 %v3081, %v3081
        %v3130 = vpack.c.b16 %v3082, %v3082
        %v3131 = vunpack.c.l.b16 %v3083
        %v3132 = vunpack.c.l.b16 %v3084
        %v3133 = vunpack.c.l.b16 %v3085
        %v3134 = vunpack.c.l.b16 %v3086
        %v3135 = vunpack.c.l.b16 %v3087
        %v3136 = vunpack.c.l.b16 %v3088
        %v3137 = vunpack.c.l.b16 %v3089
        %v3138 = vunpack.c.l.b16 %v3090
        %v3139 = vunpack.c.l.b16 %v3091
        %v3140 = vunpack.c.l.b16 %v3092
        %v3141 = vunpack.c.l.b16 %v3093
        %v3142 = vunpack.c.l.b16 %v3094
        %v3143 = vunpack.c.l.b16 %v3095
        %v3144 = vunpack.c.l.b16 %v3096
        %v3145 = vunpack.c.l.b16 %v3097
        %v3146 = vunpack.c.l.b16 %v3098
        %v3147 = vunpack.c.l.b16 %v3099
        %v3148 = vunpack.c.l.b16 %v3100
        %v3149 = vunpack.c.l.b16 %v3101
        %v3150 = vunpack.c.l.b16 %v3102
        %v3151 = vunpack.c.l.b16 %v3103
        %v3152 = vunpack.c.l.b16 %v3104
        %v3153 = vunpack.c.l.b16 %v3105
        %v3154 = vunpack.c.l.b16 %v3106
        %v3155 = vunpack.c.l.b16 %v3107
        %v3156 = vunpack.c.l.b16 %v3108
        %v3157 = vunpack.c.l.b16 %v3109
        %v3158 = vunpack.c.l.b16 %v3110
        %v3159 = vunpack.c.l.b16 %v3111
        %v3160 = vunpack.c.l.b16 %v3112
        %v3161 = vunpack.c.l.b16 %v3113
        %v3162 = vunpack.c.l.b16 %v3114
        %v3163 = vunpack.c.l.b16 %v3115
        %v3164 = vunpack.c.l.b16 %v3116
        %v3165 = vunpack.c.l.b16 %v3117
        %v3166 = vunpack.c.l.b16 %v3118
        %v3167 = vunpack.c.l.b16 %v3119
        %v3168 = vunpack.c.l.b16 %v3120
        %v3169 = vunpack.c.l.b16 %v3121
        %v3170 = vunpack.c.l.b16 %v3122
        %v3171 = vunpack.c.l.b16 %v3123
        %v3172 = vunpack.c.l.b16 %v3124
        %v3173 = vunpack.c.l.b16 %v3125
        %v3174 = vunpack.c.l.b16 %v3126
        %v3175 = vunpack.c.l.b16 %v3127
        %v3176 = vunpack.c.l.b16 %v3128
        %v3177 = vunpack.c.l.b16 %v3129
        %v3178 = vunpack.c.l.b16 %v3130
        %v3179 = vrot.slane %v3132, 7
        %v3180 = vsel %vm1762, %v3179, %v3131
        %v3181 = vrot.slane %v3133, 6
        %v3182 = vsel %vm1765, %v3181, %v3180
        %v3183 = vrot.slane %v3134, 5
        %v3184 = vsel %vm1768, %v3183, %v3182
        %v3185 = vrot.slane %v3135, 4
        %v3186 = vsel %vm1771, %v3185, %v3184
        %v3187 = vrot.slane %v3136, 3
        %v3188 = vsel %vm1774, %v3187, %v3186
        %v3189 = vrot.slane %v3137, 2
        %v3190 = vsel %vm1777, %v3189, %v3188
        %v3191 = vrot.slane %v3138, 1
        %v3192 = vsel %vm1780, %v3191, %v3190
        %v3193 = vrot.slane %v3140, 7
        %v3194 = vsel %vm1762, %v3193, %v3139
        %v3195 = vrot.slane %v3141, 6
        %v3196 = vsel %vm1765, %v3195, %v3194
        %v3197 = vrot.slane %v3142, 5
        %v3198 = vsel %vm1768, %v3197, %v3196
        %v3199 = vrot.slane %v3144, 7
        %v3200 = vsel %vm1762, %v3199, %v3143
        %v3201 = vrot.slane %v3145, 6
        %v3202 = vsel %vm1765, %v3201, %v3200
        %v3203 = vrot.slane %v3146, 5
        %v3204 = vsel %vm1768, %v3203, %v3202
        %v3205 = vrot.slane %v3147, 4
        %v3206 = vsel %vm1771, %v3205, %v3204
        %v3207 = vrot.slane %v3148, 3
        %v3208 = vsel %vm1774, %v3207, %v3206
        %v3209 = vrot.slane %v3149, 2
        %v3210 = vsel %vm1777, %v3209, %v3208
        %v3211 = vrot.slane %v3150, 1
        %v3212 = vsel %vm1780, %v3211, %v3210
        %v3213 = vrot.slane %v3152, 7
        %v3214 = vsel %vm1762, %v3213, %v3151
        %v3215 = vrot.slane %v3153, 6
        %v3216 = vsel %vm1765, %v3215, %v3214
        %v3217 = vrot.slane %v3154, 5
        %v3218 = vsel %vm1768, %v3217, %v3216
        %v3219 = vrot.slane %v3156, 7
        %v3220 = vsel %vm1762, %v3219, %v3155
        %v3221 = vrot.slane %v3157, 6
        %v3222 = vsel %vm1765, %v3221, %v3220
        %v3223 = vrot.slane %v3158, 5
        %v3224 = vsel %vm1768, %v3223, %v3222
        %v3225 = vrot.slane %v3159, 4
        %v3226 = vsel %vm1771, %v3225, %v3224
        %v3227 = vrot.slane %v3160, 3
        %v3228 = vsel %vm1774, %v3227, %v3226
        %v3229 = vrot.slane %v3161, 2
        %v3230 = vsel %vm1777, %v3229, %v3228
        %v3231 = vrot.slane %v3162, 1
        %v3232 = vsel %vm1780, %v3231, %v3230
        %v3233 = vrot.slane %v3164, 7
        %v3234 = vsel %vm1762, %v3233, %v3163
        %v3235 = vrot.slane %v3165, 6
        %v3236 = vsel %vm1765, %v3235, %v3234
        %v3237 = vrot.slane %v3166, 5
        %v3238 = vsel %vm1768, %v3237, %v3236
        %v3239 = vrot.slane %v3168, 7
        %v3240 = vsel %vm1762, %v3239, %v3167
        %v3241 = vrot.slane %v3169, 6
        %v3242 = vsel %vm1765, %v3241, %v3240
        %v3243 = vrot.slane %v3170, 5
        %v3244 = vsel %vm1768, %v3243, %v3242
        %v3245 = vrot.slane %v3171, 4
        %v3246 = vsel %vm1771, %v3245, %v3244
        %v3247 = vrot.slane %v3172, 3
        %v3248 = vsel %vm1774, %v3247, %v3246
        %v3249 = vrot.slane %v3173, 2
        %v3250 = vsel %vm1777, %v3249, %v3248
        %v3251 = vrot.slane %v3174, 1
        %v3252 = vsel %vm1780, %v3251, %v3250
        %v3253 = vrot.slane %v3176, 7
        %v3254 = vsel %vm1762, %v3253, %v3175
        %v3255 = vrot.slane %v3177, 6
        %v3256 = vsel %vm1765, %v3255, %v3254
        %v3257 = vrot.slane %v3178, 5
        %v3258 = vsel %vm1768, %v3257, %v3256
        %v3259 = vpack.c.b16 %v3192, %v3192
        %v3260 = vpack.c.b16 %v3198, %v3198
        %v3261 = vpack.c.b16 %v3212, %v3212
        %v3262 = vpack.c.b16 %v3218, %v3218
        %v3263 = vpack.c.b16 %v3232, %v3232
        %v3264 = vpack.c.b16 %v3238, %v3238
        %v3265 = vpack.c.b16 %v3252, %v3252
        %v3266 = vpack.c.b16 %v3258, %v3258
        %s3275 = scalar_lea.vmem [#allocation2], 32
        %3276 = vst.msk [vmem:[%s3275] sm:$0xf] %vm1864, %v3259
        %3277 = vst.msk [vmem:[%s3275 + $0x4] sm:$0x3] %vm1866, %v3260
        %3278 = vst.msk [vmem:[%s3275 + $0x8] sm:$0xf] %vm1864, %v3261
        %3279 = vst.msk [vmem:[%s3275 + $0xc] sm:$0x3] %vm1866, %v3262
        %3280 = vst.msk [vmem:[%s3275 + $0x10] sm:$0xf] %vm1864, %v3263
        %3281 = vst.msk [vmem:[%s3275 + $0x14] sm:$0x3] %vm1866, %v3264
        %3282 = vst.msk [vmem:[%s3275 + $0x18] sm:$0xf] %vm1864, %v3265
        %3283 = vst.msk [vmem:[%s3275 + $0x1c] sm:$0x3] %vm1866, %v3266
        %v3284 = vld [vmem:[%s383 + $0xc0] sm:$0xf]
        %v3285 = vld [vmem:[%s383 + $0xc4] sm:$0xf]
        %v3286 = vld [vmem:[%s383 + $0xc8] sm:$0xf]
        %v3287 = vld [vmem:[%s383 + $0xcc] sm:$0xf]
        %v3288 = vld [vmem:[%s383 + $0xd0] sm:$0xf]
        %v3289 = vld [vmem:[%s383 + $0xd4] sm:$0xf]
        %v3290 = vld [vmem:[%s383 + $0xd8] sm:$0xf]
        %v3291 = vld [vmem:[%s383 + $0xdc] sm:$0xf]
        %v3292 = vld [vmem:[%s383 + $0xe0] sm:$0xf]
        %v3293 = vld [vmem:[%s383 + $0xe4] sm:$0xf]
        %v3294 = vld [vmem:[%s383 + $0xe8] sm:$0xf]
        %v3295 = vld [vmem:[%s383 + $0xec] sm:$0xf]
        %v3296 = vld [vmem:[%s383 + $0xf0] sm:$0xf]
        %v3297 = vld [vmem:[%s383 + $0xf4] sm:$0xf]
        %v3298 = vld [vmem:[%s383 + $0xf8] sm:$0xf]
        %v3299 = vld [vmem:[%s383 + $0xfc] sm:$0xf]
        %v3300 = vld [vmem:[%s383 + $0x100] sm:$0xf]
        %v3301 = vld [vmem:[%s383 + $0x104] sm:$0xf]
        %v3302 = vld [vmem:[%s383 + $0x108] sm:$0xf]
        %v3303 = vld [vmem:[%s383 + $0x10c] sm:$0xf]
        %v3304 = vld [vmem:[%s383 + $0x110] sm:$0xf]
        %v3305 = vld [vmem:[%s383 + $0x114] sm:$0xf]
        %v3306 = vld [vmem:[%s383 + $0x118] sm:$0xf]
        %v3307 = vld [vmem:[%s383 + $0x11c] sm:$0xf]
        %v3332 = vunpack.c.l.b16 %v3284
        %v3333 = vunpack.c.l.b16 %v3285
        %v3334 = vunpack.c.l.b16 %v3286
        %v3335 = vunpack.c.l.b16 %v3287
        %v3336 = vunpack.c.l.b16 %v3288
        %v3337 = vunpack.c.l.b16 %v3289
        %v3338 = vunpack.c.l.b16 %v3290
        %v3339 = vunpack.c.l.b16 %v3291
        %v3340 = vunpack.c.l.b16 %v3292
        %v3341 = vunpack.c.l.b16 %v3293
        %v3342 = vunpack.c.l.b16 %v3294
        %v3343 = vunpack.c.l.b16 %v3295
        %v3344 = vunpack.c.l.b16 %v3296
        %v3345 = vunpack.c.l.b16 %v3297
        %v3346 = vunpack.c.l.b16 %v3298
        %v3347 = vunpack.c.l.b16 %v3299
        %v3348 = vunpack.c.l.b16 %v3300
        %v3349 = vunpack.c.l.b16 %v3301
        %v3350 = vunpack.c.l.b16 %v3302
        %v3351 = vunpack.c.l.b16 %v3303
        %v3352 = vunpack.c.l.b16 %v3304
        %v3353 = vunpack.c.l.b16 %v3305
        %v3354 = vunpack.c.l.b16 %v3306
        %v3355 = vunpack.c.l.b16 %v3307
        %v3356 = vpack.c.b16 %v3333, %v3332
        %v3357 = vpack.c.b16 %v3335, %v3334
        %v3358 = vpack.c.b16 %v3337, %v3336
        %v3359 = vpack.c.b16 %v3339, %v3338
        %v3360 = vpack.c.b16 %v3341, %v3340
        %v3361 = vpack.c.b16 %v3343, %v3342
        %v3362 = vpack.c.b16 %v3345, %v3344
        %v3363 = vpack.c.b16 %v3347, %v3346
        %v3364 = vpack.c.b16 %v3349, %v3348
        %v3365 = vpack.c.b16 %v3351, %v3350
        %v3366 = vpack.c.b16 %v3353, %v3352
        %v3367 = vpack.c.b16 %v3355, %v3354
        %3380 = vmatprep.subr.bf16.mxu0 0
        %3381 = vmatpush1.bf16.msra.mxu0 %v536
        %3382 = vmatprep.subr.bf16.mxu0 0
        %3383 = vmatpush1.bf16.msra.mxu0 %v537
        %3384 = vmatprep.subr.bf16.mxu0 0
        %3385 = vmatpush1.bf16.msra.mxu0 %v538
        %3386 = vmatprep.subr.bf16.mxu0 0
        %3387 = vmatpush1.bf16.msra.mxu0 %v539
        %3388 = vmatprep.subr.bf16.mxu0 0
        %3389 = vmatpush1.bf16.msra.mxu0 %v540
        %3390 = vmatprep.subr.bf16.mxu0 0
        %3391 = vmatpush1.bf16.msra.mxu0 %v541
        %3392 = vmatprep.subr.bf16.mxu0 0
        %3393 = vmatpush1.bf16.msra.mxu0 %v542
        %3394 = vmatprep.subr.bf16.mxu0 0
        %3395 = vmatpush1.bf16.msra.mxu0 %v543
        %3396 = vmatprep.subr.bf16.mxu0 0
        %3397 = vmatpush1.bf16.msra.mxu0 0
        %3398 = vmatprep.subr.bf16.mxu0 0
        %3399 = vmatpush1.bf16.msra.mxu0 0
        %3400 = vmatprep.subr.bf16.mxu0 0
        %3401 = vmatpush1.bf16.msra.mxu0 0
        %3402 = vmatprep.subr.bf16.mxu0 0
        %3403 = vmatpush1.bf16.msra.mxu0 0
        %3404 = vmatprep.subr.bf16.mxu0 0
        %3405 = vmatpush1.bf16.msra.mxu0 0
        %3406 = vmatprep.subr.bf16.mxu0 0
        %3407 = vmatpush1.bf16.msra.mxu0 0
        %3408 = vmatprep.subr.bf16.mxu0 0
        %3409 = vmatpush1.bf16.msra.mxu0 0
        %3410 = vmatprep.subr.bf16.mxu0 0
        %3411 = vmatpush1.bf16.msra.mxu0 0
        %3412 = vmatprep.mubr.bf16.mxu0 0
        %3413 = vmatmul.mubr.bf16.gmra.mrb[0].mxu0 %v3356
        %v3414 = vpop.f32.mrb[0].mxu0
        %v3415 = vadd.f32 %v430, %v3414
        %v3416 = vpop.f32.mrb[0].mxu0
        %v3417 = vpop.f32.mrb[0].mxu0
        %v3418 = vadd.f32 %v430, %v3417
        %v3419 = vpop.f32.mrb[0].mxu0
        %3420 = vmatprep.mubr.bf16.mxu0 0
        %3421 = vmatmul.mubr.bf16.gmra.mrb[0].mxu0 %v3357
        %v3422 = vpop.f32.mrb[0].mxu0
        %v3423 = vadd.f32 %v430, %v3422
        %v3424 = vpop.f32.mrb[0].mxu0
        %v3425 = vpop.f32.mrb[0].mxu0
        %v3426 = vadd.f32 %v430, %v3425
        %v3427 = vpop.f32.mrb[0].mxu0
        %3428 = vmatprep.mubr.bf16.mxu0 0
        %3429 = vmatmul.mubr.bf16.gmra.mrb[0].mxu0 %v3358
        %v3430 = vpop.f32.mrb[0].mxu0
        %v3431 = vadd.f32 %v430, %v3430
        %v3432 = vpop.f32.mrb[0].mxu0
        %v3433 = vpop.f32.mrb[0].mxu0
        %v3434 = vadd.f32 %v430, %v3433
        %v3435 = vpop.f32.mrb[0].mxu0
        %3436 = vmatprep.mubr.bf16.mxu0 0
        %3437 = vmatmul.mubr.bf16.gmra.mrb[0].mxu0 %v3359
        %v3438 = vpop.f32.mrb[0].mxu0
        %v3439 = vadd.f32 %v430, %v3438
        %v3440 = vpop.f32.mrb[0].mxu0
        %v3441 = vpop.f32.mrb[0].mxu0
        %v3442 = vadd.f32 %v430, %v3441
        %v3443 = vpop.f32.mrb[0].mxu0
        %3444 = vmatprep.mubr.bf16.mxu0 0
        %3445 = vmatmul.mubr.bf16.gmra.mrb[0].mxu0 %v3360
        %v3446 = vpop.f32.mrb[0].mxu0
        %v3447 = vadd.f32 %v430, %v3446
        %v3448 = vpop.f32.mrb[0].mxu0
        %v3449 = vpop.f32.mrb[0].mxu0
        %v3450 = vadd.f32 %v430, %v3449
        %v3451 = vpop.f32.mrb[0].mxu0
        %3452 = vmatprep.mubr.bf16.mxu0 0
        %3453 = vmatmul.mubr.bf16.gmra.mrb[0].mxu0 %v3361
        %v3454 = vpop.f32.mrb[0].mxu0
        %v3455 = vadd.f32 %v430, %v3454
        %v3456 = vpop.f32.mrb[0].mxu0
        %v3457 = vpop.f32.mrb[0].mxu0
        %v3458 = vadd.f32 %v430, %v3457
        %v3459 = vpop.f32.mrb[0].mxu0
        %3460 = vmatprep.mubr.bf16.mxu0 0
        %3461 = vmatmul.mubr.bf16.gmra.mrb[0].mxu0 %v3362
        %v3462 = vpop.f32.mrb[0].mxu0
        %v3463 = vadd.f32 %v430, %v3462
        %v3464 = vpop.f32.mrb[0].mxu0
        %v3465 = vpop.f32.mrb[0].mxu0
        %v3466 = vadd.f32 %v430, %v3465
        %v3467 = vpop.f32.mrb[0].mxu0
        %3468 = vmatprep.mubr.bf16.mxu0 0
        %3469 = vmatmul.mubr.bf16.gmra.mrb[0].mxu0 %v3363
        %v3470 = vpop.f32.mrb[0].mxu0
        %v3471 = vadd.f32 %v430, %v3470
        %v3472 = vpop.f32.mrb[0].mxu0
        %v3473 = vpop.f32.mrb[0].mxu0
        %v3474 = vadd.f32 %v430, %v3473
        %v3475 = vpop.f32.mrb[0].mxu0
        %3476 = vmatprep.mubr.bf16.mxu0 0
        %3477 = vmatmul.mubr.bf16.gmra.mrb[0].mxu0 %v3364
        %v3478 = vpop.f32.mrb[0].mxu0
        %v3479 = vadd.f32 %v430, %v3478
        %v3480 = vpop.f32.mrb[0].mxu0
        %v3481 = vpop.f32.mrb[0].mxu0
        %v3482 = vadd.f32 %v430, %v3481
        %v3483 = vpop.f32.mrb[0].mxu0
        %3484 = vmatprep.mubr.bf16.mxu0 0
        %3485 = vmatmul.mubr.bf16.gmra.mrb[0].mxu0 %v3365
        %v3486 = vpop.f32.mrb[0].mxu0
        %v3487 = vadd.f32 %v430, %v3486
        %v3488 = vpop.f32.mrb[0].mxu0
        %v3489 = vpop.f32.mrb[0].mxu0
        %v3490 = vadd.f32 %v430, %v3489
        %v3491 = vpop.f32.mrb[0].mxu0
        %3492 = vmatprep.mubr.bf16.mxu0 0
        %3493 = vmatmul.mubr.bf16.gmra.mrb[0].mxu0 %v3366
        %v3494 = vpop.f32.mrb[0].mxu0
        %v3495 = vadd.f32 %v430, %v3494
        %v3496 = vpop.f32.mrb[0].mxu0
        %v3497 = vpop.f32.mrb[0].mxu0
        %v3498 = vadd.f32 %v430, %v3497
        %v3499 = vpop.f32.mrb[0].mxu0
        %3500 = vmatprep.mubr.bf16.mxu0 0
        %3501 = vmatmul.mubr.bf16.gmra.mrb[0].mxu0 %v3367
        %v3502 = vpop.f32.mrb[0].mxu0
        %v3503 = vadd.f32 %v430, %v3502
        %v3504 = vpop.f32.mrb[0].mxu0
        %v3505 = vpop.f32.mrb[0].mxu0
        %v3506 = vadd.f32 %v430, %v3505
        %v3507 = vpop.f32.mrb[0].mxu0
        %3508 = vdwg.mxu0
        %v3509 = vmax.f32 %v3415, 0.0
        %v3510 = vmax.f32 %v3418, 0.0
        %v3511 = vmax.f32 %v3423, 0.0
        %v3512 = vmax.f32 %v3426, 0.0
        %v3513 = vmax.f32 %v3431, 0.0
        %v3514 = vmax.f32 %v3434, 0.0
        %v3515 = vmax.f32 %v3439, 0.0
        %v3516 = vmax.f32 %v3442, 0.0
        %v3517 = vmax.f32 %v3447, 0.0
        %v3518 = vmax.f32 %v3450, 0.0
        %v3519 = vmax.f32 %v3455, 0.0
        %v3520 = vmax.f32 %v3458, 0.0
        %v3521 = vmax.f32 %v3463, 0.0
        %v3522 = vmax.f32 %v3466, 0.0
        %v3523 = vmax.f32 %v3471, 0.0
        %v3524 = vmax.f32 %v3474, 0.0
        %v3525 = vmax.f32 %v3479, 0.0
        %v3526 = vmax.f32 %v3482, 0.0
        %v3527 = vmax.f32 %v3487, 0.0
        %v3528 = vmax.f32 %v3490, 0.0
        %v3529 = vmax.f32 %v3495, 0.0
        %v3530 = vmax.f32 %v3498, 0.0
        %v3531 = vmax.f32 %v3503, 0.0
        %v3532 = vmax.f32 %v3506, 0.0
        %v3557 = vcombine.high %v3509, %v3509
        %v3559 = vunpack.c.l.s4 1983009808
        %v3560 = vunpack.c.0.s8 %v3559
        %v3561 = vlaneseq
        %v3562 = vshrl.u32 %v3561, 7
        %v3563 = vsub.s32 %v3560, %v3562
        %v3564 = vrot.slane %v3509, %v3563
        %v3566 = vunpack.c.l.s4 1983009808
        %v3567 = vunpack.c.0.s8 %v3566
        %v3568 = vlaneseq
        %v3569 = vshrl.u32 %v3568, 7
        %v3570 = vsub.s32 %v3567, %v3569
        %v3571 = vrot.slane %v3557, %v3570
        %v3572 = vcombine.high %v3564, %v3564
        %v3573 = vcombine.high %v3571, %v3571
        %v3574 = vcombine.high %v3510, %v3510
        %v3576 = vunpack.c.l.s4 1983009808
        %v3577 = vunpack.c.0.s8 %v3576
        %v3578 = vlaneseq
        %v3579 = vshrl.u32 %v3578, 7
        %v3580 = vsub.s32 %v3577, %v3579
        %v3581 = vrot.slane %v3510, %v3580
        %v3583 = vunpack.c.l.s4 1983009808
        %v3584 = vunpack.c.0.s8 %v3583
        %v3585 = vlaneseq
        %v3586 = vshrl.u32 %v3585, 7
        %v3587 = vsub.s32 %v3584, %v3586
        %v3588 = vrot.slane %v3574, %v3587
        %v3589 = vcombine.high %v3581, %v3581
        %v3590 = vcombine.high %v3588, %v3588
        %v3591 = vcombine.high %v3511, %v3511
        %v3593 = vunpack.c.l.s4 1983009808
        %v3594 = vunpack.c.0.s8 %v3593
        %v3595 = vlaneseq
        %v3596 = vshrl.u32 %v3595, 7
        %v3597 = vsub.s32 %v3594, %v3596
        %v3598 = vrot.slane %v3511, %v3597
        %v3600 = vunpack.c.l.s4 1983009808
        %v3601 = vunpack.c.0.s8 %v3600
        %v3602 = vlaneseq
        %v3603 = vshrl.u32 %v3602, 7
        %v3604 = vsub.s32 %v3601, %v3603
        %v3605 = vrot.slane %v3591, %v3604
        %v3606 = vcombine.high %v3598, %v3598
        %v3607 = vcombine.high %v3605, %v3605
        %v3608 = vcombine.high %v3512, %v3512
        %v3610 = vunpack.c.l.s4 1983009808
        %v3611 = vunpack.c.0.s8 %v3610
        %v3612 = vlaneseq
        %v3613 = vshrl.u32 %v3612, 7
        %v3614 = vsub.s32 %v3611, %v3613
        %v3615 = vrot.slane %v3512, %v3614
        %v3617 = vunpack.c.l.s4 1983009808
        %v3618 = vunpack.c.0.s8 %v3617
        %v3619 = vlaneseq
        %v3620 = vshrl.u32 %v3619, 7
        %v3621 = vsub.s32 %v3618, %v3620
        %v3622 = vrot.slane %v3608, %v3621
        %v3623 = vcombine.high %v3615, %v3615
        %v3624 = vcombine.high %v3622, %v3622
        %v3625 = vcombine.high %v3513, %v3513
        %v3627 = vunpack.c.l.s4 1983009808
        %v3628 = vunpack.c.0.s8 %v3627
        %v3629 = vlaneseq
        %v3630 = vshrl.u32 %v3629, 7
        %v3631 = vsub.s32 %v3628, %v3630
        %v3632 = vrot.slane %v3513, %v3631
        %v3634 = vunpack.c.l.s4 1983009808
        %v3635 = vunpack.c.0.s8 %v3634
        %v3636 = vlaneseq
        %v3637 = vshrl.u32 %v3636, 7
        %v3638 = vsub.s32 %v3635, %v3637
        %v3639 = vrot.slane %v3625, %v3638
        %v3640 = vcombine.high %v3632, %v3632
        %v3641 = vcombine.high %v3639, %v3639
        %v3642 = vcombine.high %v3514, %v3514
        %v3644 = vunpack.c.l.s4 1983009808
        %v3645 = vunpack.c.0.s8 %v3644
        %v3646 = vlaneseq
        %v3647 = vshrl.u32 %v3646, 7
        %v3648 = vsub.s32 %v3645, %v3647
        %v3649 = vrot.slane %v3514, %v3648
        %v3651 = vunpack.c.l.s4 1983009808
        %v3652 = vunpack.c.0.s8 %v3651
        %v3653 = vlaneseq
        %v3654 = vshrl.u32 %v3653, 7
        %v3655 = vsub.s32 %v3652, %v3654
        %v3656 = vrot.slane %v3642, %v3655
        %v3657 = vcombine.high %v3649, %v3649
        %v3658 = vcombine.high %v3656, %v3656
        %v3659 = vcombine.high %v3515, %v3515
        %v3661 = vunpack.c.l.s4 1983009808
        %v3662 = vunpack.c.0.s8 %v3661
        %v3663 = vlaneseq
        %v3664 = vshrl.u32 %v3663, 7
        %v3665 = vsub.s32 %v3662, %v3664
        %v3666 = vrot.slane %v3515, %v3665
        %v3668 = vunpack.c.l.s4 1983009808
        %v3669 = vunpack.c.0.s8 %v3668
        %v3670 = vlaneseq
        %v3671 = vshrl.u32 %v3670, 7
        %v3672 = vsub.s32 %v3669, %v3671
        %v3673 = vrot.slane %v3659, %v3672
        %v3674 = vcombine.high %v3666, %v3666
        %v3675 = vcombine.high %v3673, %v3673
        %v3676 = vcombine.high %v3516, %v3516
        %v3678 = vunpack.c.l.s4 1983009808
        %v3679 = vunpack.c.0.s8 %v3678
        %v3680 = vlaneseq
        %v3681 = vshrl.u32 %v3680, 7
        %v3682 = vsub.s32 %v3679, %v3681
        %v3683 = vrot.slane %v3516, %v3682
        %v3685 = vunpack.c.l.s4 1983009808
        %v3686 = vunpack.c.0.s8 %v3685
        %v3687 = vlaneseq
        %v3688 = vshrl.u32 %v3687, 7
        %v3689 = vsub.s32 %v3686, %v3688
        %v3690 = vrot.slane %v3676, %v3689
        %v3691 = vcombine.high %v3683, %v3683
        %v3692 = vcombine.high %v3690, %v3690
        %v3693 = vcombine.high %v3517, %v3517
        %v3695 = vunpack.c.l.s4 1983009808
        %v3696 = vunpack.c.0.s8 %v3695
        %v3697 = vlaneseq
        %v3698 = vshrl.u32 %v3697, 7
        %v3699 = vsub.s32 %v3696, %v3698
        %v3700 = vrot.slane %v3517, %v3699
        %v3702 = vunpack.c.l.s4 1983009808
        %v3703 = vunpack.c.0.s8 %v3702
        %v3704 = vlaneseq
        %v3705 = vshrl.u32 %v3704, 7
        %v3706 = vsub.s32 %v3703, %v3705
        %v3707 = vrot.slane %v3693, %v3706
        %v3708 = vcombine.high %v3700, %v3700
        %v3709 = vcombine.high %v3707, %v3707
        %v3710 = vcombine.high %v3518, %v3518
        %v3712 = vunpack.c.l.s4 1983009808
        %v3713 = vunpack.c.0.s8 %v3712
        %v3714 = vlaneseq
        %v3715 = vshrl.u32 %v3714, 7
        %v3716 = vsub.s32 %v3713, %v3715
        %v3717 = vrot.slane %v3518, %v3716
        %v3719 = vunpack.c.l.s4 1983009808
        %v3720 = vunpack.c.0.s8 %v3719
        %v3721 = vlaneseq
        %v3722 = vshrl.u32 %v3721, 7
        %v3723 = vsub.s32 %v3720, %v3722
        %v3724 = vrot.slane %v3710, %v3723
        %v3725 = vcombine.high %v3717, %v3717
        %v3726 = vcombine.high %v3724, %v3724
        %v3727 = vcombine.high %v3519, %v3519
        %v3729 = vunpack.c.l.s4 1983009808
        %v3730 = vunpack.c.0.s8 %v3729
        %v3731 = vlaneseq
        %v3732 = vshrl.u32 %v3731, 7
        %v3733 = vsub.s32 %v3730, %v3732
        %v3734 = vrot.slane %v3519, %v3733
        %v3736 = vunpack.c.l.s4 1983009808
        %v3737 = vunpack.c.0.s8 %v3736
        %v3738 = vlaneseq
        %v3739 = vshrl.u32 %v3738, 7
        %v3740 = vsub.s32 %v3737, %v3739
        %v3741 = vrot.slane %v3727, %v3740
        %v3742 = vcombine.high %v3734, %v3734
        %v3743 = vcombine.high %v3741, %v3741
        %v3744 = vcombine.high %v3520, %v3520
        %v3746 = vunpack.c.l.s4 1983009808
        %v3747 = vunpack.c.0.s8 %v3746
        %v3748 = vlaneseq
        %v3749 = vshrl.u32 %v3748, 7
        %v3750 = vsub.s32 %v3747, %v3749
        %v3751 = vrot.slane %v3520, %v3750
        %v3753 = vunpack.c.l.s4 1983009808
        %v3754 = vunpack.c.0.s8 %v3753
        %v3755 = vlaneseq
        %v3756 = vshrl.u32 %v3755, 7
        %v3757 = vsub.s32 %v3754, %v3756
        %v3758 = vrot.slane %v3744, %v3757
        %v3759 = vcombine.high %v3751, %v3751
        %v3760 = vcombine.high %v3758, %v3758
        %v3761 = vcombine.high %v3521, %v3521
        %v3763 = vunpack.c.l.s4 1983009808
        %v3764 = vunpack.c.0.s8 %v3763
        %v3765 = vlaneseq
        %v3766 = vshrl.u32 %v3765, 7
        %v3767 = vsub.s32 %v3764, %v3766
        %v3768 = vrot.slane %v3521, %v3767
        %v3770 = vunpack.c.l.s4 1983009808
        %v3771 = vunpack.c.0.s8 %v3770
        %v3772 = vlaneseq
        %v3773 = vshrl.u32 %v3772, 7
        %v3774 = vsub.s32 %v3771, %v3773
        %v3775 = vrot.slane %v3761, %v3774
        %v3776 = vcombine.high %v3768, %v3768
        %v3777 = vcombine.high %v3775, %v3775
        %v3778 = vcombine.high %v3522, %v3522
        %v3780 = vunpack.c.l.s4 1983009808
        %v3781 = vunpack.c.0.s8 %v3780
        %v3782 = vlaneseq
        %v3783 = vshrl.u32 %v3782, 7
        %v3784 = vsub.s32 %v3781, %v3783
        %v3785 = vrot.slane %v3522, %v3784
        %v3787 = vunpack.c.l.s4 1983009808
        %v3788 = vunpack.c.0.s8 %v3787
        %v3789 = vlaneseq
        %v3790 = vshrl.u32 %v3789, 7
        %v3791 = vsub.s32 %v3788, %v3790
        %v3792 = vrot.slane %v3778, %v3791
        %v3793 = vcombine.high %v3785, %v3785
        %v3794 = vcombine.high %v3792, %v3792
        %v3795 = vcombine.high %v3523, %v3523
        %v3797 = vunpack.c.l.s4 1983009808
        %v3798 = vunpack.c.0.s8 %v3797
        %v3799 = vlaneseq
        %v3800 = vshrl.u32 %v3799, 7
        %v3801 = vsub.s32 %v3798, %v3800
        %v3802 = vrot.slane %v3523, %v3801
        %v3804 = vunpack.c.l.s4 1983009808
        %v3805 = vunpack.c.0.s8 %v3804
        %v3806 = vlaneseq
        %v3807 = vshrl.u32 %v3806, 7
        %v3808 = vsub.s32 %v3805, %v3807
        %v3809 = vrot.slane %v3795, %v3808
        %v3810 = vcombine.high %v3802, %v3802
        %v3811 = vcombine.high %v3809, %v3809
        %v3812 = vcombine.high %v3524, %v3524
        %v3814 = vunpack.c.l.s4 1983009808
        %v3815 = vunpack.c.0.s8 %v3814
        %v3816 = vlaneseq
        %v3817 = vshrl.u32 %v3816, 7
        %v3818 = vsub.s32 %v3815, %v3817
        %v3819 = vrot.slane %v3524, %v3818
        %v3821 = vunpack.c.l.s4 1983009808
        %v3822 = vunpack.c.0.s8 %v3821
        %v3823 = vlaneseq
        %v3824 = vshrl.u32 %v3823, 7
        %v3825 = vsub.s32 %v3822, %v3824
        %v3826 = vrot.slane %v3812, %v3825
        %v3827 = vcombine.high %v3819, %v3819
        %v3828 = vcombine.high %v3826, %v3826
        %v3829 = vcombine.high %v3525, %v3525
        %v3831 = vunpack.c.l.s4 1983009808
        %v3832 = vunpack.c.0.s8 %v3831
        %v3833 = vlaneseq
        %v3834 = vshrl.u32 %v3833, 7
        %v3835 = vsub.s32 %v3832, %v3834
        %v3836 = vrot.slane %v3525, %v3835
        %v3838 = vunpack.c.l.s4 1983009808
        %v3839 = vunpack.c.0.s8 %v3838
        %v3840 = vlaneseq
        %v3841 = vshrl.u32 %v3840, 7
        %v3842 = vsub.s32 %v3839, %v3841
        %v3843 = vrot.slane %v3829, %v3842
        %v3844 = vcombine.high %v3836, %v3836
        %v3845 = vcombine.high %v3843, %v3843
        %v3846 = vcombine.high %v3526, %v3526
        %v3848 = vunpack.c.l.s4 1983009808
        %v3849 = vunpack.c.0.s8 %v3848
        %v3850 = vlaneseq
        %v3851 = vshrl.u32 %v3850, 7
        %v3852 = vsub.s32 %v3849, %v3851
        %v3853 = vrot.slane %v3526, %v3852
        %v3855 = vunpack.c.l.s4 1983009808
        %v3856 = vunpack.c.0.s8 %v3855
        %v3857 = vlaneseq
        %v3858 = vshrl.u32 %v3857, 7
        %v3859 = vsub.s32 %v3856, %v3858
        %v3860 = vrot.slane %v3846, %v3859
        %v3861 = vcombine.high %v3853, %v3853
        %v3862 = vcombine.high %v3860, %v3860
        %v3863 = vcombine.high %v3527, %v3527
        %v3865 = vunpack.c.l.s4 1983009808
        %v3866 = vunpack.c.0.s8 %v3865
        %v3867 = vlaneseq
        %v3868 = vshrl.u32 %v3867, 7
        %v3869 = vsub.s32 %v3866, %v3868
        %v3870 = vrot.slane %v3527, %v3869
        %v3872 = vunpack.c.l.s4 1983009808
        %v3873 = vunpack.c.0.s8 %v3872
        %v3874 = vlaneseq
        %v3875 = vshrl.u32 %v3874, 7
        %v3876 = vsub.s32 %v3873, %v3875
        %v3877 = vrot.slane %v3863, %v3876
        %v3878 = vcombine.high %v3870, %v3870
        %v3879 = vcombine.high %v3877, %v3877
        %v3880 = vcombine.high %v3528, %v3528
        %v3882 = vunpack.c.l.s4 1983009808
        %v3883 = vunpack.c.0.s8 %v3882
        %v3884 = vlaneseq
        %v3885 = vshrl.u32 %v3884, 7
        %v3886 = vsub.s32 %v3883, %v3885
        %v3887 = vrot.slane %v3528, %v3886
        %v3889 = vunpack.c.l.s4 1983009808
        %v3890 = vunpack.c.0.s8 %v3889
        %v3891 = vlaneseq
        %v3892 = vshrl.u32 %v3891, 7
        %v3893 = vsub.s32 %v3890, %v3892
        %v3894 = vrot.slane %v3880, %v3893
        %v3895 = vcombine.high %v3887, %v3887
        %v3896 = vcombine.high %v3894, %v3894
        %v3897 = vcombine.high %v3529, %v3529
        %v3899 = vunpack.c.l.s4 1983009808
        %v3900 = vunpack.c.0.s8 %v3899
        %v3901 = vlaneseq
        %v3902 = vshrl.u32 %v3901, 7
        %v3903 = vsub.s32 %v3900, %v3902
        %v3904 = vrot.slane %v3529, %v3903
        %v3906 = vunpack.c.l.s4 1983009808
        %v3907 = vunpack.c.0.s8 %v3906
        %v3908 = vlaneseq
        %v3909 = vshrl.u32 %v3908, 7
        %v3910 = vsub.s32 %v3907, %v3909
        %v3911 = vrot.slane %v3897, %v3910
        %v3912 = vcombine.high %v3904, %v3904
        %v3913 = vcombine.high %v3911, %v3911
        %v3914 = vcombine.high %v3530, %v3530
        %v3916 = vunpack.c.l.s4 1983009808
        %v3917 = vunpack.c.0.s8 %v3916
        %v3918 = vlaneseq
        %v3919 = vshrl.u32 %v3918, 7
        %v3920 = vsub.s32 %v3917, %v3919
        %v3921 = vrot.slane %v3530, %v3920
        %v3923 = vunpack.c.l.s4 1983009808
        %v3924 = vunpack.c.0.s8 %v3923
        %v3925 = vlaneseq
        %v3926 = vshrl.u32 %v3925, 7
        %v3927 = vsub.s32 %v3924, %v3926
        %v3928 = vrot.slane %v3914, %v3927
        %v3929 = vcombine.high %v3921, %v3921
        %v3930 = vcombine.high %v3928, %v3928
        %v3931 = vcombine.high %v3531, %v3531
        %v3933 = vunpack.c.l.s4 1983009808
        %v3934 = vunpack.c.0.s8 %v3933
        %v3935 = vlaneseq
        %v3936 = vshrl.u32 %v3935, 7
        %v3937 = vsub.s32 %v3934, %v3936
        %v3938 = vrot.slane %v3531, %v3937
        %v3940 = vunpack.c.l.s4 1983009808
        %v3941 = vunpack.c.0.s8 %v3940
        %v3942 = vlaneseq
        %v3943 = vshrl.u32 %v3942, 7
        %v3944 = vsub.s32 %v3941, %v3943
        %v3945 = vrot.slane %v3931, %v3944
        %v3946 = vcombine.high %v3938, %v3938
        %v3947 = vcombine.high %v3945, %v3945
        %v3948 = vcombine.high %v3532, %v3532
        %v3950 = vunpack.c.l.s4 1983009808
        %v3951 = vunpack.c.0.s8 %v3950
        %v3952 = vlaneseq
        %v3953 = vshrl.u32 %v3952, 7
        %v3954 = vsub.s32 %v3951, %v3953
        %v3955 = vrot.slane %v3532, %v3954
        %v3957 = vunpack.c.l.s4 1983009808
        %v3958 = vunpack.c.0.s8 %v3957
        %v3959 = vlaneseq
        %v3960 = vshrl.u32 %v3959, 7
        %v3961 = vsub.s32 %v3958, %v3960
        %v3962 = vrot.slane %v3948, %v3961
        %v3963 = vcombine.high %v3955, %v3955
        %v3964 = vcombine.high %v3962, %v3962
        %v4061 = vmax.f32 %v3564, %v3615
        %v4062 = vmax.f32 %v3572, %v3623
        %v4063 = vmax.f32 %v3571, %v3622
        %v4064 = vmax.f32 %v3573, %v3624
        %v4065 = vmax.f32 %v3581, %v3632
        %v4066 = vmax.f32 %v3589, %v3640
        %v4067 = vmax.f32 %v3588, %v3639
        %v4068 = vmax.f32 %v3590, %v3641
        %v4069 = vmax.f32 %v3598, %v3649
        %v4070 = vmax.f32 %v3606, %v3657
        %v4071 = vmax.f32 %v3605, %v3656
        %v4072 = vmax.f32 %v3607, %v3658
        %v4073 = vmax.f32 %v3666, %v3717
        %v4074 = vmax.f32 %v3674, %v3725
        %v4075 = vmax.f32 %v3673, %v3724
        %v4076 = vmax.f32 %v3675, %v3726
        %v4077 = vmax.f32 %v3683, %v3734
        %v4078 = vmax.f32 %v3691, %v3742
        %v4079 = vmax.f32 %v3690, %v3741
        %v4080 = vmax.f32 %v3692, %v3743
        %v4081 = vmax.f32 %v3700, %v3751
        %v4082 = vmax.f32 %v3708, %v3759
        %v4083 = vmax.f32 %v3707, %v3758
        %v4084 = vmax.f32 %v3709, %v3760
        %v4085 = vmax.f32 %v3768, %v3819
        %v4086 = vmax.f32 %v3776, %v3827
        %v4087 = vmax.f32 %v3775, %v3826
        %v4088 = vmax.f32 %v3777, %v3828
        %v4089 = vmax.f32 %v3785, %v3836
        %v4090 = vmax.f32 %v3793, %v3844
        %v4091 = vmax.f32 %v3792, %v3843
        %v4092 = vmax.f32 %v3794, %v3845
        %v4093 = vmax.f32 %v3802, %v3853
        %v4094 = vmax.f32 %v3810, %v3861
        %v4095 = vmax.f32 %v3809, %v3860
        %v4096 = vmax.f32 %v3811, %v3862
        %v4097 = vmax.f32 %v3870, %v3921
        %v4098 = vmax.f32 %v3878, %v3929
        %v4099 = vmax.f32 %v3877, %v3928
        %v4100 = vmax.f32 %v3879, %v3930
        %v4101 = vmax.f32 %v3887, %v3938
        %v4102 = vmax.f32 %v3895, %v3946
        %v4103 = vmax.f32 %v3894, %v3945
        %v4104 = vmax.f32 %v3896, %v3947
        %v4105 = vmax.f32 %v3904, %v3955
        %v4106 = vmax.f32 %v3912, %v3963
        %v4107 = vmax.f32 %v3911, %v3962
        %v4108 = vmax.f32 %v3913, %v3964
        %v4157 = vrot.slane %v4061, 7
        %v4158 = vrot.slane %v4157, 2
        %v4159 = vrot.slane %v4062, 7
        %v4160 = vrot.slane %v4159, 2
        %v4161 = vrot.slane %v4063, 7
        %v4162 = vrot.slane %v4161, 2
        %v4163 = vrot.slane %v4064, 7
        %v4164 = vrot.slane %v4163, 2
        %v4165 = vrot.slane %v4065, 7
        %v4166 = vrot.slane %v4165, 2
        %v4167 = vrot.slane %v4066, 7
        %v4168 = vrot.slane %v4167, 2
        %v4169 = vrot.slane %v4067, 7
        %v4170 = vrot.slane %v4169, 2
        %v4171 = vrot.slane %v4068, 7
        %v4172 = vrot.slane %v4171, 2
        %v4173 = vrot.slane %v4069, 7
        %v4174 = vrot.slane %v4173, 2
        %v4175 = vrot.slane %v4070, 7
        %v4176 = vrot.slane %v4175, 2
        %v4177 = vrot.slane %v4071, 7
        %v4178 = vrot.slane %v4177, 2
        %v4179 = vrot.slane %v4072, 7
        %v4180 = vrot.slane %v4179, 2
        %v4181 = vrot.slane %v4073, 7
        %v4182 = vrot.slane %v4181, 2
        %v4183 = vrot.slane %v4074, 7
        %v4184 = vrot.slane %v4183, 2
        %v4185 = vrot.slane %v4075, 7
        %v4186 = vrot.slane %v4185, 2
        %v4187 = vrot.slane %v4076, 7
        %v4188 = vrot.slane %v4187, 2
        %v4189 = vrot.slane %v4077, 7
        %v4190 = vrot.slane %v4189, 2
        %v4191 = vrot.slane %v4078, 7
        %v4192 = vrot.slane %v4191, 2
        %v4193 = vrot.slane %v4079, 7
        %v4194 = vrot.slane %v4193, 2
        %v4195 = vrot.slane %v4080, 7
        %v4196 = vrot.slane %v4195, 2
        %v4197 = vrot.slane %v4081, 7
        %v4198 = vrot.slane %v4197, 2
        %v4199 = vrot.slane %v4082, 7
        %v4200 = vrot.slane %v4199, 2
        %v4201 = vrot.slane %v4083, 7
        %v4202 = vrot.slane %v4201, 2
        %v4203 = vrot.slane %v4084, 7
        %v4204 = vrot.slane %v4203, 2
        %v4205 = vrot.slane %v4085, 7
        %v4206 = vrot.slane %v4205, 2
        %v4207 = vrot.slane %v4086, 7
        %v4208 = vrot.slane %v4207, 2
        %v4209 = vrot.slane %v4087, 7
        %v4210 = vrot.slane %v4209, 2
        %v4211 = vrot.slane %v4088, 7
        %v4212 = vrot.slane %v4211, 2
        %v4213 = vrot.slane %v4089, 7
        %v4214 = vrot.slane %v4213, 2
        %v4215 = vrot.slane %v4090, 7
        %v4216 = vrot.slane %v4215, 2
        %v4217 = vrot.slane %v4091, 7
        %v4218 = vrot.slane %v4217, 2
        %v4219 = vrot.slane %v4092, 7
        %v4220 = vrot.slane %v4219, 2
        %v4221 = vrot.slane %v4093, 7
        %v4222 = vrot.slane %v4221, 2
        %v4223 = vrot.slane %v4094, 7
        %v4224 = vrot.slane %v4223, 2
        %v4225 = vrot.slane %v4095, 7
        %v4226 = vrot.slane %v4225, 2
        %v4227 = vrot.slane %v4096, 7
        %v4228 = vrot.slane %v4227, 2
        %v4229 = vrot.slane %v4097, 7
        %v4230 = vrot.slane %v4229, 2
        %v4231 = vrot.slane %v4098, 7
        %v4232 = vrot.slane %v4231, 2
        %v4233 = vrot.slane %v4099, 7
        %v4234 = vrot.slane %v4233, 2
        %v4235 = vrot.slane %v4100, 7
        %v4236 = vrot.slane %v4235, 2
        %v4237 = vrot.slane %v4101, 7
        %v4238 = vrot.slane %v4237, 2
        %v4239 = vrot.slane %v4102, 7
        %v4240 = vrot.slane %v4239, 2
        %v4241 = vrot.slane %v4103, 7
        %v4242 = vrot.slane %v4241, 2
        %v4243 = vrot.slane %v4104, 7
        %v4244 = vrot.slane %v4243, 2
        %v4245 = vrot.slane %v4105, 7
        %v4246 = vrot.slane %v4245, 2
        %v4247 = vrot.slane %v4106, 7
        %v4248 = vrot.slane %v4247, 2
        %v4249 = vrot.slane %v4107, 7
        %v4250 = vrot.slane %v4249, 2
        %v4251 = vrot.slane %v4108, 7
        %v4252 = vrot.slane %v4251, 2
        %v4301 = vmax.f32 %v4061, %v4158
        %v4302 = vmax.f32 %v4062, %v4160
        %v4303 = vmax.f32 %v4063, %v4162
        %v4304 = vmax.f32 %v4064, %v4164
        %v4305 = vmax.f32 %v4065, %v4166
        %v4306 = vmax.f32 %v4066, %v4168
        %v4307 = vmax.f32 %v4067, %v4170
        %v4308 = vmax.f32 %v4068, %v4172
        %v4309 = vmax.f32 %v4069, %v4174
        %v4310 = vmax.f32 %v4070, %v4176
        %v4311 = vmax.f32 %v4071, %v4178
        %v4312 = vmax.f32 %v4072, %v4180
        %v4313 = vmax.f32 %v4073, %v4182
        %v4314 = vmax.f32 %v4074, %v4184
        %v4315 = vmax.f32 %v4075, %v4186
        %v4316 = vmax.f32 %v4076, %v4188
        %v4317 = vmax.f32 %v4077, %v4190
        %v4318 = vmax.f32 %v4078, %v4192
        %v4319 = vmax.f32 %v4079, %v4194
        %v4320 = vmax.f32 %v4080, %v4196
        %v4321 = vmax.f32 %v4081, %v4198
        %v4322 = vmax.f32 %v4082, %v4200
        %v4323 = vmax.f32 %v4083, %v4202
        %v4324 = vmax.f32 %v4084, %v4204
        %v4325 = vmax.f32 %v4085, %v4206
        %v4326 = vmax.f32 %v4086, %v4208
        %v4327 = vmax.f32 %v4087, %v4210
        %v4328 = vmax.f32 %v4088, %v4212
        %v4329 = vmax.f32 %v4089, %v4214
        %v4330 = vmax.f32 %v4090, %v4216
        %v4331 = vmax.f32 %v4091, %v4218
        %v4332 = vmax.f32 %v4092, %v4220
        %v4333 = vmax.f32 %v4093, %v4222
        %v4334 = vmax.f32 %v4094, %v4224
        %v4335 = vmax.f32 %v4095, %v4226
        %v4336 = vmax.f32 %v4096, %v4228
        %v4337 = vmax.f32 %v4097, %v4230
        %v4338 = vmax.f32 %v4098, %v4232
        %v4339 = vmax.f32 %v4099, %v4234
        %v4340 = vmax.f32 %v4100, %v4236
        %v4341 = vmax.f32 %v4101, %v4238
        %v4342 = vmax.f32 %v4102, %v4240
        %v4343 = vmax.f32 %v4103, %v4242
        %v4344 = vmax.f32 %v4104, %v4244
        %v4345 = vmax.f32 %v4105, %v4246
        %v4346 = vmax.f32 %v4106, %v4248
        %v4347 = vmax.f32 %v4107, %v4250
        %v4348 = vmax.f32 %v4108, %v4252
        %v4349 = vpack.c.bf16 %v4301, %v4301
        %v4350 = vpack.c.bf16 %v4302, %v4302
        %v4351 = vpack.c.bf16 %v4303, %v4303
        %v4352 = vpack.c.bf16 %v4304, %v4304
        %v4353 = vpack.c.bf16 %v4305, %v4305
        %v4354 = vpack.c.bf16 %v4306, %v4306
        %v4355 = vpack.c.bf16 %v4307, %v4307
        %v4356 = vpack.c.bf16 %v4308, %v4308
        %v4357 = vpack.c.bf16 %v4309, %v4309
        %v4358 = vpack.c.bf16 %v4310, %v4310
        %v4359 = vpack.c.bf16 %v4311, %v4311
        %v4360 = vpack.c.bf16 %v4312, %v4312
        %v4361 = vpack.c.bf16 %v4313, %v4313
        %v4362 = vpack.c.bf16 %v4314, %v4314
        %v4363 = vpack.c.bf16 %v4315, %v4315
        %v4364 = vpack.c.bf16 %v4316, %v4316
        %v4365 = vpack.c.bf16 %v4317, %v4317
        %v4366 = vpack.c.bf16 %v4318, %v4318
        %v4367 = vpack.c.bf16 %v4319, %v4319
        %v4368 = vpack.c.bf16 %v4320, %v4320
        %v4369 = vpack.c.bf16 %v4321, %v4321
        %v4370 = vpack.c.bf16 %v4322, %v4322
        %v4371 = vpack.c.bf16 %v4323, %v4323
        %v4372 = vpack.c.bf16 %v4324, %v4324
        %v4373 = vpack.c.bf16 %v4325, %v4325
        %v4374 = vpack.c.bf16 %v4326, %v4326
        %v4375 = vpack.c.bf16 %v4327, %v4327
        %v4376 = vpack.c.bf16 %v4328, %v4328
        %v4377 = vpack.c.bf16 %v4329, %v4329
        %v4378 = vpack.c.bf16 %v4330, %v4330
        %v4379 = vpack.c.bf16 %v4331, %v4331
        %v4380 = vpack.c.bf16 %v4332, %v4332
        %v4381 = vpack.c.bf16 %v4333, %v4333
        %v4382 = vpack.c.bf16 %v4334, %v4334
        %v4383 = vpack.c.bf16 %v4335, %v4335
        %v4384 = vpack.c.bf16 %v4336, %v4336
        %v4385 = vpack.c.bf16 %v4337, %v4337
        %v4386 = vpack.c.bf16 %v4338, %v4338
        %v4387 = vpack.c.bf16 %v4339, %v4339
        %v4388 = vpack.c.bf16 %v4340, %v4340
        %v4389 = vpack.c.bf16 %v4341, %v4341
        %v4390 = vpack.c.bf16 %v4342, %v4342
        %v4391 = vpack.c.bf16 %v4343, %v4343
        %v4392 = vpack.c.bf16 %v4344, %v4344
        %v4393 = vpack.c.bf16 %v4345, %v4345
        %v4394 = vpack.c.bf16 %v4346, %v4346
        %v4395 = vpack.c.bf16 %v4347, %v4347
        %v4396 = vpack.c.bf16 %v4348, %v4348
        %v4445 = vunpack.c.l.b16 %v4349
        %v4446 = vunpack.c.l.b16 %v4350
        %v4447 = vunpack.c.l.b16 %v4351
        %v4448 = vunpack.c.l.b16 %v4352
        %v4449 = vunpack.c.l.b16 %v4353
        %v4450 = vunpack.c.l.b16 %v4354
        %v4451 = vunpack.c.l.b16 %v4355
        %v4452 = vunpack.c.l.b16 %v4356
        %v4453 = vunpack.c.l.b16 %v4357
        %v4454 = vunpack.c.l.b16 %v4358
        %v4455 = vunpack.c.l.b16 %v4359
        %v4456 = vunpack.c.l.b16 %v4360
        %v4457 = vunpack.c.l.b16 %v4361
        %v4458 = vunpack.c.l.b16 %v4362
        %v4459 = vunpack.c.l.b16 %v4363
        %v4460 = vunpack.c.l.b16 %v4364
        %v4461 = vunpack.c.l.b16 %v4365
        %v4462 = vunpack.c.l.b16 %v4366
        %v4463 = vunpack.c.l.b16 %v4367
        %v4464 = vunpack.c.l.b16 %v4368
        %v4465 = vunpack.c.l.b16 %v4369
        %v4466 = vunpack.c.l.b16 %v4370
        %v4467 = vunpack.c.l.b16 %v4371
        %v4468 = vunpack.c.l.b16 %v4372
        %v4469 = vunpack.c.l.b16 %v4373
        %v4470 = vunpack.c.l.b16 %v4374
        %v4471 = vunpack.c.l.b16 %v4375
        %v4472 = vunpack.c.l.b16 %v4376
        %v4473 = vunpack.c.l.b16 %v4377
        %v4474 = vunpack.c.l.b16 %v4378
        %v4475 = vunpack.c.l.b16 %v4379
        %v4476 = vunpack.c.l.b16 %v4380
        %v4477 = vunpack.c.l.b16 %v4381
        %v4478 = vunpack.c.l.b16 %v4382
        %v4479 = vunpack.c.l.b16 %v4383
        %v4480 = vunpack.c.l.b16 %v4384
        %v4481 = vunpack.c.l.b16 %v4385
        %v4482 = vunpack.c.l.b16 %v4386
        %v4483 = vunpack.c.l.b16 %v4387
        %v4484 = vunpack.c.l.b16 %v4388
        %v4485 = vunpack.c.l.b16 %v4389
        %v4486 = vunpack.c.l.b16 %v4390
        %v4487 = vunpack.c.l.b16 %v4391
        %v4488 = vunpack.c.l.b16 %v4392
        %v4489 = vunpack.c.l.b16 %v4393
        %v4490 = vunpack.c.l.b16 %v4394
        %v4491 = vunpack.c.l.b16 %v4395
        %v4492 = vunpack.c.l.b16 %v4396
        %v4493 = vpack.c.b16 %v4445, %v4445
        %v4494 = vpack.c.b16 %v4446, %v4446
        %v4495 = vpack.c.b16 %v4447, %v4447
        %v4496 = vpack.c.b16 %v4448, %v4448
        %v4497 = vpack.c.b16 %v4449, %v4449
        %v4498 = vpack.c.b16 %v4450, %v4450
        %v4499 = vpack.c.b16 %v4451, %v4451
        %v4500 = vpack.c.b16 %v4452, %v4452
        %v4501 = vpack.c.b16 %v4453, %v4453
        %v4502 = vpack.c.b16 %v4454, %v4454
        %v4503 = vpack.c.b16 %v4455, %v4455
        %v4504 = vpack.c.b16 %v4456, %v4456
        %v4505 = vpack.c.b16 %v4457, %v4457
        %v4506 = vpack.c.b16 %v4458, %v4458
        %v4507 = vpack.c.b16 %v4459, %v4459
        %v4508 = vpack.c.b16 %v4460, %v4460
        %v4509 = vpack.c.b16 %v4461, %v4461
        %v4510 = vpack.c.b16 %v4462, %v4462
        %v4511 = vpack.c.b16 %v4463, %v4463
        %v4512 = vpack.c.b16 %v4464, %v4464
        %v4513 = vpack.c.b16 %v4465, %v4465
        %v4514 = vpack.c.b16 %v4466, %v4466
        %v4515 = vpack.c.b16 %v4467, %v4467
        %v4516 = vpack.c.b16 %v4468, %v4468
        %v4517 = vpack.c.b16 %v4469, %v4469
        %v4518 = vpack.c.b16 %v4470, %v4470
        %v4519 = vpack.c.b16 %v4471, %v4471
        %v4520 = vpack.c.b16 %v4472, %v4472
        %v4521 = vpack.c.b16 %v4473, %v4473
        %v4522 = vpack.c.b16 %v4474, %v4474
        %v4523 = vpack.c.b16 %v4475, %v4475
        %v4524 = vpack.c.b16 %v4476, %v4476
        %v4525 = vpack.c.b16 %v4477, %v4477
        %v4526 = vpack.c.b16 %v4478, %v4478
        %v4527 = vpack.c.b16 %v4479, %v4479
        %v4528 = vpack.c.b16 %v4480, %v4480
        %v4529 = vpack.c.b16 %v4481, %v4481
        %v4530 = vpack.c.b16 %v4482, %v4482
        %v4531 = vpack.c.b16 %v4483, %v4483
        %v4532 = vpack.c.b16 %v4484, %v4484
        %v4533 = vpack.c.b16 %v4485, %v4485
        %v4534 = vpack.c.b16 %v4486, %v4486
        %v4535 = vpack.c.b16 %v4487, %v4487
        %v4536 = vpack.c.b16 %v4488, %v4488
        %v4537 = vpack.c.b16 %v4489, %v4489
        %v4538 = vpack.c.b16 %v4490, %v4490
        %v4539 = vpack.c.b16 %v4491, %v4491
        %v4540 = vpack.c.b16 %v4492, %v4492
        %v4541 = vunpack.c.l.b16 %v4493
        %v4542 = vunpack.c.l.b16 %v4494
        %v4543 = vunpack.c.l.b16 %v4495
        %v4544 = vunpack.c.l.b16 %v4496
        %v4545 = vunpack.c.l.b16 %v4497
        %v4546 = vunpack.c.l.b16 %v4498
        %v4547 = vunpack.c.l.b16 %v4499
        %v4548 = vunpack.c.l.b16 %v4500
        %v4549 = vunpack.c.l.b16 %v4501
        %v4550 = vunpack.c.l.b16 %v4502
        %v4551 = vunpack.c.l.b16 %v4503
        %v4552 = vunpack.c.l.b16 %v4504
        %v4553 = vunpack.c.l.b16 %v4505
        %v4554 = vunpack.c.l.b16 %v4506
        %v4555 = vunpack.c.l.b16 %v4507
        %v4556 = vunpack.c.l.b16 %v4508
        %v4557 = vunpack.c.l.b16 %v4509
        %v4558 = vunpack.c.l.b16 %v4510
        %v4559 = vunpack.c.l.b16 %v4511
        %v4560 = vunpack.c.l.b16 %v4512
        %v4561 = vunpack.c.l.b16 %v4513
        %v4562 = vunpack.c.l.b16 %v4514
        %v4563 = vunpack.c.l.b16 %v4515
        %v4564 = vunpack.c.l.b16 %v4516
        %v4565 = vunpack.c.l.b16 %v4517
        %v4566 = vunpack.c.l.b16 %v4518
        %v4567 = vunpack.c.l.b16 %v4519
        %v4568 = vunpack.c.l.b16 %v4520
        %v4569 = vunpack.c.l.b16 %v4521
        %v4570 = vunpack.c.l.b16 %v4522
        %v4571 = vunpack.c.l.b16 %v4523
        %v4572 = vunpack.c.l.b16 %v4524
        %v4573 = vunpack.c.l.b16 %v4525
        %v4574 = vunpack.c.l.b16 %v4526
        %v4575 = vunpack.c.l.b16 %v4527
        %v4576 = vunpack.c.l.b16 %v4528
        %v4577 = vunpack.c.l.b16 %v4529
        %v4578 = vunpack.c.l.b16 %v4530
        %v4579 = vunpack.c.l.b16 %v4531
        %v4580 = vunpack.c.l.b16 %v4532
        %v4581 = vunpack.c.l.b16 %v4533
        %v4582 = vunpack.c.l.b16 %v4534
        %v4583 = vunpack.c.l.b16 %v4535
        %v4584 = vunpack.c.l.b16 %v4536
        %v4585 = vunpack.c.l.b16 %v4537
        %v4586 = vunpack.c.l.b16 %v4538
        %v4587 = vunpack.c.l.b16 %v4539
        %v4588 = vunpack.c.l.b16 %v4540
        %v4589 = vrot.slane %v4542, 7
        %v4590 = vsel %vm1762, %v4589, %v4541
        %v4591 = vrot.slane %v4543, 6
        %v4592 = vsel %vm1765, %v4591, %v4590
        %v4593 = vrot.slane %v4544, 5
        %v4594 = vsel %vm1768, %v4593, %v4592
        %v4595 = vrot.slane %v4545, 4
        %v4596 = vsel %vm1771, %v4595, %v4594
        %v4597 = vrot.slane %v4546, 3
        %v4598 = vsel %vm1774, %v4597, %v4596
        %v4599 = vrot.slane %v4547, 2
        %v4600 = vsel %vm1777, %v4599, %v4598
        %v4601 = vrot.slane %v4548, 1
        %v4602 = vsel %vm1780, %v4601, %v4600
        %v4603 = vrot.slane %v4550, 7
        %v4604 = vsel %vm1762, %v4603, %v4549
        %v4605 = vrot.slane %v4551, 6
        %v4606 = vsel %vm1765, %v4605, %v4604
        %v4607 = vrot.slane %v4552, 5
        %v4608 = vsel %vm1768, %v4607, %v4606
        %v4609 = vrot.slane %v4554, 7
        %v4610 = vsel %vm1762, %v4609, %v4553
        %v4611 = vrot.slane %v4555, 6
        %v4612 = vsel %vm1765, %v4611, %v4610
        %v4613 = vrot.slane %v4556, 5
        %v4614 = vsel %vm1768, %v4613, %v4612
        %v4615 = vrot.slane %v4557, 4
        %v4616 = vsel %vm1771, %v4615, %v4614
        %v4617 = vrot.slane %v4558, 3
        %v4618 = vsel %vm1774, %v4617, %v4616
        %v4619 = vrot.slane %v4559, 2
        %v4620 = vsel %vm1777, %v4619, %v4618
        %v4621 = vrot.slane %v4560, 1
        %v4622 = vsel %vm1780, %v4621, %v4620
        %v4623 = vrot.slane %v4562, 7
        %v4624 = vsel %vm1762, %v4623, %v4561
        %v4625 = vrot.slane %v4563, 6
        %v4626 = vsel %vm1765, %v4625, %v4624
        %v4627 = vrot.slane %v4564, 5
        %v4628 = vsel %vm1768, %v4627, %v4626
        %v4629 = vrot.slane %v4566, 7
        %v4630 = vsel %vm1762, %v4629, %v4565
        %v4631 = vrot.slane %v4567, 6
        %v4632 = vsel %vm1765, %v4631, %v4630
        %v4633 = vrot.slane %v4568, 5
        %v4634 = vsel %vm1768, %v4633, %v4632
        %v4635 = vrot.slane %v4569, 4
        %v4636 = vsel %vm1771, %v4635, %v4634
        %v4637 = vrot.slane %v4570, 3
        %v4638 = vsel %vm1774, %v4637, %v4636
        %v4639 = vrot.slane %v4571, 2
        %v4640 = vsel %vm1777, %v4639, %v4638
        %v4641 = vrot.slane %v4572, 1
        %v4642 = vsel %vm1780, %v4641, %v4640
        %v4643 = vrot.slane %v4574, 7
        %v4644 = vsel %vm1762, %v4643, %v4573
        %v4645 = vrot.slane %v4575, 6
        %v4646 = vsel %vm1765, %v4645, %v4644
        %v4647 = vrot.slane %v4576, 5
        %v4648 = vsel %vm1768, %v4647, %v4646
        %v4649 = vrot.slane %v4578, 7
        %v4650 = vsel %vm1762, %v4649, %v4577
        %v4651 = vrot.slane %v4579, 6
        %v4652 = vsel %vm1765, %v4651, %v4650
        %v4653 = vrot.slane %v4580, 5
        %v4654 = vsel %vm1768, %v4653, %v4652
        %v4655 = vrot.slane %v4581, 4
        %v4656 = vsel %vm1771, %v4655, %v4654
        %v4657 = vrot.slane %v4582, 3
        %v4658 = vsel %vm1774, %v4657, %v4656
        %v4659 = vrot.slane %v4583, 2
        %v4660 = vsel %vm1777, %v4659, %v4658
        %v4661 = vrot.slane %v4584, 1
        %v4662 = vsel %vm1780, %v4661, %v4660
        %v4663 = vrot.slane %v4586, 7
        %v4664 = vsel %vm1762, %v4663, %v4585
        %v4665 = vrot.slane %v4587, 6
        %v4666 = vsel %vm1765, %v4665, %v4664
        %v4667 = vrot.slane %v4588, 5
        %v4668 = vsel %vm1768, %v4667, %v4666
        %v4669 = vpack.c.b16 %v4602, %v4602
        %v4670 = vpack.c.b16 %v4608, %v4608
        %v4671 = vpack.c.b16 %v4622, %v4622
        %v4672 = vpack.c.b16 %v4628, %v4628
        %v4673 = vpack.c.b16 %v4642, %v4642
        %v4674 = vpack.c.b16 %v4648, %v4648
        %v4675 = vpack.c.b16 %v4662, %v4662
        %v4676 = vpack.c.b16 %v4668, %v4668
        %s4685 = scalar_lea.vmem [#allocation2], 64
        %4686 = vst.msk [vmem:[%s4685] sm:$0xf] %vm1864, %v4669
        %4687 = vst.msk [vmem:[%s4685 + $0x4] sm:$0x3] %vm1866, %v4670
        %4688 = vst.msk [vmem:[%s4685 + $0x8] sm:$0xf] %vm1864, %v4671
        %4689 = vst.msk [vmem:[%s4685 + $0xc] sm:$0x3] %vm1866, %v4672
        %4690 = vst.msk [vmem:[%s4685 + $0x10] sm:$0xf] %vm1864, %v4673
        %4691 = vst.msk [vmem:[%s4685 + $0x14] sm:$0x3] %vm1866, %v4674
        %4692 = vst.msk [vmem:[%s4685 + $0x18] sm:$0xf] %vm1864, %v4675
        %4693 = vst.msk [vmem:[%s4685 + $0x1c] sm:$0x3] %vm1866, %v4676
        %v4694 = vld [vmem:[%s4] sm:$0x1]
        %v4695 = vld [vmem:[#allocation2] sm:$0xf]
        %v4696 = vld [vmem:[#allocation2 + $0x8] sm:$0xf]
        %v4697 = vld [vmem:[#allocation2 + $0x10] sm:$0xf]
        %v4698 = vld [vmem:[#allocation2 + $0x18] sm:$0xf]
        %v4699 = vld [vmem:[#allocation2 + $0x20] sm:$0xf]
        %v4700 = vld [vmem:[#allocation2 + $0x28] sm:$0xf]
        %v4701 = vld [vmem:[#allocation2 + $0x30] sm:$0xf]
        %v4702 = vld [vmem:[#allocation2 + $0x38] sm:$0xf]
        %v4703 = vld [vmem:[%s3] sm:$0xf]
        %v4704 = vld [vmem:[%s3 + $0x4] sm:$0xf]
        %v4705 = vld [vmem:[%s3 + $0x8] sm:$0xf]
        %v4706 = vld [vmem:[%s3 + $0xc] sm:$0xf]
        %v4707 = vld [vmem:[#allocation2 + $0x4] sm:$0x1]
        %v4708 = vld [vmem:[#allocation2 + $0xc] sm:$0x1]
        %v4709 = vld [vmem:[#allocation2 + $0x14] sm:$0x1]
        %v4710 = vld [vmem:[#allocation2 + $0x1c] sm:$0x1]
        %v4711 = vld [vmem:[#allocation2 + $0x24] sm:$0x1]
        %v4712 = vld [vmem:[#allocation2 + $0x2c] sm:$0x1]
        %v4713 = vld [vmem:[#allocation2 + $0x34] sm:$0x1]
        %v4714 = vld [vmem:[#allocation2 + $0x3c] sm:$0x1]
        %vm4715 = vsmask.f32 3328
        %vm4716 = vsmask.f32 7440
        %vm4717 = vmor %vm4715, %vm4716
        %v4719 = vshrl.u32 %v4695, 16
        %v4721 = vrot.slane %v4719, 4
        %v4722 = vshll.u32 %v4695, 16
        %v4724 = vrot.slane %v4722, 5
        %v4725 = vor.u32 %v4721, %v4724
        %v4726 = vrot.slane %v4725, 4
        %v4728 = vshll.u32 %v4707, 16
        %v4730 = vrot.slane %v4728, 5
        %v4731 = vsel %vm4717, %v4726, %v4730
        %v4733 = vshrl.u32 %v4696, 16
        %v4735 = vrot.slane %v4733, 4
        %v4736 = vshll.u32 %v4696, 16
        %v4738 = vrot.slane %v4736, 5
        %v4739 = vor.u32 %v4735, %v4738
        %v4740 = vrot.slane %v4739, 4
        %v4742 = vshll.u32 %v4708, 16
        %v4744 = vrot.slane %v4742, 5
        %v4745 = vsel %vm4717, %v4740, %v4744
        %v4747 = vshrl.u32 %v4697, 16
        %v4749 = vrot.slane %v4747, 4
        %v4750 = vshll.u32 %v4697, 16
        %v4752 = vrot.slane %v4750, 5
        %v4753 = vor.u32 %v4749, %v4752
        %v4754 = vrot.slane %v4753, 4
        %v4756 = vshll.u32 %v4709, 16
        %v4758 = vrot.slane %v4756, 5
        %v4759 = vsel %vm4717, %v4754, %v4758
        %v4761 = vshrl.u32 %v4698, 16
        %v4763 = vrot.slane %v4761, 4
        %v4764 = vshll.u32 %v4698, 16
        %v4766 = vrot.slane %v4764, 5
        %v4767 = vor.u32 %v4763, %v4766
        %v4768 = vrot.slane %v4767, 4
        %v4770 = vshll.u32 %v4710, 16
        %v4772 = vrot.slane %v4770, 5
        %v4773 = vsel %vm4717, %v4768, %v4772
        %v4775 = vshrl.u32 %v4699, 16
        %v4777 = vrot.slane %v4775, 4
        %v4778 = vshll.u32 %v4699, 16
        %v4780 = vrot.slane %v4778, 5
        %v4781 = vor.u32 %v4777, %v4780
        %v4782 = vrot.slane %v4781, 4
        %v4784 = vshll.u32 %v4711, 16
        %v4786 = vrot.slane %v4784, 5
        %v4787 = vsel %vm4717, %v4782, %v4786
        %v4789 = vshrl.u32 %v4700, 16
        %v4791 = vrot.slane %v4789, 4
        %v4792 = vshll.u32 %v4700, 16
        %v4794 = vrot.slane %v4792, 5
        %v4795 = vor.u32 %v4791, %v4794
        %v4796 = vrot.slane %v4795, 4
        %v4798 = vshll.u32 %v4712, 16
        %v4800 = vrot.slane %v4798, 5
        %v4801 = vsel %vm4717, %v4796, %v4800
        %v4803 = vshrl.u32 %v4701, 16
        %v4805 = vrot.slane %v4803, 4
        %v4806 = vshll.u32 %v4701, 16
        %v4808 = vrot.slane %v4806, 5
        %v4809 = vor.u32 %v4805, %v4808
        %v4810 = vrot.slane %v4809, 4
        %v4812 = vshll.u32 %v4713, 16
        %v4814 = vrot.slane %v4812, 5
        %v4815 = vsel %vm4717, %v4810, %v4814
        %v4817 = vshrl.u32 %v4702, 16
        %v4819 = vrot.slane %v4817, 4
        %v4820 = vshll.u32 %v4702, 16
        %v4822 = vrot.slane %v4820, 5
        %v4823 = vor.u32 %v4819, %v4822
        %v4824 = vrot.slane %v4823, 4
        %v4826 = vshll.u32 %v4714, 16
        %v4828 = vrot.slane %v4826, 5
        %v4829 = vsel %vm4717, %v4824, %v4828
        %s4830 = scalar_lea.vmem %s3, 16
        %v4831 = vld [vmem:[%s4830] sm:$0xf]
        %v4832 = vld [vmem:[%s4830 + $0x4] sm:$0xf]
        %v4833 = vld [vmem:[%s4830 + $0x8] sm:$0xf]
        %v4834 = vld [vmem:[%s4830 + $0xc] sm:$0xf]
        %v4835 = vunpack.c.l.b16 %v4731
        %v4836 = vunpack.c.l.b16 %v4745
        %v4837 = vunpack.c.l.b16 %v4759
        %v4838 = vunpack.c.l.b16 %v4773
        %v4839 = vunpack.c.l.b16 %v4787
        %v4840 = vunpack.c.l.b16 %v4801
        %v4841 = vunpack.c.l.b16 %v4815
        %v4842 = vunpack.c.l.b16 %v4829
        %v4843 = vpack.c.b16 %v4836, %v4835
        %v4844 = vpack.c.b16 %v4838, %v4837
        %v4845 = vpack.c.b16 %v4840, %v4839
        %v4846 = vpack.c.b16 %v4842, %v4841
        %v4851 = vunpack.c.l.b16 %v4831
        %v4852 = vunpack.c.l.b16 %v4832
        %v4853 = vunpack.c.l.b16 %v4833
        %v4854 = vunpack.c.l.b16 %v4834
        %v4855 = vpack.c.b16 %v4852, %v4851
        %v4856 = vpack.c.b16 %v4854, %v4853
        %vm4859 = vcmask 261120
        %v4861 = vsel %vm4859, %v4843, 0
        %v4864 = vsel %vm4859, %v4844, 0
        %v4867 = vsel %vm4859, %v4845, 0
        %v4870 = vsel %vm4859, %v4846, 0
        %4872 = vmatprep.subr.bf16.mxu0 0
        %4873 = vmatpush1.bf16.msra.mxu0 %v4855
        %4874 = vmatprep.subr.bf16.mxu0 0
        %4875 = vmatpush1.bf16.msra.mxu0 %v4856
        %4876 = vmatprep.subr.bf16.mxu0 0
        %4877 = vmatpush1.bf16.msra.mxu0 0
        %4878 = vmatprep.subr.bf16.mxu0 0
        %4879 = vmatpush1.bf16.msra.mxu0 0
        %4880 = vmatprep.subr.bf16.mxu0 0
        %4881 = vmatpush1.bf16.msra.mxu0 0
        %4882 = vmatprep.subr.bf16.mxu0 0
        %4883 = vmatpush1.bf16.msra.mxu0 0
        %4884 = vmatprep.subr.bf16.mxu0 0
        %4885 = vmatpush1.bf16.msra.mxu0 0
        %4886 = vmatprep.subr.bf16.mxu0 0
        %4887 = vmatpush1.bf16.msra.mxu0 0
        %4888 = vmatprep.subr.bf16.mxu0 0
        %4889 = vmatpush1.bf16.msra.mxu0 0
        %4890 = vmatprep.subr.bf16.mxu0 0
        %4891 = vmatpush1.bf16.msra.mxu0 0
        %4892 = vmatprep.subr.bf16.mxu0 0
        %4893 = vmatpush1.bf16.msra.mxu0 0
        %4894 = vmatprep.subr.bf16.mxu0 0
        %4895 = vmatpush1.bf16.msra.mxu0 0
        %4896 = vmatprep.subr.bf16.mxu0 0
        %4897 = vmatpush1.bf16.msra.mxu0 0
        %4898 = vmatprep.subr.bf16.mxu0 0
        %4899 = vmatpush1.bf16.msra.mxu0 0
        %4900 = vmatprep.subr.bf16.mxu0 0
        %4901 = vmatpush1.bf16.msra.mxu0 0
        %4902 = vmatprep.subr.bf16.mxu0 0
        %4903 = vmatpush1.bf16.msra.mxu0 0
        %4904 = vmatprep.mubr.bf16.mxu0 0
        %4905 = vmatmul.mubr.bf16.gmra.mrb[0].mxu0 %v4861
        %v4906 = vpop.f32.mrb[0].mxu0
        %v4907 = vadd.f32 0.0, %v4906
        %v4908 = vpop.f32.mrb[0].mxu0
        %v4909 = vpop.f32.mrb[0].mxu0
        %v4910 = vadd.f32 0.0, %v4909
        %v4911 = vpop.f32.mrb[0].mxu0
        %4912 = vmatprep.mubr.bf16.mxu0 0
        %4913 = vmatmul.mubr.bf16.gmra.mrb[0].mxu0 %v4864
        %v4914 = vpop.f32.mrb[0].mxu0
        %v4915 = vadd.f32 0.0, %v4914
        %v4916 = vpop.f32.mrb[0].mxu0
        %v4917 = vpop.f32.mrb[0].mxu0
        %v4918 = vadd.f32 0.0, %v4917
        %v4919 = vpop.f32.mrb[0].mxu0
        %4920 = vmatprep.mubr.bf16.mxu0 0
        %4921 = vmatmul.mubr.bf16.gmra.mrb[0].mxu0 %v4867
        %v4922 = vpop.f32.mrb[0].mxu0
        %v4923 = vadd.f32 0.0, %v4922
        %v4924 = vpop.f32.mrb[0].mxu0
        %v4925 = vpop.f32.mrb[0].mxu0
        %v4926 = vadd.f32 0.0, %v4925
        %v4927 = vpop.f32.mrb[0].mxu0
        %4928 = vmatprep.mubr.bf16.mxu0 0
        %4929 = vmatmul.mubr.bf16.gmra.mrb[0].mxu0 %v4870
        %v4930 = vpop.f32.mrb[0].mxu0
        %v4931 = vadd.f32 0.0, %v4930
        %v4932 = vpop.f32.mrb[0].mxu0
        %v4933 = vpop.f32.mrb[0].mxu0
        %v4934 = vadd.f32 0.0, %v4933
        %v4935 = vpop.f32.mrb[0].mxu0
        %4936 = vdwg.mxu0
        %v4945 = vunpack.c.l.b16 %v4695
        %v4946 = vunpack.c.l.b16 %v4696
        %v4947 = vunpack.c.l.b16 %v4697
        %v4948 = vunpack.c.l.b16 %v4698
        %v4949 = vunpack.c.l.b16 %v4699
        %v4950 = vunpack.c.l.b16 %v4700
        %v4951 = vunpack.c.l.b16 %v4701
        %v4952 = vunpack.c.l.b16 %v4702
        %v4953 = vpack.c.b16 %v4946, %v4945
        %v4954 = vpack.c.b16 %v4948, %v4947
        %v4955 = vpack.c.b16 %v4950, %v4949
        %v4956 = vpack.c.b16 %v4952, %v4951
        %v4961 = vunpack.c.l.b16 %v4703
        %v4962 = vunpack.c.l.b16 %v4704
        %v4963 = vunpack.c.l.b16 %v4705
        %v4964 = vunpack.c.l.b16 %v4706
        %v4965 = vpack.c.b16 %v4962, %v4961
        %v4966 = vpack.c.b16 %v4964, %v4963
        %v4970 = vsel %vm4859, %v4953, 0
        %v4973 = vsel %vm4859, %v4954, 0
        %v4976 = vsel %vm4859, %v4955, 0
        %v4979 = vsel %vm4859, %v4956, 0
        %4981 = vmatprep.subr.bf16.mxu0 0
        %4982 = vmatpush1.bf16.msra.mxu0 %v4965
        %4983 = vmatprep.subr.bf16.mxu0 0
        %4984 = vmatpush1.bf16.msra.mxu0 %v4966
        %4985 = vmatprep.subr.bf16.mxu0 0
        %4986 = vmatpush1.bf16.msra.mxu0 0
        %4987 = vmatprep.subr.bf16.mxu0 0
        %4988 = vmatpush1.bf16.msra.mxu0 0
        %4989 = vmatprep.subr.bf16.mxu0 0
        %4990 = vmatpush1.bf16.msra.mxu0 0
        %4991 = vmatprep.subr.bf16.mxu0 0
        %4992 = vmatpush1.bf16.msra.mxu0 0
        %4993 = vmatprep.subr.bf16.mxu0 0
        %4994 = vmatpush1.bf16.msra.mxu0 0
        %4995 = vmatprep.subr.bf16.mxu0 0
        %4996 = vmatpush1.bf16.msra.mxu0 0
        %4997 = vmatprep.subr.bf16.mxu0 0
        %4998 = vmatpush1.bf16.msra.mxu0 0
        %4999 = vmatprep.subr.bf16.mxu0 0
        %5000 = vmatpush1.bf16.msra.mxu0 0
        %5001 = vmatprep.subr.bf16.mxu0 0
        %5002 = vmatpush1.bf16.msra.mxu0 0
        %5003 = vmatprep.subr.bf16.mxu0 0
        %5004 = vmatpush1.bf16.msra.mxu0 0
        %5005 = vmatprep.subr.bf16.mxu0 0
        %5006 = vmatpush1.bf16.msra.mxu0 0
        %5007 = vmatprep.subr.bf16.mxu0 0
        %5008 = vmatpush1.bf16.msra.mxu0 0
        %5009 = vmatprep.subr.bf16.mxu0 0
        %5010 = vmatpush1.bf16.msra.mxu0 0
        %5011 = vmatprep.subr.bf16.mxu0 0
        %5012 = vmatpush1.bf16.msra.mxu0 0
        %5013 = vmatprep.mubr.bf16.mxu0 0
        %5014 = vmatmul.mubr.bf16.gmra.mrb[0].mxu0 %v4970
        %v5015 = vpop.f32.mrb[0].mxu0
        %v5016 = vadd.f32 %v4907, %v5015
        %v5017 = vpop.f32.mrb[0].mxu0
        %v5018 = vpop.f32.mrb[0].mxu0
        %v5019 = vadd.f32 %v4910, %v5018
        %v5020 = vpop.f32.mrb[0].mxu0
        %5021 = vmatprep.mubr.bf16.mxu0 0
        %5022 = vmatmul.mubr.bf16.gmra.mrb[0].mxu0 %v4973
        %v5023 = vpop.f32.mrb[0].mxu0
        %v5024 = vadd.f32 %v4915, %v5023
        %v5025 = vpop.f32.mrb[0].mxu0
        %v5026 = vpop.f32.mrb[0].mxu0
        %v5027 = vadd.f32 %v4918, %v5026
        %v5028 = vpop.f32.mrb[0].mxu0
        %5029 = vmatprep.mubr.bf16.mxu0 0
        %5030 = vmatmul.mubr.bf16.gmra.mrb[0].mxu0 %v4976
        %v5031 = vpop.f32.mrb[0].mxu0
        %v5032 = vadd.f32 %v4923, %v5031
        %v5033 = vpop.f32.mrb[0].mxu0
        %v5034 = vpop.f32.mrb[0].mxu0
        %v5035 = vadd.f32 %v4926, %v5034
        %v5036 = vpop.f32.mrb[0].mxu0
        %5037 = vmatprep.mubr.bf16.mxu0 0
        %5038 = vmatmul.mubr.bf16.gmra.mrb[0].mxu0 %v4979
        %v5039 = vpop.f32.mrb[0].mxu0
        %v5040 = vadd.f32 %v4931, %v5039
        %v5041 = vpop.f32.mrb[0].mxu0
        %v5042 = vpop.f32.mrb[0].mxu0
        %v5043 = vadd.f32 %v4934, %v5042
        %v5044 = vpop.f32.mrb[0].mxu0
        %5045 = vdwg.mxu0
        %v5046 = vld [vmem:[#allocation2] sm:$0xe]
        %v5047 = vld [vmem:[#allocation2 + $0x8] sm:$0xe]
        %v5048 = vld [vmem:[#allocation2 + $0x10] sm:$0xe]
        %v5049 = vld [vmem:[#allocation2 + $0x18] sm:$0xe]
        %v5050 = vld [vmem:[#allocation2 + $0x20] sm:$0xe]
        %v5051 = vld [vmem:[#allocation2 + $0x28] sm:$0xe]
        %v5052 = vld [vmem:[#allocation2 + $0x30] sm:$0xe]
        %v5053 = vld [vmem:[#allocation2 + $0x38] sm:$0xe]
        %vm5070 = vcmask 1042432
        %vm5071 = vcmask 1046532
        %vm5072 = vmor %vm5070, %vm5071
        %v5073 = vrot.slane %v5046, 5
        %v5074 = vrot.slane %v5073, 4
        %v5075 = vrot.slane %v4707, 5
        %v5076 = vsel %vm5072, %v5074, %v5075
        %v5077 = vrot.slane %v5047, 5
        %v5078 = vrot.slane %v5077, 4
        %v5079 = vrot.slane %v4708, 5
        %v5080 = vsel %vm5072, %v5078, %v5079
        %v5081 = vrot.slane %v5048, 5
        %v5082 = vrot.slane %v5081, 4
        %v5083 = vrot.slane %v4709, 5
        %v5084 = vsel %vm5072, %v5082, %v5083
        %v5085 = vrot.slane %v5049, 5
        %v5086 = vrot.slane %v5085, 4
        %v5087 = vrot.slane %v4710, 5
        %v5088 = vsel %vm5072, %v5086, %v5087
        %v5089 = vrot.slane %v5050, 5
        %v5090 = vrot.slane %v5089, 4
        %v5091 = vrot.slane %v4711, 5
        %v5092 = vsel %vm5072, %v5090, %v5091
        %v5093 = vrot.slane %v5051, 5
        %v5094 = vrot.slane %v5093, 4
        %v5095 = vrot.slane %v4712, 5
        %v5096 = vsel %vm5072, %v5094, %v5095
        %v5097 = vrot.slane %v5052, 5
        %v5098 = vrot.slane %v5097, 4
        %v5099 = vrot.slane %v4713, 5
        %v5100 = vsel %vm5072, %v5098, %v5099
        %v5101 = vrot.slane %v5053, 5
        %v5102 = vrot.slane %v5101, 4
        %v5103 = vrot.slane %v4714, 5
        %v5104 = vsel %vm5072, %v5102, %v5103
        %s5105 = scalar_lea.vmem %s3, 32
        %v5106 = vld [vmem:[%s5105] sm:$0xf]
        %v5107 = vld [vmem:[%s5105 + $0x4] sm:$0xf]
        %v5108 = vld [vmem:[%s5105 + $0x8] sm:$0xf]
        %v5109 = vld [vmem:[%s5105 + $0xc] sm:$0xf]
        %v5110 = vunpack.c.l.b16 %v5076
        %v5111 = vunpack.c.l.b16 %v5080
        %v5112 = vunpack.c.l.b16 %v5084
        %v5113 = vunpack.c.l.b16 %v5088
        %v5114 = vunpack.c.l.b16 %v5092
        %v5115 = vunpack.c.l.b16 %v5096
        %v5116 = vunpack.c.l.b16 %v5100
        %v5117 = vunpack.c.l.b16 %v5104
        %v5118 = vpack.c.b16 %v5111, %v5110
        %v5119 = vpack.c.b16 %v5113, %v5112
        %v5120 = vpack.c.b16 %v5115, %v5114
        %v5121 = vpack.c.b16 %v5117, %v5116
        %v5126 = vunpack.c.l.b16 %v5106
        %v5127 = vunpack.c.l.b16 %v5107
        %v5128 = vunpack.c.l.b16 %v5108
        %v5129 = vunpack.c.l.b16 %v5109
        %v5130 = vpack.c.b16 %v5127, %v5126
        %v5131 = vpack.c.b16 %v5129, %v5128
        %v5135 = vsel %vm4859, %v5118, 0
        %v5138 = vsel %vm4859, %v5119, 0
        %v5141 = vsel %vm4859, %v5120, 0
        %v5144 = vsel %vm4859, %v5121, 0
        %5146 = vmatprep.subr.bf16.mxu0 0
        %5147 = vmatpush1.bf16.msra.mxu0 %v5130
        %5148 = vmatprep.subr.bf16.mxu0 0
        %5149 = vmatpush1.bf16.msra.mxu0 %v5131
        %5150 = vmatprep.subr.bf16.mxu0 0
        %5151 = vmatpush1.bf16.msra.mxu0 0
        %5152 = vmatprep.subr.bf16.mxu0 0
        %5153 = vmatpush1.bf16.msra.mxu0 0
        %5154 = vmatprep.subr.bf16.mxu0 0
        %5155 = vmatpush1.bf16.msra.mxu0 0
        %5156 = vmatprep.subr.bf16.mxu0 0
        %5157 = vmatpush1.bf16.msra.mxu0 0
        %5158 = vmatprep.subr.bf16.mxu0 0
        %5159 = vmatpush1.bf16.msra.mxu0 0
        %5160 = vmatprep.subr.bf16.mxu0 0
        %5161 = vmatpush1.bf16.msra.mxu0 0
        %5162 = vmatprep.subr.bf16.mxu0 0
        %5163 = vmatpush1.bf16.msra.mxu0 0
        %5164 = vmatprep.subr.bf16.mxu0 0
        %5165 = vmatpush1.bf16.msra.mxu0 0
        %5166 = vmatprep.subr.bf16.mxu0 0
        %5167 = vmatpush1.bf16.msra.mxu0 0
        %5168 = vmatprep.subr.bf16.mxu0 0
        %5169 = vmatpush1.bf16.msra.mxu0 0
        %5170 = vmatprep.subr.bf16.mxu0 0
        %5171 = vmatpush1.bf16.msra.mxu0 0
        %5172 = vmatprep.subr.bf16.mxu0 0
        %5173 = vmatpush1.bf16.msra.mxu0 0
        %5174 = vmatprep.subr.bf16.mxu0 0
        %5175 = vmatpush1.bf16.msra.mxu0 0
        %5176 = vmatprep.subr.bf16.mxu0 0
        %5177 = vmatpush1.bf16.msra.mxu0 0
        %5178 = vmatprep.mubr.bf16.mxu0 0
        %5179 = vmatmul.mubr.bf16.gmra.mrb[0].mxu0 %v5135
        %v5180 = vpop.f32.mrb[0].mxu0
        %v5181 = vadd.f32 0.0, %v5180
        %v5182 = vpop.f32.mrb[0].mxu0
        %v5183 = vpop.f32.mrb[0].mxu0
        %v5184 = vadd.f32 0.0, %v5183
        %v5185 = vpop.f32.mrb[0].mxu0
        %5186 = vmatprep.mubr.bf16.mxu0 0
        %5187 = vmatmul.mubr.bf16.gmra.mrb[0].mxu0 %v5138
        %v5188 = vpop.f32.mrb[0].mxu0
        %v5189 = vadd.f32 0.0, %v5188
        %v5190 = vpop.f32.mrb[0].mxu0
        %v5191 = vpop.f32.mrb[0].mxu0
        %v5192 = vadd.f32 0.0, %v5191
        %v5193 = vpop.f32.mrb[0].mxu0
        %5194 = vmatprep.mubr.bf16.mxu0 0
        %5195 = vmatmul.mubr.bf16.gmra.mrb[0].mxu0 %v5141
        %v5196 = vpop.f32.mrb[0].mxu0
        %v5197 = vadd.f32 0.0, %v5196
        %v5198 = vpop.f32.mrb[0].mxu0
        %v5199 = vpop.f32.mrb[0].mxu0
        %v5200 = vadd.f32 0.0, %v5199
        %v5201 = vpop.f32.mrb[0].mxu0
        %5202 = vmatprep.mubr.bf16.mxu0 0
        %5203 = vmatmul.mubr.bf16.gmra.mrb[0].mxu0 %v5144
        %v5204 = vpop.f32.mrb[0].mxu0
        %v5205 = vadd.f32 0.0, %v5204
        %v5206 = vpop.f32.mrb[0].mxu0
        %v5207 = vpop.f32.mrb[0].mxu0
        %v5208 = vadd.f32 0.0, %v5207
        %v5209 = vpop.f32.mrb[0].mxu0
        %5210 = vdwg.mxu0
        %v5211 = vadd.f32 %v5016, %v5181
        %v5212 = vadd.f32 %v5019, %v5184
        %v5213 = vadd.f32 %v5024, %v5189
        %v5214 = vadd.f32 %v5027, %v5192
        %v5215 = vadd.f32 %v5032, %v5197
        %v5216 = vadd.f32 %v5035, %v5200
        %v5217 = vadd.f32 %v5040, %v5205
        %v5218 = vadd.f32 %v5043, %v5208
        %v5219 = vld [vmem:[#allocation2 + $0x4] sm:$0x3]
        %v5220 = vld [vmem:[#allocation2 + $0xc] sm:$0x3]
        %v5221 = vld [vmem:[#allocation2 + $0x14] sm:$0x3]
        %v5222 = vld [vmem:[#allocation2 + $0x1c] sm:$0x3]
        %v5223 = vld [vmem:[#allocation2 + $0x24] sm:$0x3]
        %v5224 = vld [vmem:[#allocation2 + $0x2c] sm:$0x3]
        %v5225 = vld [vmem:[#allocation2 + $0x34] sm:$0x3]
        %v5226 = vld [vmem:[#allocation2 + $0x3c] sm:$0x3]
        %vm5227 = vsmask.f32 2304
        %vm5228 = vsmask.f32 6416
        %vm5229 = vmor %vm5227, %vm5228
        %v5231 = vshrl.u32 %v5046, 16
        %v5233 = vrot.slane %v5231, 5
        %v5234 = vshll.u32 %v5046, 16
        %v5236 = vrot.slane %v5234, 6
        %v5237 = vor.u32 %v5233, %v5236
        %v5238 = vrot.slane %v5237, 4
        %v5240 = vshrl.u32 %v5219, 16
        %v5242 = vrot.slane %v5240, 5
        %v5243 = vshll.u32 %v5219, 16
        %v5245 = vrot.slane %v5243, 6
        %v5246 = vor.u32 %v5242, %v5245
        %v5247 = vsel %vm5229, %v5238, %v5246
        %v5249 = vshrl.u32 %v5047, 16
        %v5251 = vrot.slane %v5249, 5
        %v5252 = vshll.u32 %v5047, 16
        %v5254 = vrot.slane %v5252, 6
        %v5255 = vor.u32 %v5251, %v5254
        %v5256 = vrot.slane %v5255, 4
        %v5258 = vshrl.u32 %v5220, 16
        %v5260 = vrot.slane %v5258, 5
        %v5261 = vshll.u32 %v5220, 16
        %v5263 = vrot.slane %v5261, 6
        %v5264 = vor.u32 %v5260, %v5263
        %v5265 = vsel %vm5229, %v5256, %v5264
        %v5267 = vshrl.u32 %v5048, 16
        %v5269 = vrot.slane %v5267, 5
        %v5270 = vshll.u32 %v5048, 16
        %v5272 = vrot.slane %v5270, 6
        %v5273 = vor.u32 %v5269, %v5272
        %v5274 = vrot.slane %v5273, 4
        %v5276 = vshrl.u32 %v5221, 16
        %v5278 = vrot.slane %v5276, 5
        %v5279 = vshll.u32 %v5221, 16
        %v5281 = vrot.slane %v5279, 6
        %v5282 = vor.u32 %v5278, %v5281
        %v5283 = vsel %vm5229, %v5274, %v5282
        %v5285 = vshrl.u32 %v5049, 16
        %v5287 = vrot.slane %v5285, 5
        %v5288 = vshll.u32 %v5049, 16
        %v5290 = vrot.slane %v5288, 6
        %v5291 = vor.u32 %v5287, %v5290
        %v5292 = vrot.slane %v5291, 4
        %v5294 = vshrl.u32 %v5222, 16
        %v5296 = vrot.slane %v5294, 5
        %v5297 = vshll.u32 %v5222, 16
        %v5299 = vrot.slane %v5297, 6
        %v5300 = vor.u32 %v5296, %v5299
        %v5301 = vsel %vm5229, %v5292, %v5300
        %v5303 = vshrl.u32 %v5050, 16
        %v5305 = vrot.slane %v5303, 5
        %v5306 = vshll.u32 %v5050, 16
        %v5308 = vrot.slane %v5306, 6
        %v5309 = vor.u32 %v5305, %v5308
        %v5310 = vrot.slane %v5309, 4
        %v5312 = vshrl.u32 %v5223, 16
        %v5314 = vrot.slane %v5312, 5
        %v5315 = vshll.u32 %v5223, 16
        %v5317 = vrot.slane %v5315, 6
        %v5318 = vor.u32 %v5314, %v5317
        %v5319 = vsel %vm5229, %v5310, %v5318
        %v5321 = vshrl.u32 %v5051, 16
        %v5323 = vrot.slane %v5321, 5
        %v5324 = vshll.u32 %v5051, 16
        %v5326 = vrot.slane %v5324, 6
        %v5327 = vor.u32 %v5323, %v5326
        %v5328 = vrot.slane %v5327, 4
        %v5330 = vshrl.u32 %v5224, 16
        %v5332 = vrot.slane %v5330, 5
        %v5333 = vshll.u32 %v5224, 16
        %v5335 = vrot.slane %v5333, 6
        %v5336 = vor.u32 %v5332, %v5335
        %v5337 = vsel %vm5229, %v5328, %v5336
        %v5339 = vshrl.u32 %v5052, 16
        %v5341 = vrot.slane %v5339, 5
        %v5342 = vshll.u32 %v5052, 16
        %v5344 = vrot.slane %v5342, 6
        %v5345 = vor.u32 %v5341, %v5344
        %v5346 = vrot.slane %v5345, 4
        %v5348 = vshrl.u32 %v5225, 16
        %v5350 = vrot.slane %v5348, 5
        %v5351 = vshll.u32 %v5225, 16
        %v5353 = vrot.slane %v5351, 6
        %v5354 = vor.u32 %v5350, %v5353
        %v5355 = vsel %vm5229, %v5346, %v5354
        %v5357 = vshrl.u32 %v5053, 16
        %v5359 = vrot.slane %v5357, 5
        %v5360 = vshll.u32 %v5053, 16
        %v5362 = vrot.slane %v5360, 6
        %v5363 = vor.u32 %v5359, %v5362
        %v5364 = vrot.slane %v5363, 4
        %v5366 = vshrl.u32 %v5226, 16
        %v5368 = vrot.slane %v5366, 5
        %v5369 = vshll.u32 %v5226, 16
        %v5371 = vrot.slane %v5369, 6
        %v5372 = vor.u32 %v5368, %v5371
        %v5373 = vsel %vm5229, %v5364, %v5372
        %s5374 = scalar_lea.vmem %s3, 48
        %v5375 = vld [vmem:[%s5374] sm:$0xf]
        %v5376 = vld [vmem:[%s5374 + $0x4] sm:$0xf]
        %v5377 = vld [vmem:[%s5374 + $0x8] sm:$0xf]
        %v5378 = vld [vmem:[%s5374 + $0xc] sm:$0xf]
        %v5379 = vunpack.c.l.b16 %v5247
        %v5380 = vunpack.c.l.b16 %v5265
        %v5381 = vunpack.c.l.b16 %v5283
        %v5382 = vunpack.c.l.b16 %v5301
        %v5383 = vunpack.c.l.b16 %v5319
        %v5384 = vunpack.c.l.b16 %v5337
        %v5385 = vunpack.c.l.b16 %v5355
        %v5386 = vunpack.c.l.b16 %v5373
        %v5387 = vpack.c.b16 %v5380, %v5379
        %v5388 = vpack.c.b16 %v5382, %v5381
        %v5389 = vpack.c.b16 %v5384, %v5383
        %v5390 = vpack.c.b16 %v5386, %v5385
        %v5395 = vunpack.c.l.b16 %v5375
        %v5396 = vunpack.c.l.b16 %v5376
        %v5397 = vunpack.c.l.b16 %v5377
        %v5398 = vunpack.c.l.b16 %v5378
        %v5399 = vpack.c.b16 %v5396, %v5395
        %v5400 = vpack.c.b16 %v5398, %v5397
        %v5404 = vsel %vm4859, %v5387, 0
        %v5407 = vsel %vm4859, %v5388, 0
        %v5410 = vsel %vm4859, %v5389, 0
        %v5413 = vsel %vm4859, %v5390, 0
        %5415 = vmatprep.subr.bf16.mxu0 0
        %5416 = vmatpush1.bf16.msra.mxu0 %v5399
        %5417 = vmatprep.subr.bf16.mxu0 0
        %5418 = vmatpush1.bf16.msra.mxu0 %v5400
        %5419 = vmatprep.subr.bf16.mxu0 0
        %5420 = vmatpush1.bf16.msra.mxu0 0
        %5421 = vmatprep.subr.bf16.mxu0 0
        %5422 = vmatpush1.bf16.msra.mxu0 0
        %5423 = vmatprep.subr.bf16.mxu0 0
        %5424 = vmatpush1.bf16.msra.mxu0 0
        %5425 = vmatprep.subr.bf16.mxu0 0
        %5426 = vmatpush1.bf16.msra.mxu0 0
        %5427 = vmatprep.subr.bf16.mxu0 0
        %5428 = vmatpush1.bf16.msra.mxu0 0
        %5429 = vmatprep.subr.bf16.mxu0 0
        %5430 = vmatpush1.bf16.msra.mxu0 0
        %5431 = vmatprep.subr.bf16.mxu0 0
        %5432 = vmatpush1.bf16.msra.mxu0 0
        %5433 = vmatprep.subr.bf16.mxu0 0
        %5434 = vmatpush1.bf16.msra.mxu0 0
        %5435 = vmatprep.subr.bf16.mxu0 0
        %5436 = vmatpush1.bf16.msra.mxu0 0
        %5437 = vmatprep.subr.bf16.mxu0 0
        %5438 = vmatpush1.bf16.msra.mxu0 0
        %5439 = vmatprep.subr.bf16.mxu0 0
        %5440 = vmatpush1.bf16.msra.mxu0 0
        %5441 = vmatprep.subr.bf16.mxu0 0
        %5442 = vmatpush1.bf16.msra.mxu0 0
        %5443 = vmatprep.subr.bf16.mxu0 0
        %5444 = vmatpush1.bf16.msra.mxu0 0
        %5445 = vmatprep.subr.bf16.mxu0 0
        %5446 = vmatpush1.bf16.msra.mxu0 0
        %5447 = vmatprep.mubr.bf16.mxu0 0
        %5448 = vmatmul.mubr.bf16.gmra.mrb[0].mxu0 %v5404
        %v5449 = vpop.f32.mrb[0].mxu0
        %v5450 = vadd.f32 0.0, %v5449
        %v5451 = vpop.f32.mrb[0].mxu0
        %v5452 = vpop.f32.mrb[0].mxu0
        %v5453 = vadd.f32 0.0, %v5452
        %v5454 = vpop.f32.mrb[0].mxu0
        %5455 = vmatprep.mubr.bf16.mxu0 0
        %5456 = vmatmul.mubr.bf16.gmra.mrb[0].mxu0 %v5407
        %v5457 = vpop.f32.mrb[0].mxu0
        %v5458 = vadd.f32 0.0, %v5457
        %v5459 = vpop.f32.mrb[0].mxu0
        %v5460 = vpop.f32.mrb[0].mxu0
        %v5461 = vadd.f32 0.0, %v5460
        %v5462 = vpop.f32.mrb[0].mxu0
        %5463 = vmatprep.mubr.bf16.mxu0 0
        %5464 = vmatmul.mubr.bf16.gmra.mrb[0].mxu0 %v5410
        %v5465 = vpop.f32.mrb[0].mxu0
        %v5466 = vadd.f32 0.0, %v5465
        %v5467 = vpop.f32.mrb[0].mxu0
        %v5468 = vpop.f32.mrb[0].mxu0
        %v5469 = vadd.f32 0.0, %v5468
        %v5470 = vpop.f32.mrb[0].mxu0
        %5471 = vmatprep.mubr.bf16.mxu0 0
        %5472 = vmatmul.mubr.bf16.gmra.mrb[0].mxu0 %v5413
        %v5473 = vpop.f32.mrb[0].mxu0
        %v5474 = vadd.f32 0.0, %v5473
        %v5475 = vpop.f32.mrb[0].mxu0
        %v5476 = vpop.f32.mrb[0].mxu0
        %v5477 = vadd.f32 0.0, %v5476
        %v5478 = vpop.f32.mrb[0].mxu0
        %5479 = vdwg.mxu0
        %v5480 = vadd.f32 %v5211, %v5450
        %v5481 = vadd.f32 %v5212, %v5453
        %v5482 = vadd.f32 %v5213, %v5458
        %v5483 = vadd.f32 %v5214, %v5461
        %v5484 = vadd.f32 %v5215, %v5466
        %v5485 = vadd.f32 %v5216, %v5469
        %v5486 = vadd.f32 %v5217, %v5474
        %v5487 = vadd.f32 %v5218, %v5477
        %v5488 = vld [vmem:[#allocation2] sm:$0xc]
        %v5489 = vld [vmem:[#allocation2 + $0x8] sm:$0xc]
        %v5490 = vld [vmem:[#allocation2 + $0x10] sm:$0xc]
        %v5491 = vld [vmem:[#allocation2 + $0x18] sm:$0xc]
        %v5492 = vld [vmem:[#allocation2 + $0x20] sm:$0xc]
        %v5493 = vld [vmem:[#allocation2 + $0x28] sm:$0xc]
        %v5494 = vld [vmem:[#allocation2 + $0x30] sm:$0xc]
        %v5495 = vld [vmem:[#allocation2 + $0x38] sm:$0xc]
        %vm5512 = vcmask 1041408
        %vm5513 = vcmask 1045508
        %vm5514 = vmor %vm5512, %vm5513
        %v5515 = vrot.slane %v5488, 6
        %v5516 = vrot.slane %v5515, 4
        %v5517 = vrot.slane %v5219, 6
        %v5518 = vsel %vm5514, %v5516, %v5517
        %v5519 = vrot.slane %v5489, 6
        %v5520 = vrot.slane %v5519, 4
        %v5521 = vrot.slane %v5220, 6
        %v5522 = vsel %vm5514, %v5520, %v5521
        %v5523 = vrot.slane %v5490, 6
        %v5524 = vrot.slane %v5523, 4
        %v5525 = vrot.slane %v5221, 6
        %v5526 = vsel %vm5514, %v5524, %v5525
        %v5527 = vrot.slane %v5491, 6
        %v5528 = vrot.slane %v5527, 4
        %v5529 = vrot.slane %v5222, 6
        %v5530 = vsel %vm5514, %v5528, %v5529
        %v5531 = vrot.slane %v5492, 6
        %v5532 = vrot.slane %v5531, 4
        %v5533 = vrot.slane %v5223, 6
        %v5534 = vsel %vm5514, %v5532, %v5533
        %v5535 = vrot.slane %v5493, 6
        %v5536 = vrot.slane %v5535, 4
        %v5537 = vrot.slane %v5224, 6
        %v5538 = vsel %vm5514, %v5536, %v5537
        %v5539 = vrot.slane %v5494, 6
        %v5540 = vrot.slane %v5539, 4
        %v5541 = vrot.slane %v5225, 6
        %v5542 = vsel %vm5514, %v5540, %v5541
        %v5543 = vrot.slane %v5495, 6
        %v5544 = vrot.slane %v5543, 4
        %v5545 = vrot.slane %v5226, 6
        %v5546 = vsel %vm5514, %v5544, %v5545
        %s5547 = scalar_lea.vmem %s3, 64
        %v5548 = vld [vmem:[%s5547] sm:$0xf]
        %v5549 = vld [vmem:[%s5547 + $0x4] sm:$0xf]
        %v5550 = vld [vmem:[%s5547 + $0x8] sm:$0xf]
        %v5551 = vld [vmem:[%s5547 + $0xc] sm:$0xf]
        %v5552 = vunpack.c.l.b16 %v5518
        %v5553 = vunpack.c.l.b16 %v5522
        %v5554 = vunpack.c.l.b16 %v5526
        %v5555 = vunpack.c.l.b16 %v5530
        %v5556 = vunpack.c.l.b16 %v5534
        %v5557 = vunpack.c.l.b16 %v5538
        %v5558 = vunpack.c.l.b16 %v5542
        %v5559 = vunpack.c.l.b16 %v5546
        %v5560 = vpack.c.b16 %v5553, %v5552
        %v5561 = vpack.c.b16 %v5555, %v5554
        %v5562 = vpack.c.b16 %v5557, %v5556
        %v5563 = vpack.c.b16 %v5559, %v5558
        %v5568 = vunpack.c.l.b16 %v5548
        %v5569 = vunpack.c.l.b16 %v5549
        %v5570 = vunpack.c.l.b16 %v5550
        %v5571 = vunpack.c.l.b16 %v5551
        %v5572 = vpack.c.b16 %v5569, %v5568
        %v5573 = vpack.c.b16 %v5571, %v5570
        %v5577 = vsel %vm4859, %v5560, 0
        %v5580 = vsel %vm4859, %v5561, 0
        %v5583 = vsel %vm4859, %v5562, 0
        %v5586 = vsel %vm4859, %v5563, 0
        %5588 = vmatprep.subr.bf16.mxu0 0
        %5589 = vmatpush1.bf16.msra.mxu0 %v5572
        %5590 = vmatprep.subr.bf16.mxu0 0
        %5591 = vmatpush1.bf16.msra.mxu0 %v5573
        %5592 = vmatprep.subr.bf16.mxu0 0
        %5593 = vmatpush1.bf16.msra.mxu0 0
        %5594 = vmatprep.subr.bf16.mxu0 0
        %5595 = vmatpush1.bf16.msra.mxu0 0
        %5596 = vmatprep.subr.bf16.mxu0 0
        %5597 = vmatpush1.bf16.msra.mxu0 0
        %5598 = vmatprep.subr.bf16.mxu0 0
        %5599 = vmatpush1.bf16.msra.mxu0 0
        %5600 = vmatprep.subr.bf16.mxu0 0
        %5601 = vmatpush1.bf16.msra.mxu0 0
        %5602 = vmatprep.subr.bf16.mxu0 0
        %5603 = vmatpush1.bf16.msra.mxu0 0
        %5604 = vmatprep.subr.bf16.mxu0 0
        %5605 = vmatpush1.bf16.msra.mxu0 0
        %5606 = vmatprep.subr.bf16.mxu0 0
        %5607 = vmatpush1.bf16.msra.mxu0 0
        %5608 = vmatprep.subr.bf16.mxu0 0
        %5609 = vmatpush1.bf16.msra.mxu0 0
        %5610 = vmatprep.subr.bf16.mxu0 0
        %5611 = vmatpush1.bf16.msra.mxu0 0
        %5612 = vmatprep.subr.bf16.mxu0 0
        %5613 = vmatpush1.bf16.msra.mxu0 0
        %5614 = vmatprep.subr.bf16.mxu0 0
        %5615 = vmatpush1.bf16.msra.mxu0 0
        %5616 = vmatprep.subr.bf16.mxu0 0
        %5617 = vmatpush1.bf16.msra.mxu0 0
        %5618 = vmatprep.subr.bf16.mxu0 0
        %5619 = vmatpush1.bf16.msra.mxu0 0
        %5620 = vmatprep.mubr.bf16.mxu0 0
        %5621 = vmatmul.mubr.bf16.gmra.mrb[0].mxu0 %v5577
        %v5622 = vpop.f32.mrb[0].mxu0
        %v5623 = vadd.f32 0.0, %v5622
        %v5624 = vpop.f32.mrb[0].mxu0
        %v5625 = vpop.f32.mrb[0].mxu0
        %v5626 = vadd.f32 0.0, %v5625
        %v5627 = vpop.f32.mrb[0].mxu0
        %5628 = vmatprep.mubr.bf16.mxu0 0
        %5629 = vmatmul.mubr.bf16.gmra.mrb[0].mxu0 %v5580
        %v5630 = vpop.f32.mrb[0].mxu0
        %v5631 = vadd.f32 0.0, %v5630
        %v5632 = vpop.f32.mrb[0].mxu0
        %v5633 = vpop.f32.mrb[0].mxu0
        %v5634 = vadd.f32 0.0, %v5633
        %v5635 = vpop.f32.mrb[0].mxu0
        %5636 = vmatprep.mubr.bf16.mxu0 0
        %5637 = vmatmul.mubr.bf16.gmra.mrb[0].mxu0 %v5583
        %v5638 = vpop.f32.mrb[0].mxu0
        %v5639 = vadd.f32 0.0, %v5638
        %v5640 = vpop.f32.mrb[0].mxu0
        %v5641 = vpop.f32.mrb[0].mxu0
        %v5642 = vadd.f32 0.0, %v5641
        %v5643 = vpop.f32.mrb[0].mxu0
        %5644 = vmatprep.mubr.bf16.mxu0 0
        %5645 = vmatmul.mubr.bf16.gmra.mrb[0].mxu0 %v5586
        %v5646 = vpop.f32.mrb[0].mxu0
        %v5647 = vadd.f32 0.0, %v5646
        %v5648 = vpop.f32.mrb[0].mxu0
        %v5649 = vpop.f32.mrb[0].mxu0
        %v5650 = vadd.f32 0.0, %v5649
        %v5651 = vpop.f32.mrb[0].mxu0
        %5652 = vdwg.mxu0
        %v5653 = vadd.f32 %v5480, %v5623
        %v5654 = vadd.f32 %v5481, %v5626
        %v5655 = vadd.f32 %v5482, %v5631
        %v5656 = vadd.f32 %v5483, %v5634
        %v5657 = vadd.f32 %v5484, %v5639
        %v5658 = vadd.f32 %v5485, %v5642
        %v5659 = vadd.f32 %v5486, %v5647
        %v5660 = vadd.f32 %v5487, %v5650
        %s5661 = scalar_lea.vmem [#allocation2], 8
        %v5662 = vld [vmem:[%s5661] sm:$0xf]
        %v5663 = vld [vmem:[%s5661 + $0x8] sm:$0xf]
        %v5664 = vld [vmem:[%s5661 + $0x10] sm:$0xf]
        %v5665 = vld [vmem:[%s5661 + $0x18] sm:$0xf]
        %v5666 = vld [vmem:[%s5661 + $0x20] sm:$0xf]
        %v5667 = vld [vmem:[%s5661 + $0x28] sm:$0xf]
        %v5668 = vld [vmem:[%s5661 + $0x30] sm:$0xf]
        %v5669 = vld [vmem:[%s5661 + $0x38] sm:$0xf]
        %s5670 = scalar_lea.vmem %s3, 80
        %v5671 = vld [vmem:[%s5670] sm:$0xf]
        %v5672 = vld [vmem:[%s5670 + $0x4] sm:$0xf]
        %v5673 = vld [vmem:[%s5670 + $0x8] sm:$0xf]
        %v5674 = vld [vmem:[%s5670 + $0xc] sm:$0xf]
        %v5683 = vunpack.c.l.b16 %v5662
        %v5684 = vunpack.c.l.b16 %v5663
        %v5685 = vunpack.c.l.b16 %v5664
        %v5686 = vunpack.c.l.b16 %v5665
        %v5687 = vunpack.c.l.b16 %v5666
        %v5688 = vunpack.c.l.b16 %v5667
        %v5689 = vunpack.c.l.b16 %v5668
        %v5690 = vunpack.c.l.b16 %v5669
        %v5691 = vpack.c.b16 %v5684, %v5683
        %v5692 = vpack.c.b16 %v5686, %v5685
        %v5693 = vpack.c.b16 %v5688, %v5687
        %v5694 = vpack.c.b16 %v5690, %v5689
        %v5699 = vunpack.c.l.b16 %v5671
        %v5700 = vunpack.c.l.b16 %v5672
        %v5701 = vunpack.c.l.b16 %v5673
        %v5702 = vunpack.c.l.b16 %v5674
        %v5703 = vpack.c.b16 %v5700, %v5699
        %v5704 = vpack.c.b16 %v5702, %v5701
        %v5708 = vsel %vm4859, %v5691, 0
        %v5711 = vsel %vm4859, %v5692, 0
        %v5714 = vsel %vm4859, %v5693, 0
        %v5717 = vsel %vm4859, %v5694, 0
        %5719 = vmatprep.subr.bf16.mxu0 0
        %5720 = vmatpush1.bf16.msra.mxu0 %v5703
        %5721 = vmatprep.subr.bf16.mxu0 0
        %5722 = vmatpush1.bf16.msra.mxu0 %v5704
        %5723 = vmatprep.subr.bf16.mxu0 0
        %5724 = vmatpush1.bf16.msra.mxu0 0
        %5725 = vmatprep.subr.bf16.mxu0 0
        %5726 = vmatpush1.bf16.msra.mxu0 0
        %5727 = vmatprep.subr.bf16.mxu0 0
        %5728 = vmatpush1.bf16.msra.mxu0 0
        %5729 = vmatprep.subr.bf16.mxu0 0
        %5730 = vmatpush1.bf16.msra.mxu0 0
        %5731 = vmatprep.subr.bf16.mxu0 0
        %5732 = vmatpush1.bf16.msra.mxu0 0
        %5733 = vmatprep.subr.bf16.mxu0 0
        %5734 = vmatpush1.bf16.msra.mxu0 0
        %5735 = vmatprep.subr.bf16.mxu0 0
        %5736 = vmatpush1.bf16.msra.mxu0 0
        %5737 = vmatprep.subr.bf16.mxu0 0
        %5738 = vmatpush1.bf16.msra.mxu0 0
        %5739 = vmatprep.subr.bf16.mxu0 0
        %5740 = vmatpush1.bf16.msra.mxu0 0
        %5741 = vmatprep.subr.bf16.mxu0 0
        %5742 = vmatpush1.bf16.msra.mxu0 0
        %5743 = vmatprep.subr.bf16.mxu0 0
        %5744 = vmatpush1.bf16.msra.mxu0 0
        %5745 = vmatprep.subr.bf16.mxu0 0
        %5746 = vmatpush1.bf16.msra.mxu0 0
        %5747 = vmatprep.subr.bf16.mxu0 0
        %5748 = vmatpush1.bf16.msra.mxu0 0
        %5749 = vmatprep.subr.bf16.mxu0 0
        %5750 = vmatpush1.bf16.msra.mxu0 0
        %5751 = vmatprep.mubr.bf16.mxu0 0
        %5752 = vmatmul.mubr.bf16.gmra.mrb[0].mxu0 %v5708
        %v5753 = vpop.f32.mrb[0].mxu0
        %v5754 = vadd.f32 0.0, %v5753
        %v5755 = vpop.f32.mrb[0].mxu0
        %v5756 = vpop.f32.mrb[0].mxu0
        %v5757 = vadd.f32 0.0, %v5756
        %v5758 = vpop.f32.mrb[0].mxu0
        %5759 = vmatprep.mubr.bf16.mxu0 0
        %5760 = vmatmul.mubr.bf16.gmra.mrb[0].mxu0 %v5711
        %v5761 = vpop.f32.mrb[0].mxu0
        %v5762 = vadd.f32 0.0, %v5761
        %v5763 = vpop.f32.mrb[0].mxu0
        %v5764 = vpop.f32.mrb[0].mxu0
        %v5765 = vadd.f32 0.0, %v5764
        %v5766 = vpop.f32.mrb[0].mxu0
        %5767 = vmatprep.mubr.bf16.mxu0 0
        %5768 = vmatmul.mubr.bf16.gmra.mrb[0].mxu0 %v5714
        %v5769 = vpop.f32.mrb[0].mxu0
        %v5770 = vadd.f32 0.0, %v5769
        %v5771 = vpop.f32.mrb[0].mxu0
        %v5772 = vpop.f32.mrb[0].mxu0
        %v5773 = vadd.f32 0.0, %v5772
        %v5774 = vpop.f32.mrb[0].mxu0
        %5775 = vmatprep.mubr.bf16.mxu0 0
        %5776 = vmatmul.mubr.bf16.gmra.mrb[0].mxu0 %v5717
        %v5777 = vpop.f32.mrb[0].mxu0
        %v5778 = vadd.f32 0.0, %v5777
        %v5779 = vpop.f32.mrb[0].mxu0
        %v5780 = vpop.f32.mrb[0].mxu0
        %v5781 = vadd.f32 0.0, %v5780
        %v5782 = vpop.f32.mrb[0].mxu0
        %5783 = vdwg.mxu0
        %v5784 = vadd.f32 %v5653, %v5754
        %v5785 = vadd.f32 %v5654, %v5757
        %v5786 = vadd.f32 %v5655, %v5762
        %v5787 = vadd.f32 %v5656, %v5765
        %v5788 = vadd.f32 %v5657, %v5770
        %v5789 = vadd.f32 %v5658, %v5773
        %v5790 = vadd.f32 %v5659, %v5778
        %v5791 = vadd.f32 %v5660, %v5781
        %v5792 = vld [vmem:[%s5661] sm:$0xf]
        %v5793 = vld [vmem:[%s5661 + $0x4] sm:$0x1]
        %v5794 = vld [vmem:[%s5661 + $0x8] sm:$0xf]
        %v5795 = vld [vmem:[%s5661 + $0xc] sm:$0x1]
        %v5796 = vld [vmem:[%s5661 + $0x10] sm:$0xf]
        %v5797 = vld [vmem:[%s5661 + $0x14] sm:$0x1]
        %v5798 = vld [vmem:[%s5661 + $0x18] sm:$0xf]
        %v5799 = vld [vmem:[%s5661 + $0x1c] sm:$0x1]
        %v5800 = vld [vmem:[%s5661 + $0x20] sm:$0xf]
        %v5801 = vld [vmem:[%s5661 + $0x24] sm:$0x1]
        %v5802 = vld [vmem:[%s5661 + $0x28] sm:$0xf]
        %v5803 = vld [vmem:[%s5661 + $0x2c] sm:$0x1]
        %v5804 = vld [vmem:[%s5661 + $0x30] sm:$0xf]
        %v5805 = vld [vmem:[%s5661 + $0x34] sm:$0x1]
        %v5806 = vld [vmem:[%s5661 + $0x38] sm:$0xf]
        %v5807 = vld [vmem:[%s5661 + $0x3c] sm:$0x1]
        %v5809 = vshrl.u32 %v5792, 16
        %v5811 = vrot.slane %v5809, 4
        %v5812 = vshll.u32 %v5792, 16
        %v5814 = vrot.slane %v5812, 5
        %v5815 = vor.u32 %v5811, %v5814
        %v5816 = vrot.slane %v5815, 4
        %v5818 = vshll.u32 %v5793, 16
        %v5820 = vrot.slane %v5818, 5
        %v5821 = vsel %vm4717, %v5816, %v5820
        %v5823 = vshrl.u32 %v5794, 16
        %v5825 = vrot.slane %v5823, 4
        %v5826 = vshll.u32 %v5794, 16
        %v5828 = vrot.slane %v5826, 5
        %v5829 = vor.u32 %v5825, %v5828
        %v5830 = vrot.slane %v5829, 4
        %v5832 = vshll.u32 %v5795, 16
        %v5834 = vrot.slane %v5832, 5
        %v5835 = vsel %vm4717, %v5830, %v5834
        %v5837 = vshrl.u32 %v5796, 16
        %v5839 = vrot.slane %v5837, 4
        %v5840 = vshll.u32 %v5796, 16
        %v5842 = vrot.slane %v5840, 5
        %v5843 = vor.u32 %v5839, %v5842
        %v5844 = vrot.slane %v5843, 4
        %v5846 = vshll.u32 %v5797, 16
        %v5848 = vrot.slane %v5846, 5
        %v5849 = vsel %vm4717, %v5844, %v5848
        %v5851 = vshrl.u32 %v5798, 16
        %v5853 = vrot.slane %v5851, 4
        %v5854 = vshll.u32 %v5798, 16
        %v5856 = vrot.slane %v5854, 5
        %v5857 = vor.u32 %v5853, %v5856
        %v5858 = vrot.slane %v5857, 4
        %v5860 = vshll.u32 %v5799, 16
        %v5862 = vrot.slane %v5860, 5
        %v5863 = vsel %vm4717, %v5858, %v5862
        %v5865 = vshrl.u32 %v5800, 16
        %v5867 = vrot.slane %v5865, 4
        %v5868 = vshll.u32 %v5800, 16
        %v5870 = vrot.slane %v5868, 5
        %v5871 = vor.u32 %v5867, %v5870
        %v5872 = vrot.slane %v5871, 4
        %v5874 = vshll.u32 %v5801, 16
        %v5876 = vrot.slane %v5874, 5
        %v5877 = vsel %vm4717, %v5872, %v5876
        %v5879 = vshrl.u32 %v5802, 16
        %v5881 = vrot.slane %v5879, 4
        %v5882 = vshll.u32 %v5802, 16
        %v5884 = vrot.slane %v5882, 5
        %v5885 = vor.u32 %v5881, %v5884
        %v5886 = vrot.slane %v5885, 4
        %v5888 = vshll.u32 %v5803, 16
        %v5890 = vrot.slane %v5888, 5
        %v5891 = vsel %vm4717, %v5886, %v5890
        %v5893 = vshrl.u32 %v5804, 16
        %v5895 = vrot.slane %v5893, 4
        %v5896 = vshll.u32 %v5804, 16
        %v5898 = vrot.slane %v5896, 5
        %v5899 = vor.u32 %v5895, %v5898
        %v5900 = vrot.slane %v5899, 4
        %v5902 = vshll.u32 %v5805, 16
        %v5904 = vrot.slane %v5902, 5
        %v5905 = vsel %vm4717, %v5900, %v5904
        %v5907 = vshrl.u32 %v5806, 16
        %v5909 = vrot.slane %v5907, 4
        %v5910 = vshll.u32 %v5806, 16
        %v5912 = vrot.slane %v5910, 5
        %v5913 = vor.u32 %v5909, %v5912
        %v5914 = vrot.slane %v5913, 4
        %v5916 = vshll.u32 %v5807, 16
        %v5918 = vrot.slane %v5916, 5
        %v5919 = vsel %vm4717, %v5914, %v5918
        %s5920 = scalar_lea.vmem %s3, 96
        %v5921 = vld [vmem:[%s5920] sm:$0xf]
        %v5922 = vld [vmem:[%s5920 + $0x4] sm:$0xf]
        %v5923 = vld [vmem:[%s5920 + $0x8] sm:$0xf]
        %v5924 = vld [vmem:[%s5920 + $0xc] sm:$0xf]
        %v5925 = vunpack.c.l.b16 %v5821
        %v5926 = vunpack.c.l.b16 %v5835
        %v5927 = vunpack.c.l.b16 %v5849
        %v5928 = vunpack.c.l.b16 %v5863
        %v5929 = vunpack.c.l.b16 %v5877
        %v5930 = vunpack.c.l.b16 %v5891
        %v5931 = vunpack.c.l.b16 %v5905
        %v5932 = vunpack.c.l.b16 %v5919
        %v5933 = vpack.c.b16 %v5926, %v5925
        %v5934 = vpack.c.b16 %v5928, %v5927
        %v5935 = vpack.c.b16 %v5930, %v5929
        %v5936 = vpack.c.b16 %v5932, %v5931
        %v5941 = vunpack.c.l.b16 %v5921
        %v5942 = vunpack.c.l.b16 %v5922
        %v5943 = vunpack.c.l.b16 %v5923
        %v5944 = vunpack.c.l.b16 %v5924
        %v5945 = vpack.c.b16 %v5942, %v5941
        %v5946 = vpack.c.b16 %v5944, %v5943
        %v5950 = vsel %vm4859, %v5933, 0
        %v5953 = vsel %vm4859, %v5934, 0
        %v5956 = vsel %vm4859, %v5935, 0
        %v5959 = vsel %vm4859, %v5936, 0
        %5961 = vmatprep.subr.bf16.mxu0 0
        %5962 = vmatpush1.bf16.msra.mxu0 %v5945
        %5963 = vmatprep.subr.bf16.mxu0 0
        %5964 = vmatpush1.bf16.msra.mxu0 %v5946
        %5965 = vmatprep.subr.bf16.mxu0 0
        %5966 = vmatpush1.bf16.msra.mxu0 0
        %5967 = vmatprep.subr.bf16.mxu0 0
        %5968 = vmatpush1.bf16.msra.mxu0 0
        %5969 = vmatprep.subr.bf16.mxu0 0
        %5970 = vmatpush1.bf16.msra.mxu0 0
        %5971 = vmatprep.subr.bf16.mxu0 0
        %5972 = vmatpush1.bf16.msra.mxu0 0
        %5973 = vmatprep.subr.bf16.mxu0 0
        %5974 = vmatpush1.bf16.msra.mxu0 0
        %5975 = vmatprep.subr.bf16.mxu0 0
        %5976 = vmatpush1.bf16.msra.mxu0 0
        %5977 = vmatprep.subr.bf16.mxu0 0
        %5978 = vmatpush1.bf16.msra.mxu0 0
        %5979 = vmatprep.subr.bf16.mxu0 0
        %5980 = vmatpush1.bf16.msra.mxu0 0
        %5981 = vmatprep.subr.bf16.mxu0 0
        %5982 = vmatpush1.bf16.msra.mxu0 0
        %5983 = vmatprep.subr.bf16.mxu0 0
        %5984 = vmatpush1.bf16.msra.mxu0 0
        %5985 = vmatprep.subr.bf16.mxu0 0
        %5986 = vmatpush1.bf16.msra.mxu0 0
        %5987 = vmatprep.subr.bf16.mxu0 0
        %5988 = vmatpush1.bf16.msra.mxu0 0
        %5989 = vmatprep.subr.bf16.mxu0 0
        %5990 = vmatpush1.bf16.msra.mxu0 0
        %5991 = vmatprep.subr.bf16.mxu0 0
        %5992 = vmatpush1.bf16.msra.mxu0 0
        %5993 = vmatprep.mubr.bf16.mxu0 0
        %5994 = vmatmul.mubr.bf16.gmra.mrb[0].mxu0 %v5950
        %v5995 = vpop.f32.mrb[0].mxu0
        %v5996 = vadd.f32 0.0, %v5995
        %v5997 = vpop.f32.mrb[0].mxu0
        %v5998 = vpop.f32.mrb[0].mxu0
        %v5999 = vadd.f32 0.0, %v5998
        %v6000 = vpop.f32.mrb[0].mxu0
        %6001 = vmatprep.mubr.bf16.mxu0 0
        %6002 = vmatmul.mubr.bf16.gmra.mrb[0].mxu0 %v5953
        %v6003 = vpop.f32.mrb[0].mxu0
        %v6004 = vadd.f32 0.0, %v6003
        %v6005 = vpop.f32.mrb[0].mxu0
        %v6006 = vpop.f32.mrb[0].mxu0
        %v6007 = vadd.f32 0.0, %v6006
        %v6008 = vpop.f32.mrb[0].mxu0
        %6009 = vmatprep.mubr.bf16.mxu0 0
        %6010 = vmatmul.mubr.bf16.gmra.mrb[0].mxu0 %v5956
        %v6011 = vpop.f32.mrb[0].mxu0
        %v6012 = vadd.f32 0.0, %v6011
        %v6013 = vpop.f32.mrb[0].mxu0
        %v6014 = vpop.f32.mrb[0].mxu0
        %v6015 = vadd.f32 0.0, %v6014
        %v6016 = vpop.f32.mrb[0].mxu0
        %6017 = vmatprep.mubr.bf16.mxu0 0
        %6018 = vmatmul.mubr.bf16.gmra.mrb[0].mxu0 %v5959
        %v6019 = vpop.f32.mrb[0].mxu0
        %v6020 = vadd.f32 0.0, %v6019
        %v6021 = vpop.f32.mrb[0].mxu0
        %v6022 = vpop.f32.mrb[0].mxu0
        %v6023 = vadd.f32 0.0, %v6022
        %v6024 = vpop.f32.mrb[0].mxu0
        %6025 = vdwg.mxu0
        %v6026 = vadd.f32 %v5784, %v5996
        %v6027 = vadd.f32 %v5785, %v5999
        %v6028 = vadd.f32 %v5786, %v6004
        %v6029 = vadd.f32 %v5787, %v6007
        %v6030 = vadd.f32 %v5788, %v6012
        %v6031 = vadd.f32 %v5789, %v6015
        %v6032 = vadd.f32 %v5790, %v6020
        %v6033 = vadd.f32 %v5791, %v6023
        %v6034 = vld [vmem:[%s5661] sm:$0xe]
        %v6035 = vld [vmem:[%s5661 + $0x8] sm:$0xe]
        %v6036 = vld [vmem:[%s5661 + $0x10] sm:$0xe]
        %v6037 = vld [vmem:[%s5661 + $0x18] sm:$0xe]
        %v6038 = vld [vmem:[%s5661 + $0x20] sm:$0xe]
        %v6039 = vld [vmem:[%s5661 + $0x28] sm:$0xe]
        %v6040 = vld [vmem:[%s5661 + $0x30] sm:$0xe]
        %v6041 = vld [vmem:[%s5661 + $0x38] sm:$0xe]
        %v6058 = vrot.slane %v6034, 5
        %v6059 = vrot.slane %v6058, 4
        %v6060 = vrot.slane %v5793, 5
        %v6061 = vsel %vm5072, %v6059, %v6060
        %v6062 = vrot.slane %v6035, 5
        %v6063 = vrot.slane %v6062, 4
        %v6064 = vrot.slane %v5795, 5
        %v6065 = vsel %vm5072, %v6063, %v6064
        %v6066 = vrot.slane %v6036, 5
        %v6067 = vrot.slane %v6066, 4
        %v6068 = vrot.slane %v5797, 5
        %v6069 = vsel %vm5072, %v6067, %v6068
        %v6070 = vrot.slane %v6037, 5
        %v6071 = vrot.slane %v6070, 4
        %v6072 = vrot.slane %v5799, 5
        %v6073 = vsel %vm5072, %v6071, %v6072
        %v6074 = vrot.slane %v6038, 5
        %v6075 = vrot.slane %v6074, 4
        %v6076 = vrot.slane %v5801, 5
        %v6077 = vsel %vm5072, %v6075, %v6076
        %v6078 = vrot.slane %v6039, 5
        %v6079 = vrot.slane %v6078, 4
        %v6080 = vrot.slane %v5803, 5
        %v6081 = vsel %vm5072, %v6079, %v6080
        %v6082 = vrot.slane %v6040, 5
        %v6083 = vrot.slane %v6082, 4
        %v6084 = vrot.slane %v5805, 5
        %v6085 = vsel %vm5072, %v6083, %v6084
        %v6086 = vrot.slane %v6041, 5
        %v6087 = vrot.slane %v6086, 4
        %v6088 = vrot.slane %v5807, 5
        %v6089 = vsel %vm5072, %v6087, %v6088
        %s6090 = scalar_lea.vmem %s3, 112
        %v6091 = vld [vmem:[%s6090] sm:$0xf]
        %v6092 = vld [vmem:[%s6090 + $0x4] sm:$0xf]
        %v6093 = vld [vmem:[%s6090 + $0x8] sm:$0xf]
        %v6094 = vld [vmem:[%s6090 + $0xc] sm:$0xf]
        %v6095 = vunpack.c.l.b16 %v6061
        %v6096 = vunpack.c.l.b16 %v6065
        %v6097 = vunpack.c.l.b16 %v6069
        %v6098 = vunpack.c.l.b16 %v6073
        %v6099 = vunpack.c.l.b16 %v6077
        %v6100 = vunpack.c.l.b16 %v6081
        %v6101 = vunpack.c.l.b16 %v6085
        %v6102 = vunpack.c.l.b16 %v6089
        %v6103 = vpack.c.b16 %v6096, %v6095
        %v6104 = vpack.c.b16 %v6098, %v6097
        %v6105 = vpack.c.b16 %v6100, %v6099
        %v6106 = vpack.c.b16 %v6102, %v6101
        %v6111 = vunpack.c.l.b16 %v6091
        %v6112 = vunpack.c.l.b16 %v6092
        %v6113 = vunpack.c.l.b16 %v6093
        %v6114 = vunpack.c.l.b16 %v6094
        %v6115 = vpack.c.b16 %v6112, %v6111
        %v6116 = vpack.c.b16 %v6114, %v6113
        %v6120 = vsel %vm4859, %v6103, 0
        %v6123 = vsel %vm4859, %v6104, 0
        %v6126 = vsel %vm4859, %v6105, 0
        %v6129 = vsel %vm4859, %v6106, 0
        %6131 = vmatprep.subr.bf16.mxu0 0
        %6132 = vmatpush1.bf16.msra.mxu0 %v6115
        %6133 = vmatprep.subr.bf16.mxu0 0
        %6134 = vmatpush1.bf16.msra.mxu0 %v6116
        %6135 = vmatprep.subr.bf16.mxu0 0
        %6136 = vmatpush1.bf16.msra.mxu0 0
        %6137 = vmatprep.subr.bf16.mxu0 0
        %6138 = vmatpush1.bf16.msra.mxu0 0
        %6139 = vmatprep.subr.bf16.mxu0 0
        %6140 = vmatpush1.bf16.msra.mxu0 0
        %6141 = vmatprep.subr.bf16.mxu0 0
        %6142 = vmatpush1.bf16.msra.mxu0 0
        %6143 = vmatprep.subr.bf16.mxu0 0
        %6144 = vmatpush1.bf16.msra.mxu0 0
        %6145 = vmatprep.subr.bf16.mxu0 0
        %6146 = vmatpush1.bf16.msra.mxu0 0
        %6147 = vmatprep.subr.bf16.mxu0 0
        %6148 = vmatpush1.bf16.msra.mxu0 0
        %6149 = vmatprep.subr.bf16.mxu0 0
        %6150 = vmatpush1.bf16.msra.mxu0 0
        %6151 = vmatprep.subr.bf16.mxu0 0
        %6152 = vmatpush1.bf16.msra.mxu0 0
        %6153 = vmatprep.subr.bf16.mxu0 0
        %6154 = vmatpush1.bf16.msra.mxu0 0
        %6155 = vmatprep.subr.bf16.mxu0 0
        %6156 = vmatpush1.bf16.msra.mxu0 0
        %6157 = vmatprep.subr.bf16.mxu0 0
        %6158 = vmatpush1.bf16.msra.mxu0 0
        %6159 = vmatprep.subr.bf16.mxu0 0
        %6160 = vmatpush1.bf16.msra.mxu0 0
        %6161 = vmatprep.subr.bf16.mxu0 0
        %6162 = vmatpush1.bf16.msra.mxu0 0
        %6163 = vmatprep.mubr.bf16.mxu0 0
        %6164 = vmatmul.mubr.bf16.gmra.mrb[0].mxu0 %v6120
        %v6165 = vpop.f32.mrb[0].mxu0
        %v6166 = vadd.f32 0.0, %v6165
        %v6167 = vpop.f32.mrb[0].mxu0
        %v6168 = vpop.f32.mrb[0].mxu0
        %v6169 = vadd.f32 0.0, %v6168
        %v6170 = vpop.f32.mrb[0].mxu0
        %6171 = vmatprep.mubr.bf16.mxu0 0
        %6172 = vmatmul.mubr.bf16.gmra.mrb[0].mxu0 %v6123
        %v6173 = vpop.f32.mrb[0].mxu0
        %v6174 = vadd.f32 0.0, %v6173
        %v6175 = vpop.f32.mrb[0].mxu0
        %v6176 = vpop.f32.mrb[0].mxu0
        %v6177 = vadd.f32 0.0, %v6176
        %v6178 = vpop.f32.mrb[0].mxu0
        %6179 = vmatprep.mubr.bf16.mxu0 0
        %6180 = vmatmul.mubr.bf16.gmra.mrb[0].mxu0 %v6126
        %v6181 = vpop.f32.mrb[0].mxu0
        %v6182 = vadd.f32 0.0, %v6181
        %v6183 = vpop.f32.mrb[0].mxu0
        %v6184 = vpop.f32.mrb[0].mxu0
        %v6185 = vadd.f32 0.0, %v6184
        %v6186 = vpop.f32.mrb[0].mxu0
        %6187 = vmatprep.mubr.bf16.mxu0 0
        %6188 = vmatmul.mubr.bf16.gmra.mrb[0].mxu0 %v6129
        %v6189 = vpop.f32.mrb[0].mxu0
        %v6190 = vadd.f32 0.0, %v6189
        %v6191 = vpop.f32.mrb[0].mxu0
        %v6192 = vpop.f32.mrb[0].mxu0
        %v6193 = vadd.f32 0.0, %v6192
        %v6194 = vpop.f32.mrb[0].mxu0
        %6195 = vdwg.mxu0
        %v6196 = vadd.f32 %v6026, %v6166
        %v6197 = vadd.f32 %v6027, %v6169
        %v6198 = vadd.f32 %v6028, %v6174
        %v6199 = vadd.f32 %v6029, %v6177
        %v6200 = vadd.f32 %v6030, %v6182
        %v6201 = vadd.f32 %v6031, %v6185
        %v6202 = vadd.f32 %v6032, %v6190
        %v6203 = vadd.f32 %v6033, %v6193
        %v6204 = vld [vmem:[%s5661 + $0x4] sm:$0x3]
        %v6205 = vld [vmem:[%s5661 + $0xc] sm:$0x3]
        %v6206 = vld [vmem:[%s5661 + $0x14] sm:$0x3]
        %v6207 = vld [vmem:[%s5661 + $0x1c] sm:$0x3]
        %v6208 = vld [vmem:[%s5661 + $0x24] sm:$0x3]
        %v6209 = vld [vmem:[%s5661 + $0x2c] sm:$0x3]
        %v6210 = vld [vmem:[%s5661 + $0x34] sm:$0x3]
        %v6211 = vld [vmem:[%s5661 + $0x3c] sm:$0x3]
        %v6213 = vshrl.u32 %v6034, 16
        %v6215 = vrot.slane %v6213, 5
        %v6216 = vshll.u32 %v6034, 16
        %v6218 = vrot.slane %v6216, 6
        %v6219 = vor.u32 %v6215, %v6218
        %v6220 = vrot.slane %v6219, 4
        %v6222 = vshrl.u32 %v6204, 16
        %v6224 = vrot.slane %v6222, 5
        %v6225 = vshll.u32 %v6204, 16
        %v6227 = vrot.slane %v6225, 6
        %v6228 = vor.u32 %v6224, %v6227
        %v6229 = vsel %vm5229, %v6220, %v6228
        %v6231 = vshrl.u32 %v6035, 16
        %v6233 = vrot.slane %v6231, 5
        %v6234 = vshll.u32 %v6035, 16
        %v6236 = vrot.slane %v6234, 6
        %v6237 = vor.u32 %v6233, %v6236
        %v6238 = vrot.slane %v6237, 4
        %v6240 = vshrl.u32 %v6205, 16
        %v6242 = vrot.slane %v6240, 5
        %v6243 = vshll.u32 %v6205, 16
        %v6245 = vrot.slane %v6243, 6
        %v6246 = vor.u32 %v6242, %v6245
        %v6247 = vsel %vm5229, %v6238, %v6246
        %v6249 = vshrl.u32 %v6036, 16
        %v6251 = vrot.slane %v6249, 5
        %v6252 = vshll.u32 %v6036, 16
        %v6254 = vrot.slane %v6252, 6
        %v6255 = vor.u32 %v6251, %v6254
        %v6256 = vrot.slane %v6255, 4
        %v6258 = vshrl.u32 %v6206, 16
        %v6260 = vrot.slane %v6258, 5
        %v6261 = vshll.u32 %v6206, 16
        %v6263 = vrot.slane %v6261, 6
        %v6264 = vor.u32 %v6260, %v6263
        %v6265 = vsel %vm5229, %v6256, %v6264
        %v6267 = vshrl.u32 %v6037, 16
        %v6269 = vrot.slane %v6267, 5
        %v6270 = vshll.u32 %v6037, 16
        %v6272 = vrot.slane %v6270, 6
        %v6273 = vor.u32 %v6269, %v6272
        %v6274 = vrot.slane %v6273, 4
        %v6276 = vshrl.u32 %v6207, 16
        %v6278 = vrot.slane %v6276, 5
        %v6279 = vshll.u32 %v6207, 16
        %v6281 = vrot.slane %v6279, 6
        %v6282 = vor.u32 %v6278, %v6281
        %v6283 = vsel %vm5229, %v6274, %v6282
        %v6285 = vshrl.u32 %v6038, 16
        %v6287 = vrot.slane %v6285, 5
        %v6288 = vshll.u32 %v6038, 16
        %v6290 = vrot.slane %v6288, 6
        %v6291 = vor.u32 %v6287, %v6290
        %v6292 = vrot.slane %v6291, 4
        %v6294 = vshrl.u32 %v6208, 16
        %v6296 = vrot.slane %v6294, 5
        %v6297 = vshll.u32 %v6208, 16
        %v6299 = vrot.slane %v6297, 6
        %v6300 = vor.u32 %v6296, %v6299
        %v6301 = vsel %vm5229, %v6292, %v6300
        %v6303 = vshrl.u32 %v6039, 16
        %v6305 = vrot.slane %v6303, 5
        %v6306 = vshll.u32 %v6039, 16
        %v6308 = vrot.slane %v6306, 6
        %v6309 = vor.u32 %v6305, %v6308
        %v6310 = vrot.slane %v6309, 4
        %v6312 = vshrl.u32 %v6209, 16
        %v6314 = vrot.slane %v6312, 5
        %v6315 = vshll.u32 %v6209, 16
        %v6317 = vrot.slane %v6315, 6
        %v6318 = vor.u32 %v6314, %v6317
        %v6319 = vsel %vm5229, %v6310, %v6318
        %v6321 = vshrl.u32 %v6040, 16
        %v6323 = vrot.slane %v6321, 5
        %v6324 = vshll.u32 %v6040, 16
        %v6326 = vrot.slane %v6324, 6
        %v6327 = vor.u32 %v6323, %v6326
        %v6328 = vrot.slane %v6327, 4
        %v6330 = vshrl.u32 %v6210, 16
        %v6332 = vrot.slane %v6330, 5
        %v6333 = vshll.u32 %v6210, 16
        %v6335 = vrot.slane %v6333, 6
        %v6336 = vor.u32 %v6332, %v6335
        %v6337 = vsel %vm5229, %v6328, %v6336
        %v6339 = vshrl.u32 %v6041, 16
        %v6341 = vrot.slane %v6339, 5
        %v6342 = vshll.u32 %v6041, 16
        %v6344 = vrot.slane %v6342, 6
        %v6345 = vor.u32 %v6341, %v6344
        %v6346 = vrot.slane %v6345, 4
        %v6348 = vshrl.u32 %v6211, 16
        %v6350 = vrot.slane %v6348, 5
        %v6351 = vshll.u32 %v6211, 16
        %v6353 = vrot.slane %v6351, 6
        %v6354 = vor.u32 %v6350, %v6353
        %v6355 = vsel %vm5229, %v6346, %v6354
        %s6356 = scalar_lea.vmem %s3, 128
        %v6357 = vld [vmem:[%s6356] sm:$0xf]
        %v6358 = vld [vmem:[%s6356 + $0x4] sm:$0xf]
        %v6359 = vld [vmem:[%s6356 + $0x8] sm:$0xf]
        %v6360 = vld [vmem:[%s6356 + $0xc] sm:$0xf]
        %v6361 = vunpack.c.l.b16 %v6229
        %v6362 = vunpack.c.l.b16 %v6247
        %v6363 = vunpack.c.l.b16 %v6265
        %v6364 = vunpack.c.l.b16 %v6283
        %v6365 = vunpack.c.l.b16 %v6301
        %v6366 = vunpack.c.l.b16 %v6319
        %v6367 = vunpack.c.l.b16 %v6337
        %v6368 = vunpack.c.l.b16 %v6355
        %v6369 = vpack.c.b16 %v6362, %v6361
        %v6370 = vpack.c.b16 %v6364, %v6363
        %v6371 = vpack.c.b16 %v6366, %v6365
        %v6372 = vpack.c.b16 %v6368, %v6367
        %v6377 = vunpack.c.l.b16 %v6357
        %v6378 = vunpack.c.l.b16 %v6358
        %v6379 = vunpack.c.l.b16 %v6359
        %v6380 = vunpack.c.l.b16 %v6360
        %v6381 = vpack.c.b16 %v6378, %v6377
        %v6382 = vpack.c.b16 %v6380, %v6379
        %v6386 = vsel %vm4859, %v6369, 0
        %v6389 = vsel %vm4859, %v6370, 0
        %v6392 = vsel %vm4859, %v6371, 0
        %v6395 = vsel %vm4859, %v6372, 0
        %6397 = vmatprep.subr.bf16.mxu0 0
        %6398 = vmatpush1.bf16.msra.mxu0 %v6381
        %6399 = vmatprep.subr.bf16.mxu0 0
        %6400 = vmatpush1.bf16.msra.mxu0 %v6382
        %6401 = vmatprep.subr.bf16.mxu0 0
        %6402 = vmatpush1.bf16.msra.mxu0 0
        %6403 = vmatprep.subr.bf16.mxu0 0
        %6404 = vmatpush1.bf16.msra.mxu0 0
        %6405 = vmatprep.subr.bf16.mxu0 0
        %6406 = vmatpush1.bf16.msra.mxu0 0
        %6407 = vmatprep.subr.bf16.mxu0 0
        %6408 = vmatpush1.bf16.msra.mxu0 0
        %6409 = vmatprep.subr.bf16.mxu0 0
        %6410 = vmatpush1.bf16.msra.mxu0 0
        %6411 = vmatprep.subr.bf16.mxu0 0
        %6412 = vmatpush1.bf16.msra.mxu0 0
        %6413 = vmatprep.subr.bf16.mxu0 0
        %6414 = vmatpush1.bf16.msra.mxu0 0
        %6415 = vmatprep.subr.bf16.mxu0 0
        %6416 = vmatpush1.bf16.msra.mxu0 0
        %6417 = vmatprep.subr.bf16.mxu0 0
        %6418 = vmatpush1.bf16.msra.mxu0 0
        %6419 = vmatprep.subr.bf16.mxu0 0
        %6420 = vmatpush1.bf16.msra.mxu0 0
        %6421 = vmatprep.subr.bf16.mxu0 0
        %6422 = vmatpush1.bf16.msra.mxu0 0
        %6423 = vmatprep.subr.bf16.mxu0 0
        %6424 = vmatpush1.bf16.msra.mxu0 0
        %6425 = vmatprep.subr.bf16.mxu0 0
        %6426 = vmatpush1.bf16.msra.mxu0 0
        %6427 = vmatprep.subr.bf16.mxu0 0
        %6428 = vmatpush1.bf16.msra.mxu0 0
        %6429 = vmatprep.mubr.bf16.mxu0 0
        %6430 = vmatmul.mubr.bf16.gmra.mrb[0].mxu0 %v6386
        %v6431 = vpop.f32.mrb[0].mxu0
        %v6432 = vadd.f32 0.0, %v6431
        %v6433 = vpop.f32.mrb[0].mxu0
        %v6434 = vpop.f32.mrb[0].mxu0
        %v6435 = vadd.f32 0.0, %v6434
        %v6436 = vpop.f32.mrb[0].mxu0
        %6437 = vmatprep.mubr.bf16.mxu0 0
        %6438 = vmatmul.mubr.bf16.gmra.mrb[0].mxu0 %v6389
        %v6439 = vpop.f32.mrb[0].mxu0
        %v6440 = vadd.f32 0.0, %v6439
        %v6441 = vpop.f32.mrb[0].mxu0
        %v6442 = vpop.f32.mrb[0].mxu0
        %v6443 = vadd.f32 0.0, %v6442
        %v6444 = vpop.f32.mrb[0].mxu0
        %6445 = vmatprep.mubr.bf16.mxu0 0
        %6446 = vmatmul.mubr.bf16.gmra.mrb[0].mxu0 %v6392
        %v6447 = vpop.f32.mrb[0].mxu0
        %v6448 = vadd.f32 0.0, %v6447
        %v6449 = vpop.f32.mrb[0].mxu0
        %v6450 = vpop.f32.mrb[0].mxu0
        %v6451 = vadd.f32 0.0, %v6450
        %v6452 = vpop.f32.mrb[0].mxu0
        %6453 = vmatprep.mubr.bf16.mxu0 0
        %6454 = vmatmul.mubr.bf16.gmra.mrb[0].mxu0 %v6395
        %v6455 = vpop.f32.mrb[0].mxu0
        %v6456 = vadd.f32 0.0, %v6455
        %v6457 = vpop.f32.mrb[0].mxu0
        %v6458 = vpop.f32.mrb[0].mxu0
        %v6459 = vadd.f32 0.0, %v6458
        %v6460 = vpop.f32.mrb[0].mxu0
        %6461 = vdwg.mxu0
        %v6462 = vadd.f32 %v6196, %v6432
        %v6463 = vadd.f32 %v6197, %v6435
        %v6464 = vadd.f32 %v6198, %v6440
        %v6465 = vadd.f32 %v6199, %v6443
        %v6466 = vadd.f32 %v6200, %v6448
        %v6467 = vadd.f32 %v6201, %v6451
        %v6468 = vadd.f32 %v6202, %v6456
        %v6469 = vadd.f32 %v6203, %v6459
        %v6470 = vld [vmem:[%s5661] sm:$0xc]
        %v6471 = vld [vmem:[%s5661 + $0x8] sm:$0xc]
        %v6472 = vld [vmem:[%s5661 + $0x10] sm:$0xc]
        %v6473 = vld [vmem:[%s5661 + $0x18] sm:$0xc]
        %v6474 = vld [vmem:[%s5661 + $0x20] sm:$0xc]
        %v6475 = vld [vmem:[%s5661 + $0x28] sm:$0xc]
        %v6476 = vld [vmem:[%s5661 + $0x30] sm:$0xc]
        %v6477 = vld [vmem:[%s5661 + $0x38] sm:$0xc]
        %v6494 = vrot.slane %v6470, 6
        %v6495 = vrot.slane %v6494, 4
        %v6496 = vrot.slane %v6204, 6
        %v6497 = vsel %vm5514, %v6495, %v6496
        %v6498 = vrot.slane %v6471, 6
        %v6499 = vrot.slane %v6498, 4
        %v6500 = vrot.slane %v6205, 6
        %v6501 = vsel %vm5514, %v6499, %v6500
        %v6502 = vrot.slane %v6472, 6
        %v6503 = vrot.slane %v6502, 4
        %v6504 = vrot.slane %v6206, 6
        %v6505 = vsel %vm5514, %v6503, %v6504
        %v6506 = vrot.slane %v6473, 6
        %v6507 = vrot.slane %v6506, 4
        %v6508 = vrot.slane %v6207, 6
        %v6509 = vsel %vm5514, %v6507, %v6508
        %v6510 = vrot.slane %v6474, 6
        %v6511 = vrot.slane %v6510, 4
        %v6512 = vrot.slane %v6208, 6
        %v6513 = vsel %vm5514, %v6511, %v6512
        %v6514 = vrot.slane %v6475, 6
        %v6515 = vrot.slane %v6514, 4
        %v6516 = vrot.slane %v6209, 6
        %v6517 = vsel %vm5514, %v6515, %v6516
        %v6518 = vrot.slane %v6476, 6
        %v6519 = vrot.slane %v6518, 4
        %v6520 = vrot.slane %v6210, 6
        %v6521 = vsel %vm5514, %v6519, %v6520
        %v6522 = vrot.slane %v6477, 6
        %v6523 = vrot.slane %v6522, 4
        %v6524 = vrot.slane %v6211, 6
        %v6525 = vsel %vm5514, %v6523, %v6524
        %s6526 = scalar_lea.vmem %s3, 144
        %v6527 = vld [vmem:[%s6526] sm:$0xf]
        %v6528 = vld [vmem:[%s6526 + $0x4] sm:$0xf]
        %v6529 = vld [vmem:[%s6526 + $0x8] sm:$0xf]
        %v6530 = vld [vmem:[%s6526 + $0xc] sm:$0xf]
        %v6531 = vunpack.c.l.b16 %v6497
        %v6532 = vunpack.c.l.b16 %v6501
        %v6533 = vunpack.c.l.b16 %v6505
        %v6534 = vunpack.c.l.b16 %v6509
        %v6535 = vunpack.c.l.b16 %v6513
        %v6536 = vunpack.c.l.b16 %v6517
        %v6537 = vunpack.c.l.b16 %v6521
        %v6538 = vunpack.c.l.b16 %v6525
        %v6539 = vpack.c.b16 %v6532, %v6531
        %v6540 = vpack.c.b16 %v6534, %v6533
        %v6541 = vpack.c.b16 %v6536, %v6535
        %v6542 = vpack.c.b16 %v6538, %v6537
        %v6547 = vunpack.c.l.b16 %v6527
        %v6548 = vunpack.c.l.b16 %v6528
        %v6549 = vunpack.c.l.b16 %v6529
        %v6550 = vunpack.c.l.b16 %v6530
        %v6551 = vpack.c.b16 %v6548, %v6547
        %v6552 = vpack.c.b16 %v6550, %v6549
        %v6556 = vsel %vm4859, %v6539, 0
        %v6559 = vsel %vm4859, %v6540, 0
        %v6562 = vsel %vm4859, %v6541, 0
        %v6565 = vsel %vm4859, %v6542, 0
        %6567 = vmatprep.subr.bf16.mxu0 0
        %6568 = vmatpush1.bf16.msra.mxu0 %v6551
        %6569 = vmatprep.subr.bf16.mxu0 0
        %6570 = vmatpush1.bf16.msra.mxu0 %v6552
        %6571 = vmatprep.subr.bf16.mxu0 0
        %6572 = vmatpush1.bf16.msra.mxu0 0
        %6573 = vmatprep.subr.bf16.mxu0 0
        %6574 = vmatpush1.bf16.msra.mxu0 0
        %6575 = vmatprep.subr.bf16.mxu0 0
        %6576 = vmatpush1.bf16.msra.mxu0 0
        %6577 = vmatprep.subr.bf16.mxu0 0
        %6578 = vmatpush1.bf16.msra.mxu0 0
        %6579 = vmatprep.subr.bf16.mxu0 0
        %6580 = vmatpush1.bf16.msra.mxu0 0
        %6581 = vmatprep.subr.bf16.mxu0 0
        %6582 = vmatpush1.bf16.msra.mxu0 0
        %6583 = vmatprep.subr.bf16.mxu0 0
        %6584 = vmatpush1.bf16.msra.mxu0 0
        %6585 = vmatprep.subr.bf16.mxu0 0
        %6586 = vmatpush1.bf16.msra.mxu0 0
        %6587 = vmatprep.subr.bf16.mxu0 0
        %6588 = vmatpush1.bf16.msra.mxu0 0
        %6589 = vmatprep.subr.bf16.mxu0 0
        %6590 = vmatpush1.bf16.msra.mxu0 0
        %6591 = vmatprep.subr.bf16.mxu0 0
        %6592 = vmatpush1.bf16.msra.mxu0 0
        %6593 = vmatprep.subr.bf16.mxu0 0
        %6594 = vmatpush1.bf16.msra.mxu0 0
        %6595 = vmatprep.subr.bf16.mxu0 0
        %6596 = vmatpush1.bf16.msra.mxu0 0
        %6597 = vmatprep.subr.bf16.mxu0 0
        %6598 = vmatpush1.bf16.msra.mxu0 0
        %6599 = vmatprep.mubr.bf16.mxu0 0
        %6600 = vmatmul.mubr.bf16.gmra.mrb[0].mxu0 %v6556
        %v6601 = vpop.f32.mrb[0].mxu0
        %v6602 = vadd.f32 0.0, %v6601
        %v6603 = vpop.f32.mrb[0].mxu0
        %v6604 = vpop.f32.mrb[0].mxu0
        %v6605 = vadd.f32 0.0, %v6604
        %v6606 = vpop.f32.mrb[0].mxu0
        %6607 = vmatprep.mubr.bf16.mxu0 0
        %6608 = vmatmul.mubr.bf16.gmra.mrb[0].mxu0 %v6559
        %v6609 = vpop.f32.mrb[0].mxu0
        %v6610 = vadd.f32 0.0, %v6609
        %v6611 = vpop.f32.mrb[0].mxu0
        %v6612 = vpop.f32.mrb[0].mxu0
        %v6613 = vadd.f32 0.0, %v6612
        %v6614 = vpop.f32.mrb[0].mxu0
        %6615 = vmatprep.mubr.bf16.mxu0 0
        %6616 = vmatmul.mubr.bf16.gmra.mrb[0].mxu0 %v6562
        %v6617 = vpop.f32.mrb[0].mxu0
        %v6618 = vadd.f32 0.0, %v6617
        %v6619 = vpop.f32.mrb[0].mxu0
        %v6620 = vpop.f32.mrb[0].mxu0
        %v6621 = vadd.f32 0.0, %v6620
        %v6622 = vpop.f32.mrb[0].mxu0
        %6623 = vmatprep.mubr.bf16.mxu0 0
        %6624 = vmatmul.mubr.bf16.gmra.mrb[0].mxu0 %v6565
        %v6625 = vpop.f32.mrb[0].mxu0
        %v6626 = vadd.f32 0.0, %v6625
        %v6627 = vpop.f32.mrb[0].mxu0
        %v6628 = vpop.f32.mrb[0].mxu0
        %v6629 = vadd.f32 0.0, %v6628
        %v6630 = vpop.f32.mrb[0].mxu0
        %6631 = vdwg.mxu0
        %v6632 = vadd.f32 %v6462, %v6602
        %v6633 = vadd.f32 %v6463, %v6605
        %v6634 = vadd.f32 %v6464, %v6610
        %v6635 = vadd.f32 %v6465, %v6613
        %v6636 = vadd.f32 %v6466, %v6618
        %v6637 = vadd.f32 %v6467, %v6621
        %v6638 = vadd.f32 %v6468, %v6626
        %v6639 = vadd.f32 %v6469, %v6629
        %s6640 = scalar_lea.vmem [#allocation2], 16
        %v6641 = vld [vmem:[%s6640] sm:$0xf]
        %v6642 = vld [vmem:[%s6640 + $0x8] sm:$0xf]
        %v6643 = vld [vmem:[%s6640 + $0x10] sm:$0xf]
        %v6644 = vld [vmem:[%s6640 + $0x18] sm:$0xf]
        %v6645 = vld [vmem:[%s6640 + $0x20] sm:$0xf]
        %v6646 = vld [vmem:[%s6640 + $0x28] sm:$0xf]
        %v6647 = vld [vmem:[%s6640 + $0x30] sm:$0xf]
        %v6648 = vld [vmem:[%s6640 + $0x38] sm:$0xf]
        %s6649 = scalar_lea.vmem %s3, 160
        %v6650 = vld [vmem:[%s6649] sm:$0xf]
        %v6651 = vld [vmem:[%s6649 + $0x4] sm:$0xf]
        %v6652 = vld [vmem:[%s6649 + $0x8] sm:$0xf]
        %v6653 = vld [vmem:[%s6649 + $0xc] sm:$0xf]
        %v6662 = vunpack.c.l.b16 %v6641
        %v6663 = vunpack.c.l.b16 %v6642
        %v6664 = vunpack.c.l.b16 %v6643
        %v6665 = vunpack.c.l.b16 %v6644
        %v6666 = vunpack.c.l.b16 %v6645
        %v6667 = vunpack.c.l.b16 %v6646
        %v6668 = vunpack.c.l.b16 %v6647
        %v6669 = vunpack.c.l.b16 %v6648
        %v6670 = vpack.c.b16 %v6663, %v6662
        %v6671 = vpack.c.b16 %v6665, %v6664
        %v6672 = vpack.c.b16 %v6667, %v6666
        %v6673 = vpack.c.b16 %v6669, %v6668
        %v6678 = vunpack.c.l.b16 %v6650
        %v6679 = vunpack.c.l.b16 %v6651
        %v6680 = vunpack.c.l.b16 %v6652
        %v6681 = vunpack.c.l.b16 %v6653
        %v6682 = vpack.c.b16 %v6679, %v6678
        %v6683 = vpack.c.b16 %v6681, %v6680
        %v6687 = vsel %vm4859, %v6670, 0
        %v6690 = vsel %vm4859, %v6671, 0
        %v6693 = vsel %vm4859, %v6672, 0
        %v6696 = vsel %vm4859, %v6673, 0
        %6698 = vmatprep.subr.bf16.mxu0 0
        %6699 = vmatpush1.bf16.msra.mxu0 %v6682
        %6700 = vmatprep.subr.bf16.mxu0 0
        %6701 = vmatpush1.bf16.msra.mxu0 %v6683
        %6702 = vmatprep.subr.bf16.mxu0 0
        %6703 = vmatpush1.bf16.msra.mxu0 0
        %6704 = vmatprep.subr.bf16.mxu0 0
        %6705 = vmatpush1.bf16.msra.mxu0 0
        %6706 = vmatprep.subr.bf16.mxu0 0
        %6707 = vmatpush1.bf16.msra.mxu0 0
        %6708 = vmatprep.subr.bf16.mxu0 0
        %6709 = vmatpush1.bf16.msra.mxu0 0
        %6710 = vmatprep.subr.bf16.mxu0 0
        %6711 = vmatpush1.bf16.msra.mxu0 0
        %6712 = vmatprep.subr.bf16.mxu0 0
        %6713 = vmatpush1.bf16.msra.mxu0 0
        %6714 = vmatprep.subr.bf16.mxu0 0
        %6715 = vmatpush1.bf16.msra.mxu0 0
        %6716 = vmatprep.subr.bf16.mxu0 0
        %6717 = vmatpush1.bf16.msra.mxu0 0
        %6718 = vmatprep.subr.bf16.mxu0 0
        %6719 = vmatpush1.bf16.msra.mxu0 0
        %6720 = vmatprep.subr.bf16.mxu0 0
        %6721 = vmatpush1.bf16.msra.mxu0 0
        %6722 = vmatprep.subr.bf16.mxu0 0
        %6723 = vmatpush1.bf16.msra.mxu0 0
        %6724 = vmatprep.subr.bf16.mxu0 0
        %6725 = vmatpush1.bf16.msra.mxu0 0
        %6726 = vmatprep.subr.bf16.mxu0 0
        %6727 = vmatpush1.bf16.msra.mxu0 0
        %6728 = vmatprep.subr.bf16.mxu0 0
        %6729 = vmatpush1.bf16.msra.mxu0 0
        %6730 = vmatprep.mubr.bf16.mxu0 0
        %6731 = vmatmul.mubr.bf16.gmra.mrb[0].mxu0 %v6687
        %v6732 = vpop.f32.mrb[0].mxu0
        %v6733 = vadd.f32 0.0, %v6732
        %v6734 = vpop.f32.mrb[0].mxu0
        %v6735 = vpop.f32.mrb[0].mxu0
        %v6736 = vadd.f32 0.0, %v6735
        %v6737 = vpop.f32.mrb[0].mxu0
        %6738 = vmatprep.mubr.bf16.mxu0 0
        %6739 = vmatmul.mubr.bf16.gmra.mrb[0].mxu0 %v6690
        %v6740 = vpop.f32.mrb[0].mxu0
        %v6741 = vadd.f32 0.0, %v6740
        %v6742 = vpop.f32.mrb[0].mxu0
        %v6743 = vpop.f32.mrb[0].mxu0
        %v6744 = vadd.f32 0.0, %v6743
        %v6745 = vpop.f32.mrb[0].mxu0
        %6746 = vmatprep.mubr.bf16.mxu0 0
        %6747 = vmatmul.mubr.bf16.gmra.mrb[0].mxu0 %v6693
        %v6748 = vpop.f32.mrb[0].mxu0
        %v6749 = vadd.f32 0.0, %v6748
        %v6750 = vpop.f32.mrb[0].mxu0
        %v6751 = vpop.f32.mrb[0].mxu0
        %v6752 = vadd.f32 0.0, %v6751
        %v6753 = vpop.f32.mrb[0].mxu0
        %6754 = vmatprep.mubr.bf16.mxu0 0
        %6755 = vmatmul.mubr.bf16.gmra.mrb[0].mxu0 %v6696
        %v6756 = vpop.f32.mrb[0].mxu0
        %v6757 = vadd.f32 0.0, %v6756
        %v6758 = vpop.f32.mrb[0].mxu0
        %v6759 = vpop.f32.mrb[0].mxu0
        %v6760 = vadd.f32 0.0, %v6759
        %v6761 = vpop.f32.mrb[0].mxu0
        %6762 = vdwg.mxu0
        %v6763 = vadd.f32 %v6632, %v6733
        %v6764 = vadd.f32 %v6633, %v6736
        %v6765 = vadd.f32 %v6634, %v6741
        %v6766 = vadd.f32 %v6635, %v6744
        %v6767 = vadd.f32 %v6636, %v6749
        %v6768 = vadd.f32 %v6637, %v6752
        %v6769 = vadd.f32 %v6638, %v6757
        %v6770 = vadd.f32 %v6639, %v6760
        %v6771 = vld [vmem:[%s6640] sm:$0xf]
        %v6772 = vld [vmem:[%s6640 + $0x4] sm:$0x1]
        %v6773 = vld [vmem:[%s6640 + $0x8] sm:$0xf]
        %v6774 = vld [vmem:[%s6640 + $0xc] sm:$0x1]
        %v6775 = vld [vmem:[%s6640 + $0x10] sm:$0xf]
        %v6776 = vld [vmem:[%s6640 + $0x14] sm:$0x1]
        %v6777 = vld [vmem:[%s6640 + $0x18] sm:$0xf]
        %v6778 = vld [vmem:[%s6640 + $0x1c] sm:$0x1]
        %v6779 = vld [vmem:[%s6640 + $0x20] sm:$0xf]
        %v6780 = vld [vmem:[%s6640 + $0x24] sm:$0x1]
        %v6781 = vld [vmem:[%s6640 + $0x28] sm:$0xf]
        %v6782 = vld [vmem:[%s6640 + $0x2c] sm:$0x1]
        %v6783 = vld [vmem:[%s6640 + $0x30] sm:$0xf]
        %v6784 = vld [vmem:[%s6640 + $0x34] sm:$0x1]
        %v6785 = vld [vmem:[%s6640 + $0x38] sm:$0xf]
        %v6786 = vld [vmem:[%s6640 + $0x3c] sm:$0x1]
        %v6788 = vshrl.u32 %v6771, 16
        %v6790 = vrot.slane %v6788, 4
        %v6791 = vshll.u32 %v6771, 16
        %v6793 = vrot.slane %v6791, 5
        %v6794 = vor.u32 %v6790, %v6793
        %v6795 = vrot.slane %v6794, 4
        %v6797 = vshll.u32 %v6772, 16
        %v6799 = vrot.slane %v6797, 5
        %v6800 = vsel %vm4717, %v6795, %v6799
        %v6802 = vshrl.u32 %v6773, 16
        %v6804 = vrot.slane %v6802, 4
        %v6805 = vshll.u32 %v6773, 16
        %v6807 = vrot.slane %v6805, 5
        %v6808 = vor.u32 %v6804, %v6807
        %v6809 = vrot.slane %v6808, 4
        %v6811 = vshll.u32 %v6774, 16
        %v6813 = vrot.slane %v6811, 5
        %v6814 = vsel %vm4717, %v6809, %v6813
        %v6816 = vshrl.u32 %v6775, 16
        %v6818 = vrot.slane %v6816, 4
        %v6819 = vshll.u32 %v6775, 16
        %v6821 = vrot.slane %v6819, 5
        %v6822 = vor.u32 %v6818, %v6821
        %v6823 = vrot.slane %v6822, 4
        %v6825 = vshll.u32 %v6776, 16
        %v6827 = vrot.slane %v6825, 5
        %v6828 = vsel %vm4717, %v6823, %v6827
        %v6830 = vshrl.u32 %v6777, 16
        %v6832 = vrot.slane %v6830, 4
        %v6833 = vshll.u32 %v6777, 16
        %v6835 = vrot.slane %v6833, 5
        %v6836 = vor.u32 %v6832, %v6835
        %v6837 = vrot.slane %v6836, 4
        %v6839 = vshll.u32 %v6778, 16
        %v6841 = vrot.slane %v6839, 5
        %v6842 = vsel %vm4717, %v6837, %v6841
        %v6844 = vshrl.u32 %v6779, 16
        %v6846 = vrot.slane %v6844, 4
        %v6847 = vshll.u32 %v6779, 16
        %v6849 = vrot.slane %v6847, 5
        %v6850 = vor.u32 %v6846, %v6849
        %v6851 = vrot.slane %v6850, 4
        %v6853 = vshll.u32 %v6780, 16
        %v6855 = vrot.slane %v6853, 5
        %v6856 = vsel %vm4717, %v6851, %v6855
        %v6858 = vshrl.u32 %v6781, 16
        %v6860 = vrot.slane %v6858, 4
        %v6861 = vshll.u32 %v6781, 16
        %v6863 = vrot.slane %v6861, 5
        %v6864 = vor.u32 %v6860, %v6863
        %v6865 = vrot.slane %v6864, 4
        %v6867 = vshll.u32 %v6782, 16
        %v6869 = vrot.slane %v6867, 5
        %v6870 = vsel %vm4717, %v6865, %v6869
        %v6872 = vshrl.u32 %v6783, 16
        %v6874 = vrot.slane %v6872, 4
        %v6875 = vshll.u32 %v6783, 16
        %v6877 = vrot.slane %v6875, 5
        %v6878 = vor.u32 %v6874, %v6877
        %v6879 = vrot.slane %v6878, 4
        %v6881 = vshll.u32 %v6784, 16
        %v6883 = vrot.slane %v6881, 5
        %v6884 = vsel %vm4717, %v6879, %v6883
        %v6886 = vshrl.u32 %v6785, 16
        %v6888 = vrot.slane %v6886, 4
        %v6889 = vshll.u32 %v6785, 16
        %v6891 = vrot.slane %v6889, 5
        %v6892 = vor.u32 %v6888, %v6891
        %v6893 = vrot.slane %v6892, 4
        %v6895 = vshll.u32 %v6786, 16
        %v6897 = vrot.slane %v6895, 5
        %v6898 = vsel %vm4717, %v6893, %v6897
        %s6899 = scalar_lea.vmem %s3, 176
        %v6900 = vld [vmem:[%s6899] sm:$0xf]
        %v6901 = vld [vmem:[%s6899 + $0x4] sm:$0xf]
        %v6902 = vld [vmem:[%s6899 + $0x8] sm:$0xf]
        %v6903 = vld [vmem:[%s6899 + $0xc] sm:$0xf]
        %v6904 = vunpack.c.l.b16 %v6800
        %v6905 = vunpack.c.l.b16 %v6814
        %v6906 = vunpack.c.l.b16 %v6828
        %v6907 = vunpack.c.l.b16 %v6842
        %v6908 = vunpack.c.l.b16 %v6856
        %v6909 = vunpack.c.l.b16 %v6870
        %v6910 = vunpack.c.l.b16 %v6884
        %v6911 = vunpack.c.l.b16 %v6898
        %v6912 = vpack.c.b16 %v6905, %v6904
        %v6913 = vpack.c.b16 %v6907, %v6906
        %v6914 = vpack.c.b16 %v6909, %v6908
        %v6915 = vpack.c.b16 %v6911, %v6910
        %v6920 = vunpack.c.l.b16 %v6900
        %v6921 = vunpack.c.l.b16 %v6901
        %v6922 = vunpack.c.l.b16 %v6902
        %v6923 = vunpack.c.l.b16 %v6903
        %v6924 = vpack.c.b16 %v6921, %v6920
        %v6925 = vpack.c.b16 %v6923, %v6922
        %v6929 = vsel %vm4859, %v6912, 0
        %v6932 = vsel %vm4859, %v6913, 0
        %v6935 = vsel %vm4859, %v6914, 0
        %v6938 = vsel %vm4859, %v6915, 0
        %6940 = vmatprep.subr.bf16.mxu0 0
        %6941 = vmatpush1.bf16.msra.mxu0 %v6924
        %6942 = vmatprep.subr.bf16.mxu0 0
        %6943 = vmatpush1.bf16.msra.mxu0 %v6925
        %6944 = vmatprep.subr.bf16.mxu0 0
        %6945 = vmatpush1.bf16.msra.mxu0 0
        %6946 = vmatprep.subr.bf16.mxu0 0
        %6947 = vmatpush1.bf16.msra.mxu0 0
        %6948 = vmatprep.subr.bf16.mxu0 0
        %6949 = vmatpush1.bf16.msra.mxu0 0
        %6950 = vmatprep.subr.bf16.mxu0 0
        %6951 = vmatpush1.bf16.msra.mxu0 0
        %6952 = vmatprep.subr.bf16.mxu0 0
        %6953 = vmatpush1.bf16.msra.mxu0 0
        %6954 = vmatprep.subr.bf16.mxu0 0
        %6955 = vmatpush1.bf16.msra.mxu0 0
        %6956 = vmatprep.subr.bf16.mxu0 0
        %6957 = vmatpush1.bf16.msra.mxu0 0
        %6958 = vmatprep.subr.bf16.mxu0 0
        %6959 = vmatpush1.bf16.msra.mxu0 0
        %6960 = vmatprep.subr.bf16.mxu0 0
        %6961 = vmatpush1.bf16.msra.mxu0 0
        %6962 = vmatprep.subr.bf16.mxu0 0
        %6963 = vmatpush1.bf16.msra.mxu0 0
        %6964 = vmatprep.subr.bf16.mxu0 0
        %6965 = vmatpush1.bf16.msra.mxu0 0
        %6966 = vmatprep.subr.bf16.mxu0 0
        %6967 = vmatpush1.bf16.msra.mxu0 0
        %6968 = vmatprep.subr.bf16.mxu0 0
        %6969 = vmatpush1.bf16.msra.mxu0 0
        %6970 = vmatprep.subr.bf16.mxu0 0
        %6971 = vmatpush1.bf16.msra.mxu0 0
        %6972 = vmatprep.mubr.bf16.mxu0 0
        %6973 = vmatmul.mubr.bf16.gmra.mrb[0].mxu0 %v6929
        %v6974 = vpop.f32.mrb[0].mxu0
        %v6975 = vadd.f32 0.0, %v6974
        %v6976 = vpop.f32.mrb[0].mxu0
        %v6977 = vpop.f32.mrb[0].mxu0
        %v6978 = vadd.f32 0.0, %v6977
        %v6979 = vpop.f32.mrb[0].mxu0
        %6980 = vmatprep.mubr.bf16.mxu0 0
        %6981 = vmatmul.mubr.bf16.gmra.mrb[0].mxu0 %v6932
        %v6982 = vpop.f32.mrb[0].mxu0
        %v6983 = vadd.f32 0.0, %v6982
        %v6984 = vpop.f32.mrb[0].mxu0
        %v6985 = vpop.f32.mrb[0].mxu0
        %v6986 = vadd.f32 0.0, %v6985
        %v6987 = vpop.f32.mrb[0].mxu0
        %6988 = vmatprep.mubr.bf16.mxu0 0
        %6989 = vmatmul.mubr.bf16.gmra.mrb[0].mxu0 %v6935
        %v6990 = vpop.f32.mrb[0].mxu0
        %v6991 = vadd.f32 0.0, %v6990
        %v6992 = vpop.f32.mrb[0].mxu0
        %v6993 = vpop.f32.mrb[0].mxu0
        %v6994 = vadd.f32 0.0, %v6993
        %v6995 = vpop.f32.mrb[0].mxu0
        %6996 = vmatprep.mubr.bf16.mxu0 0
        %6997 = vmatmul.mubr.bf16.gmra.mrb[0].mxu0 %v6938
        %v6998 = vpop.f32.mrb[0].mxu0
        %v6999 = vadd.f32 0.0, %v6998
        %v7000 = vpop.f32.mrb[0].mxu0
        %v7001 = vpop.f32.mrb[0].mxu0
        %v7002 = vadd.f32 0.0, %v7001
        %v7003 = vpop.f32.mrb[0].mxu0
        %7004 = vdwg.mxu0
        %v7005 = vadd.f32 %v6763, %v6975
        %v7006 = vadd.f32 %v6764, %v6978
        %v7007 = vadd.f32 %v6765, %v6983
        %v7008 = vadd.f32 %v6766, %v6986
        %v7009 = vadd.f32 %v6767, %v6991
        %v7010 = vadd.f32 %v6768, %v6994
        %v7011 = vadd.f32 %v6769, %v6999
        %v7012 = vadd.f32 %v6770, %v7002
        %v7013 = vld [vmem:[%s6640] sm:$0xe]
        %v7014 = vld [vmem:[%s6640 + $0x8] sm:$0xe]
        %v7015 = vld [vmem:[%s6640 + $0x10] sm:$0xe]
        %v7016 = vld [vmem:[%s6640 + $0x18] sm:$0xe]
        %v7017 = vld [vmem:[%s6640 + $0x20] sm:$0xe]
        %v7018 = vld [vmem:[%s6640 + $0x28] sm:$0xe]
        %v7019 = vld [vmem:[%s6640 + $0x30] sm:$0xe]
        %v7020 = vld [vmem:[%s6640 + $0x38] sm:$0xe]
        %v7037 = vrot.slane %v7013, 5
        %v7038 = vrot.slane %v7037, 4
        %v7039 = vrot.slane %v6772, 5
        %v7040 = vsel %vm5072, %v7038, %v7039
        %v7041 = vrot.slane %v7014, 5
        %v7042 = vrot.slane %v7041, 4
        %v7043 = vrot.slane %v6774, 5
        %v7044 = vsel %vm5072, %v7042, %v7043
        %v7045 = vrot.slane %v7015, 5
        %v7046 = vrot.slane %v7045, 4
        %v7047 = vrot.slane %v6776, 5
        %v7048 = vsel %vm5072, %v7046, %v7047
        %v7049 = vrot.slane %v7016, 5
        %v7050 = vrot.slane %v7049, 4
        %v7051 = vrot.slane %v6778, 5
        %v7052 = vsel %vm5072, %v7050, %v7051
        %v7053 = vrot.slane %v7017, 5
        %v7054 = vrot.slane %v7053, 4
        %v7055 = vrot.slane %v6780, 5
        %v7056 = vsel %vm5072, %v7054, %v7055
        %v7057 = vrot.slane %v7018, 5
        %v7058 = vrot.slane %v7057, 4
        %v7059 = vrot.slane %v6782, 5
        %v7060 = vsel %vm5072, %v7058, %v7059
        %v7061 = vrot.slane %v7019, 5
        %v7062 = vrot.slane %v7061, 4
        %v7063 = vrot.slane %v6784, 5
        %v7064 = vsel %vm5072, %v7062, %v7063
        %v7065 = vrot.slane %v7020, 5
        %v7066 = vrot.slane %v7065, 4
        %v7067 = vrot.slane %v6786, 5
        %v7068 = vsel %vm5072, %v7066, %v7067
        %s7069 = scalar_lea.vmem %s3, 192
        %v7070 = vld [vmem:[%s7069] sm:$0xf]
        %v7071 = vld [vmem:[%s7069 + $0x4] sm:$0xf]
        %v7072 = vld [vmem:[%s7069 + $0x8] sm:$0xf]
        %v7073 = vld [vmem:[%s7069 + $0xc] sm:$0xf]
        %v7074 = vunpack.c.l.b16 %v7040
        %v7075 = vunpack.c.l.b16 %v7044
        %v7076 = vunpack.c.l.b16 %v7048
        %v7077 = vunpack.c.l.b16 %v7052
        %v7078 = vunpack.c.l.b16 %v7056
        %v7079 = vunpack.c.l.b16 %v7060
        %v7080 = vunpack.c.l.b16 %v7064
        %v7081 = vunpack.c.l.b16 %v7068
        %v7082 = vpack.c.b16 %v7075, %v7074
        %v7083 = vpack.c.b16 %v7077, %v7076
        %v7084 = vpack.c.b16 %v7079, %v7078
        %v7085 = vpack.c.b16 %v7081, %v7080
        %v7090 = vunpack.c.l.b16 %v7070
        %v7091 = vunpack.c.l.b16 %v7071
        %v7092 = vunpack.c.l.b16 %v7072
        %v7093 = vunpack.c.l.b16 %v7073
        %v7094 = vpack.c.b16 %v7091, %v7090
        %v7095 = vpack.c.b16 %v7093, %v7092
        %v7099 = vsel %vm4859, %v7082, 0
        %v7102 = vsel %vm4859, %v7083, 0
        %v7105 = vsel %vm4859, %v7084, 0
        %v7108 = vsel %vm4859, %v7085, 0
        %7110 = vmatprep.subr.bf16.mxu0 0
        %7111 = vmatpush1.bf16.msra.mxu0 %v7094
        %7112 = vmatprep.subr.bf16.mxu0 0
        %7113 = vmatpush1.bf16.msra.mxu0 %v7095
        %7114 = vmatprep.subr.bf16.mxu0 0
        %7115 = vmatpush1.bf16.msra.mxu0 0
        %7116 = vmatprep.subr.bf16.mxu0 0
        %7117 = vmatpush1.bf16.msra.mxu0 0
        %7118 = vmatprep.subr.bf16.mxu0 0
        %7119 = vmatpush1.bf16.msra.mxu0 0
        %7120 = vmatprep.subr.bf16.mxu0 0
        %7121 = vmatpush1.bf16.msra.mxu0 0
        %7122 = vmatprep.subr.bf16.mxu0 0
        %7123 = vmatpush1.bf16.msra.mxu0 0
        %7124 = vmatprep.subr.bf16.mxu0 0
        %7125 = vmatpush1.bf16.msra.mxu0 0
        %7126 = vmatprep.subr.bf16.mxu0 0
        %7127 = vmatpush1.bf16.msra.mxu0 0
        %7128 = vmatprep.subr.bf16.mxu0 0
        %7129 = vmatpush1.bf16.msra.mxu0 0
        %7130 = vmatprep.subr.bf16.mxu0 0
        %7131 = vmatpush1.bf16.msra.mxu0 0
        %7132 = vmatprep.subr.bf16.mxu0 0
        %7133 = vmatpush1.bf16.msra.mxu0 0
        %7134 = vmatprep.subr.bf16.mxu0 0
        %7135 = vmatpush1.bf16.msra.mxu0 0
        %7136 = vmatprep.subr.bf16.mxu0 0
        %7137 = vmatpush1.bf16.msra.mxu0 0
        %7138 = vmatprep.subr.bf16.mxu0 0
        %7139 = vmatpush1.bf16.msra.mxu0 0
        %7140 = vmatprep.subr.bf16.mxu0 0
        %7141 = vmatpush1.bf16.msra.mxu0 0
        %7142 = vmatprep.mubr.bf16.mxu0 0
        %7143 = vmatmul.mubr.bf16.gmra.mrb[0].mxu0 %v7099
        %v7144 = vpop.f32.mrb[0].mxu0
        %v7145 = vadd.f32 0.0, %v7144
        %v7146 = vpop.f32.mrb[0].mxu0
        %v7147 = vpop.f32.mrb[0].mxu0
        %v7148 = vadd.f32 0.0, %v7147
        %v7149 = vpop.f32.mrb[0].mxu0
        %7150 = vmatprep.mubr.bf16.mxu0 0
        %7151 = vmatmul.mubr.bf16.gmra.mrb[0].mxu0 %v7102
        %v7152 = vpop.f32.mrb[0].mxu0
        %v7153 = vadd.f32 0.0, %v7152
        %v7154 = vpop.f32.mrb[0].mxu0
        %v7155 = vpop.f32.mrb[0].mxu0
        %v7156 = vadd.f32 0.0, %v7155
        %v7157 = vpop.f32.mrb[0].mxu0
        %7158 = vmatprep.mubr.bf16.mxu0 0
        %7159 = vmatmul.mubr.bf16.gmra.mrb[0].mxu0 %v7105
        %v7160 = vpop.f32.mrb[0].mxu0
        %v7161 = vadd.f32 0.0, %v7160
        %v7162 = vpop.f32.mrb[0].mxu0
        %v7163 = vpop.f32.mrb[0].mxu0
        %v7164 = vadd.f32 0.0, %v7163
        %v7165 = vpop.f32.mrb[0].mxu0
        %7166 = vmatprep.mubr.bf16.mxu0 0
        %7167 = vmatmul.mubr.bf16.gmra.mrb[0].mxu0 %v7108
        %v7168 = vpop.f32.mrb[0].mxu0
        %v7169 = vadd.f32 0.0, %v7168
        %v7170 = vpop.f32.mrb[0].mxu0
        %v7171 = vpop.f32.mrb[0].mxu0
        %v7172 = vadd.f32 0.0, %v7171
        %v7173 = vpop.f32.mrb[0].mxu0
        %7174 = vdwg.mxu0
        %v7175 = vadd.f32 %v7005, %v7145
        %v7176 = vadd.f32 %v7006, %v7148
        %v7177 = vadd.f32 %v7007, %v7153
        %v7178 = vadd.f32 %v7008, %v7156
        %v7179 = vadd.f32 %v7009, %v7161
        %v7180 = vadd.f32 %v7010, %v7164
        %v7181 = vadd.f32 %v7011, %v7169
        %v7182 = vadd.f32 %v7012, %v7172
        %v7183 = vld [vmem:[%s6640 + $0x4] sm:$0x3]
        %v7184 = vld [vmem:[%s6640 + $0xc] sm:$0x3]
        %v7185 = vld [vmem:[%s6640 + $0x14] sm:$0x3]
        %v7186 = vld [vmem:[%s6640 + $0x1c] sm:$0x3]
        %v7187 = vld [vmem:[%s6640 + $0x24] sm:$0x3]
        %v7188 = vld [vmem:[%s6640 + $0x2c] sm:$0x3]
        %v7189 = vld [vmem:[%s6640 + $0x34] sm:$0x3]
        %v7190 = vld [vmem:[%s6640 + $0x3c] sm:$0x3]
        %v7192 = vshrl.u32 %v7013, 16
        %v7194 = vrot.slane %v7192, 5
        %v7195 = vshll.u32 %v7013, 16
        %v7197 = vrot.slane %v7195, 6
        %v7198 = vor.u32 %v7194, %v7197
        %v7199 = vrot.slane %v7198, 4
        %v7201 = vshrl.u32 %v7183, 16
        %v7203 = vrot.slane %v7201, 5
        %v7204 = vshll.u32 %v7183, 16
        %v7206 = vrot.slane %v7204, 6
        %v7207 = vor.u32 %v7203, %v7206
        %v7208 = vsel %vm5229, %v7199, %v7207
        %v7210 = vshrl.u32 %v7014, 16
        %v7212 = vrot.slane %v7210, 5
        %v7213 = vshll.u32 %v7014, 16
        %v7215 = vrot.slane %v7213, 6
        %v7216 = vor.u32 %v7212, %v7215
        %v7217 = vrot.slane %v7216, 4
        %v7219 = vshrl.u32 %v7184, 16
        %v7221 = vrot.slane %v7219, 5
        %v7222 = vshll.u32 %v7184, 16
        %v7224 = vrot.slane %v7222, 6
        %v7225 = vor.u32 %v7221, %v7224
        %v7226 = vsel %vm5229, %v7217, %v7225
        %v7228 = vshrl.u32 %v7015, 16
        %v7230 = vrot.slane %v7228, 5
        %v7231 = vshll.u32 %v7015, 16
        %v7233 = vrot.slane %v7231, 6
        %v7234 = vor.u32 %v7230, %v7233
        %v7235 = vrot.slane %v7234, 4
        %v7237 = vshrl.u32 %v7185, 16
        %v7239 = vrot.slane %v7237, 5
        %v7240 = vshll.u32 %v7185, 16
        %v7242 = vrot.slane %v7240, 6
        %v7243 = vor.u32 %v7239, %v7242
        %v7244 = vsel %vm5229, %v7235, %v7243
        %v7246 = vshrl.u32 %v7016, 16
        %v7248 = vrot.slane %v7246, 5
        %v7249 = vshll.u32 %v7016, 16
        %v7251 = vrot.slane %v7249, 6
        %v7252 = vor.u32 %v7248, %v7251
        %v7253 = vrot.slane %v7252, 4
        %v7255 = vshrl.u32 %v7186, 16
        %v7257 = vrot.slane %v7255, 5
        %v7258 = vshll.u32 %v7186, 16
        %v7260 = vrot.slane %v7258, 6
        %v7261 = vor.u32 %v7257, %v7260
        %v7262 = vsel %vm5229, %v7253, %v7261
        %v7264 = vshrl.u32 %v7017, 16
        %v7266 = vrot.slane %v7264, 5
        %v7267 = vshll.u32 %v7017, 16
        %v7269 = vrot.slane %v7267, 6
        %v7270 = vor.u32 %v7266, %v7269
        %v7271 = vrot.slane %v7270, 4
        %v7273 = vshrl.u32 %v7187, 16
        %v7275 = vrot.slane %v7273, 5
        %v7276 = vshll.u32 %v7187, 16
        %v7278 = vrot.slane %v7276, 6
        %v7279 = vor.u32 %v7275, %v7278
        %v7280 = vsel %vm5229, %v7271, %v7279
        %v7282 = vshrl.u32 %v7018, 16
        %v7284 = vrot.slane %v7282, 5
        %v7285 = vshll.u32 %v7018, 16
        %v7287 = vrot.slane %v7285, 6
        %v7288 = vor.u32 %v7284, %v7287
        %v7289 = vrot.slane %v7288, 4
        %v7291 = vshrl.u32 %v7188, 16
        %v7293 = vrot.slane %v7291, 5
        %v7294 = vshll.u32 %v7188, 16
        %v7296 = vrot.slane %v7294, 6
        %v7297 = vor.u32 %v7293, %v7296
        %v7298 = vsel %vm5229, %v7289, %v7297
        %v7300 = vshrl.u32 %v7019, 16
        %v7302 = vrot.slane %v7300, 5
        %v7303 = vshll.u32 %v7019, 16
        %v7305 = vrot.slane %v7303, 6
        %v7306 = vor.u32 %v7302, %v7305
        %v7307 = vrot.slane %v7306, 4
        %v7309 = vshrl.u32 %v7189, 16
        %v7311 = vrot.slane %v7309, 5
        %v7312 = vshll.u32 %v7189, 16
        %v7314 = vrot.slane %v7312, 6
        %v7315 = vor.u32 %v7311, %v7314
        %v7316 = vsel %vm5229, %v7307, %v7315
        %v7318 = vshrl.u32 %v7020, 16
        %v7320 = vrot.slane %v7318, 5
        %v7321 = vshll.u32 %v7020, 16
        %v7323 = vrot.slane %v7321, 6
        %v7324 = vor.u32 %v7320, %v7323
        %v7325 = vrot.slane %v7324, 4
        %v7327 = vshrl.u32 %v7190, 16
        %v7329 = vrot.slane %v7327, 5
        %v7330 = vshll.u32 %v7190, 16
        %v7332 = vrot.slane %v7330, 6
        %v7333 = vor.u32 %v7329, %v7332
        %v7334 = vsel %vm5229, %v7325, %v7333
        %s7335 = scalar_lea.vmem %s3, 208
        %v7336 = vld [vmem:[%s7335] sm:$0xf]
        %v7337 = vld [vmem:[%s7335 + $0x4] sm:$0xf]
        %v7338 = vld [vmem:[%s7335 + $0x8] sm:$0xf]
        %v7339 = vld [vmem:[%s7335 + $0xc] sm:$0xf]
        %v7340 = vunpack.c.l.b16 %v7208
        %v7341 = vunpack.c.l.b16 %v7226
        %v7342 = vunpack.c.l.b16 %v7244
        %v7343 = vunpack.c.l.b16 %v7262
        %v7344 = vunpack.c.l.b16 %v7280
        %v7345 = vunpack.c.l.b16 %v7298
        %v7346 = vunpack.c.l.b16 %v7316
        %v7347 = vunpack.c.l.b16 %v7334
        %v7348 = vpack.c.b16 %v7341, %v7340
        %v7349 = vpack.c.b16 %v7343, %v7342
        %v7350 = vpack.c.b16 %v7345, %v7344
        %v7351 = vpack.c.b16 %v7347, %v7346
        %v7356 = vunpack.c.l.b16 %v7336
        %v7357 = vunpack.c.l.b16 %v7337
        %v7358 = vunpack.c.l.b16 %v7338
        %v7359 = vunpack.c.l.b16 %v7339
        %v7360 = vpack.c.b16 %v7357, %v7356
        %v7361 = vpack.c.b16 %v7359, %v7358
        %v7365 = vsel %vm4859, %v7348, 0
        %v7368 = vsel %vm4859, %v7349, 0
        %v7371 = vsel %vm4859, %v7350, 0
        %v7374 = vsel %vm4859, %v7351, 0
        %7376 = vmatprep.subr.bf16.mxu0 0
        %7377 = vmatpush1.bf16.msra.mxu0 %v7360
        %7378 = vmatprep.subr.bf16.mxu0 0
        %7379 = vmatpush1.bf16.msra.mxu0 %v7361
        %7380 = vmatprep.subr.bf16.mxu0 0
        %7381 = vmatpush1.bf16.msra.mxu0 0
        %7382 = vmatprep.subr.bf16.mxu0 0
        %7383 = vmatpush1.bf16.msra.mxu0 0
        %7384 = vmatprep.subr.bf16.mxu0 0
        %7385 = vmatpush1.bf16.msra.mxu0 0
        %7386 = vmatprep.subr.bf16.mxu0 0
        %7387 = vmatpush1.bf16.msra.mxu0 0
        %7388 = vmatprep.subr.bf16.mxu0 0
        %7389 = vmatpush1.bf16.msra.mxu0 0
        %7390 = vmatprep.subr.bf16.mxu0 0
        %7391 = vmatpush1.bf16.msra.mxu0 0
        %7392 = vmatprep.subr.bf16.mxu0 0
        %7393 = vmatpush1.bf16.msra.mxu0 0
        %7394 = vmatprep.subr.bf16.mxu0 0
        %7395 = vmatpush1.bf16.msra.mxu0 0
        %7396 = vmatprep.subr.bf16.mxu0 0
        %7397 = vmatpush1.bf16.msra.mxu0 0
        %7398 = vmatprep.subr.bf16.mxu0 0
        %7399 = vmatpush1.bf16.msra.mxu0 0
        %7400 = vmatprep.subr.bf16.mxu0 0
        %7401 = vmatpush1.bf16.msra.mxu0 0
        %7402 = vmatprep.subr.bf16.mxu0 0
        %7403 = vmatpush1.bf16.msra.mxu0 0
        %7404 = vmatprep.subr.bf16.mxu0 0
        %7405 = vmatpush1.bf16.msra.mxu0 0
        %7406 = vmatprep.subr.bf16.mxu0 0
        %7407 = vmatpush1.bf16.msra.mxu0 0
        %7408 = vmatprep.mubr.bf16.mxu0 0
        %7409 = vmatmul.mubr.bf16.gmra.mrb[0].mxu0 %v7365
        %v7410 = vpop.f32.mrb[0].mxu0
        %v7411 = vadd.f32 0.0, %v7410
        %v7412 = vpop.f32.mrb[0].mxu0
        %v7413 = vpop.f32.mrb[0].mxu0
        %v7414 = vadd.f32 0.0, %v7413
        %v7415 = vpop.f32.mrb[0].mxu0
        %7416 = vmatprep.mubr.bf16.mxu0 0
        %7417 = vmatmul.mubr.bf16.gmra.mrb[0].mxu0 %v7368
        %v7418 = vpop.f32.mrb[0].mxu0
        %v7419 = vadd.f32 0.0, %v7418
        %v7420 = vpop.f32.mrb[0].mxu0
        %v7421 = vpop.f32.mrb[0].mxu0
        %v7422 = vadd.f32 0.0, %v7421
        %v7423 = vpop.f32.mrb[0].mxu0
        %7424 = vmatprep.mubr.bf16.mxu0 0
        %7425 = vmatmul.mubr.bf16.gmra.mrb[0].mxu0 %v7371
        %v7426 = vpop.f32.mrb[0].mxu0
        %v7427 = vadd.f32 0.0, %v7426
        %v7428 = vpop.f32.mrb[0].mxu0
        %v7429 = vpop.f32.mrb[0].mxu0
        %v7430 = vadd.f32 0.0, %v7429
        %v7431 = vpop.f32.mrb[0].mxu0
        %7432 = vmatprep.mubr.bf16.mxu0 0
        %7433 = vmatmul.mubr.bf16.gmra.mrb[0].mxu0 %v7374
        %v7434 = vpop.f32.mrb[0].mxu0
        %v7435 = vadd.f32 0.0, %v7434
        %v7436 = vpop.f32.mrb[0].mxu0
        %v7437 = vpop.f32.mrb[0].mxu0
        %v7438 = vadd.f32 0.0, %v7437
        %v7439 = vpop.f32.mrb[0].mxu0
        %7440 = vdwg.mxu0
        %v7441 = vadd.f32 %v7175, %v7411
        %v7442 = vadd.f32 %v7176, %v7414
        %v7443 = vadd.f32 %v7177, %v7419
        %v7444 = vadd.f32 %v7178, %v7422
        %v7445 = vadd.f32 %v7179, %v7427
        %v7446 = vadd.f32 %v7180, %v7430
        %v7447 = vadd.f32 %v7181, %v7435
        %v7448 = vadd.f32 %v7182, %v7438
        %v7449 = vld [vmem:[%s6640] sm:$0xc]
        %v7450 = vld [vmem:[%s6640 + $0x8] sm:$0xc]
        %v7451 = vld [vmem:[%s6640 + $0x10] sm:$0xc]
        %v7452 = vld [vmem:[%s6640 + $0x18] sm:$0xc]
        %v7453 = vld [vmem:[%s6640 + $0x20] sm:$0xc]
        %v7454 = vld [vmem:[%s6640 + $0x28] sm:$0xc]
        %v7455 = vld [vmem:[%s6640 + $0x30] sm:$0xc]
        %v7456 = vld [vmem:[%s6640 + $0x38] sm:$0xc]
        %v7473 = vrot.slane %v7449, 6
        %v7474 = vrot.slane %v7473, 4
        %v7475 = vrot.slane %v7183, 6
        %v7476 = vsel %vm5514, %v7474, %v7475
        %v7477 = vrot.slane %v7450, 6
        %v7478 = vrot.slane %v7477, 4
        %v7479 = vrot.slane %v7184, 6
        %v7480 = vsel %vm5514, %v7478, %v7479
        %v7481 = vrot.slane %v7451, 6
        %v7482 = vrot.slane %v7481, 4
        %v7483 = vrot.slane %v7185, 6
        %v7484 = vsel %vm5514, %v7482, %v7483
        %v7485 = vrot.slane %v7452, 6
        %v7486 = vrot.slane %v7485, 4
        %v7487 = vrot.slane %v7186, 6
        %v7488 = vsel %vm5514, %v7486, %v7487
        %v7489 = vrot.slane %v7453, 6
        %v7490 = vrot.slane %v7489, 4
        %v7491 = vrot.slane %v7187, 6
        %v7492 = vsel %vm5514, %v7490, %v7491
        %v7493 = vrot.slane %v7454, 6
        %v7494 = vrot.slane %v7493, 4
        %v7495 = vrot.slane %v7188, 6
        %v7496 = vsel %vm5514, %v7494, %v7495
        %v7497 = vrot.slane %v7455, 6
        %v7498 = vrot.slane %v7497, 4
        %v7499 = vrot.slane %v7189, 6
        %v7500 = vsel %vm5514, %v7498, %v7499
        %v7501 = vrot.slane %v7456, 6
        %v7502 = vrot.slane %v7501, 4
        %v7503 = vrot.slane %v7190, 6
        %v7504 = vsel %vm5514, %v7502, %v7503
        %s7505 = scalar_lea.vmem %s3, 224
        %v7506 = vld [vmem:[%s7505] sm:$0xf]
        %v7507 = vld [vmem:[%s7505 + $0x4] sm:$0xf]
        %v7508 = vld [vmem:[%s7505 + $0x8] sm:$0xf]
        %v7509 = vld [vmem:[%s7505 + $0xc] sm:$0xf]
        %v7510 = vunpack.c.l.b16 %v7476
        %v7511 = vunpack.c.l.b16 %v7480
        %v7512 = vunpack.c.l.b16 %v7484
        %v7513 = vunpack.c.l.b16 %v7488
        %v7514 = vunpack.c.l.b16 %v7492
        %v7515 = vunpack.c.l.b16 %v7496
        %v7516 = vunpack.c.l.b16 %v7500
        %v7517 = vunpack.c.l.b16 %v7504
        %v7518 = vpack.c.b16 %v7511, %v7510
        %v7519 = vpack.c.b16 %v7513, %v7512
        %v7520 = vpack.c.b16 %v7515, %v7514
        %v7521 = vpack.c.b16 %v7517, %v7516
        %v7526 = vunpack.c.l.b16 %v7506
        %v7527 = vunpack.c.l.b16 %v7507
        %v7528 = vunpack.c.l.b16 %v7508
        %v7529 = vunpack.c.l.b16 %v7509
        %v7530 = vpack.c.b16 %v7527, %v7526
        %v7531 = vpack.c.b16 %v7529, %v7528
        %v7535 = vsel %vm4859, %v7518, 0
        %v7538 = vsel %vm4859, %v7519, 0
        %v7541 = vsel %vm4859, %v7520, 0
        %v7544 = vsel %vm4859, %v7521, 0
        %7546 = vmatprep.subr.bf16.mxu0 0
        %7547 = vmatpush1.bf16.msra.mxu0 %v7530
        %7548 = vmatprep.subr.bf16.mxu0 0
        %7549 = vmatpush1.bf16.msra.mxu0 %v7531
        %7550 = vmatprep.subr.bf16.mxu0 0
        %7551 = vmatpush1.bf16.msra.mxu0 0
        %7552 = vmatprep.subr.bf16.mxu0 0
        %7553 = vmatpush1.bf16.msra.mxu0 0
        %7554 = vmatprep.subr.bf16.mxu0 0
        %7555 = vmatpush1.bf16.msra.mxu0 0
        %7556 = vmatprep.subr.bf16.mxu0 0
        %7557 = vmatpush1.bf16.msra.mxu0 0
        %7558 = vmatprep.subr.bf16.mxu0 0
        %7559 = vmatpush1.bf16.msra.mxu0 0
        %7560 = vmatprep.subr.bf16.mxu0 0
        %7561 = vmatpush1.bf16.msra.mxu0 0
        %7562 = vmatprep.subr.bf16.mxu0 0
        %7563 = vmatpush1.bf16.msra.mxu0 0
        %7564 = vmatprep.subr.bf16.mxu0 0
        %7565 = vmatpush1.bf16.msra.mxu0 0
        %7566 = vmatprep.subr.bf16.mxu0 0
        %7567 = vmatpush1.bf16.msra.mxu0 0
        %7568 = vmatprep.subr.bf16.mxu0 0
        %7569 = vmatpush1.bf16.msra.mxu0 0
        %7570 = vmatprep.subr.bf16.mxu0 0
        %7571 = vmatpush1.bf16.msra.mxu0 0
        %7572 = vmatprep.subr.bf16.mxu0 0
        %7573 = vmatpush1.bf16.msra.mxu0 0
        %7574 = vmatprep.subr.bf16.mxu0 0
        %7575 = vmatpush1.bf16.msra.mxu0 0
        %7576 = vmatprep.subr.bf16.mxu0 0
        %7577 = vmatpush1.bf16.msra.mxu0 0
        %7578 = vmatprep.mubr.bf16.mxu0 0
        %7579 = vmatmul.mubr.bf16.gmra.mrb[0].mxu0 %v7535
        %v7580 = vpop.f32.mrb[0].mxu0
        %v7581 = vadd.f32 0.0, %v7580
        %v7582 = vpop.f32.mrb[0].mxu0
        %v7583 = vpop.f32.mrb[0].mxu0
        %v7584 = vadd.f32 0.0, %v7583
        %v7585 = vpop.f32.mrb[0].mxu0
        %7586 = vmatprep.mubr.bf16.mxu0 0
        %7587 = vmatmul.mubr.bf16.gmra.mrb[0].mxu0 %v7538
        %v7588 = vpop.f32.mrb[0].mxu0
        %v7589 = vadd.f32 0.0, %v7588
        %v7590 = vpop.f32.mrb[0].mxu0
        %v7591 = vpop.f32.mrb[0].mxu0
        %v7592 = vadd.f32 0.0, %v7591
        %v7593 = vpop.f32.mrb[0].mxu0
        %7594 = vmatprep.mubr.bf16.mxu0 0
        %7595 = vmatmul.mubr.bf16.gmra.mrb[0].mxu0 %v7541
        %v7596 = vpop.f32.mrb[0].mxu0
        %v7597 = vadd.f32 0.0, %v7596
        %v7598 = vpop.f32.mrb[0].mxu0
        %v7599 = vpop.f32.mrb[0].mxu0
        %v7600 = vadd.f32 0.0, %v7599
        %v7601 = vpop.f32.mrb[0].mxu0
        %7602 = vmatprep.mubr.bf16.mxu0 0
        %7603 = vmatmul.mubr.bf16.gmra.mrb[0].mxu0 %v7544
        %v7604 = vpop.f32.mrb[0].mxu0
        %v7605 = vadd.f32 0.0, %v7604
        %v7606 = vpop.f32.mrb[0].mxu0
        %v7607 = vpop.f32.mrb[0].mxu0
        %v7608 = vadd.f32 0.0, %v7607
        %v7609 = vpop.f32.mrb[0].mxu0
        %7610 = vdwg.mxu0
        %v7611 = vadd.f32 %v7441, %v7581
        %v7612 = vadd.f32 %v7442, %v7584
        %v7613 = vadd.f32 %v7443, %v7589
        %v7614 = vadd.f32 %v7444, %v7592
        %v7615 = vadd.f32 %v7445, %v7597
        %v7616 = vadd.f32 %v7446, %v7600
        %v7617 = vadd.f32 %v7447, %v7605
        %v7618 = vadd.f32 %v7448, %v7608
        %s7619 = scalar_lea.vmem [#allocation2], 24
        %v7620 = vld [vmem:[%s7619] sm:$0xf]
        %v7621 = vld [vmem:[%s7619 + $0x8] sm:$0xf]
        %v7622 = vld [vmem:[%s7619 + $0x10] sm:$0xf]
        %v7623 = vld [vmem:[%s7619 + $0x18] sm:$0xf]
        %v7624 = vld [vmem:[%s7619 + $0x20] sm:$0xf]
        %v7625 = vld [vmem:[%s7619 + $0x28] sm:$0xf]
        %v7626 = vld [vmem:[%s7619 + $0x30] sm:$0xf]
        %v7627 = vld [vmem:[%s7619 + $0x38] sm:$0xf]
        %s7628 = scalar_lea.vmem %s3, 240
        %v7629 = vld [vmem:[%s7628] sm:$0xf]
        %v7630 = vld [vmem:[%s7628 + $0x4] sm:$0xf]
        %v7631 = vld [vmem:[%s7628 + $0x8] sm:$0xf]
        %v7632 = vld [vmem:[%s7628 + $0xc] sm:$0xf]
        %v7641 = vunpack.c.l.b16 %v7620
        %v7642 = vunpack.c.l.b16 %v7621
        %v7643 = vunpack.c.l.b16 %v7622
        %v7644 = vunpack.c.l.b16 %v7623
        %v7645 = vunpack.c.l.b16 %v7624
        %v7646 = vunpack.c.l.b16 %v7625
        %v7647 = vunpack.c.l.b16 %v7626
        %v7648 = vunpack.c.l.b16 %v7627
        %v7649 = vpack.c.b16 %v7642, %v7641
        %v7650 = vpack.c.b16 %v7644, %v7643
        %v7651 = vpack.c.b16 %v7646, %v7645
        %v7652 = vpack.c.b16 %v7648, %v7647
        %v7657 = vunpack.c.l.b16 %v7629
        %v7658 = vunpack.c.l.b16 %v7630
        %v7659 = vunpack.c.l.b16 %v7631
        %v7660 = vunpack.c.l.b16 %v7632
        %v7661 = vpack.c.b16 %v7658, %v7657
        %v7662 = vpack.c.b16 %v7660, %v7659
        %v7666 = vsel %vm4859, %v7649, 0
        %v7669 = vsel %vm4859, %v7650, 0
        %v7672 = vsel %vm4859, %v7651, 0
        %v7675 = vsel %vm4859, %v7652, 0
        %7677 = vmatprep.subr.bf16.mxu0 0
        %7678 = vmatpush1.bf16.msra.mxu0 %v7661
        %7679 = vmatprep.subr.bf16.mxu0 0
        %7680 = vmatpush1.bf16.msra.mxu0 %v7662
        %7681 = vmatprep.subr.bf16.mxu0 0
        %7682 = vmatpush1.bf16.msra.mxu0 0
        %7683 = vmatprep.subr.bf16.mxu0 0
        %7684 = vmatpush1.bf16.msra.mxu0 0
        %7685 = vmatprep.subr.bf16.mxu0 0
        %7686 = vmatpush1.bf16.msra.mxu0 0
        %7687 = vmatprep.subr.bf16.mxu0 0
        %7688 = vmatpush1.bf16.msra.mxu0 0
        %7689 = vmatprep.subr.bf16.mxu0 0
        %7690 = vmatpush1.bf16.msra.mxu0 0
        %7691 = vmatprep.subr.bf16.mxu0 0
        %7692 = vmatpush1.bf16.msra.mxu0 0
        %7693 = vmatprep.subr.bf16.mxu0 0
        %7694 = vmatpush1.bf16.msra.mxu0 0
        %7695 = vmatprep.subr.bf16.mxu0 0
        %7696 = vmatpush1.bf16.msra.mxu0 0
        %7697 = vmatprep.subr.bf16.mxu0 0
        %7698 = vmatpush1.bf16.msra.mxu0 0
        %7699 = vmatprep.subr.bf16.mxu0 0
        %7700 = vmatpush1.bf16.msra.mxu0 0
        %7701 = vmatprep.subr.bf16.mxu0 0
        %7702 = vmatpush1.bf16.msra.mxu0 0
        %7703 = vmatprep.subr.bf16.mxu0 0
        %7704 = vmatpush1.bf16.msra.mxu0 0
        %7705 = vmatprep.subr.bf16.mxu0 0
        %7706 = vmatpush1.bf16.msra.mxu0 0
        %7707 = vmatprep.subr.bf16.mxu0 0
        %7708 = vmatpush1.bf16.msra.mxu0 0
        %7709 = vmatprep.mubr.bf16.mxu0 0
        %7710 = vmatmul.mubr.bf16.gmra.mrb[0].mxu0 %v7666
        %v7711 = vpop.f32.mrb[0].mxu0
        %v7712 = vadd.f32 0.0, %v7711
        %v7713 = vpop.f32.mrb[0].mxu0
        %v7714 = vpop.f32.mrb[0].mxu0
        %v7715 = vadd.f32 0.0, %v7714
        %v7716 = vpop.f32.mrb[0].mxu0
        %7717 = vmatprep.mubr.bf16.mxu0 0
        %7718 = vmatmul.mubr.bf16.gmra.mrb[0].mxu0 %v7669
        %v7719 = vpop.f32.mrb[0].mxu0
        %v7720 = vadd.f32 0.0, %v7719
        %v7721 = vpop.f32.mrb[0].mxu0
        %v7722 = vpop.f32.mrb[0].mxu0
        %v7723 = vadd.f32 0.0, %v7722
        %v7724 = vpop.f32.mrb[0].mxu0
        %7725 = vmatprep.mubr.bf16.mxu0 0
        %7726 = vmatmul.mubr.bf16.gmra.mrb[0].mxu0 %v7672
        %v7727 = vpop.f32.mrb[0].mxu0
        %v7728 = vadd.f32 0.0, %v7727
        %v7729 = vpop.f32.mrb[0].mxu0
        %v7730 = vpop.f32.mrb[0].mxu0
        %v7731 = vadd.f32 0.0, %v7730
        %v7732 = vpop.f32.mrb[0].mxu0
        %7733 = vmatprep.mubr.bf16.mxu0 0
        %7734 = vmatmul.mubr.bf16.gmra.mrb[0].mxu0 %v7675
        %v7735 = vpop.f32.mrb[0].mxu0
        %v7736 = vadd.f32 0.0, %v7735
        %v7737 = vpop.f32.mrb[0].mxu0
        %v7738 = vpop.f32.mrb[0].mxu0
        %v7739 = vadd.f32 0.0, %v7738
        %v7740 = vpop.f32.mrb[0].mxu0
        %7741 = vdwg.mxu0
        %v7742 = vadd.f32 %v7611, %v7712
        %v7743 = vadd.f32 %v7612, %v7715
        %v7744 = vadd.f32 %v7613, %v7720
        %v7745 = vadd.f32 %v7614, %v7723
        %v7746 = vadd.f32 %v7615, %v7728
        %v7747 = vadd.f32 %v7616, %v7731
        %v7748 = vadd.f32 %v7617, %v7736
        %v7749 = vadd.f32 %v7618, %v7739
        %v7750 = vld [vmem:[%s7619] sm:$0xf]
        %v7751 = vld [vmem:[%s7619 + $0x4] sm:$0x1]
        %v7752 = vld [vmem:[%s7619 + $0x8] sm:$0xf]
        %v7753 = vld [vmem:[%s7619 + $0xc] sm:$0x1]
        %v7754 = vld [vmem:[%s7619 + $0x10] sm:$0xf]
        %v7755 = vld [vmem:[%s7619 + $0x14] sm:$0x1]
        %v7756 = vld [vmem:[%s7619 + $0x18] sm:$0xf]
        %v7757 = vld [vmem:[%s7619 + $0x1c] sm:$0x1]
        %v7758 = vld [vmem:[%s7619 + $0x20] sm:$0xf]
        %v7759 = vld [vmem:[%s7619 + $0x24] sm:$0x1]
        %v7760 = vld [vmem:[%s7619 + $0x28] sm:$0xf]
        %v7761 = vld [vmem:[%s7619 + $0x2c] sm:$0x1]
        %v7762 = vld [vmem:[%s7619 + $0x30] sm:$0xf]
        %v7763 = vld [vmem:[%s7619 + $0x34] sm:$0x1]
        %v7764 = vld [vmem:[%s7619 + $0x38] sm:$0xf]
        %v7765 = vld [vmem:[%s7619 + $0x3c] sm:$0x1]
        %v7767 = vshrl.u32 %v7750, 16
        %v7769 = vrot.slane %v7767, 4
        %v7770 = vshll.u32 %v7750, 16
        %v7772 = vrot.slane %v7770, 5
        %v7773 = vor.u32 %v7769, %v7772
        %v7774 = vrot.slane %v7773, 4
        %v7776 = vshll.u32 %v7751, 16
        %v7778 = vrot.slane %v7776, 5
        %v7779 = vsel %vm4717, %v7774, %v7778
        %v7781 = vshrl.u32 %v7752, 16
        %v7783 = vrot.slane %v7781, 4
        %v7784 = vshll.u32 %v7752, 16
        %v7786 = vrot.slane %v7784, 5
        %v7787 = vor.u32 %v7783, %v7786
        %v7788 = vrot.slane %v7787, 4
        %v7790 = vshll.u32 %v7753, 16
        %v7792 = vrot.slane %v7790, 5
        %v7793 = vsel %vm4717, %v7788, %v7792
        %v7795 = vshrl.u32 %v7754, 16
        %v7797 = vrot.slane %v7795, 4
        %v7798 = vshll.u32 %v7754, 16
        %v7800 = vrot.slane %v7798, 5
        %v7801 = vor.u32 %v7797, %v7800
        %v7802 = vrot.slane %v7801, 4
        %v7804 = vshll.u32 %v7755, 16
        %v7806 = vrot.slane %v7804, 5
        %v7807 = vsel %vm4717, %v7802, %v7806
        %v7809 = vshrl.u32 %v7756, 16
        %v7811 = vrot.slane %v7809, 4
        %v7812 = vshll.u32 %v7756, 16
        %v7814 = vrot.slane %v7812, 5
        %v7815 = vor.u32 %v7811, %v7814
        %v7816 = vrot.slane %v7815, 4
        %v7818 = vshll.u32 %v7757, 16
        %v7820 = vrot.slane %v7818, 5
        %v7821 = vsel %vm4717, %v7816, %v7820
        %v7823 = vshrl.u32 %v7758, 16
        %v7825 = vrot.slane %v7823, 4
        %v7826 = vshll.u32 %v7758, 16
        %v7828 = vrot.slane %v7826, 5
        %v7829 = vor.u32 %v7825, %v7828
        %v7830 = vrot.slane %v7829, 4
        %v7832 = vshll.u32 %v7759, 16
        %v7834 = vrot.slane %v7832, 5
        %v7835 = vsel %vm4717, %v7830, %v7834
        %v7837 = vshrl.u32 %v7760, 16
        %v7839 = vrot.slane %v7837, 4
        %v7840 = vshll.u32 %v7760, 16
        %v7842 = vrot.slane %v7840, 5
        %v7843 = vor.u32 %v7839, %v7842
        %v7844 = vrot.slane %v7843, 4
        %v7846 = vshll.u32 %v7761, 16
        %v7848 = vrot.slane %v7846, 5
        %v7849 = vsel %vm4717, %v7844, %v7848
        %v7851 = vshrl.u32 %v7762, 16
        %v7853 = vrot.slane %v7851, 4
        %v7854 = vshll.u32 %v7762, 16
        %v7856 = vrot.slane %v7854, 5
        %v7857 = vor.u32 %v7853, %v7856
        %v7858 = vrot.slane %v7857, 4
        %v7860 = vshll.u32 %v7763, 16
        %v7862 = vrot.slane %v7860, 5
        %v7863 = vsel %vm4717, %v7858, %v7862
        %v7865 = vshrl.u32 %v7764, 16
        %v7867 = vrot.slane %v7865, 4
        %v7868 = vshll.u32 %v7764, 16
        %v7870 = vrot.slane %v7868, 5
        %v7871 = vor.u32 %v7867, %v7870
        %v7872 = vrot.slane %v7871, 4
        %v7874 = vshll.u32 %v7765, 16
        %v7876 = vrot.slane %v7874, 5
        %v7877 = vsel %vm4717, %v7872, %v7876
        %s7878 = scalar_lea.vmem %s3, 256
        %v7879 = vld [vmem:[%s7878] sm:$0xf]
        %v7880 = vld [vmem:[%s7878 + $0x4] sm:$0xf]
        %v7881 = vld [vmem:[%s7878 + $0x8] sm:$0xf]
        %v7882 = vld [vmem:[%s7878 + $0xc] sm:$0xf]
        %v7883 = vunpack.c.l.b16 %v7779
        %v7884 = vunpack.c.l.b16 %v7793
        %v7885 = vunpack.c.l.b16 %v7807
        %v7886 = vunpack.c.l.b16 %v7821
        %v7887 = vunpack.c.l.b16 %v7835
        %v7888 = vunpack.c.l.b16 %v7849
        %v7889 = vunpack.c.l.b16 %v7863
        %v7890 = vunpack.c.l.b16 %v7877
        %v7891 = vpack.c.b16 %v7884, %v7883
        %v7892 = vpack.c.b16 %v7886, %v7885
        %v7893 = vpack.c.b16 %v7888, %v7887
        %v7894 = vpack.c.b16 %v7890, %v7889
        %v7899 = vunpack.c.l.b16 %v7879
        %v7900 = vunpack.c.l.b16 %v7880
        %v7901 = vunpack.c.l.b16 %v7881
        %v7902 = vunpack.c.l.b16 %v7882
        %v7903 = vpack.c.b16 %v7900, %v7899
        %v7904 = vpack.c.b16 %v7902, %v7901
        %v7908 = vsel %vm4859, %v7891, 0
        %v7911 = vsel %vm4859, %v7892, 0
        %v7914 = vsel %vm4859, %v7893, 0
        %v7917 = vsel %vm4859, %v7894, 0
        %7919 = vmatprep.subr.bf16.mxu0 0
        %7920 = vmatpush1.bf16.msra.mxu0 %v7903
        %7921 = vmatprep.subr.bf16.mxu0 0
        %7922 = vmatpush1.bf16.msra.mxu0 %v7904
        %7923 = vmatprep.subr.bf16.mxu0 0
        %7924 = vmatpush1.bf16.msra.mxu0 0
        %7925 = vmatprep.subr.bf16.mxu0 0
        %7926 = vmatpush1.bf16.msra.mxu0 0
        %7927 = vmatprep.subr.bf16.mxu0 0
        %7928 = vmatpush1.bf16.msra.mxu0 0
        %7929 = vmatprep.subr.bf16.mxu0 0
        %7930 = vmatpush1.bf16.msra.mxu0 0
        %7931 = vmatprep.subr.bf16.mxu0 0
        %7932 = vmatpush1.bf16.msra.mxu0 0
        %7933 = vmatprep.subr.bf16.mxu0 0
        %7934 = vmatpush1.bf16.msra.mxu0 0
        %7935 = vmatprep.subr.bf16.mxu0 0
        %7936 = vmatpush1.bf16.msra.mxu0 0
        %7937 = vmatprep.subr.bf16.mxu0 0
        %7938 = vmatpush1.bf16.msra.mxu0 0
        %7939 = vmatprep.subr.bf16.mxu0 0
        %7940 = vmatpush1.bf16.msra.mxu0 0
        %7941 = vmatprep.subr.bf16.mxu0 0
        %7942 = vmatpush1.bf16.msra.mxu0 0
        %7943 = vmatprep.subr.bf16.mxu0 0
        %7944 = vmatpush1.bf16.msra.mxu0 0
        %7945 = vmatprep.subr.bf16.mxu0 0
        %7946 = vmatpush1.bf16.msra.mxu0 0
        %7947 = vmatprep.subr.bf16.mxu0 0
        %7948 = vmatpush1.bf16.msra.mxu0 0
        %7949 = vmatprep.subr.bf16.mxu0 0
        %7950 = vmatpush1.bf16.msra.mxu0 0
        %7951 = vmatprep.mubr.bf16.mxu0 0
        %7952 = vmatmul.mubr.bf16.gmra.mrb[0].mxu0 %v7908
        %v7953 = vpop.f32.mrb[0].mxu0
        %v7954 = vadd.f32 0.0, %v7953
        %v7955 = vpop.f32.mrb[0].mxu0
        %v7956 = vpop.f32.mrb[0].mxu0
        %v7957 = vadd.f32 0.0, %v7956
        %v7958 = vpop.f32.mrb[0].mxu0
        %7959 = vmatprep.mubr.bf16.mxu0 0
        %7960 = vmatmul.mubr.bf16.gmra.mrb[0].mxu0 %v7911
        %v7961 = vpop.f32.mrb[0].mxu0
        %v7962 = vadd.f32 0.0, %v7961
        %v7963 = vpop.f32.mrb[0].mxu0
        %v7964 = vpop.f32.mrb[0].mxu0
        %v7965 = vadd.f32 0.0, %v7964
        %v7966 = vpop.f32.mrb[0].mxu0
        %7967 = vmatprep.mubr.bf16.mxu0 0
        %7968 = vmatmul.mubr.bf16.gmra.mrb[0].mxu0 %v7914
        %v7969 = vpop.f32.mrb[0].mxu0
        %v7970 = vadd.f32 0.0, %v7969
        %v7971 = vpop.f32.mrb[0].mxu0
        %v7972 = vpop.f32.mrb[0].mxu0
        %v7973 = vadd.f32 0.0, %v7972
        %v7974 = vpop.f32.mrb[0].mxu0
        %7975 = vmatprep.mubr.bf16.mxu0 0
        %7976 = vmatmul.mubr.bf16.gmra.mrb[0].mxu0 %v7917
        %v7977 = vpop.f32.mrb[0].mxu0
        %v7978 = vadd.f32 0.0, %v7977
        %v7979 = vpop.f32.mrb[0].mxu0
        %v7980 = vpop.f32.mrb[0].mxu0
        %v7981 = vadd.f32 0.0, %v7980
        %v7982 = vpop.f32.mrb[0].mxu0
        %7983 = vdwg.mxu0
        %v7984 = vadd.f32 %v7742, %v7954
        %v7985 = vadd.f32 %v7743, %v7957
        %v7986 = vadd.f32 %v7744, %v7962
        %v7987 = vadd.f32 %v7745, %v7965
        %v7988 = vadd.f32 %v7746, %v7970
        %v7989 = vadd.f32 %v7747, %v7973
        %v7990 = vadd.f32 %v7748, %v7978
        %v7991 = vadd.f32 %v7749, %v7981
        %v7992 = vld [vmem:[%s7619] sm:$0xe]
        %v7993 = vld [vmem:[%s7619 + $0x8] sm:$0xe]
        %v7994 = vld [vmem:[%s7619 + $0x10] sm:$0xe]
        %v7995 = vld [vmem:[%s7619 + $0x18] sm:$0xe]
        %v7996 = vld [vmem:[%s7619 + $0x20] sm:$0xe]
        %v7997 = vld [vmem:[%s7619 + $0x28] sm:$0xe]
        %v7998 = vld [vmem:[%s7619 + $0x30] sm:$0xe]
        %v7999 = vld [vmem:[%s7619 + $0x38] sm:$0xe]
        %v8016 = vrot.slane %v7992, 5
        %v8017 = vrot.slane %v8016, 4
        %v8018 = vrot.slane %v7751, 5
        %v8019 = vsel %vm5072, %v8017, %v8018
        %v8020 = vrot.slane %v7993, 5
        %v8021 = vrot.slane %v8020, 4
        %v8022 = vrot.slane %v7753, 5
        %v8023 = vsel %vm5072, %v8021, %v8022
        %v8024 = vrot.slane %v7994, 5
        %v8025 = vrot.slane %v8024, 4
        %v8026 = vrot.slane %v7755, 5
        %v8027 = vsel %vm5072, %v8025, %v8026
        %v8028 = vrot.slane %v7995, 5
        %v8029 = vrot.slane %v8028, 4
        %v8030 = vrot.slane %v7757, 5
        %v8031 = vsel %vm5072, %v8029, %v8030
        %v8032 = vrot.slane %v7996, 5
        %v8033 = vrot.slane %v8032, 4
        %v8034 = vrot.slane %v7759, 5
        %v8035 = vsel %vm5072, %v8033, %v8034
        %v8036 = vrot.slane %v7997, 5
        %v8037 = vrot.slane %v8036, 4
        %v8038 = vrot.slane %v7761, 5
        %v8039 = vsel %vm5072, %v8037, %v8038
        %v8040 = vrot.slane %v7998, 5
        %v8041 = vrot.slane %v8040, 4
        %v8042 = vrot.slane %v7763, 5
        %v8043 = vsel %vm5072, %v8041, %v8042
        %v8044 = vrot.slane %v7999, 5
        %v8045 = vrot.slane %v8044, 4
        %v8046 = vrot.slane %v7765, 5
        %v8047 = vsel %vm5072, %v8045, %v8046
        %s8048 = scalar_lea.vmem %s3, 272
        %v8049 = vld [vmem:[%s8048] sm:$0xf]
        %v8050 = vld [vmem:[%s8048 + $0x4] sm:$0xf]
        %v8051 = vld [vmem:[%s8048 + $0x8] sm:$0xf]
        %v8052 = vld [vmem:[%s8048 + $0xc] sm:$0xf]
        %v8053 = vunpack.c.l.b16 %v8019
        %v8054 = vunpack.c.l.b16 %v8023
        %v8055 = vunpack.c.l.b16 %v8027
        %v8056 = vunpack.c.l.b16 %v8031
        %v8057 = vunpack.c.l.b16 %v8035
        %v8058 = vunpack.c.l.b16 %v8039
        %v8059 = vunpack.c.l.b16 %v8043
        %v8060 = vunpack.c.l.b16 %v8047
        %v8061 = vpack.c.b16 %v8054, %v8053
        %v8062 = vpack.c.b16 %v8056, %v8055
        %v8063 = vpack.c.b16 %v8058, %v8057
        %v8064 = vpack.c.b16 %v8060, %v8059
        %v8069 = vunpack.c.l.b16 %v8049
        %v8070 = vunpack.c.l.b16 %v8050
        %v8071 = vunpack.c.l.b16 %v8051
        %v8072 = vunpack.c.l.b16 %v8052
        %v8073 = vpack.c.b16 %v8070, %v8069
        %v8074 = vpack.c.b16 %v8072, %v8071
        %v8078 = vsel %vm4859, %v8061, 0
        %v8081 = vsel %vm4859, %v8062, 0
        %v8084 = vsel %vm4859, %v8063, 0
        %v8087 = vsel %vm4859, %v8064, 0
        %8089 = vmatprep.subr.bf16.mxu0 0
        %8090 = vmatpush1.bf16.msra.mxu0 %v8073
        %8091 = vmatprep.subr.bf16.mxu0 0
        %8092 = vmatpush1.bf16.msra.mxu0 %v8074
        %8093 = vmatprep.subr.bf16.mxu0 0
        %8094 = vmatpush1.bf16.msra.mxu0 0
        %8095 = vmatprep.subr.bf16.mxu0 0
        %8096 = vmatpush1.bf16.msra.mxu0 0
        %8097 = vmatprep.subr.bf16.mxu0 0
        %8098 = vmatpush1.bf16.msra.mxu0 0
        %8099 = vmatprep.subr.bf16.mxu0 0
        %8100 = vmatpush1.bf16.msra.mxu0 0
        %8101 = vmatprep.subr.bf16.mxu0 0
        %8102 = vmatpush1.bf16.msra.mxu0 0
        %8103 = vmatprep.subr.bf16.mxu0 0
        %8104 = vmatpush1.bf16.msra.mxu0 0
        %8105 = vmatprep.subr.bf16.mxu0 0
        %8106 = vmatpush1.bf16.msra.mxu0 0
        %8107 = vmatprep.subr.bf16.mxu0 0
        %8108 = vmatpush1.bf16.msra.mxu0 0
        %8109 = vmatprep.subr.bf16.mxu0 0
        %8110 = vmatpush1.bf16.msra.mxu0 0
        %8111 = vmatprep.subr.bf16.mxu0 0
        %8112 = vmatpush1.bf16.msra.mxu0 0
        %8113 = vmatprep.subr.bf16.mxu0 0
        %8114 = vmatpush1.bf16.msra.mxu0 0
        %8115 = vmatprep.subr.bf16.mxu0 0
        %8116 = vmatpush1.bf16.msra.mxu0 0
        %8117 = vmatprep.subr.bf16.mxu0 0
        %8118 = vmatpush1.bf16.msra.mxu0 0
        %8119 = vmatprep.subr.bf16.mxu0 0
        %8120 = vmatpush1.bf16.msra.mxu0 0
        %8121 = vmatprep.mubr.bf16.mxu0 0
        %8122 = vmatmul.mubr.bf16.gmra.mrb[0].mxu0 %v8078
        %v8123 = vpop.f32.mrb[0].mxu0
        %v8124 = vadd.f32 0.0, %v8123
        %v8125 = vpop.f32.mrb[0].mxu0
        %v8126 = vpop.f32.mrb[0].mxu0
        %v8127 = vadd.f32 0.0, %v8126
        %v8128 = vpop.f32.mrb[0].mxu0
        %8129 = vmatprep.mubr.bf16.mxu0 0
        %8130 = vmatmul.mubr.bf16.gmra.mrb[0].mxu0 %v8081
        %v8131 = vpop.f32.mrb[0].mxu0
        %v8132 = vadd.f32 0.0, %v8131
        %v8133 = vpop.f32.mrb[0].mxu0
        %v8134 = vpop.f32.mrb[0].mxu0
        %v8135 = vadd.f32 0.0, %v8134
        %v8136 = vpop.f32.mrb[0].mxu0
        %8137 = vmatprep.mubr.bf16.mxu0 0
        %8138 = vmatmul.mubr.bf16.gmra.mrb[0].mxu0 %v8084
        %v8139 = vpop.f32.mrb[0].mxu0
        %v8140 = vadd.f32 0.0, %v8139
        %v8141 = vpop.f32.mrb[0].mxu0
        %v8142 = vpop.f32.mrb[0].mxu0
        %v8143 = vadd.f32 0.0, %v8142
        %v8144 = vpop.f32.mrb[0].mxu0
        %8145 = vmatprep.mubr.bf16.mxu0 0
        %8146 = vmatmul.mubr.bf16.gmra.mrb[0].mxu0 %v8087
        %v8147 = vpop.f32.mrb[0].mxu0
        %v8148 = vadd.f32 0.0, %v8147
        %v8149 = vpop.f32.mrb[0].mxu0
        %v8150 = vpop.f32.mrb[0].mxu0
        %v8151 = vadd.f32 0.0, %v8150
        %v8152 = vpop.f32.mrb[0].mxu0
        %8153 = vdwg.mxu0
        %v8154 = vadd.f32 %v7984, %v8124
        %v8155 = vadd.f32 %v7985, %v8127
        %v8156 = vadd.f32 %v7986, %v8132
        %v8157 = vadd.f32 %v7987, %v8135
        %v8158 = vadd.f32 %v7988, %v8140
        %v8159 = vadd.f32 %v7989, %v8143
        %v8160 = vadd.f32 %v7990, %v8148
        %v8161 = vadd.f32 %v7991, %v8151
        %v8162 = vld [vmem:[%s7619 + $0x4] sm:$0x3]
        %v8163 = vld [vmem:[%s7619 + $0xc] sm:$0x3]
        %v8164 = vld [vmem:[%s7619 + $0x14] sm:$0x3]
        %v8165 = vld [vmem:[%s7619 + $0x1c] sm:$0x3]
        %v8166 = vld [vmem:[%s7619 + $0x24] sm:$0x3]
        %v8167 = vld [vmem:[%s7619 + $0x2c] sm:$0x3]
        %v8168 = vld [vmem:[%s7619 + $0x34] sm:$0x3]
        %v8169 = vld [vmem:[%s7619 + $0x3c] sm:$0x3]
        %v8171 = vshrl.u32 %v7992, 16
        %v8173 = vrot.slane %v8171, 5
        %v8174 = vshll.u32 %v7992, 16
        %v8176 = vrot.slane %v8174, 6
        %v8177 = vor.u32 %v8173, %v8176
        %v8178 = vrot.slane %v8177, 4
        %v8180 = vshrl.u32 %v8162, 16
        %v8182 = vrot.slane %v8180, 5
        %v8183 = vshll.u32 %v8162, 16
        %v8185 = vrot.slane %v8183, 6
        %v8186 = vor.u32 %v8182, %v8185
        %v8187 = vsel %vm5229, %v8178, %v8186
        %v8189 = vshrl.u32 %v7993, 16
        %v8191 = vrot.slane %v8189, 5
        %v8192 = vshll.u32 %v7993, 16
        %v8194 = vrot.slane %v8192, 6
        %v8195 = vor.u32 %v8191, %v8194
        %v8196 = vrot.slane %v8195, 4
        %v8198 = vshrl.u32 %v8163, 16
        %v8200 = vrot.slane %v8198, 5
        %v8201 = vshll.u32 %v8163, 16
        %v8203 = vrot.slane %v8201, 6
        %v8204 = vor.u32 %v8200, %v8203
        %v8205 = vsel %vm5229, %v8196, %v8204
        %v8207 = vshrl.u32 %v7994, 16
        %v8209 = vrot.slane %v8207, 5
        %v8210 = vshll.u32 %v7994, 16
        %v8212 = vrot.slane %v8210, 6
        %v8213 = vor.u32 %v8209, %v8212
        %v8214 = vrot.slane %v8213, 4
        %v8216 = vshrl.u32 %v8164, 16
        %v8218 = vrot.slane %v8216, 5
        %v8219 = vshll.u32 %v8164, 16
        %v8221 = vrot.slane %v8219, 6
        %v8222 = vor.u32 %v8218, %v8221
        %v8223 = vsel %vm5229, %v8214, %v8222
        %v8225 = vshrl.u32 %v7995, 16
        %v8227 = vrot.slane %v8225, 5
        %v8228 = vshll.u32 %v7995, 16
        %v8230 = vrot.slane %v8228, 6
        %v8231 = vor.u32 %v8227, %v8230
        %v8232 = vrot.slane %v8231, 4
        %v8234 = vshrl.u32 %v8165, 16
        %v8236 = vrot.slane %v8234, 5
        %v8237 = vshll.u32 %v8165, 16
        %v8239 = vrot.slane %v8237, 6
        %v8240 = vor.u32 %v8236, %v8239
        %v8241 = vsel %vm5229, %v8232, %v8240
        %v8243 = vshrl.u32 %v7996, 16
        %v8245 = vrot.slane %v8243, 5
        %v8246 = vshll.u32 %v7996, 16
        %v8248 = vrot.slane %v8246, 6
        %v8249 = vor.u32 %v8245, %v8248
        %v8250 = vrot.slane %v8249, 4
        %v8252 = vshrl.u32 %v8166, 16
        %v8254 = vrot.slane %v8252, 5
        %v8255 = vshll.u32 %v8166, 16
        %v8257 = vrot.slane %v8255, 6
        %v8258 = vor.u32 %v8254, %v8257
        %v8259 = vsel %vm5229, %v8250, %v8258
        %v8261 = vshrl.u32 %v7997, 16
        %v8263 = vrot.slane %v8261, 5
        %v8264 = vshll.u32 %v7997, 16
        %v8266 = vrot.slane %v8264, 6
        %v8267 = vor.u32 %v8263, %v8266
        %v8268 = vrot.slane %v8267, 4
        %v8270 = vshrl.u32 %v8167, 16
        %v8272 = vrot.slane %v8270, 5
        %v8273 = vshll.u32 %v8167, 16
        %v8275 = vrot.slane %v8273, 6
        %v8276 = vor.u32 %v8272, %v8275
        %v8277 = vsel %vm5229, %v8268, %v8276
        %v8279 = vshrl.u32 %v7998, 16
        %v8281 = vrot.slane %v8279, 5
        %v8282 = vshll.u32 %v7998, 16
        %v8284 = vrot.slane %v8282, 6
        %v8285 = vor.u32 %v8281, %v8284
        %v8286 = vrot.slane %v8285, 4
        %v8288 = vshrl.u32 %v8168, 16
        %v8290 = vrot.slane %v8288, 5
        %v8291 = vshll.u32 %v8168, 16
        %v8293 = vrot.slane %v8291, 6
        %v8294 = vor.u32 %v8290, %v8293
        %v8295 = vsel %vm5229, %v8286, %v8294
        %v8297 = vshrl.u32 %v7999, 16
        %v8299 = vrot.slane %v8297, 5
        %v8300 = vshll.u32 %v7999, 16
        %v8302 = vrot.slane %v8300, 6
        %v8303 = vor.u32 %v8299, %v8302
        %v8304 = vrot.slane %v8303, 4
        %v8306 = vshrl.u32 %v8169, 16
        %v8308 = vrot.slane %v8306, 5
        %v8309 = vshll.u32 %v8169, 16
        %v8311 = vrot.slane %v8309, 6
        %v8312 = vor.u32 %v8308, %v8311
        %v8313 = vsel %vm5229, %v8304, %v8312
        %s8314 = scalar_lea.vmem %s3, 288
        %v8315 = vld [vmem:[%s8314] sm:$0xf]
        %v8316 = vld [vmem:[%s8314 + $0x4] sm:$0xf]
        %v8317 = vld [vmem:[%s8314 + $0x8] sm:$0xf]
        %v8318 = vld [vmem:[%s8314 + $0xc] sm:$0xf]
        %v8319 = vunpack.c.l.b16 %v8187
        %v8320 = vunpack.c.l.b16 %v8205
        %v8321 = vunpack.c.l.b16 %v8223
        %v8322 = vunpack.c.l.b16 %v8241
        %v8323 = vunpack.c.l.b16 %v8259
        %v8324 = vunpack.c.l.b16 %v8277
        %v8325 = vunpack.c.l.b16 %v8295
        %v8326 = vunpack.c.l.b16 %v8313
        %v8327 = vpack.c.b16 %v8320, %v8319
        %v8328 = vpack.c.b16 %v8322, %v8321
        %v8329 = vpack.c.b16 %v8324, %v8323
        %v8330 = vpack.c.b16 %v8326, %v8325
        %v8335 = vunpack.c.l.b16 %v8315
        %v8336 = vunpack.c.l.b16 %v8316
        %v8337 = vunpack.c.l.b16 %v8317
        %v8338 = vunpack.c.l.b16 %v8318
        %v8339 = vpack.c.b16 %v8336, %v8335
        %v8340 = vpack.c.b16 %v8338, %v8337
        %v8344 = vsel %vm4859, %v8327, 0
        %v8347 = vsel %vm4859, %v8328, 0
        %v8350 = vsel %vm4859, %v8329, 0
        %v8353 = vsel %vm4859, %v8330, 0
        %8355 = vmatprep.subr.bf16.mxu0 0
        %8356 = vmatpush1.bf16.msra.mxu0 %v8339
        %8357 = vmatprep.subr.bf16.mxu0 0
        %8358 = vmatpush1.bf16.msra.mxu0 %v8340
        %8359 = vmatprep.subr.bf16.mxu0 0
        %8360 = vmatpush1.bf16.msra.mxu0 0
        %8361 = vmatprep.subr.bf16.mxu0 0
        %8362 = vmatpush1.bf16.msra.mxu0 0
        %8363 = vmatprep.subr.bf16.mxu0 0
        %8364 = vmatpush1.bf16.msra.mxu0 0
        %8365 = vmatprep.subr.bf16.mxu0 0
        %8366 = vmatpush1.bf16.msra.mxu0 0
        %8367 = vmatprep.subr.bf16.mxu0 0
        %8368 = vmatpush1.bf16.msra.mxu0 0
        %8369 = vmatprep.subr.bf16.mxu0 0
        %8370 = vmatpush1.bf16.msra.mxu0 0
        %8371 = vmatprep.subr.bf16.mxu0 0
        %8372 = vmatpush1.bf16.msra.mxu0 0
        %8373 = vmatprep.subr.bf16.mxu0 0
        %8374 = vmatpush1.bf16.msra.mxu0 0
        %8375 = vmatprep.subr.bf16.mxu0 0
        %8376 = vmatpush1.bf16.msra.mxu0 0
        %8377 = vmatprep.subr.bf16.mxu0 0
        %8378 = vmatpush1.bf16.msra.mxu0 0
        %8379 = vmatprep.subr.bf16.mxu0 0
        %8380 = vmatpush1.bf16.msra.mxu0 0
        %8381 = vmatprep.subr.bf16.mxu0 0
        %8382 = vmatpush1.bf16.msra.mxu0 0
        %8383 = vmatprep.subr.bf16.mxu0 0
        %8384 = vmatpush1.bf16.msra.mxu0 0
        %8385 = vmatprep.subr.bf16.mxu0 0
        %8386 = vmatpush1.bf16.msra.mxu0 0
        %8387 = vmatprep.mubr.bf16.mxu0 0
        %8388 = vmatmul.mubr.bf16.gmra.mrb[0].mxu0 %v8344
        %v8389 = vpop.f32.mrb[0].mxu0
        %v8390 = vadd.f32 0.0, %v8389
        %v8391 = vpop.f32.mrb[0].mxu0
        %v8392 = vpop.f32.mrb[0].mxu0
        %v8393 = vadd.f32 0.0, %v8392
        %v8394 = vpop.f32.mrb[0].mxu0
        %8395 = vmatprep.mubr.bf16.mxu0 0
        %8396 = vmatmul.mubr.bf16.gmra.mrb[0].mxu0 %v8347
        %v8397 = vpop.f32.mrb[0].mxu0
        %v8398 = vadd.f32 0.0, %v8397
        %v8399 = vpop.f32.mrb[0].mxu0
        %v8400 = vpop.f32.mrb[0].mxu0
        %v8401 = vadd.f32 0.0, %v8400
        %v8402 = vpop.f32.mrb[0].mxu0
        %8403 = vmatprep.mubr.bf16.mxu0 0
        %8404 = vmatmul.mubr.bf16.gmra.mrb[0].mxu0 %v8350
        %v8405 = vpop.f32.mrb[0].mxu0
        %v8406 = vadd.f32 0.0, %v8405
        %v8407 = vpop.f32.mrb[0].mxu0
        %v8408 = vpop.f32.mrb[0].mxu0
        %v8409 = vadd.f32 0.0, %v8408
        %v8410 = vpop.f32.mrb[0].mxu0
        %8411 = vmatprep.mubr.bf16.mxu0 0
        %8412 = vmatmul.mubr.bf16.gmra.mrb[0].mxu0 %v8353
        %v8413 = vpop.f32.mrb[0].mxu0
        %v8414 = vadd.f32 0.0, %v8413
        %v8415 = vpop.f32.mrb[0].mxu0
        %v8416 = vpop.f32.mrb[0].mxu0
        %v8417 = vadd.f32 0.0, %v8416
        %v8418 = vpop.f32.mrb[0].mxu0
        %8419 = vdwg.mxu0
        %v8420 = vadd.f32 %v8154, %v8390
        %v8421 = vadd.f32 %v8155, %v8393
        %v8422 = vadd.f32 %v8156, %v8398
        %v8423 = vadd.f32 %v8157, %v8401
        %v8424 = vadd.f32 %v8158, %v8406
        %v8425 = vadd.f32 %v8159, %v8409
        %v8426 = vadd.f32 %v8160, %v8414
        %v8427 = vadd.f32 %v8161, %v8417
        %v8428 = vld [vmem:[%s7619] sm:$0xc]
        %v8429 = vld [vmem:[%s7619 + $0x8] sm:$0xc]
        %v8430 = vld [vmem:[%s7619 + $0x10] sm:$0xc]
        %v8431 = vld [vmem:[%s7619 + $0x18] sm:$0xc]
        %v8432 = vld [vmem:[%s7619 + $0x20] sm:$0xc]
        %v8433 = vld [vmem:[%s7619 + $0x28] sm:$0xc]
        %v8434 = vld [vmem:[%s7619 + $0x30] sm:$0xc]
        %v8435 = vld [vmem:[%s7619 + $0x38] sm:$0xc]
        %v8452 = vrot.slane %v8428, 6
        %v8453 = vrot.slane %v8452, 4
        %v8454 = vrot.slane %v8162, 6
        %v8455 = vsel %vm5514, %v8453, %v8454
        %v8456 = vrot.slane %v8429, 6
        %v8457 = vrot.slane %v8456, 4
        %v8458 = vrot.slane %v8163, 6
        %v8459 = vsel %vm5514, %v8457, %v8458
        %v8460 = vrot.slane %v8430, 6
        %v8461 = vrot.slane %v8460, 4
        %v8462 = vrot.slane %v8164, 6
        %v8463 = vsel %vm5514, %v8461, %v8462
        %v8464 = vrot.slane %v8431, 6
        %v8465 = vrot.slane %v8464, 4
        %v8466 = vrot.slane %v8165, 6
        %v8467 = vsel %vm5514, %v8465, %v8466
        %v8468 = vrot.slane %v8432, 6
        %v8469 = vrot.slane %v8468, 4
        %v8470 = vrot.slane %v8166, 6
        %v8471 = vsel %vm5514, %v8469, %v8470
        %v8472 = vrot.slane %v8433, 6
        %v8473 = vrot.slane %v8472, 4
        %v8474 = vrot.slane %v8167, 6
        %v8475 = vsel %vm5514, %v8473, %v8474
        %v8476 = vrot.slane %v8434, 6
        %v8477 = vrot.slane %v8476, 4
        %v8478 = vrot.slane %v8168, 6
        %v8479 = vsel %vm5514, %v8477, %v8478
        %v8480 = vrot.slane %v8435, 6
        %v8481 = vrot.slane %v8480, 4
        %v8482 = vrot.slane %v8169, 6
        %v8483 = vsel %vm5514, %v8481, %v8482
        %s8484 = scalar_lea.vmem %s3, 304
        %v8485 = vld [vmem:[%s8484] sm:$0xf]
        %v8486 = vld [vmem:[%s8484 + $0x4] sm:$0xf]
        %v8487 = vld [vmem:[%s8484 + $0x8] sm:$0xf]
        %v8488 = vld [vmem:[%s8484 + $0xc] sm:$0xf]
        %v8489 = vunpack.c.l.b16 %v8455
        %v8490 = vunpack.c.l.b16 %v8459
        %v8491 = vunpack.c.l.b16 %v8463
        %v8492 = vunpack.c.l.b16 %v8467
        %v8493 = vunpack.c.l.b16 %v8471
        %v8494 = vunpack.c.l.b16 %v8475
        %v8495 = vunpack.c.l.b16 %v8479
        %v8496 = vunpack.c.l.b16 %v8483
        %v8497 = vpack.c.b16 %v8490, %v8489
        %v8498 = vpack.c.b16 %v8492, %v8491
        %v8499 = vpack.c.b16 %v8494, %v8493
        %v8500 = vpack.c.b16 %v8496, %v8495
        %v8505 = vunpack.c.l.b16 %v8485
        %v8506 = vunpack.c.l.b16 %v8486
        %v8507 = vunpack.c.l.b16 %v8487
        %v8508 = vunpack.c.l.b16 %v8488
        %v8509 = vpack.c.b16 %v8506, %v8505
        %v8510 = vpack.c.b16 %v8508, %v8507
        %v8514 = vsel %vm4859, %v8497, 0
        %v8517 = vsel %vm4859, %v8498, 0
        %v8520 = vsel %vm4859, %v8499, 0
        %v8523 = vsel %vm4859, %v8500, 0
        %8525 = vmatprep.subr.bf16.mxu0 0
        %8526 = vmatpush1.bf16.msra.mxu0 %v8509
        %8527 = vmatprep.subr.bf16.mxu0 0
        %8528 = vmatpush1.bf16.msra.mxu0 %v8510
        %8529 = vmatprep.subr.bf16.mxu0 0
        %8530 = vmatpush1.bf16.msra.mxu0 0
        %8531 = vmatprep.subr.bf16.mxu0 0
        %8532 = vmatpush1.bf16.msra.mxu0 0
        %8533 = vmatprep.subr.bf16.mxu0 0
        %8534 = vmatpush1.bf16.msra.mxu0 0
        %8535 = vmatprep.subr.bf16.mxu0 0
        %8536 = vmatpush1.bf16.msra.mxu0 0
        %8537 = vmatprep.subr.bf16.mxu0 0
        %8538 = vmatpush1.bf16.msra.mxu0 0
        %8539 = vmatprep.subr.bf16.mxu0 0
        %8540 = vmatpush1.bf16.msra.mxu0 0
        %8541 = vmatprep.subr.bf16.mxu0 0
        %8542 = vmatpush1.bf16.msra.mxu0 0
        %8543 = vmatprep.subr.bf16.mxu0 0
        %8544 = vmatpush1.bf16.msra.mxu0 0
        %8545 = vmatprep.subr.bf16.mxu0 0
        %8546 = vmatpush1.bf16.msra.mxu0 0
        %8547 = vmatprep.subr.bf16.mxu0 0
        %8548 = vmatpush1.bf16.msra.mxu0 0
        %8549 = vmatprep.subr.bf16.mxu0 0
        %8550 = vmatpush1.bf16.msra.mxu0 0
        %8551 = vmatprep.subr.bf16.mxu0 0
        %8552 = vmatpush1.bf16.msra.mxu0 0
        %8553 = vmatprep.subr.bf16.mxu0 0
        %8554 = vmatpush1.bf16.msra.mxu0 0
        %8555 = vmatprep.subr.bf16.mxu0 0
        %8556 = vmatpush1.bf16.msra.mxu0 0
        %8557 = vmatprep.mubr.bf16.mxu0 0
        %8558 = vmatmul.mubr.bf16.gmra.mrb[0].mxu0 %v8514
        %v8559 = vpop.f32.mrb[0].mxu0
        %v8560 = vadd.f32 0.0, %v8559
        %v8561 = vpop.f32.mrb[0].mxu0
        %v8562 = vpop.f32.mrb[0].mxu0
        %v8563 = vadd.f32 0.0, %v8562
        %v8564 = vpop.f32.mrb[0].mxu0
        %8565 = vmatprep.mubr.bf16.mxu0 0
        %8566 = vmatmul.mubr.bf16.gmra.mrb[0].mxu0 %v8517
        %v8567 = vpop.f32.mrb[0].mxu0
        %v8568 = vadd.f32 0.0, %v8567
        %v8569 = vpop.f32.mrb[0].mxu0
        %v8570 = vpop.f32.mrb[0].mxu0
        %v8571 = vadd.f32 0.0, %v8570
        %v8572 = vpop.f32.mrb[0].mxu0
        %8573 = vmatprep.mubr.bf16.mxu0 0
        %8574 = vmatmul.mubr.bf16.gmra.mrb[0].mxu0 %v8520
        %v8575 = vpop.f32.mrb[0].mxu0
        %v8576 = vadd.f32 0.0, %v8575
        %v8577 = vpop.f32.mrb[0].mxu0
        %v8578 = vpop.f32.mrb[0].mxu0
        %v8579 = vadd.f32 0.0, %v8578
        %v8580 = vpop.f32.mrb[0].mxu0
        %8581 = vmatprep.mubr.bf16.mxu0 0
        %8582 = vmatmul.mubr.bf16.gmra.mrb[0].mxu0 %v8523
        %v8583 = vpop.f32.mrb[0].mxu0
        %v8584 = vadd.f32 0.0, %v8583
        %v8585 = vpop.f32.mrb[0].mxu0
        %v8586 = vpop.f32.mrb[0].mxu0
        %v8587 = vadd.f32 0.0, %v8586
        %v8588 = vpop.f32.mrb[0].mxu0
        %8589 = vdwg.mxu0
        %v8590 = vadd.f32 %v8420, %v8560
        %v8591 = vadd.f32 %v8421, %v8563
        %v8592 = vadd.f32 %v8422, %v8568
        %v8593 = vadd.f32 %v8423, %v8571
        %v8594 = vadd.f32 %v8424, %v8576
        %v8595 = vadd.f32 %v8425, %v8579
        %v8596 = vadd.f32 %v8426, %v8584
        %v8597 = vadd.f32 %v8427, %v8587
        %v8598 = vld [vmem:[%s3275] sm:$0xf]
        %v8599 = vld [vmem:[%s3275 + $0x8] sm:$0xf]
        %v8600 = vld [vmem:[%s3275 + $0x10] sm:$0xf]
        %v8601 = vld [vmem:[%s3275 + $0x18] sm:$0xf]
        %v8602 = vld [vmem:[%s3275 + $0x20] sm:$0xf]
        %v8603 = vld [vmem:[%s3275 + $0x28] sm:$0xf]
        %v8604 = vld [vmem:[%s3275 + $0x30] sm:$0xf]
        %v8605 = vld [vmem:[%s3275 + $0x38] sm:$0xf]
        %s8606 = scalar_lea.vmem %s3, 320
        %v8607 = vld [vmem:[%s8606] sm:$0xf]
        %v8608 = vld [vmem:[%s8606 + $0x4] sm:$0xf]
        %v8609 = vld [vmem:[%s8606 + $0x8] sm:$0xf]
        %v8610 = vld [vmem:[%s8606 + $0xc] sm:$0xf]
        %v8619 = vunpack.c.l.b16 %v8598
        %v8620 = vunpack.c.l.b16 %v8599
        %v8621 = vunpack.c.l.b16 %v8600
        %v8622 = vunpack.c.l.b16 %v8601
        %v8623 = vunpack.c.l.b16 %v8602
        %v8624 = vunpack.c.l.b16 %v8603
        %v8625 = vunpack.c.l.b16 %v8604
        %v8626 = vunpack.c.l.b16 %v8605
        %v8627 = vpack.c.b16 %v8620, %v8619
        %v8628 = vpack.c.b16 %v8622, %v8621
        %v8629 = vpack.c.b16 %v8624, %v8623
        %v8630 = vpack.c.b16 %v8626, %v8625
        %v8635 = vunpack.c.l.b16 %v8607
        %v8636 = vunpack.c.l.b16 %v8608
        %v8637 = vunpack.c.l.b16 %v8609
        %v8638 = vunpack.c.l.b16 %v8610
        %v8639 = vpack.c.b16 %v8636, %v8635
        %v8640 = vpack.c.b16 %v8638, %v8637
        %v8644 = vsel %vm4859, %v8627, 0
        %v8647 = vsel %vm4859, %v8628, 0
        %v8650 = vsel %vm4859, %v8629, 0
        %v8653 = vsel %vm4859, %v8630, 0
        %8655 = vmatprep.subr.bf16.mxu0 0
        %8656 = vmatpush1.bf16.msra.mxu0 %v8639
        %8657 = vmatprep.subr.bf16.mxu0 0
        %8658 = vmatpush1.bf16.msra.mxu0 %v8640
        %8659 = vmatprep.subr.bf16.mxu0 0
        %8660 = vmatpush1.bf16.msra.mxu0 0
        %8661 = vmatprep.subr.bf16.mxu0 0
        %8662 = vmatpush1.bf16.msra.mxu0 0
        %8663 = vmatprep.subr.bf16.mxu0 0
        %8664 = vmatpush1.bf16.msra.mxu0 0
        %8665 = vmatprep.subr.bf16.mxu0 0
        %8666 = vmatpush1.bf16.msra.mxu0 0
        %8667 = vmatprep.subr.bf16.mxu0 0
        %8668 = vmatpush1.bf16.msra.mxu0 0
        %8669 = vmatprep.subr.bf16.mxu0 0
        %8670 = vmatpush1.bf16.msra.mxu0 0
        %8671 = vmatprep.subr.bf16.mxu0 0
        %8672 = vmatpush1.bf16.msra.mxu0 0
        %8673 = vmatprep.subr.bf16.mxu0 0
        %8674 = vmatpush1.bf16.msra.mxu0 0
        %8675 = vmatprep.subr.bf16.mxu0 0
        %8676 = vmatpush1.bf16.msra.mxu0 0
        %8677 = vmatprep.subr.bf16.mxu0 0
        %8678 = vmatpush1.bf16.msra.mxu0 0
        %8679 = vmatprep.subr.bf16.mxu0 0
        %8680 = vmatpush1.bf16.msra.mxu0 0
        %8681 = vmatprep.subr.bf16.mxu0 0
        %8682 = vmatpush1.bf16.msra.mxu0 0
        %8683 = vmatprep.subr.bf16.mxu0 0
        %8684 = vmatpush1.bf16.msra.mxu0 0
        %8685 = vmatprep.subr.bf16.mxu0 0
        %8686 = vmatpush1.bf16.msra.mxu0 0
        %8687 = vmatprep.mubr.bf16.mxu0 0
        %8688 = vmatmul.mubr.bf16.gmra.mrb[0].mxu0 %v8644
        %v8689 = vpop.f32.mrb[0].mxu0
        %v8690 = vadd.f32 0.0, %v8689
        %v8691 = vpop.f32.mrb[0].mxu0
        %v8692 = vpop.f32.mrb[0].mxu0
        %v8693 = vadd.f32 0.0, %v8692
        %v8694 = vpop.f32.mrb[0].mxu0
        %8695 = vmatprep.mubr.bf16.mxu0 0
        %8696 = vmatmul.mubr.bf16.gmra.mrb[0].mxu0 %v8647
        %v8697 = vpop.f32.mrb[0].mxu0
        %v8698 = vadd.f32 0.0, %v8697
        %v8699 = vpop.f32.mrb[0].mxu0
        %v8700 = vpop.f32.mrb[0].mxu0
        %v8701 = vadd.f32 0.0, %v8700
        %v8702 = vpop.f32.mrb[0].mxu0
        %8703 = vmatprep.mubr.bf16.mxu0 0
        %8704 = vmatmul.mubr.bf16.gmra.mrb[0].mxu0 %v8650
        %v8705 = vpop.f32.mrb[0].mxu0
        %v8706 = vadd.f32 0.0, %v8705
        %v8707 = vpop.f32.mrb[0].mxu0
        %v8708 = vpop.f32.mrb[0].mxu0
        %v8709 = vadd.f32 0.0, %v8708
        %v8710 = vpop.f32.mrb[0].mxu0
        %8711 = vmatprep.mubr.bf16.mxu0 0
        %8712 = vmatmul.mubr.bf16.gmra.mrb[0].mxu0 %v8653
        %v8713 = vpop.f32.mrb[0].mxu0
        %v8714 = vadd.f32 0.0, %v8713
        %v8715 = vpop.f32.mrb[0].mxu0
        %v8716 = vpop.f32.mrb[0].mxu0
        %v8717 = vadd.f32 0.0, %v8716
        %v8718 = vpop.f32.mrb[0].mxu0
        %8719 = vdwg.mxu0
        %v8720 = vadd.f32 %v8590, %v8690
        %v8721 = vadd.f32 %v8591, %v8693
        %v8722 = vadd.f32 %v8592, %v8698
        %v8723 = vadd.f32 %v8593, %v8701
        %v8724 = vadd.f32 %v8594, %v8706
        %v8725 = vadd.f32 %v8595, %v8709
        %v8726 = vadd.f32 %v8596, %v8714
        %v8727 = vadd.f32 %v8597, %v8717
        %v8728 = vld [vmem:[%s3275] sm:$0xf]
        %v8729 = vld [vmem:[%s3275 + $0x4] sm:$0x1]
        %v8730 = vld [vmem:[%s3275 + $0x8] sm:$0xf]
        %v8731 = vld [vmem:[%s3275 + $0xc] sm:$0x1]
        %v8732 = vld [vmem:[%s3275 + $0x10] sm:$0xf]
        %v8733 = vld [vmem:[%s3275 + $0x14] sm:$0x1]
        %v8734 = vld [vmem:[%s3275 + $0x18] sm:$0xf]
        %v8735 = vld [vmem:[%s3275 + $0x1c] sm:$0x1]
        %v8736 = vld [vmem:[%s3275 + $0x20] sm:$0xf]
        %v8737 = vld [vmem:[%s3275 + $0x24] sm:$0x1]
        %v8738 = vld [vmem:[%s3275 + $0x28] sm:$0xf]
        %v8739 = vld [vmem:[%s3275 + $0x2c] sm:$0x1]
        %v8740 = vld [vmem:[%s3275 + $0x30] sm:$0xf]
        %v8741 = vld [vmem:[%s3275 + $0x34] sm:$0x1]
        %v8742 = vld [vmem:[%s3275 + $0x38] sm:$0xf]
        %v8743 = vld [vmem:[%s3275 + $0x3c] sm:$0x1]
        %v8745 = vshrl.u32 %v8728, 16
        %v8747 = vrot.slane %v8745, 4
        %v8748 = vshll.u32 %v8728, 16
        %v8750 = vrot.slane %v8748, 5
        %v8751 = vor.u32 %v8747, %v8750
        %v8752 = vrot.slane %v8751, 4
        %v8754 = vshll.u32 %v8729, 16
        %v8756 = vrot.slane %v8754, 5
        %v8757 = vsel %vm4717, %v8752, %v8756
        %v8759 = vshrl.u32 %v8730, 16
        %v8761 = vrot.slane %v8759, 4
        %v8762 = vshll.u32 %v8730, 16
        %v8764 = vrot.slane %v8762, 5
        %v8765 = vor.u32 %v8761, %v8764
        %v8766 = vrot.slane %v8765, 4
        %v8768 = vshll.u32 %v8731, 16
        %v8770 = vrot.slane %v8768, 5
        %v8771 = vsel %vm4717, %v8766, %v8770
        %v8773 = vshrl.u32 %v8732, 16
        %v8775 = vrot.slane %v8773, 4
        %v8776 = vshll.u32 %v8732, 16
        %v8778 = vrot.slane %v8776, 5
        %v8779 = vor.u32 %v8775, %v8778
        %v8780 = vrot.slane %v8779, 4
        %v8782 = vshll.u32 %v8733, 16
        %v8784 = vrot.slane %v8782, 5
        %v8785 = vsel %vm4717, %v8780, %v8784
        %v8787 = vshrl.u32 %v8734, 16
        %v8789 = vrot.slane %v8787, 4
        %v8790 = vshll.u32 %v8734, 16
        %v8792 = vrot.slane %v8790, 5
        %v8793 = vor.u32 %v8789, %v8792
        %v8794 = vrot.slane %v8793, 4
        %v8796 = vshll.u32 %v8735, 16
        %v8798 = vrot.slane %v8796, 5
        %v8799 = vsel %vm4717, %v8794, %v8798
        %v8801 = vshrl.u32 %v8736, 16
        %v8803 = vrot.slane %v8801, 4
        %v8804 = vshll.u32 %v8736, 16
        %v8806 = vrot.slane %v8804, 5
        %v8807 = vor.u32 %v8803, %v8806
        %v8808 = vrot.slane %v8807, 4
        %v8810 = vshll.u32 %v8737, 16
        %v8812 = vrot.slane %v8810, 5
        %v8813 = vsel %vm4717, %v8808, %v8812
        %v8815 = vshrl.u32 %v8738, 16
        %v8817 = vrot.slane %v8815, 4
        %v8818 = vshll.u32 %v8738, 16
        %v8820 = vrot.slane %v8818, 5
        %v8821 = vor.u32 %v8817, %v8820
        %v8822 = vrot.slane %v8821, 4
        %v8824 = vshll.u32 %v8739, 16
        %v8826 = vrot.slane %v8824, 5
        %v8827 = vsel %vm4717, %v8822, %v8826
        %v8829 = vshrl.u32 %v8740, 16
        %v8831 = vrot.slane %v8829, 4
        %v8832 = vshll.u32 %v8740, 16
        %v8834 = vrot.slane %v8832, 5
        %v8835 = vor.u32 %v8831, %v8834
        %v8836 = vrot.slane %v8835, 4
        %v8838 = vshll.u32 %v8741, 16
        %v8840 = vrot.slane %v8838, 5
        %v8841 = vsel %vm4717, %v8836, %v8840
        %v8843 = vshrl.u32 %v8742, 16
        %v8845 = vrot.slane %v8843, 4
        %v8846 = vshll.u32 %v8742, 16
        %v8848 = vrot.slane %v8846, 5
        %v8849 = vor.u32 %v8845, %v8848
        %v8850 = vrot.slane %v8849, 4
        %v8852 = vshll.u32 %v8743, 16
        %v8854 = vrot.slane %v8852, 5
        %v8855 = vsel %vm4717, %v8850, %v8854
        %s8856 = scalar_lea.vmem %s3, 336
        %v8857 = vld [vmem:[%s8856] sm:$0xf]
        %v8858 = vld [vmem:[%s8856 + $0x4] sm:$0xf]
        %v8859 = vld [vmem:[%s8856 + $0x8] sm:$0xf]
        %v8860 = vld [vmem:[%s8856 + $0xc] sm:$0xf]
        %v8861 = vunpack.c.l.b16 %v8757
        %v8862 = vunpack.c.l.b16 %v8771
        %v8863 = vunpack.c.l.b16 %v8785
        %v8864 = vunpack.c.l.b16 %v8799
        %v8865 = vunpack.c.l.b16 %v8813
        %v8866 = vunpack.c.l.b16 %v8827
        %v8867 = vunpack.c.l.b16 %v8841
        %v8868 = vunpack.c.l.b16 %v8855
        %v8869 = vpack.c.b16 %v8862, %v8861
        %v8870 = vpack.c.b16 %v8864, %v8863
        %v8871 = vpack.c.b16 %v8866, %v8865
        %v8872 = vpack.c.b16 %v8868, %v8867
        %v8877 = vunpack.c.l.b16 %v8857
        %v8878 = vunpack.c.l.b16 %v8858
        %v8879 = vunpack.c.l.b16 %v8859
        %v8880 = vunpack.c.l.b16 %v8860
        %v8881 = vpack.c.b16 %v8878, %v8877
        %v8882 = vpack.c.b16 %v8880, %v8879
        %v8886 = vsel %vm4859, %v8869, 0
        %v8889 = vsel %vm4859, %v8870, 0
        %v8892 = vsel %vm4859, %v8871, 0
        %v8895 = vsel %vm4859, %v8872, 0
        %8897 = vmatprep.subr.bf16.mxu0 0
        %8898 = vmatpush1.bf16.msra.mxu0 %v8881
        %8899 = vmatprep.subr.bf16.mxu0 0
        %8900 = vmatpush1.bf16.msra.mxu0 %v8882
        %8901 = vmatprep.subr.bf16.mxu0 0
        %8902 = vmatpush1.bf16.msra.mxu0 0
        %8903 = vmatprep.subr.bf16.mxu0 0
        %8904 = vmatpush1.bf16.msra.mxu0 0
        %8905 = vmatprep.subr.bf16.mxu0 0
        %8906 = vmatpush1.bf16.msra.mxu0 0
        %8907 = vmatprep.subr.bf16.mxu0 0
        %8908 = vmatpush1.bf16.msra.mxu0 0
        %8909 = vmatprep.subr.bf16.mxu0 0
        %8910 = vmatpush1.bf16.msra.mxu0 0
        %8911 = vmatprep.subr.bf16.mxu0 0
        %8912 = vmatpush1.bf16.msra.mxu0 0
        %8913 = vmatprep.subr.bf16.mxu0 0
        %8914 = vmatpush1.bf16.msra.mxu0 0
        %8915 = vmatprep.subr.bf16.mxu0 0
        %8916 = vmatpush1.bf16.msra.mxu0 0
        %8917 = vmatprep.subr.bf16.mxu0 0
        %8918 = vmatpush1.bf16.msra.mxu0 0
        %8919 = vmatprep.subr.bf16.mxu0 0
        %8920 = vmatpush1.bf16.msra.mxu0 0
        %8921 = vmatprep.subr.bf16.mxu0 0
        %8922 = vmatpush1.bf16.msra.mxu0 0
        %8923 = vmatprep.subr.bf16.mxu0 0
        %8924 = vmatpush1.bf16.msra.mxu0 0
        %8925 = vmatprep.subr.bf16.mxu0 0
        %8926 = vmatpush1.bf16.msra.mxu0 0
        %8927 = vmatprep.subr.bf16.mxu0 0
        %8928 = vmatpush1.bf16.msra.mxu0 0
        %8929 = vmatprep.mubr.bf16.mxu0 0
        %8930 = vmatmul.mubr.bf16.gmra.mrb[0].mxu0 %v8886
        %v8931 = vpop.f32.mrb[0].mxu0
        %v8932 = vadd.f32 0.0, %v8931
        %v8933 = vpop.f32.mrb[0].mxu0
        %v8934 = vpop.f32.mrb[0].mxu0
        %v8935 = vadd.f32 0.0, %v8934
        %v8936 = vpop.f32.mrb[0].mxu0
        %8937 = vmatprep.mubr.bf16.mxu0 0
        %8938 = vmatmul.mubr.bf16.gmra.mrb[0].mxu0 %v8889
        %v8939 = vpop.f32.mrb[0].mxu0
        %v8940 = vadd.f32 0.0, %v8939
        %v8941 = vpop.f32.mrb[0].mxu0
        %v8942 = vpop.f32.mrb[0].mxu0
        %v8943 = vadd.f32 0.0, %v8942
        %v8944 = vpop.f32.mrb[0].mxu0
        %8945 = vmatprep.mubr.bf16.mxu0 0
        %8946 = vmatmul.mubr.bf16.gmra.mrb[0].mxu0 %v8892
        %v8947 = vpop.f32.mrb[0].mxu0
        %v8948 = vadd.f32 0.0, %v8947
        %v8949 = vpop.f32.mrb[0].mxu0
        %v8950 = vpop.f32.mrb[0].mxu0
        %v8951 = vadd.f32 0.0, %v8950
        %v8952 = vpop.f32.mrb[0].mxu0
        %8953 = vmatprep.mubr.bf16.mxu0 0
        %8954 = vmatmul.mubr.bf16.gmra.mrb[0].mxu0 %v8895
        %v8955 = vpop.f32.mrb[0].mxu0
        %v8956 = vadd.f32 0.0, %v8955
        %v8957 = vpop.f32.mrb[0].mxu0
        %v8958 = vpop.f32.mrb[0].mxu0
        %v8959 = vadd.f32 0.0, %v8958
        %v8960 = vpop.f32.mrb[0].mxu0
        %8961 = vdwg.mxu0
        %v8962 = vadd.f32 %v8720, %v8932
        %v8963 = vadd.f32 %v8721, %v8935
        %v8964 = vadd.f32 %v8722, %v8940
        %v8965 = vadd.f32 %v8723, %v8943
        %v8966 = vadd.f32 %v8724, %v8948
        %v8967 = vadd.f32 %v8725, %v8951
        %v8968 = vadd.f32 %v8726, %v8956
        %v8969 = vadd.f32 %v8727, %v8959
        %v8970 = vld [vmem:[%s3275] sm:$0xe]
        %v8971 = vld [vmem:[%s3275 + $0x8] sm:$0xe]
        %v8972 = vld [vmem:[%s3275 + $0x10] sm:$0xe]
        %v8973 = vld [vmem:[%s3275 + $0x18] sm:$0xe]
        %v8974 = vld [vmem:[%s3275 + $0x20] sm:$0xe]
        %v8975 = vld [vmem:[%s3275 + $0x28] sm:$0xe]
        %v8976 = vld [vmem:[%s3275 + $0x30] sm:$0xe]
        %v8977 = vld [vmem:[%s3275 + $0x38] sm:$0xe]
        %v8994 = vrot.slane %v8970, 5
        %v8995 = vrot.slane %v8994, 4
        %v8996 = vrot.slane %v8729, 5
        %v8997 = vsel %vm5072, %v8995, %v8996
        %v8998 = vrot.slane %v8971, 5
        %v8999 = vrot.slane %v8998, 4
        %v9000 = vrot.slane %v8731, 5
        %v9001 = vsel %vm5072, %v8999, %v9000
        %v9002 = vrot.slane %v8972, 5
        %v9003 = vrot.slane %v9002, 4
        %v9004 = vrot.slane %v8733, 5
        %v9005 = vsel %vm5072, %v9003, %v9004
        %v9006 = vrot.slane %v8973, 5
        %v9007 = vrot.slane %v9006, 4
        %v9008 = vrot.slane %v8735, 5
        %v9009 = vsel %vm5072, %v9007, %v9008
        %v9010 = vrot.slane %v8974, 5
        %v9011 = vrot.slane %v9010, 4
        %v9012 = vrot.slane %v8737, 5
        %v9013 = vsel %vm5072, %v9011, %v9012
        %v9014 = vrot.slane %v8975, 5
        %v9015 = vrot.slane %v9014, 4
        %v9016 = vrot.slane %v8739, 5
        %v9017 = vsel %vm5072, %v9015, %v9016
        %v9018 = vrot.slane %v8976, 5
        %v9019 = vrot.slane %v9018, 4
        %v9020 = vrot.slane %v8741, 5
        %v9021 = vsel %vm5072, %v9019, %v9020
        %v9022 = vrot.slane %v8977, 5
        %v9023 = vrot.slane %v9022, 4
        %v9024 = vrot.slane %v8743, 5
        %v9025 = vsel %vm5072, %v9023, %v9024
        %s9026 = scalar_lea.vmem %s3, 352
        %v9027 = vld [vmem:[%s9026] sm:$0xf]
        %v9028 = vld [vmem:[%s9026 + $0x4] sm:$0xf]
        %v9029 = vld [vmem:[%s9026 + $0x8] sm:$0xf]
        %v9030 = vld [vmem:[%s9026 + $0xc] sm:$0xf]
        %v9031 = vunpack.c.l.b16 %v8997
        %v9032 = vunpack.c.l.b16 %v9001
        %v9033 = vunpack.c.l.b16 %v9005
        %v9034 = vunpack.c.l.b16 %v9009
        %v9035 = vunpack.c.l.b16 %v9013
        %v9036 = vunpack.c.l.b16 %v9017
        %v9037 = vunpack.c.l.b16 %v9021
        %v9038 = vunpack.c.l.b16 %v9025
        %v9039 = vpack.c.b16 %v9032, %v9031
        %v9040 = vpack.c.b16 %v9034, %v9033
        %v9041 = vpack.c.b16 %v9036, %v9035
        %v9042 = vpack.c.b16 %v9038, %v9037
        %v9047 = vunpack.c.l.b16 %v9027
        %v9048 = vunpack.c.l.b16 %v9028
        %v9049 = vunpack.c.l.b16 %v9029
        %v9050 = vunpack.c.l.b16 %v9030
        %v9051 = vpack.c.b16 %v9048, %v9047
        %v9052 = vpack.c.b16 %v9050, %v9049
        %v9056 = vsel %vm4859, %v9039, 0
        %v9059 = vsel %vm4859, %v9040, 0
        %v9062 = vsel %vm4859, %v9041, 0
        %v9065 = vsel %vm4859, %v9042, 0
        %9067 = vmatprep.subr.bf16.mxu0 0
        %9068 = vmatpush1.bf16.msra.mxu0 %v9051
        %9069 = vmatprep.subr.bf16.mxu0 0
        %9070 = vmatpush1.bf16.msra.mxu0 %v9052
        %9071 = vmatprep.subr.bf16.mxu0 0
        %9072 = vmatpush1.bf16.msra.mxu0 0
        %9073 = vmatprep.subr.bf16.mxu0 0
        %9074 = vmatpush1.bf16.msra.mxu0 0
        %9075 = vmatprep.subr.bf16.mxu0 0
        %9076 = vmatpush1.bf16.msra.mxu0 0
        %9077 = vmatprep.subr.bf16.mxu0 0
        %9078 = vmatpush1.bf16.msra.mxu0 0
        %9079 = vmatprep.subr.bf16.mxu0 0
        %9080 = vmatpush1.bf16.msra.mxu0 0
        %9081 = vmatprep.subr.bf16.mxu0 0
        %9082 = vmatpush1.bf16.msra.mxu0 0
        %9083 = vmatprep.subr.bf16.mxu0 0
        %9084 = vmatpush1.bf16.msra.mxu0 0
        %9085 = vmatprep.subr.bf16.mxu0 0
        %9086 = vmatpush1.bf16.msra.mxu0 0
        %9087 = vmatprep.subr.bf16.mxu0 0
        %9088 = vmatpush1.bf16.msra.mxu0 0
        %9089 = vmatprep.subr.bf16.mxu0 0
        %9090 = vmatpush1.bf16.msra.mxu0 0
        %9091 = vmatprep.subr.bf16.mxu0 0
        %9092 = vmatpush1.bf16.msra.mxu0 0
        %9093 = vmatprep.subr.bf16.mxu0 0
        %9094 = vmatpush1.bf16.msra.mxu0 0
        %9095 = vmatprep.subr.bf16.mxu0 0
        %9096 = vmatpush1.bf16.msra.mxu0 0
        %9097 = vmatprep.subr.bf16.mxu0 0
        %9098 = vmatpush1.bf16.msra.mxu0 0
        %9099 = vmatprep.mubr.bf16.mxu0 0
        %9100 = vmatmul.mubr.bf16.gmra.mrb[0].mxu0 %v9056
        %v9101 = vpop.f32.mrb[0].mxu0
        %v9102 = vadd.f32 0.0, %v9101
        %v9103 = vpop.f32.mrb[0].mxu0
        %v9104 = vpop.f32.mrb[0].mxu0
        %v9105 = vadd.f32 0.0, %v9104
        %v9106 = vpop.f32.mrb[0].mxu0
        %9107 = vmatprep.mubr.bf16.mxu0 0
        %9108 = vmatmul.mubr.bf16.gmra.mrb[0].mxu0 %v9059
        %v9109 = vpop.f32.mrb[0].mxu0
        %v9110 = vadd.f32 0.0, %v9109
        %v9111 = vpop.f32.mrb[0].mxu0
        %v9112 = vpop.f32.mrb[0].mxu0
        %v9113 = vadd.f32 0.0, %v9112
        %v9114 = vpop.f32.mrb[0].mxu0
        %9115 = vmatprep.mubr.bf16.mxu0 0
        %9116 = vmatmul.mubr.bf16.gmra.mrb[0].mxu0 %v9062
        %v9117 = vpop.f32.mrb[0].mxu0
        %v9118 = vadd.f32 0.0, %v9117
        %v9119 = vpop.f32.mrb[0].mxu0
        %v9120 = vpop.f32.mrb[0].mxu0
        %v9121 = vadd.f32 0.0, %v9120
        %v9122 = vpop.f32.mrb[0].mxu0
        %9123 = vmatprep.mubr.bf16.mxu0 0
        %9124 = vmatmul.mubr.bf16.gmra.mrb[0].mxu0 %v9065
        %v9125 = vpop.f32.mrb[0].mxu0
        %v9126 = vadd.f32 0.0, %v9125
        %v9127 = vpop.f32.mrb[0].mxu0
        %v9128 = vpop.f32.mrb[0].mxu0
        %v9129 = vadd.f32 0.0, %v9128
        %v9130 = vpop.f32.mrb[0].mxu0
        %9131 = vdwg.mxu0
        %v9132 = vadd.f32 %v8962, %v9102
        %v9133 = vadd.f32 %v8963, %v9105
        %v9134 = vadd.f32 %v8964, %v9110
        %v9135 = vadd.f32 %v8965, %v9113
        %v9136 = vadd.f32 %v8966, %v9118
        %v9137 = vadd.f32 %v8967, %v9121
        %v9138 = vadd.f32 %v8968, %v9126
        %v9139 = vadd.f32 %v8969, %v9129
        %v9140 = vld [vmem:[%s3275 + $0x4] sm:$0x3]
        %v9141 = vld [vmem:[%s3275 + $0xc] sm:$0x3]
        %v9142 = vld [vmem:[%s3275 + $0x14] sm:$0x3]
        %v9143 = vld [vmem:[%s3275 + $0x1c] sm:$0x3]
        %v9144 = vld [vmem:[%s3275 + $0x24] sm:$0x3]
        %v9145 = vld [vmem:[%s3275 + $0x2c] sm:$0x3]
        %v9146 = vld [vmem:[%s3275 + $0x34] sm:$0x3]
        %v9147 = vld [vmem:[%s3275 + $0x3c] sm:$0x3]
        %v9149 = vshrl.u32 %v8970, 16
        %v9151 = vrot.slane %v9149, 5
        %v9152 = vshll.u32 %v8970, 16
        %v9154 = vrot.slane %v9152, 6
        %v9155 = vor.u32 %v9151, %v9154
        %v9156 = vrot.slane %v9155, 4
        %v9158 = vshrl.u32 %v9140, 16
        %v9160 = vrot.slane %v9158, 5
        %v9161 = vshll.u32 %v9140, 16
        %v9163 = vrot.slane %v9161, 6
        %v9164 = vor.u32 %v9160, %v9163
        %v9165 = vsel %vm5229, %v9156, %v9164
        %v9167 = vshrl.u32 %v8971, 16
        %v9169 = vrot.slane %v9167, 5
        %v9170 = vshll.u32 %v8971, 16
        %v9172 = vrot.slane %v9170, 6
        %v9173 = vor.u32 %v9169, %v9172
        %v9174 = vrot.slane %v9173, 4
        %v9176 = vshrl.u32 %v9141, 16
        %v9178 = vrot.slane %v9176, 5
        %v9179 = vshll.u32 %v9141, 16
        %v9181 = vrot.slane %v9179, 6
        %v9182 = vor.u32 %v9178, %v9181
        %v9183 = vsel %vm5229, %v9174, %v9182
        %v9185 = vshrl.u32 %v8972, 16
        %v9187 = vrot.slane %v9185, 5
        %v9188 = vshll.u32 %v8972, 16
        %v9190 = vrot.slane %v9188, 6
        %v9191 = vor.u32 %v9187, %v9190
        %v9192 = vrot.slane %v9191, 4
        %v9194 = vshrl.u32 %v9142, 16
        %v9196 = vrot.slane %v9194, 5
        %v9197 = vshll.u32 %v9142, 16
        %v9199 = vrot.slane %v9197, 6
        %v9200 = vor.u32 %v9196, %v9199
        %v9201 = vsel %vm5229, %v9192, %v9200
        %v9203 = vshrl.u32 %v8973, 16
        %v9205 = vrot.slane %v9203, 5
        %v9206 = vshll.u32 %v8973, 16
        %v9208 = vrot.slane %v9206, 6
        %v9209 = vor.u32 %v9205, %v9208
        %v9210 = vrot.slane %v9209, 4
        %v9212 = vshrl.u32 %v9143, 16
        %v9214 = vrot.slane %v9212, 5
        %v9215 = vshll.u32 %v9143, 16
        %v9217 = vrot.slane %v9215, 6
        %v9218 = vor.u32 %v9214, %v9217
        %v9219 = vsel %vm5229, %v9210, %v9218
        %v9221 = vshrl.u32 %v8974, 16
        %v9223 = vrot.slane %v9221, 5
        %v9224 = vshll.u32 %v8974, 16
        %v9226 = vrot.slane %v9224, 6
        %v9227 = vor.u32 %v9223, %v9226
        %v9228 = vrot.slane %v9227, 4
        %v9230 = vshrl.u32 %v9144, 16
        %v9232 = vrot.slane %v9230, 5
        %v9233 = vshll.u32 %v9144, 16
        %v9235 = vrot.slane %v9233, 6
        %v9236 = vor.u32 %v9232, %v9235
        %v9237 = vsel %vm5229, %v9228, %v9236
        %v9239 = vshrl.u32 %v8975, 16
        %v9241 = vrot.slane %v9239, 5
        %v9242 = vshll.u32 %v8975, 16
        %v9244 = vrot.slane %v9242, 6
        %v9245 = vor.u32 %v9241, %v9244
        %v9246 = vrot.slane %v9245, 4
        %v9248 = vshrl.u32 %v9145, 16
        %v9250 = vrot.slane %v9248, 5
        %v9251 = vshll.u32 %v9145, 16
        %v9253 = vrot.slane %v9251, 6
        %v9254 = vor.u32 %v9250, %v9253
        %v9255 = vsel %vm5229, %v9246, %v9254
        %v9257 = vshrl.u32 %v8976, 16
        %v9259 = vrot.slane %v9257, 5
        %v9260 = vshll.u32 %v8976, 16
        %v9262 = vrot.slane %v9260, 6
        %v9263 = vor.u32 %v9259, %v9262
        %v9264 = vrot.slane %v9263, 4
        %v9266 = vshrl.u32 %v9146, 16
        %v9268 = vrot.slane %v9266, 5
        %v9269 = vshll.u32 %v9146, 16
        %v9271 = vrot.slane %v9269, 6
        %v9272 = vor.u32 %v9268, %v9271
        %v9273 = vsel %vm5229, %v9264, %v9272
        %v9275 = vshrl.u32 %v8977, 16
        %v9277 = vrot.slane %v9275, 5
        %v9278 = vshll.u32 %v8977, 16
        %v9280 = vrot.slane %v9278, 6
        %v9281 = vor.u32 %v9277, %v9280
        %v9282 = vrot.slane %v9281, 4
        %v9284 = vshrl.u32 %v9147, 16
        %v9286 = vrot.slane %v9284, 5
        %v9287 = vshll.u32 %v9147, 16
        %v9289 = vrot.slane %v9287, 6
        %v9290 = vor.u32 %v9286, %v9289
        %v9291 = vsel %vm5229, %v9282, %v9290
        %s9292 = scalar_lea.vmem %s3, 368
        %v9293 = vld [vmem:[%s9292] sm:$0xf]
        %v9294 = vld [vmem:[%s9292 + $0x4] sm:$0xf]
        %v9295 = vld [vmem:[%s9292 + $0x8] sm:$0xf]
        %v9296 = vld [vmem:[%s9292 + $0xc] sm:$0xf]
        %v9297 = vunpack.c.l.b16 %v9165
        %v9298 = vunpack.c.l.b16 %v9183
        %v9299 = vunpack.c.l.b16 %v9201
        %v9300 = vunpack.c.l.b16 %v9219
        %v9301 = vunpack.c.l.b16 %v9237
        %v9302 = vunpack.c.l.b16 %v9255
        %v9303 = vunpack.c.l.b16 %v9273
        %v9304 = vunpack.c.l.b16 %v9291
        %v9305 = vpack.c.b16 %v9298, %v9297
        %v9306 = vpack.c.b16 %v9300, %v9299
        %v9307 = vpack.c.b16 %v9302, %v9301
        %v9308 = vpack.c.b16 %v9304, %v9303
        %v9313 = vunpack.c.l.b16 %v9293
        %v9314 = vunpack.c.l.b16 %v9294
        %v9315 = vunpack.c.l.b16 %v9295
        %v9316 = vunpack.c.l.b16 %v9296
        %v9317 = vpack.c.b16 %v9314, %v9313
        %v9318 = vpack.c.b16 %v9316, %v9315
        %v9322 = vsel %vm4859, %v9305, 0
        %v9325 = vsel %vm4859, %v9306, 0
        %v9328 = vsel %vm4859, %v9307, 0
        %v9331 = vsel %vm4859, %v9308, 0
        %9333 = vmatprep.subr.bf16.mxu0 0
        %9334 = vmatpush1.bf16.msra.mxu0 %v9317
        %9335 = vmatprep.subr.bf16.mxu0 0
        %9336 = vmatpush1.bf16.msra.mxu0 %v9318
        %9337 = vmatprep.subr.bf16.mxu0 0
        %9338 = vmatpush1.bf16.msra.mxu0 0
        %9339 = vmatprep.subr.bf16.mxu0 0
        %9340 = vmatpush1.bf16.msra.mxu0 0
        %9341 = vmatprep.subr.bf16.mxu0 0
        %9342 = vmatpush1.bf16.msra.mxu0 0
        %9343 = vmatprep.subr.bf16.mxu0 0
        %9344 = vmatpush1.bf16.msra.mxu0 0
        %9345 = vmatprep.subr.bf16.mxu0 0
        %9346 = vmatpush1.bf16.msra.mxu0 0
        %9347 = vmatprep.subr.bf16.mxu0 0
        %9348 = vmatpush1.bf16.msra.mxu0 0
        %9349 = vmatprep.subr.bf16.mxu0 0
        %9350 = vmatpush1.bf16.msra.mxu0 0
        %9351 = vmatprep.subr.bf16.mxu0 0
        %9352 = vmatpush1.bf16.msra.mxu0 0
        %9353 = vmatprep.subr.bf16.mxu0 0
        %9354 = vmatpush1.bf16.msra.mxu0 0
        %9355 = vmatprep.subr.bf16.mxu0 0
        %9356 = vmatpush1.bf16.msra.mxu0 0
        %9357 = vmatprep.subr.bf16.mxu0 0
        %9358 = vmatpush1.bf16.msra.mxu0 0
        %9359 = vmatprep.subr.bf16.mxu0 0
        %9360 = vmatpush1.bf16.msra.mxu0 0
        %9361 = vmatprep.subr.bf16.mxu0 0
        %9362 = vmatpush1.bf16.msra.mxu0 0
        %9363 = vmatprep.subr.bf16.mxu0 0
        %9364 = vmatpush1.bf16.msra.mxu0 0
        %9365 = vmatprep.mubr.bf16.mxu0 0
        %9366 = vmatmul.mubr.bf16.gmra.mrb[0].mxu0 %v9322
        %v9367 = vpop.f32.mrb[0].mxu0
        %v9368 = vadd.f32 0.0, %v9367
        %v9369 = vpop.f32.mrb[0].mxu0
        %v9370 = vpop.f32.mrb[0].mxu0
        %v9371 = vadd.f32 0.0, %v9370
        %v9372 = vpop.f32.mrb[0].mxu0
        %9373 = vmatprep.mubr.bf16.mxu0 0
        %9374 = vmatmul.mubr.bf16.gmra.mrb[0].mxu0 %v9325
        %v9375 = vpop.f32.mrb[0].mxu0
        %v9376 = vadd.f32 0.0, %v9375
        %v9377 = vpop.f32.mrb[0].mxu0
        %v9378 = vpop.f32.mrb[0].mxu0
        %v9379 = vadd.f32 0.0, %v9378
        %v9380 = vpop.f32.mrb[0].mxu0
        %9381 = vmatprep.mubr.bf16.mxu0 0
        %9382 = vmatmul.mubr.bf16.gmra.mrb[0].mxu0 %v9328
        %v9383 = vpop.f32.mrb[0].mxu0
        %v9384 = vadd.f32 0.0, %v9383
        %v9385 = vpop.f32.mrb[0].mxu0
        %v9386 = vpop.f32.mrb[0].mxu0
        %v9387 = vadd.f32 0.0, %v9386
        %v9388 = vpop.f32.mrb[0].mxu0
        %9389 = vmatprep.mubr.bf16.mxu0 0
        %9390 = vmatmul.mubr.bf16.gmra.mrb[0].mxu0 %v9331
        %v9391 = vpop.f32.mrb[0].mxu0
        %v9392 = vadd.f32 0.0, %v9391
        %v9393 = vpop.f32.mrb[0].mxu0
        %v9394 = vpop.f32.mrb[0].mxu0
        %v9395 = vadd.f32 0.0, %v9394
        %v9396 = vpop.f32.mrb[0].mxu0
        %9397 = vdwg.mxu0
        %v9398 = vadd.f32 %v9132, %v9368
        %v9399 = vadd.f32 %v9133, %v9371
        %v9400 = vadd.f32 %v9134, %v9376
        %v9401 = vadd.f32 %v9135, %v9379
        %v9402 = vadd.f32 %v9136, %v9384
        %v9403 = vadd.f32 %v9137, %v9387
        %v9404 = vadd.f32 %v9138, %v9392
        %v9405 = vadd.f32 %v9139, %v9395
        %v9406 = vld [vmem:[%s3275] sm:$0xc]
        %v9407 = vld [vmem:[%s3275 + $0x8] sm:$0xc]
        %v9408 = vld [vmem:[%s3275 + $0x10] sm:$0xc]
        %v9409 = vld [vmem:[%s3275 + $0x18] sm:$0xc]
        %v9410 = vld [vmem:[%s3275 + $0x20] sm:$0xc]
        %v9411 = vld [vmem:[%s3275 + $0x28] sm:$0xc]
        %v9412 = vld [vmem:[%s3275 + $0x30] sm:$0xc]
        %v9413 = vld [vmem:[%s3275 + $0x38] sm:$0xc]
        %v9430 = vrot.slane %v9406, 6
        %v9431 = vrot.slane %v9430, 4
        %v9432 = vrot.slane %v9140, 6
        %v9433 = vsel %vm5514, %v9431, %v9432
        %v9434 = vrot.slane %v9407, 6
        %v9435 = vrot.slane %v9434, 4
        %v9436 = vrot.slane %v9141, 6
        %v9437 = vsel %vm5514, %v9435, %v9436
        %v9438 = vrot.slane %v9408, 6
        %v9439 = vrot.slane %v9438, 4
        %v9440 = vrot.slane %v9142, 6
        %v9441 = vsel %vm5514, %v9439, %v9440
        %v9442 = vrot.slane %v9409, 6
        %v9443 = vrot.slane %v9442, 4
        %v9444 = vrot.slane %v9143, 6
        %v9445 = vsel %vm5514, %v9443, %v9444
        %v9446 = vrot.slane %v9410, 6
        %v9447 = vrot.slane %v9446, 4
        %v9448 = vrot.slane %v9144, 6
        %v9449 = vsel %vm5514, %v9447, %v9448
        %v9450 = vrot.slane %v9411, 6
        %v9451 = vrot.slane %v9450, 4
        %v9452 = vrot.slane %v9145, 6
        %v9453 = vsel %vm5514, %v9451, %v9452
        %v9454 = vrot.slane %v9412, 6
        %v9455 = vrot.slane %v9454, 4
        %v9456 = vrot.slane %v9146, 6
        %v9457 = vsel %vm5514, %v9455, %v9456
        %v9458 = vrot.slane %v9413, 6
        %v9459 = vrot.slane %v9458, 4
        %v9460 = vrot.slane %v9147, 6
        %v9461 = vsel %vm5514, %v9459, %v9460
        %s9462 = scalar_lea.vmem %s3, 384
        %v9463 = vld [vmem:[%s9462] sm:$0xf]
        %v9464 = vld [vmem:[%s9462 + $0x4] sm:$0xf]
        %v9465 = vld [vmem:[%s9462 + $0x8] sm:$0xf]
        %v9466 = vld [vmem:[%s9462 + $0xc] sm:$0xf]
        %v9467 = vunpack.c.l.b16 %v9433
        %v9468 = vunpack.c.l.b16 %v9437
        %v9469 = vunpack.c.l.b16 %v9441
        %v9470 = vunpack.c.l.b16 %v9445
        %v9471 = vunpack.c.l.b16 %v9449
        %v9472 = vunpack.c.l.b16 %v9453
        %v9473 = vunpack.c.l.b16 %v9457
        %v9474 = vunpack.c.l.b16 %v9461
        %v9475 = vpack.c.b16 %v9468, %v9467
        %v9476 = vpack.c.b16 %v9470, %v9469
        %v9477 = vpack.c.b16 %v9472, %v9471
        %v9478 = vpack.c.b16 %v9474, %v9473
        %v9483 = vunpack.c.l.b16 %v9463
        %v9484 = vunpack.c.l.b16 %v9464
        %v9485 = vunpack.c.l.b16 %v9465
        %v9486 = vunpack.c.l.b16 %v9466
        %v9487 = vpack.c.b16 %v9484, %v9483
        %v9488 = vpack.c.b16 %v9486, %v9485
        %v9492 = vsel %vm4859, %v9475, 0
        %v9495 = vsel %vm4859, %v9476, 0
        %v9498 = vsel %vm4859, %v9477, 0
        %v9501 = vsel %vm4859, %v9478, 0
        %9503 = vmatprep.subr.bf16.mxu0 0
        %9504 = vmatpush1.bf16.msra.mxu0 %v9487
        %9505 = vmatprep.subr.bf16.mxu0 0
        %9506 = vmatpush1.bf16.msra.mxu0 %v9488
        %9507 = vmatprep.subr.bf16.mxu0 0
        %9508 = vmatpush1.bf16.msra.mxu0 0
        %9509 = vmatprep.subr.bf16.mxu0 0
        %9510 = vmatpush1.bf16.msra.mxu0 0
        %9511 = vmatprep.subr.bf16.mxu0 0
        %9512 = vmatpush1.bf16.msra.mxu0 0
        %9513 = vmatprep.subr.bf16.mxu0 0
        %9514 = vmatpush1.bf16.msra.mxu0 0
        %9515 = vmatprep.subr.bf16.mxu0 0
        %9516 = vmatpush1.bf16.msra.mxu0 0
        %9517 = vmatprep.subr.bf16.mxu0 0
        %9518 = vmatpush1.bf16.msra.mxu0 0
        %9519 = vmatprep.subr.bf16.mxu0 0
        %9520 = vmatpush1.bf16.msra.mxu0 0
        %9521 = vmatprep.subr.bf16.mxu0 0
        %9522 = vmatpush1.bf16.msra.mxu0 0
        %9523 = vmatprep.subr.bf16.mxu0 0
        %9524 = vmatpush1.bf16.msra.mxu0 0
        %9525 = vmatprep.subr.bf16.mxu0 0
        %9526 = vmatpush1.bf16.msra.mxu0 0
        %9527 = vmatprep.subr.bf16.mxu0 0
        %9528 = vmatpush1.bf16.msra.mxu0 0
        %9529 = vmatprep.subr.bf16.mxu0 0
        %9530 = vmatpush1.bf16.msra.mxu0 0
        %9531 = vmatprep.subr.bf16.mxu0 0
        %9532 = vmatpush1.bf16.msra.mxu0 0
        %9533 = vmatprep.subr.bf16.mxu0 0
        %9534 = vmatpush1.bf16.msra.mxu0 0
        %9535 = vmatprep.mubr.bf16.mxu0 0
        %9536 = vmatmul.mubr.bf16.gmra.mrb[0].mxu0 %v9492
        %v9537 = vpop.f32.mrb[0].mxu0
        %v9538 = vadd.f32 0.0, %v9537
        %v9539 = vpop.f32.mrb[0].mxu0
        %v9540 = vpop.f32.mrb[0].mxu0
        %v9541 = vadd.f32 0.0, %v9540
        %v9542 = vpop.f32.mrb[0].mxu0
        %9543 = vmatprep.mubr.bf16.mxu0 0
        %9544 = vmatmul.mubr.bf16.gmra.mrb[0].mxu0 %v9495
        %v9545 = vpop.f32.mrb[0].mxu0
        %v9546 = vadd.f32 0.0, %v9545
        %v9547 = vpop.f32.mrb[0].mxu0
        %v9548 = vpop.f32.mrb[0].mxu0
        %v9549 = vadd.f32 0.0, %v9548
        %v9550 = vpop.f32.mrb[0].mxu0
        %9551 = vmatprep.mubr.bf16.mxu0 0
        %9552 = vmatmul.mubr.bf16.gmra.mrb[0].mxu0 %v9498
        %v9553 = vpop.f32.mrb[0].mxu0
        %v9554 = vadd.f32 0.0, %v9553
        %v9555 = vpop.f32.mrb[0].mxu0
        %v9556 = vpop.f32.mrb[0].mxu0
        %v9557 = vadd.f32 0.0, %v9556
        %v9558 = vpop.f32.mrb[0].mxu0
        %9559 = vmatprep.mubr.bf16.mxu0 0
        %9560 = vmatmul.mubr.bf16.gmra.mrb[0].mxu0 %v9501
        %v9561 = vpop.f32.mrb[0].mxu0
        %v9562 = vadd.f32 0.0, %v9561
        %v9563 = vpop.f32.mrb[0].mxu0
        %v9564 = vpop.f32.mrb[0].mxu0
        %v9565 = vadd.f32 0.0, %v9564
        %v9566 = vpop.f32.mrb[0].mxu0
        %9567 = vdwg.mxu0
        %v9568 = vadd.f32 %v9398, %v9538
        %v9569 = vadd.f32 %v9399, %v9541
        %v9570 = vadd.f32 %v9400, %v9546
        %v9571 = vadd.f32 %v9401, %v9549
        %v9572 = vadd.f32 %v9402, %v9554
        %v9573 = vadd.f32 %v9403, %v9557
        %v9574 = vadd.f32 %v9404, %v9562
        %v9575 = vadd.f32 %v9405, %v9565
        %v9577 = vlaneseq
        %v9578 = vshrl.u32 %v9577, 7
        %v9579 = vsub.s32 0, %v9578
        %v9580 = vrot.slane %v4694, %v9579
        %v9582 = vadd.f32 %v9568, %v9580
        %v9583 = vadd.f32 %v9569, %v9580
        %v9584 = vadd.f32 %v9570, %v9580
        %v9585 = vadd.f32 %v9571, %v9580
        %v9586 = vadd.f32 %v9572, %v9580
        %v9587 = vadd.f32 %v9573, %v9580
        %v9588 = vadd.f32 %v9574, %v9580
        %v9589 = vadd.f32 %v9575, %v9580
        %v9590 = vmax.f32 %v9582, 0.0
        %v9591 = vmax.f32 %v9583, 0.0
        %v9592 = vmax.f32 %v9584, 0.0
        %v9593 = vmax.f32 %v9585, 0.0
        %v9594 = vmax.f32 %v9586, 0.0
        %v9595 = vmax.f32 %v9587, 0.0
        %v9596 = vmax.f32 %v9588, 0.0
        %v9597 = vmax.f32 %v9589, 0.0
        %v9606 = vcombine.high %v9590, %v9590
        %v9608 = vunpack.c.l.s4 1983009808
        %v9609 = vunpack.c.0.s8 %v9608
        %v9610 = vlaneseq
        %v9611 = vshrl.u32 %v9610, 7
        %v9612 = vsub.s32 %v9609, %v9611
        %v9613 = vrot.slane %v9590, %v9612
        %v9615 = vunpack.c.l.s4 1983009808
        %v9616 = vunpack.c.0.s8 %v9615
        %v9617 = vlaneseq
        %v9618 = vshrl.u32 %v9617, 7
        %v9619 = vsub.s32 %v9616, %v9618
        %v9620 = vrot.slane %v9606, %v9619
        %v9621 = vcombine.high %v9613, %v9613
        %v9622 = vcombine.high %v9620, %v9620
        %v9623 = vcombine.high %v9591, %v9591
        %v9625 = vunpack.c.l.s4 1983009808
        %v9626 = vunpack.c.0.s8 %v9625
        %v9627 = vlaneseq
        %v9628 = vshrl.u32 %v9627, 7
        %v9629 = vsub.s32 %v9626, %v9628
        %v9630 = vrot.slane %v9591, %v9629
        %v9632 = vunpack.c.l.s4 1983009808
        %v9633 = vunpack.c.0.s8 %v9632
        %v9634 = vlaneseq
        %v9635 = vshrl.u32 %v9634, 7
        %v9636 = vsub.s32 %v9633, %v9635
        %v9637 = vrot.slane %v9623, %v9636
        %v9638 = vcombine.high %v9630, %v9630
        %v9639 = vcombine.high %v9637, %v9637
        %v9640 = vcombine.high %v9592, %v9592
        %v9642 = vunpack.c.l.s4 1983009808
        %v9643 = vunpack.c.0.s8 %v9642
        %v9644 = vlaneseq
        %v9645 = vshrl.u32 %v9644, 7
        %v9646 = vsub.s32 %v9643, %v9645
        %v9647 = vrot.slane %v9592, %v9646
        %v9649 = vunpack.c.l.s4 1983009808
        %v9650 = vunpack.c.0.s8 %v9649
        %v9651 = vlaneseq
        %v9652 = vshrl.u32 %v9651, 7
        %v9653 = vsub.s32 %v9650, %v9652
        %v9654 = vrot.slane %v9640, %v9653
        %v9655 = vcombine.high %v9647, %v9647
        %v9656 = vcombine.high %v9654, %v9654
        %v9657 = vcombine.high %v9593, %v9593
        %v9659 = vunpack.c.l.s4 1983009808
        %v9660 = vunpack.c.0.s8 %v9659
        %v9661 = vlaneseq
        %v9662 = vshrl.u32 %v9661, 7
        %v9663 = vsub.s32 %v9660, %v9662
        %v9664 = vrot.slane %v9593, %v9663
        %v9666 = vunpack.c.l.s4 1983009808
        %v9667 = vunpack.c.0.s8 %v9666
        %v9668 = vlaneseq
        %v9669 = vshrl.u32 %v9668, 7
        %v9670 = vsub.s32 %v9667, %v9669
        %v9671 = vrot.slane %v9657, %v9670
        %v9672 = vcombine.high %v9664, %v9664
        %v9673 = vcombine.high %v9671, %v9671
        %v9674 = vcombine.high %v9594, %v9594
        %v9676 = vunpack.c.l.s4 1983009808
        %v9677 = vunpack.c.0.s8 %v9676
        %v9678 = vlaneseq
        %v9679 = vshrl.u32 %v9678, 7
        %v9680 = vsub.s32 %v9677, %v9679
        %v9681 = vrot.slane %v9594, %v9680
        %v9683 = vunpack.c.l.s4 1983009808
        %v9684 = vunpack.c.0.s8 %v9683
        %v9685 = vlaneseq
        %v9686 = vshrl.u32 %v9685, 7
        %v9687 = vsub.s32 %v9684, %v9686
        %v9688 = vrot.slane %v9674, %v9687
        %v9689 = vcombine.high %v9681, %v9681
        %v9690 = vcombine.high %v9688, %v9688
        %v9691 = vcombine.high %v9595, %v9595
        %v9693 = vunpack.c.l.s4 1983009808
        %v9694 = vunpack.c.0.s8 %v9693
        %v9695 = vlaneseq
        %v9696 = vshrl.u32 %v9695, 7
        %v9697 = vsub.s32 %v9694, %v9696
        %v9698 = vrot.slane %v9595, %v9697
        %v9700 = vunpack.c.l.s4 1983009808
        %v9701 = vunpack.c.0.s8 %v9700
        %v9702 = vlaneseq
        %v9703 = vshrl.u32 %v9702, 7
        %v9704 = vsub.s32 %v9701, %v9703
        %v9705 = vrot.slane %v9691, %v9704
        %v9706 = vcombine.high %v9698, %v9698
        %v9707 = vcombine.high %v9705, %v9705
        %v9708 = vcombine.high %v9596, %v9596
        %v9710 = vunpack.c.l.s4 1983009808
        %v9711 = vunpack.c.0.s8 %v9710
        %v9712 = vlaneseq
        %v9713 = vshrl.u32 %v9712, 7
        %v9714 = vsub.s32 %v9711, %v9713
        %v9715 = vrot.slane %v9596, %v9714
        %v9717 = vunpack.c.l.s4 1983009808
        %v9718 = vunpack.c.0.s8 %v9717
        %v9719 = vlaneseq
        %v9720 = vshrl.u32 %v9719, 7
        %v9721 = vsub.s32 %v9718, %v9720
        %v9722 = vrot.slane %v9708, %v9721
        %v9723 = vcombine.high %v9715, %v9715
        %v9724 = vcombine.high %v9722, %v9722
        %v9725 = vcombine.high %v9597, %v9597
        %v9727 = vunpack.c.l.s4 1983009808
        %v9728 = vunpack.c.0.s8 %v9727
        %v9729 = vlaneseq
        %v9730 = vshrl.u32 %v9729, 7
        %v9731 = vsub.s32 %v9728, %v9730
        %v9732 = vrot.slane %v9597, %v9731
        %v9734 = vunpack.c.l.s4 1983009808
        %v9735 = vunpack.c.0.s8 %v9734
        %v9736 = vlaneseq
        %v9737 = vshrl.u32 %v9736, 7
        %v9738 = vsub.s32 %v9735, %v9737
        %v9739 = vrot.slane %v9725, %v9738
        %v9740 = vcombine.high %v9732, %v9732
        %v9741 = vcombine.high %v9739, %v9739
        %v9774 = vmax.f32 %v9613, %v9630
        %v9775 = vmax.f32 %v9621, %v9638
        %v9776 = vmax.f32 %v9620, %v9637
        %v9777 = vmax.f32 %v9622, %v9639
        %v9778 = vmax.f32 %v9647, %v9664
        %v9779 = vmax.f32 %v9655, %v9672
        %v9780 = vmax.f32 %v9654, %v9671
        %v9781 = vmax.f32 %v9656, %v9673
        %v9782 = vmax.f32 %v9681, %v9698
        %v9783 = vmax.f32 %v9689, %v9706
        %v9784 = vmax.f32 %v9688, %v9705
        %v9785 = vmax.f32 %v9690, %v9707
        %v9786 = vmax.f32 %v9715, %v9732
        %v9787 = vmax.f32 %v9723, %v9740
        %v9788 = vmax.f32 %v9722, %v9739
        %v9789 = vmax.f32 %v9724, %v9741
        %v9806 = vrot.slane %v9774, 7
        %v9807 = vrot.slane %v9806, 2
        %v9808 = vrot.slane %v9775, 7
        %v9809 = vrot.slane %v9808, 2
        %v9810 = vrot.slane %v9776, 7
        %v9811 = vrot.slane %v9810, 2
        %v9812 = vrot.slane %v9777, 7
        %v9813 = vrot.slane %v9812, 2
        %v9814 = vrot.slane %v9778, 7
        %v9815 = vrot.slane %v9814, 2
        %v9816 = vrot.slane %v9779, 7
        %v9817 = vrot.slane %v9816, 2
        %v9818 = vrot.slane %v9780, 7
        %v9819 = vrot.slane %v9818, 2
        %v9820 = vrot.slane %v9781, 7
        %v9821 = vrot.slane %v9820, 2
        %v9822 = vrot.slane %v9782, 7
        %v9823 = vrot.slane %v9822, 2
        %v9824 = vrot.slane %v9783, 7
        %v9825 = vrot.slane %v9824, 2
        %v9826 = vrot.slane %v9784, 7
        %v9827 = vrot.slane %v9826, 2
        %v9828 = vrot.slane %v9785, 7
        %v9829 = vrot.slane %v9828, 2
        %v9830 = vrot.slane %v9786, 7
        %v9831 = vrot.slane %v9830, 2
        %v9832 = vrot.slane %v9787, 7
        %v9833 = vrot.slane %v9832, 2
        %v9834 = vrot.slane %v9788, 7
        %v9835 = vrot.slane %v9834, 2
        %v9836 = vrot.slane %v9789, 7
        %v9837 = vrot.slane %v9836, 2
        %v9854 = vmax.f32 %v9774, %v9807
        %v9855 = vmax.f32 %v9775, %v9809
        %v9856 = vmax.f32 %v9776, %v9811
        %v9857 = vmax.f32 %v9777, %v9813
        %v9858 = vmax.f32 %v9778, %v9815
        %v9859 = vmax.f32 %v9779, %v9817
        %v9860 = vmax.f32 %v9780, %v9819
        %v9861 = vmax.f32 %v9781, %v9821
        %v9862 = vmax.f32 %v9782, %v9823
        %v9863 = vmax.f32 %v9783, %v9825
        %v9864 = vmax.f32 %v9784, %v9827
        %v9865 = vmax.f32 %v9785, %v9829
        %v9866 = vmax.f32 %v9786, %v9831
        %v9867 = vmax.f32 %v9787, %v9833
        %v9868 = vmax.f32 %v9788, %v9835
        %v9869 = vmax.f32 %v9789, %v9837
        %v9870 = vpack.c.bf16 %v9854, %v9854
        %v9871 = vpack.c.bf16 %v9855, %v9855
        %v9872 = vpack.c.bf16 %v9856, %v9856
        %v9873 = vpack.c.bf16 %v9857, %v9857
        %v9874 = vpack.c.bf16 %v9858, %v9858
        %v9875 = vpack.c.bf16 %v9859, %v9859
        %v9876 = vpack.c.bf16 %v9860, %v9860
        %v9877 = vpack.c.bf16 %v9861, %v9861
        %v9878 = vpack.c.bf16 %v9862, %v9862
        %v9879 = vpack.c.bf16 %v9863, %v9863
        %v9880 = vpack.c.bf16 %v9864, %v9864
        %v9881 = vpack.c.bf16 %v9865, %v9865
        %v9882 = vpack.c.bf16 %v9866, %v9866
        %v9883 = vpack.c.bf16 %v9867, %v9867
        %v9884 = vpack.c.bf16 %v9868, %v9868
        %v9885 = vpack.c.bf16 %v9869, %v9869
        %v9903 = vunpack.c.l.s4 1983009808
        %v9904 = vunpack.c.0.s8 %v9903
        %v9905 = vlaneseq
        %v9906 = vshrl.u32 %v9905, 7
        %v9907 = vsub.s32 %v9904, %v9906
        %v9908 = vrot.slane %v9870, %v9907
        %v9910 = vunpack.c.l.s4 1983009808
        %v9911 = vunpack.c.0.s8 %v9910
        %v9912 = vlaneseq
        %v9913 = vshrl.u32 %v9912, 7
        %v9914 = vsub.s32 %v9911, %v9913
        %v9915 = vrot.slane %v9871, %v9914
        %v9917 = vunpack.c.l.s4 1983009808
        %v9918 = vunpack.c.0.s8 %v9917
        %v9919 = vlaneseq
        %v9920 = vshrl.u32 %v9919, 7
        %v9921 = vsub.s32 %v9918, %v9920
        %v9922 = vrot.slane %v9872, %v9921
        %v9924 = vunpack.c.l.s4 1983009808
        %v9925 = vunpack.c.0.s8 %v9924
        %v9926 = vlaneseq
        %v9927 = vshrl.u32 %v9926, 7
        %v9928 = vsub.s32 %v9925, %v9927
        %v9929 = vrot.slane %v9873, %v9928
        %v9931 = vunpack.c.l.s4 1983009808
        %v9932 = vunpack.c.0.s8 %v9931
        %v9933 = vlaneseq
        %v9934 = vshrl.u32 %v9933, 7
        %v9935 = vsub.s32 %v9932, %v9934
        %v9936 = vrot.slane %v9874, %v9935
        %v9938 = vunpack.c.l.s4 1983009808
        %v9939 = vunpack.c.0.s8 %v9938
        %v9940 = vlaneseq
        %v9941 = vshrl.u32 %v9940, 7
        %v9942 = vsub.s32 %v9939, %v9941
        %v9943 = vrot.slane %v9875, %v9942
        %v9945 = vunpack.c.l.s4 1983009808
        %v9946 = vunpack.c.0.s8 %v9945
        %v9947 = vlaneseq
        %v9948 = vshrl.u32 %v9947, 7
        %v9949 = vsub.s32 %v9946, %v9948
        %v9950 = vrot.slane %v9876, %v9949
        %v9952 = vunpack.c.l.s4 1983009808
        %v9953 = vunpack.c.0.s8 %v9952
        %v9954 = vlaneseq
        %v9955 = vshrl.u32 %v9954, 7
        %v9956 = vsub.s32 %v9953, %v9955
        %v9957 = vrot.slane %v9877, %v9956
        %v9959 = vunpack.c.l.s4 1983009808
        %v9960 = vunpack.c.0.s8 %v9959
        %v9961 = vlaneseq
        %v9962 = vshrl.u32 %v9961, 7
        %v9963 = vsub.s32 %v9960, %v9962
        %v9964 = vrot.slane %v9878, %v9963
        %v9966 = vunpack.c.l.s4 1983009808
        %v9967 = vunpack.c.0.s8 %v9966
        %v9968 = vlaneseq
        %v9969 = vshrl.u32 %v9968, 7
        %v9970 = vsub.s32 %v9967, %v9969
        %v9971 = vrot.slane %v9879, %v9970
        %v9973 = vunpack.c.l.s4 1983009808
        %v9974 = vunpack.c.0.s8 %v9973
        %v9975 = vlaneseq
        %v9976 = vshrl.u32 %v9975, 7
        %v9977 = vsub.s32 %v9974, %v9976
        %v9978 = vrot.slane %v9880, %v9977
        %v9980 = vunpack.c.l.s4 1983009808
        %v9981 = vunpack.c.0.s8 %v9980
        %v9982 = vlaneseq
        %v9983 = vshrl.u32 %v9982, 7
        %v9984 = vsub.s32 %v9981, %v9983
        %v9985 = vrot.slane %v9881, %v9984
        %v9987 = vunpack.c.l.s4 1983009808
        %v9988 = vunpack.c.0.s8 %v9987
        %v9989 = vlaneseq
        %v9990 = vshrl.u32 %v9989, 7
        %v9991 = vsub.s32 %v9988, %v9990
        %v9992 = vrot.slane %v9882, %v9991
        %v9994 = vunpack.c.l.s4 1983009808
        %v9995 = vunpack.c.0.s8 %v9994
        %v9996 = vlaneseq
        %v9997 = vshrl.u32 %v9996, 7
        %v9998 = vsub.s32 %v9995, %v9997
        %v9999 = vrot.slane %v9883, %v9998
        %v10001 = vunpack.c.l.s4 1983009808
        %v10002 = vunpack.c.0.s8 %v10001
        %v10003 = vlaneseq
        %v10004 = vshrl.u32 %v10003, 7
        %v10005 = vsub.s32 %v10002, %v10004
        %v10006 = vrot.slane %v9884, %v10005
        %v10008 = vunpack.c.l.s4 1983009808
        %v10009 = vunpack.c.0.s8 %v10008
        %v10010 = vlaneseq
        %v10011 = vshrl.u32 %v10010, 7
        %v10012 = vsub.s32 %v10009, %v10011
        %v10013 = vrot.slane %v9885, %v10012
        %v10015 = vunpack.c.l.s4 1983009808
        %v10016 = vunpack.c.0.s8 %v10015
        %v10017 = vlaneseq
        %v10018 = vshrl.u32 %v10017, 7
        %v10019 = vsub.s32 %v10016, %v10018
        %v10020 = vrot.slane %v9908, %v10019
        %v10022 = vunpack.c.l.s4 1983009808
        %v10023 = vunpack.c.0.s8 %v10022
        %v10024 = vlaneseq
        %v10025 = vshrl.u32 %v10024, 7
        %v10026 = vsub.s32 %v10023, %v10025
        %v10027 = vrot.slane %v9915, %v10026
        %v10029 = vunpack.c.l.s4 1983009808
        %v10030 = vunpack.c.0.s8 %v10029
        %v10031 = vlaneseq
        %v10032 = vshrl.u32 %v10031, 7
        %v10033 = vsub.s32 %v10030, %v10032
        %v10034 = vrot.slane %v9922, %v10033
        %v10036 = vunpack.c.l.s4 1983009808
        %v10037 = vunpack.c.0.s8 %v10036
        %v10038 = vlaneseq
        %v10039 = vshrl.u32 %v10038, 7
        %v10040 = vsub.s32 %v10037, %v10039
        %v10041 = vrot.slane %v9929, %v10040
        %v10043 = vunpack.c.l.s4 1983009808
        %v10044 = vunpack.c.0.s8 %v10043
        %v10045 = vlaneseq
        %v10046 = vshrl.u32 %v10045, 7
        %v10047 = vsub.s32 %v10044, %v10046
        %v10048 = vrot.slane %v9936, %v10047
        %v10050 = vunpack.c.l.s4 1983009808
        %v10051 = vunpack.c.0.s8 %v10050
        %v10052 = vlaneseq
        %v10053 = vshrl.u32 %v10052, 7
        %v10054 = vsub.s32 %v10051, %v10053
        %v10055 = vrot.slane %v9943, %v10054
        %v10057 = vunpack.c.l.s4 1983009808
        %v10058 = vunpack.c.0.s8 %v10057
        %v10059 = vlaneseq
        %v10060 = vshrl.u32 %v10059, 7
        %v10061 = vsub.s32 %v10058, %v10060
        %v10062 = vrot.slane %v9950, %v10061
        %v10064 = vunpack.c.l.s4 1983009808
        %v10065 = vunpack.c.0.s8 %v10064
        %v10066 = vlaneseq
        %v10067 = vshrl.u32 %v10066, 7
        %v10068 = vsub.s32 %v10065, %v10067
        %v10069 = vrot.slane %v9957, %v10068
        %v10071 = vunpack.c.l.s4 1983009808
        %v10072 = vunpack.c.0.s8 %v10071
        %v10073 = vlaneseq
        %v10074 = vshrl.u32 %v10073, 7
        %v10075 = vsub.s32 %v10072, %v10074
        %v10076 = vrot.slane %v9964, %v10075
        %v10078 = vunpack.c.l.s4 1983009808
        %v10079 = vunpack.c.0.s8 %v10078
        %v10080 = vlaneseq
        %v10081 = vshrl.u32 %v10080, 7
        %v10082 = vsub.s32 %v10079, %v10081
        %v10083 = vrot.slane %v9971, %v10082
        %v10085 = vunpack.c.l.s4 1983009808
        %v10086 = vunpack.c.0.s8 %v10085
        %v10087 = vlaneseq
        %v10088 = vshrl.u32 %v10087, 7
        %v10089 = vsub.s32 %v10086, %v10088
        %v10090 = vrot.slane %v9978, %v10089
        %v10092 = vunpack.c.l.s4 1983009808
        %v10093 = vunpack.c.0.s8 %v10092
        %v10094 = vlaneseq
        %v10095 = vshrl.u32 %v10094, 7
        %v10096 = vsub.s32 %v10093, %v10095
        %v10097 = vrot.slane %v9985, %v10096
        %v10099 = vunpack.c.l.s4 1983009808
        %v10100 = vunpack.c.0.s8 %v10099
        %v10101 = vlaneseq
        %v10102 = vshrl.u32 %v10101, 7
        %v10103 = vsub.s32 %v10100, %v10102
        %v10104 = vrot.slane %v9992, %v10103
        %v10106 = vunpack.c.l.s4 1983009808
        %v10107 = vunpack.c.0.s8 %v10106
        %v10108 = vlaneseq
        %v10109 = vshrl.u32 %v10108, 7
        %v10110 = vsub.s32 %v10107, %v10109
        %v10111 = vrot.slane %v9999, %v10110
        %v10113 = vunpack.c.l.s4 1983009808
        %v10114 = vunpack.c.0.s8 %v10113
        %v10115 = vlaneseq
        %v10116 = vshrl.u32 %v10115, 7
        %v10117 = vsub.s32 %v10114, %v10116
        %v10118 = vrot.slane %v10006, %v10117
        %v10120 = vunpack.c.l.s4 1983009808
        %v10121 = vunpack.c.0.s8 %v10120
        %v10122 = vlaneseq
        %v10123 = vshrl.u32 %v10122, 7
        %v10124 = vsub.s32 %v10121, %v10123
        %v10125 = vrot.slane %v10013, %v10124
        %v10126 = vunpack.c.l.b16 %v10020
        %v10127 = vunpack.c.l.b16 %v10027
        %v10128 = vunpack.c.l.b16 %v10034
        %v10129 = vunpack.c.l.b16 %v10041
        %v10130 = vunpack.c.l.b16 %v10048
        %v10131 = vunpack.c.l.b16 %v10055
        %v10132 = vunpack.c.l.b16 %v10062
        %v10133 = vunpack.c.l.b16 %v10069
        %v10134 = vunpack.c.l.b16 %v10076
        %v10135 = vunpack.c.l.b16 %v10083
        %v10136 = vunpack.c.l.b16 %v10090
        %v10137 = vunpack.c.l.b16 %v10097
        %v10138 = vunpack.c.l.b16 %v10104
        %v10139 = vunpack.c.l.b16 %v10111
        %v10140 = vunpack.c.l.b16 %v10118
        %v10141 = vunpack.c.l.b16 %v10125
        %v10142 = vrot.slane %v10127, 7
        %v10143 = vsel %vm1762, %v10142, %v10126
        %v10144 = vrot.slane %v10128, 6
        %v10145 = vsel %vm1765, %v10144, %v10143
        %v10146 = vrot.slane %v10129, 5
        %v10147 = vsel %vm1768, %v10146, %v10145
        %v10148 = vrot.slane %v10131, 7
        %v10149 = vsel %vm1762, %v10148, %v10130
        %v10150 = vrot.slane %v10132, 6
        %v10151 = vsel %vm1765, %v10150, %v10149
        %v10152 = vrot.slane %v10133, 5
        %v10153 = vsel %vm1768, %v10152, %v10151
        %v10154 = vrot.slane %v10135, 7
        %v10155 = vsel %vm1762, %v10154, %v10134
        %v10156 = vrot.slane %v10136, 6
        %v10157 = vsel %vm1765, %v10156, %v10155
        %v10158 = vrot.slane %v10137, 5
        %v10159 = vsel %vm1768, %v10158, %v10157
        %v10160 = vrot.slane %v10139, 7
        %v10161 = vsel %vm1762, %v10160, %v10138
        %v10162 = vrot.slane %v10140, 6
        %v10163 = vsel %vm1765, %v10162, %v10161
        %v10164 = vrot.slane %v10141, 5
        %v10165 = vsel %vm1768, %v10164, %v10163
        %v10166 = vpack.c.b16 %v10147, %v10147
        %v10167 = vpack.c.b16 %v10153, %v10153
        %v10168 = vpack.c.b16 %v10159, %v10159
        %v10169 = vpack.c.b16 %v10165, %v10165
        %v10171 = vunpack.c.l.s4 1983009808
        %v10172 = vunpack.c.0.s8 %v10171
        %v10173 = vlaneseq
        %v10174 = vshrl.u32 %v10173, 7
        %v10175 = vsub.s32 %v10172, %v10174
        %v10176 = vrot.slane %v10166, %v10175
        %v10178 = vunpack.c.l.s4 1983009808
        %v10179 = vunpack.c.0.s8 %v10178
        %v10180 = vlaneseq
        %v10181 = vshrl.u32 %v10180, 7
        %v10182 = vsub.s32 %v10179, %v10181
        %v10183 = vrot.slane %v10167, %v10182
        %v10185 = vunpack.c.l.s4 1983009808
        %v10186 = vunpack.c.0.s8 %v10185
        %v10187 = vlaneseq
        %v10188 = vshrl.u32 %v10187, 7
        %v10189 = vsub.s32 %v10186, %v10188
        %v10190 = vrot.slane %v10168, %v10189
        %v10192 = vunpack.c.l.s4 1983009808
        %v10193 = vunpack.c.0.s8 %v10192
        %v10194 = vlaneseq
        %v10195 = vshrl.u32 %v10194, 7
        %v10196 = vsub.s32 %v10193, %v10195
        %v10197 = vrot.slane %v10169, %v10196
        %vm10202 = vcmask 386048
        %10203 = vst.msk [vmem:[#allocation3] sm:$0x3] %vm10202, %v10176
        %10204 = vst.msk [vmem:[#allocation3 + $0x2] sm:$0x3] %vm10202, %v10183
        %10205 = vst.msk [vmem:[#allocation3 + $0x4] sm:$0x3] %vm10202, %v10190
        %10206 = vst.msk [vmem:[#allocation3 + $0x6] sm:$0x3] %vm10202, %v10197
        %v10207 = vld [vmem:[#allocation3] sm:$0x1]
        %v10208 = vld [vmem:[%s5] sm:$0xf]
        %v10209 = vld [vmem:[%s5 + $0x4] sm:$0xf]
        %v10210 = vld [vmem:[%s5 + $0x8] sm:$0xf]
        %v10211 = vld [vmem:[%s5 + $0xc] sm:$0xf]
        %v10212 = vld [vmem:[%s5 + $0x10] sm:$0xf]
        %v10213 = vld [vmem:[%s5 + $0x14] sm:$0xf]
        %s10214 = scalar_lea.vmem %s5, 24
        %v10215 = vld [vmem:[%s10214] sm:$0xf]
        %v10216 = vld [vmem:[%s10214 + $0x4] sm:$0xf]
        %v10217 = vld [vmem:[%s10214 + $0x8] sm:$0xf]
        %v10218 = vld [vmem:[%s10214 + $0xc] sm:$0xf]
        %v10219 = vld [vmem:[%s10214 + $0x10] sm:$0xf]
        %v10220 = vld [vmem:[%s10214 + $0x14] sm:$0xf]
        %v10223 = vunpack.c.l.s4 1983009808
        %v10224 = vunpack.c.0.s8 %v10223
        %v10225 = vlaneseq
        %v10226 = vshrl.u32 %v10225, 7
        %v10227 = vsub.s32 %v10224, %v10226
        %v10228 = vrot.slane %v10207, %v10227
        %v10230 = vshrl.u32 %v10228, 16
        %v10238 = vunpack.c.l.b16 %v10215
        %v10239 = vunpack.c.l.b16 %v10216
        %v10240 = vunpack.c.l.b16 %v10217
        %v10241 = vunpack.c.l.b16 %v10218
        %v10242 = vunpack.c.l.b16 %v10219
        %v10243 = vunpack.c.l.b16 %v10220
        %v10244 = vpack.c.b16 %v10239, %v10238
        %v10245 = vpack.c.b16 %v10241, %v10240
        %v10246 = vpack.c.b16 %v10243, %v10242
        %vm10250 = vcmask 392192
        %v10252 = vsel %vm10250, %v10230, 0
        %10254 = vmatprep.subr.bf16.mxu0 0
        %10255 = vmatpush1.bf16.msra.mxu0 %v10244
        %10256 = vmatprep.subr.bf16.mxu0 0
        %10257 = vmatpush1.bf16.msra.mxu0 %v10245
        %10258 = vmatprep.subr.bf16.mxu0 0
        %10259 = vmatpush1.bf16.msra.mxu0 %v10246
        %10260 = vmatprep.subr.bf16.mxu0 0
        %10261 = vmatpush1.bf16.msra.mxu0 0
        %10262 = vmatprep.subr.bf16.mxu0 0
        %10263 = vmatpush1.bf16.msra.mxu0 0
        %10264 = vmatprep.subr.bf16.mxu0 0
        %10265 = vmatpush1.bf16.msra.mxu0 0
        %10266 = vmatprep.subr.bf16.mxu0 0
        %10267 = vmatpush1.bf16.msra.mxu0 0
        %10268 = vmatprep.subr.bf16.mxu0 0
        %10269 = vmatpush1.bf16.msra.mxu0 0
        %10270 = vmatprep.subr.bf16.mxu0 0
        %10271 = vmatpush1.bf16.msra.mxu0 0
        %10272 = vmatprep.subr.bf16.mxu0 0
        %10273 = vmatpush1.bf16.msra.mxu0 0
        %10274 = vmatprep.subr.bf16.mxu0 0
        %10275 = vmatpush1.bf16.msra.mxu0 0
        %10276 = vmatprep.subr.bf16.mxu0 0
        %10277 = vmatpush1.bf16.msra.mxu0 0
        %10278 = vmatprep.subr.bf16.mxu0 0
        %10279 = vmatpush1.bf16.msra.mxu0 0
        %10280 = vmatprep.subr.bf16.mxu0 0
        %10281 = vmatpush1.bf16.msra.mxu0 0
        %10282 = vmatprep.subr.bf16.mxu0 0
        %10283 = vmatpush1.bf16.msra.mxu0 0
        %10284 = vmatprep.subr.bf16.mxu0 0
        %10285 = vmatpush1.bf16.msra.mxu0 0
        %10286 = vmatprep.mubr.bf16.mxu0 0
        %10287 = vmatmul.mubr.bf16.gmra.mrb[0].mxu0 %v10252
        %v10288 = vpop.f32.mrb[0].mxu0
        %v10289 = vadd.f32 0.0, %v10288
        %v10290 = vpop.f32.mrb[0].mxu0
        %v10291 = vpop.f32.mrb[0].mxu0
        %v10292 = vpop.f32.mrb[0].mxu0
        %10293 = vdwg.mxu0
        %v10300 = vunpack.c.l.b16 %v10208
        %v10301 = vunpack.c.l.b16 %v10209
        %v10302 = vunpack.c.l.b16 %v10210
        %v10303 = vunpack.c.l.b16 %v10211
        %v10304 = vunpack.c.l.b16 %v10212
        %v10305 = vunpack.c.l.b16 %v10213
        %v10306 = vpack.c.b16 %v10301, %v10300
        %v10307 = vpack.c.b16 %v10303, %v10302
        %v10308 = vpack.c.b16 %v10305, %v10304
        %v10313 = vsel %vm10250, %v10207, 0
        %10315 = vmatprep.subr.bf16.mxu0 0
        %10316 = vmatpush1.bf16.msra.mxu0 %v10306
        %10317 = vmatprep.subr.bf16.mxu0 0
        %10318 = vmatpush1.bf16.msra.mxu0 %v10307
        %10319 = vmatprep.subr.bf16.mxu0 0
        %10320 = vmatpush1.bf16.msra.mxu0 %v10308
        %10321 = vmatprep.subr.bf16.mxu0 0
        %10322 = vmatpush1.bf16.msra.mxu0 0
        %10323 = vmatprep.subr.bf16.mxu0 0
        %10324 = vmatpush1.bf16.msra.mxu0 0
        %10325 = vmatprep.subr.bf16.mxu0 0
        %10326 = vmatpush1.bf16.msra.mxu0 0
        %10327 = vmatprep.subr.bf16.mxu0 0
        %10328 = vmatpush1.bf16.msra.mxu0 0
        %10329 = vmatprep.subr.bf16.mxu0 0
        %10330 = vmatpush1.bf16.msra.mxu0 0
        %10331 = vmatprep.subr.bf16.mxu0 0
        %10332 = vmatpush1.bf16.msra.mxu0 0
        %10333 = vmatprep.subr.bf16.mxu0 0
        %10334 = vmatpush1.bf16.msra.mxu0 0
        %10335 = vmatprep.subr.bf16.mxu0 0
        %10336 = vmatpush1.bf16.msra.mxu0 0
        %10337 = vmatprep.subr.bf16.mxu0 0
        %10338 = vmatpush1.bf16.msra.mxu0 0
        %10339 = vmatprep.subr.bf16.mxu0 0
        %10340 = vmatpush1.bf16.msra.mxu0 0
        %10341 = vmatprep.subr.bf16.mxu0 0
        %10342 = vmatpush1.bf16.msra.mxu0 0
        %10343 = vmatprep.subr.bf16.mxu0 0
        %10344 = vmatpush1.bf16.msra.mxu0 0
        %10345 = vmatprep.subr.bf16.mxu0 0
        %10346 = vmatpush1.bf16.msra.mxu0 0
        %10347 = vmatprep.mubr.bf16.mxu0 0
        %10348 = vmatmul.mubr.bf16.gmra.mrb[0].mxu0 %v10313
        %v10349 = vpop.f32.mrb[0].mxu0
        %v10350 = vadd.f32 %v10289, %v10349
        %v10351 = vpop.f32.mrb[0].mxu0
        %v10352 = vpop.f32.mrb[0].mxu0
        %v10353 = vpop.f32.mrb[0].mxu0
        %10354 = vdwg.mxu0
        %v10355 = vld [vmem:[#allocation3] sm:$0x2]
        %s10356 = scalar_lea.vmem %s5, 48
        %v10357 = vld [vmem:[%s10356] sm:$0xf]
        %v10358 = vld [vmem:[%s10356 + $0x4] sm:$0xf]
        %v10359 = vld [vmem:[%s10356 + $0x8] sm:$0xf]
        %v10360 = vld [vmem:[%s10356 + $0xc] sm:$0xf]
        %v10361 = vld [vmem:[%s10356 + $0x10] sm:$0xf]
        %v10362 = vld [vmem:[%s10356 + $0x14] sm:$0xf]
        %v10365 = vunpack.c.l.s4 1983009808
        %v10366 = vunpack.c.0.s8 %v10365
        %v10367 = vlaneseq
        %v10368 = vshrl.u32 %v10367, 7
        %v10369 = vsub.s32 %v10366, %v10368
        %v10370 = vrot.slane %v10355, %v10369
        %v10371 = vrot.slane %v10370, 1
        %v10378 = vunpack.c.l.b16 %v10357
        %v10379 = vunpack.c.l.b16 %v10358
        %v10380 = vunpack.c.l.b16 %v10359
        %v10381 = vunpack.c.l.b16 %v10360
        %v10382 = vunpack.c.l.b16 %v10361
        %v10383 = vunpack.c.l.b16 %v10362
        %v10384 = vpack.c.b16 %v10379, %v10378
        %v10385 = vpack.c.b16 %v10381, %v10380
        %v10386 = vpack.c.b16 %v10383, %v10382
        %v10391 = vsel %vm10250, %v10371, 0
        %10393 = vmatprep.subr.bf16.mxu0 0
        %10394 = vmatpush1.bf16.msra.mxu0 %v10384
        %10395 = vmatprep.subr.bf16.mxu0 0
        %10396 = vmatpush1.bf16.msra.mxu0 %v10385
        %10397 = vmatprep.subr.bf16.mxu0 0
        %10398 = vmatpush1.bf16.msra.mxu0 %v10386
        %10399 = vmatprep.subr.bf16.mxu0 0
        %10400 = vmatpush1.bf16.msra.mxu0 0
        %10401 = vmatprep.subr.bf16.mxu0 0
        %10402 = vmatpush1.bf16.msra.mxu0 0
        %10403 = vmatprep.subr.bf16.mxu0 0
        %10404 = vmatpush1.bf16.msra.mxu0 0
        %10405 = vmatprep.subr.bf16.mxu0 0
        %10406 = vmatpush1.bf16.msra.mxu0 0
        %10407 = vmatprep.subr.bf16.mxu0 0
        %10408 = vmatpush1.bf16.msra.mxu0 0
        %10409 = vmatprep.subr.bf16.mxu0 0
        %10410 = vmatpush1.bf16.msra.mxu0 0
        %10411 = vmatprep.subr.bf16.mxu0 0
        %10412 = vmatpush1.bf16.msra.mxu0 0
        %10413 = vmatprep.subr.bf16.mxu0 0
        %10414 = vmatpush1.bf16.msra.mxu0 0
        %10415 = vmatprep.subr.bf16.mxu0 0
        %10416 = vmatpush1.bf16.msra.mxu0 0
        %10417 = vmatprep.subr.bf16.mxu0 0
        %10418 = vmatpush1.bf16.msra.mxu0 0
        %10419 = vmatprep.subr.bf16.mxu0 0
        %10420 = vmatpush1.bf16.msra.mxu0 0
        %10421 = vmatprep.subr.bf16.mxu0 0
        %10422 = vmatpush1.bf16.msra.mxu0 0
        %10423 = vmatprep.subr.bf16.mxu0 0
        %10424 = vmatpush1.bf16.msra.mxu0 0
        %10425 = vmatprep.mubr.bf16.mxu0 0
        %10426 = vmatmul.mubr.bf16.gmra.mrb[0].mxu0 %v10391
        %v10427 = vpop.f32.mrb[0].mxu0
        %v10428 = vadd.f32 0.0, %v10427
        %v10429 = vpop.f32.mrb[0].mxu0
        %v10430 = vpop.f32.mrb[0].mxu0
        %v10431 = vpop.f32.mrb[0].mxu0
        %10432 = vdwg.mxu0
        %v10433 = vadd.f32 %v10350, %v10428
        %v10434 = vld [vmem:[#allocation3] sm:$0x2]
        %s10435 = scalar_lea.vmem %s5, 72
        %v10436 = vld [vmem:[%s10435] sm:$0xf]
        %v10437 = vld [vmem:[%s10435 + $0x4] sm:$0xf]
        %v10438 = vld [vmem:[%s10435 + $0x8] sm:$0xf]
        %v10439 = vld [vmem:[%s10435 + $0xc] sm:$0xf]
        %v10440 = vld [vmem:[%s10435 + $0x10] sm:$0xf]
        %v10441 = vld [vmem:[%s10435 + $0x14] sm:$0xf]
        %v10444 = vunpack.c.l.s4 1983009808
        %v10445 = vunpack.c.0.s8 %v10444
        %v10446 = vlaneseq
        %v10447 = vshrl.u32 %v10446, 7
        %v10448 = vsub.s32 %v10445, %v10447
        %v10449 = vrot.slane %v10434, %v10448
        %v10451 = vshrl.u32 %v10449, 16
        %v10453 = vrot.slane %v10451, 1
        %v10460 = vunpack.c.l.b16 %v10436
        %v10461 = vunpack.c.l.b16 %v10437
        %v10462 = vunpack.c.l.b16 %v10438
        %v10463 = vunpack.c.l.b16 %v10439
        %v10464 = vunpack.c.l.b16 %v10440
        %v10465 = vunpack.c.l.b16 %v10441
        %v10466 = vpack.c.b16 %v10461, %v10460
        %v10467 = vpack.c.b16 %v10463, %v10462
        %v10468 = vpack.c.b16 %v10465, %v10464
        %v10473 = vsel %vm10250, %v10453, 0
        %10475 = vmatprep.subr.bf16.mxu0 0
        %10476 = vmatpush1.bf16.msra.mxu0 %v10466
        %10477 = vmatprep.subr.bf16.mxu0 0
        %10478 = vmatpush1.bf16.msra.mxu0 %v10467
        %10479 = vmatprep.subr.bf16.mxu0 0
        %10480 = vmatpush1.bf16.msra.mxu0 %v10468
        %10481 = vmatprep.subr.bf16.mxu0 0
        %10482 = vmatpush1.bf16.msra.mxu0 0
        %10483 = vmatprep.subr.bf16.mxu0 0
        %10484 = vmatpush1.bf16.msra.mxu0 0
        %10485 = vmatprep.subr.bf16.mxu0 0
        %10486 = vmatpush1.bf16.msra.mxu0 0
        %10487 = vmatprep.subr.bf16.mxu0 0
        %10488 = vmatpush1.bf16.msra.mxu0 0
        %10489 = vmatprep.subr.bf16.mxu0 0
        %10490 = vmatpush1.bf16.msra.mxu0 0
        %10491 = vmatprep.subr.bf16.mxu0 0
        %10492 = vmatpush1.bf16.msra.mxu0 0
        %10493 = vmatprep.subr.bf16.mxu0 0
        %10494 = vmatpush1.bf16.msra.mxu0 0
        %10495 = vmatprep.subr.bf16.mxu0 0
        %10496 = vmatpush1.bf16.msra.mxu0 0
        %10497 = vmatprep.subr.bf16.mxu0 0
        %10498 = vmatpush1.bf16.msra.mxu0 0
        %10499 = vmatprep.subr.bf16.mxu0 0
        %10500 = vmatpush1.bf16.msra.mxu0 0
        %10501 = vmatprep.subr.bf16.mxu0 0
        %10502 = vmatpush1.bf16.msra.mxu0 0
        %10503 = vmatprep.subr.bf16.mxu0 0
        %10504 = vmatpush1.bf16.msra.mxu0 0
        %10505 = vmatprep.subr.bf16.mxu0 0
        %10506 = vmatpush1.bf16.msra.mxu0 0
        %10507 = vmatprep.mubr.bf16.mxu0 0
        %10508 = vmatmul.mubr.bf16.gmra.mrb[0].mxu0 %v10473
        %v10509 = vpop.f32.mrb[0].mxu0
        %v10510 = vadd.f32 0.0, %v10509
        %v10511 = vpop.f32.mrb[0].mxu0
        %v10512 = vpop.f32.mrb[0].mxu0
        %v10513 = vpop.f32.mrb[0].mxu0
        %10514 = vdwg.mxu0
        %v10515 = vadd.f32 %v10433, %v10510
        %s10516 = scalar_lea.vmem [#allocation3], 2
        %v10517 = vld [vmem:[%s10516] sm:$0x1]
        %s10518 = scalar_lea.vmem %s5, 96
        %v10519 = vld [vmem:[%s10518] sm:$0xf]
        %v10520 = vld [vmem:[%s10518 + $0x4] sm:$0xf]
        %v10521 = vld [vmem:[%s10518 + $0x8] sm:$0xf]
        %v10522 = vld [vmem:[%s10518 + $0xc] sm:$0xf]
        %v10523 = vld [vmem:[%s10518 + $0x10] sm:$0xf]
        %v10524 = vld [vmem:[%s10518 + $0x14] sm:$0xf]
        %s10525 = scalar_lea.vmem %s5, 120
        %v10526 = vld [vmem:[%s10525] sm:$0xf]
        %v10527 = vld [vmem:[%s10525 + $0x4] sm:$0xf]
        %v10528 = vld [vmem:[%s10525 + $0x8] sm:$0xf]
        %v10529 = vld [vmem:[%s10525 + $0xc] sm:$0xf]
        %v10530 = vld [vmem:[%s10525 + $0x10] sm:$0xf]
        %v10531 = vld [vmem:[%s10525 + $0x14] sm:$0xf]
        %v10534 = vunpack.c.l.s4 1983009808
        %v10535 = vunpack.c.0.s8 %v10534
        %v10536 = vlaneseq
        %v10537 = vshrl.u32 %v10536, 7
        %v10538 = vsub.s32 %v10535, %v10537
        %v10539 = vrot.slane %v10517, %v10538
        %v10541 = vshrl.u32 %v10539, 16
        %v10549 = vunpack.c.l.b16 %v10526
        %v10550 = vunpack.c.l.b16 %v10527
        %v10551 = vunpack.c.l.b16 %v10528
        %v10552 = vunpack.c.l.b16 %v10529
        %v10553 = vunpack.c.l.b16 %v10530
        %v10554 = vunpack.c.l.b16 %v10531
        %v10555 = vpack.c.b16 %v10550, %v10549
        %v10556 = vpack.c.b16 %v10552, %v10551
        %v10557 = vpack.c.b16 %v10554, %v10553
        %v10562 = vsel %vm10250, %v10541, 0
        %10564 = vmatprep.subr.bf16.mxu0 0
        %10565 = vmatpush1.bf16.msra.mxu0 %v10555
        %10566 = vmatprep.subr.bf16.mxu0 0
        %10567 = vmatpush1.bf16.msra.mxu0 %v10556
        %10568 = vmatprep.subr.bf16.mxu0 0
        %10569 = vmatpush1.bf16.msra.mxu0 %v10557
        %10570 = vmatprep.subr.bf16.mxu0 0
        %10571 = vmatpush1.bf16.msra.mxu0 0
        %10572 = vmatprep.subr.bf16.mxu0 0
        %10573 = vmatpush1.bf16.msra.mxu0 0
        %10574 = vmatprep.subr.bf16.mxu0 0
        %10575 = vmatpush1.bf16.msra.mxu0 0
        %10576 = vmatprep.subr.bf16.mxu0 0
        %10577 = vmatpush1.bf16.msra.mxu0 0
        %10578 = vmatprep.subr.bf16.mxu0 0
        %10579 = vmatpush1.bf16.msra.mxu0 0
        %10580 = vmatprep.subr.bf16.mxu0 0
        %10581 = vmatpush1.bf16.msra.mxu0 0
        %10582 = vmatprep.subr.bf16.mxu0 0
        %10583 = vmatpush1.bf16.msra.mxu0 0
        %10584 = vmatprep.subr.bf16.mxu0 0
        %10585 = vmatpush1.bf16.msra.mxu0 0
        %10586 = vmatprep.subr.bf16.mxu0 0
        %10587 = vmatpush1.bf16.msra.mxu0 0
        %10588 = vmatprep.subr.bf16.mxu0 0
        %10589 = vmatpush1.bf16.msra.mxu0 0
        %10590 = vmatprep.subr.bf16.mxu0 0
        %10591 = vmatpush1.bf16.msra.mxu0 0
        %10592 = vmatprep.subr.bf16.mxu0 0
        %10593 = vmatpush1.bf16.msra.mxu0 0
        %10594 = vmatprep.subr.bf16.mxu0 0
        %10595 = vmatpush1.bf16.msra.mxu0 0
        %10596 = vmatprep.mubr.bf16.mxu0 0
        %10597 = vmatmul.mubr.bf16.gmra.mrb[0].mxu0 %v10562
        %v10598 = vpop.f32.mrb[0].mxu0
        %v10599 = vadd.f32 0.0, %v10598
        %v10600 = vpop.f32.mrb[0].mxu0
        %v10601 = vpop.f32.mrb[0].mxu0
        %v10602 = vpop.f32.mrb[0].mxu0
        %10603 = vdwg.mxu0
        %v10610 = vunpack.c.l.b16 %v10519
        %v10611 = vunpack.c.l.b16 %v10520
        %v10612 = vunpack.c.l.b16 %v10521
        %v10613 = vunpack.c.l.b16 %v10522
        %v10614 = vunpack.c.l.b16 %v10523
        %v10615 = vunpack.c.l.b16 %v10524
        %v10616 = vpack.c.b16 %v10611, %v10610
        %v10617 = vpack.c.b16 %v10613, %v10612
        %v10618 = vpack.c.b16 %v10615, %v10614
        %v10623 = vsel %vm10250, %v10517, 0
        %10625 = vmatprep.subr.bf16.mxu0 0
        %10626 = vmatpush1.bf16.msra.mxu0 %v10616
        %10627 = vmatprep.subr.bf16.mxu0 0
        %10628 = vmatpush1.bf16.msra.mxu0 %v10617
        %10629 = vmatprep.subr.bf16.mxu0 0
        %10630 = vmatpush1.bf16.msra.mxu0 %v10618
        %10631 = vmatprep.subr.bf16.mxu0 0
        %10632 = vmatpush1.bf16.msra.mxu0 0
        %10633 = vmatprep.subr.bf16.mxu0 0
        %10634 = vmatpush1.bf16.msra.mxu0 0
        %10635 = vmatprep.subr.bf16.mxu0 0
        %10636 = vmatpush1.bf16.msra.mxu0 0
        %10637 = vmatprep.subr.bf16.mxu0 0
        %10638 = vmatpush1.bf16.msra.mxu0 0
        %10639 = vmatprep.subr.bf16.mxu0 0
        %10640 = vmatpush1.bf16.msra.mxu0 0
        %10641 = vmatprep.subr.bf16.mxu0 0
        %10642 = vmatpush1.bf16.msra.mxu0 0
        %10643 = vmatprep.subr.bf16.mxu0 0
        %10644 = vmatpush1.bf16.msra.mxu0 0
        %10645 = vmatprep.subr.bf16.mxu0 0
        %10646 = vmatpush1.bf16.msra.mxu0 0
        %10647 = vmatprep.subr.bf16.mxu0 0
        %10648 = vmatpush1.bf16.msra.mxu0 0
        %10649 = vmatprep.subr.bf16.mxu0 0
        %10650 = vmatpush1.bf16.msra.mxu0 0
        %10651 = vmatprep.subr.bf16.mxu0 0
        %10652 = vmatpush1.bf16.msra.mxu0 0
        %10653 = vmatprep.subr.bf16.mxu0 0
        %10654 = vmatpush1.bf16.msra.mxu0 0
        %10655 = vmatprep.subr.bf16.mxu0 0
        %10656 = vmatpush1.bf16.msra.mxu0 0
        %10657 = vmatprep.mubr.bf16.mxu0 0
        %10658 = vmatmul.mubr.bf16.gmra.mrb[0].mxu0 %v10623
        %v10659 = vpop.f32.mrb[0].mxu0
        %v10660 = vadd.f32 %v10599, %v10659
        %v10661 = vpop.f32.mrb[0].mxu0
        %v10662 = vpop.f32.mrb[0].mxu0
        %v10663 = vpop.f32.mrb[0].mxu0
        %10664 = vdwg.mxu0
        %v10665 = vld [vmem:[%s10516] sm:$0x2]
        %s10666 = scalar_lea.vmem %s5, 144
        %v10667 = vld [vmem:[%s10666] sm:$0xf]
        %v10668 = vld [vmem:[%s10666 + $0x4] sm:$0xf]
        %v10669 = vld [vmem:[%s10666 + $0x8] sm:$0xf]
        %v10670 = vld [vmem:[%s10666 + $0xc] sm:$0xf]
        %v10671 = vld [vmem:[%s10666 + $0x10] sm:$0xf]
        %v10672 = vld [vmem:[%s10666 + $0x14] sm:$0xf]
        %v10675 = vunpack.c.l.s4 1983009808
        %v10676 = vunpack.c.0.s8 %v10675
        %v10677 = vlaneseq
        %v10678 = vshrl.u32 %v10677, 7
        %v10679 = vsub.s32 %v10676, %v10678
        %v10680 = vrot.slane %v10665, %v10679
        %v10681 = vrot.slane %v10680, 1
        %v10688 = vunpack.c.l.b16 %v10667
        %v10689 = vunpack.c.l.b16 %v10668
        %v10690 = vunpack.c.l.b16 %v10669
        %v10691 = vunpack.c.l.b16 %v10670
        %v10692 = vunpack.c.l.b16 %v10671
        %v10693 = vunpack.c.l.b16 %v10672
        %v10694 = vpack.c.b16 %v10689, %v10688
        %v10695 = vpack.c.b16 %v10691, %v10690
        %v10696 = vpack.c.b16 %v10693, %v10692
        %v10701 = vsel %vm10250, %v10681, 0
        %10703 = vmatprep.subr.bf16.mxu0 0
        %10704 = vmatpush1.bf16.msra.mxu0 %v10694
        %10705 = vmatprep.subr.bf16.mxu0 0
        %10706 = vmatpush1.bf16.msra.mxu0 %v10695
        %10707 = vmatprep.subr.bf16.mxu0 0
        %10708 = vmatpush1.bf16.msra.mxu0 %v10696
        %10709 = vmatprep.subr.bf16.mxu0 0
        %10710 = vmatpush1.bf16.msra.mxu0 0
        %10711 = vmatprep.subr.bf16.mxu0 0
        %10712 = vmatpush1.bf16.msra.mxu0 0
        %10713 = vmatprep.subr.bf16.mxu0 0
        %10714 = vmatpush1.bf16.msra.mxu0 0
        %10715 = vmatprep.subr.bf16.mxu0 0
        %10716 = vmatpush1.bf16.msra.mxu0 0
        %10717 = vmatprep.subr.bf16.mxu0 0
        %10718 = vmatpush1.bf16.msra.mxu0 0
        %10719 = vmatprep.subr.bf16.mxu0 0
        %10720 = vmatpush1.bf16.msra.mxu0 0
        %10721 = vmatprep.subr.bf16.mxu0 0
        %10722 = vmatpush1.bf16.msra.mxu0 0
        %10723 = vmatprep.subr.bf16.mxu0 0
        %10724 = vmatpush1.bf16.msra.mxu0 0
        %10725 = vmatprep.subr.bf16.mxu0 0
        %10726 = vmatpush1.bf16.msra.mxu0 0
        %10727 = vmatprep.subr.bf16.mxu0 0
        %10728 = vmatpush1.bf16.msra.mxu0 0
        %10729 = vmatprep.subr.bf16.mxu0 0
        %10730 = vmatpush1.bf16.msra.mxu0 0
        %10731 = vmatprep.subr.bf16.mxu0 0
        %10732 = vmatpush1.bf16.msra.mxu0 0
        %10733 = vmatprep.subr.bf16.mxu0 0
        %10734 = vmatpush1.bf16.msra.mxu0 0
        %10735 = vmatprep.mubr.bf16.mxu0 0
        %10736 = vmatmul.mubr.bf16.gmra.mrb[0].mxu0 %v10701
        %v10737 = vpop.f32.mrb[0].mxu0
        %v10738 = vadd.f32 0.0, %v10737
        %v10739 = vpop.f32.mrb[0].mxu0
        %v10740 = vpop.f32.mrb[0].mxu0
        %v10741 = vpop.f32.mrb[0].mxu0
        %10742 = vdwg.mxu0
        %v10743 = vadd.f32 %v10660, %v10738
        %v10744 = vld [vmem:[%s10516] sm:$0x2]
        %s10745 = scalar_lea.vmem %s5, 168
        %v10746 = vld [vmem:[%s10745] sm:$0xf]
        %v10747 = vld [vmem:[%s10745 + $0x4] sm:$0xf]
        %v10748 = vld [vmem:[%s10745 + $0x8] sm:$0xf]
        %v10749 = vld [vmem:[%s10745 + $0xc] sm:$0xf]
        %v10750 = vld [vmem:[%s10745 + $0x10] sm:$0xf]
        %v10751 = vld [vmem:[%s10745 + $0x14] sm:$0xf]
        %v10754 = vunpack.c.l.s4 1983009808
        %v10755 = vunpack.c.0.s8 %v10754
        %v10756 = vlaneseq
        %v10757 = vshrl.u32 %v10756, 7
        %v10758 = vsub.s32 %v10755, %v10757
        %v10759 = vrot.slane %v10744, %v10758
        %v10761 = vshrl.u32 %v10759, 16
        %v10763 = vrot.slane %v10761, 1
        %v10770 = vunpack.c.l.b16 %v10746
        %v10771 = vunpack.c.l.b16 %v10747
        %v10772 = vunpack.c.l.b16 %v10748
        %v10773 = vunpack.c.l.b16 %v10749
        %v10774 = vunpack.c.l.b16 %v10750
        %v10775 = vunpack.c.l.b16 %v10751
        %v10776 = vpack.c.b16 %v10771, %v10770
        %v10777 = vpack.c.b16 %v10773, %v10772
        %v10778 = vpack.c.b16 %v10775, %v10774
        %v10783 = vsel %vm10250, %v10763, 0
        %10785 = vmatprep.subr.bf16.mxu0 0
        %10786 = vmatpush1.bf16.msra.mxu0 %v10776
        %10787 = vmatprep.subr.bf16.mxu0 0
        %10788 = vmatpush1.bf16.msra.mxu0 %v10777
        %10789 = vmatprep.subr.bf16.mxu0 0
        %10790 = vmatpush1.bf16.msra.mxu0 %v10778
        %10791 = vmatprep.subr.bf16.mxu0 0
        %10792 = vmatpush1.bf16.msra.mxu0 0
        %10793 = vmatprep.subr.bf16.mxu0 0
        %10794 = vmatpush1.bf16.msra.mxu0 0
        %10795 = vmatprep.subr.bf16.mxu0 0
        %10796 = vmatpush1.bf16.msra.mxu0 0
        %10797 = vmatprep.subr.bf16.mxu0 0
        %10798 = vmatpush1.bf16.msra.mxu0 0
        %10799 = vmatprep.subr.bf16.mxu0 0
        %10800 = vmatpush1.bf16.msra.mxu0 0
        %10801 = vmatprep.subr.bf16.mxu0 0
        %10802 = vmatpush1.bf16.msra.mxu0 0
        %10803 = vmatprep.subr.bf16.mxu0 0
        %10804 = vmatpush1.bf16.msra.mxu0 0
        %10805 = vmatprep.subr.bf16.mxu0 0
        %10806 = vmatpush1.bf16.msra.mxu0 0
        %10807 = vmatprep.subr.bf16.mxu0 0
        %10808 = vmatpush1.bf16.msra.mxu0 0
        %10809 = vmatprep.subr.bf16.mxu0 0
        %10810 = vmatpush1.bf16.msra.mxu0 0
        %10811 = vmatprep.subr.bf16.mxu0 0
        %10812 = vmatpush1.bf16.msra.mxu0 0
        %10813 = vmatprep.subr.bf16.mxu0 0
        %10814 = vmatpush1.bf16.msra.mxu0 0
        %10815 = vmatprep.subr.bf16.mxu0 0
        %10816 = vmatpush1.bf16.msra.mxu0 0
        %10817 = vmatprep.mubr.bf16.mxu0 0
        %10818 = vmatmul.mubr.bf16.gmra.mrb[0].mxu0 %v10783
        %v10819 = vpop.f32.mrb[0].mxu0
        %v10820 = vadd.f32 0.0, %v10819
        %v10821 = vpop.f32.mrb[0].mxu0
        %v10822 = vpop.f32.mrb[0].mxu0
        %v10823 = vpop.f32.mrb[0].mxu0
        %10824 = vdwg.mxu0
        %v10825 = vadd.f32 %v10743, %v10820
        %s10826 = scalar_lea.vmem [#allocation3], 4
        %v10827 = vld [vmem:[%s10826] sm:$0x1]
        %s10828 = scalar_lea.vmem %s5, 192
        %v10829 = vld [vmem:[%s10828] sm:$0xf]
        %v10830 = vld [vmem:[%s10828 + $0x4] sm:$0xf]
        %v10831 = vld [vmem:[%s10828 + $0x8] sm:$0xf]
        %v10832 = vld [vmem:[%s10828 + $0xc] sm:$0xf]
        %v10833 = vld [vmem:[%s10828 + $0x10] sm:$0xf]
        %v10834 = vld [vmem:[%s10828 + $0x14] sm:$0xf]
        %s10835 = scalar_lea.vmem %s5, 216
        %v10836 = vld [vmem:[%s10835] sm:$0xf]
        %v10837 = vld [vmem:[%s10835 + $0x4] sm:$0xf]
        %v10838 = vld [vmem:[%s10835 + $0x8] sm:$0xf]
        %v10839 = vld [vmem:[%s10835 + $0xc] sm:$0xf]
        %v10840 = vld [vmem:[%s10835 + $0x10] sm:$0xf]
        %v10841 = vld [vmem:[%s10835 + $0x14] sm:$0xf]
        %v10844 = vunpack.c.l.s4 1983009808
        %v10845 = vunpack.c.0.s8 %v10844
        %v10846 = vlaneseq
        %v10847 = vshrl.u32 %v10846, 7
        %v10848 = vsub.s32 %v10845, %v10847
        %v10849 = vrot.slane %v10827, %v10848
        %v10851 = vshrl.u32 %v10849, 16
        %v10859 = vunpack.c.l.b16 %v10836
        %v10860 = vunpack.c.l.b16 %v10837
        %v10861 = vunpack.c.l.b16 %v10838
        %v10862 = vunpack.c.l.b16 %v10839
        %v10863 = vunpack.c.l.b16 %v10840
        %v10864 = vunpack.c.l.b16 %v10841
        %v10865 = vpack.c.b16 %v10860, %v10859
        %v10866 = vpack.c.b16 %v10862, %v10861
        %v10867 = vpack.c.b16 %v10864, %v10863
        %v10872 = vsel %vm10250, %v10851, 0
        %10874 = vmatprep.subr.bf16.mxu0 0
        %10875 = vmatpush1.bf16.msra.mxu0 %v10865
        %10876 = vmatprep.subr.bf16.mxu0 0
        %10877 = vmatpush1.bf16.msra.mxu0 %v10866
        %10878 = vmatprep.subr.bf16.mxu0 0
        %10879 = vmatpush1.bf16.msra.mxu0 %v10867
        %10880 = vmatprep.subr.bf16.mxu0 0
        %10881 = vmatpush1.bf16.msra.mxu0 0
        %10882 = vmatprep.subr.bf16.mxu0 0
        %10883 = vmatpush1.bf16.msra.mxu0 0
        %10884 = vmatprep.subr.bf16.mxu0 0
        %10885 = vmatpush1.bf16.msra.mxu0 0
        %10886 = vmatprep.subr.bf16.mxu0 0
        %10887 = vmatpush1.bf16.msra.mxu0 0
        %10888 = vmatprep.subr.bf16.mxu0 0
        %10889 = vmatpush1.bf16.msra.mxu0 0
        %10890 = vmatprep.subr.bf16.mxu0 0
        %10891 = vmatpush1.bf16.msra.mxu0 0
        %10892 = vmatprep.subr.bf16.mxu0 0
        %10893 = vmatpush1.bf16.msra.mxu0 0
        %10894 = vmatprep.subr.bf16.mxu0 0
        %10895 = vmatpush1.bf16.msra.mxu0 0
        %10896 = vmatprep.subr.bf16.mxu0 0
        %10897 = vmatpush1.bf16.msra.mxu0 0
        %10898 = vmatprep.subr.bf16.mxu0 0
        %10899 = vmatpush1.bf16.msra.mxu0 0
        %10900 = vmatprep.subr.bf16.mxu0 0
        %10901 = vmatpush1.bf16.msra.mxu0 0
        %10902 = vmatprep.subr.bf16.mxu0 0
        %10903 = vmatpush1.bf16.msra.mxu0 0
        %10904 = vmatprep.subr.bf16.mxu0 0
        %10905 = vmatpush1.bf16.msra.mxu0 0
        %10906 = vmatprep.mubr.bf16.mxu0 0
        %10907 = vmatmul.mubr.bf16.gmra.mrb[0].mxu0 %v10872
        %v10908 = vpop.f32.mrb[0].mxu0
        %v10909 = vadd.f32 0.0, %v10908
        %v10910 = vpop.f32.mrb[0].mxu0
        %v10911 = vpop.f32.mrb[0].mxu0
        %v10912 = vpop.f32.mrb[0].mxu0
        %10913 = vdwg.mxu0
        %v10920 = vunpack.c.l.b16 %v10829
        %v10921 = vunpack.c.l.b16 %v10830
        %v10922 = vunpack.c.l.b16 %v10831
        %v10923 = vunpack.c.l.b16 %v10832
        %v10924 = vunpack.c.l.b16 %v10833
        %v10925 = vunpack.c.l.b16 %v10834
        %v10926 = vpack.c.b16 %v10921, %v10920
        %v10927 = vpack.c.b16 %v10923, %v10922
        %v10928 = vpack.c.b16 %v10925, %v10924
        %v10933 = vsel %vm10250, %v10827, 0
        %10935 = vmatprep.subr.bf16.mxu0 0
        %10936 = vmatpush1.bf16.msra.mxu0 %v10926
        %10937 = vmatprep.subr.bf16.mxu0 0
        %10938 = vmatpush1.bf16.msra.mxu0 %v10927
        %10939 = vmatprep.subr.bf16.mxu0 0
        %10940 = vmatpush1.bf16.msra.mxu0 %v10928
        %10941 = vmatprep.subr.bf16.mxu0 0
        %10942 = vmatpush1.bf16.msra.mxu0 0
        %10943 = vmatprep.subr.bf16.mxu0 0
        %10944 = vmatpush1.bf16.msra.mxu0 0
        %10945 = vmatprep.subr.bf16.mxu0 0
        %10946 = vmatpush1.bf16.msra.mxu0 0
        %10947 = vmatprep.subr.bf16.mxu0 0
        %10948 = vmatpush1.bf16.msra.mxu0 0
        %10949 = vmatprep.subr.bf16.mxu0 0
        %10950 = vmatpush1.bf16.msra.mxu0 0
        %10951 = vmatprep.subr.bf16.mxu0 0
        %10952 = vmatpush1.bf16.msra.mxu0 0
        %10953 = vmatprep.subr.bf16.mxu0 0
        %10954 = vmatpush1.bf16.msra.mxu0 0
        %10955 = vmatprep.subr.bf16.mxu0 0
        %10956 = vmatpush1.bf16.msra.mxu0 0
        %10957 = vmatprep.subr.bf16.mxu0 0
        %10958 = vmatpush1.bf16.msra.mxu0 0
        %10959 = vmatprep.subr.bf16.mxu0 0
        %10960 = vmatpush1.bf16.msra.mxu0 0
        %10961 = vmatprep.subr.bf16.mxu0 0
        %10962 = vmatpush1.bf16.msra.mxu0 0
        %10963 = vmatprep.subr.bf16.mxu0 0
        %10964 = vmatpush1.bf16.msra.mxu0 0
        %10965 = vmatprep.subr.bf16.mxu0 0
        %10966 = vmatpush1.bf16.msra.mxu0 0
        %10967 = vmatprep.mubr.bf16.mxu0 0
        %10968 = vmatmul.mubr.bf16.gmra.mrb[0].mxu0 %v10933
        %v10969 = vpop.f32.mrb[0].mxu0
        %v10970 = vadd.f32 %v10909, %v10969
        %v10971 = vpop.f32.mrb[0].mxu0
        %v10972 = vpop.f32.mrb[0].mxu0
        %v10973 = vpop.f32.mrb[0].mxu0
        %10974 = vdwg.mxu0
        %v10975 = vld [vmem:[%s10826] sm:$0x2]
        %s10976 = scalar_lea.vmem %s5, 240
        %v10977 = vld [vmem:[%s10976] sm:$0xf]
        %v10978 = vld [vmem:[%s10976 + $0x4] sm:$0xf]
        %v10979 = vld [vmem:[%s10976 + $0x8] sm:$0xf]
        %v10980 = vld [vmem:[%s10976 + $0xc] sm:$0xf]
        %v10981 = vld [vmem:[%s10976 + $0x10] sm:$0xf]
        %v10982 = vld [vmem:[%s10976 + $0x14] sm:$0xf]
        %v10985 = vunpack.c.l.s4 1983009808
        %v10986 = vunpack.c.0.s8 %v10985
        %v10987 = vlaneseq
        %v10988 = vshrl.u32 %v10987, 7
        %v10989 = vsub.s32 %v10986, %v10988
        %v10990 = vrot.slane %v10975, %v10989
        %v10991 = vrot.slane %v10990, 1
        %v10998 = vunpack.c.l.b16 %v10977
        %v10999 = vunpack.c.l.b16 %v10978
        %v11000 = vunpack.c.l.b16 %v10979
        %v11001 = vunpack.c.l.b16 %v10980
        %v11002 = vunpack.c.l.b16 %v10981
        %v11003 = vunpack.c.l.b16 %v10982
        %v11004 = vpack.c.b16 %v10999, %v10998
        %v11005 = vpack.c.b16 %v11001, %v11000
        %v11006 = vpack.c.b16 %v11003, %v11002
        %v11011 = vsel %vm10250, %v10991, 0
        %11013 = vmatprep.subr.bf16.mxu0 0
        %11014 = vmatpush1.bf16.msra.mxu0 %v11004
        %11015 = vmatprep.subr.bf16.mxu0 0
        %11016 = vmatpush1.bf16.msra.mxu0 %v11005
        %11017 = vmatprep.subr.bf16.mxu0 0
        %11018 = vmatpush1.bf16.msra.mxu0 %v11006
        %11019 = vmatprep.subr.bf16.mxu0 0
        %11020 = vmatpush1.bf16.msra.mxu0 0
        %11021 = vmatprep.subr.bf16.mxu0 0
        %11022 = vmatpush1.bf16.msra.mxu0 0
        %11023 = vmatprep.subr.bf16.mxu0 0
        %11024 = vmatpush1.bf16.msra.mxu0 0
        %11025 = vmatprep.subr.bf16.mxu0 0
        %11026 = vmatpush1.bf16.msra.mxu0 0
        %11027 = vmatprep.subr.bf16.mxu0 0
        %11028 = vmatpush1.bf16.msra.mxu0 0
        %11029 = vmatprep.subr.bf16.mxu0 0
        %11030 = vmatpush1.bf16.msra.mxu0 0
        %11031 = vmatprep.subr.bf16.mxu0 0
        %11032 = vmatpush1.bf16.msra.mxu0 0
        %11033 = vmatprep.subr.bf16.mxu0 0
        %11034 = vmatpush1.bf16.msra.mxu0 0
        %11035 = vmatprep.subr.bf16.mxu0 0
        %11036 = vmatpush1.bf16.msra.mxu0 0
        %11037 = vmatprep.subr.bf16.mxu0 0
        %11038 = vmatpush1.bf16.msra.mxu0 0
        %11039 = vmatprep.subr.bf16.mxu0 0
        %11040 = vmatpush1.bf16.msra.mxu0 0
        %11041 = vmatprep.subr.bf16.mxu0 0
        %11042 = vmatpush1.bf16.msra.mxu0 0
        %11043 = vmatprep.subr.bf16.mxu0 0
        %11044 = vmatpush1.bf16.msra.mxu0 0
        %11045 = vmatprep.mubr.bf16.mxu0 0
        %11046 = vmatmul.mubr.bf16.gmra.mrb[0].mxu0 %v11011
        %v11047 = vpop.f32.mrb[0].mxu0
        %v11048 = vadd.f32 0.0, %v11047
        %v11049 = vpop.f32.mrb[0].mxu0
        %v11050 = vpop.f32.mrb[0].mxu0
        %v11051 = vpop.f32.mrb[0].mxu0
        %11052 = vdwg.mxu0
        %v11053 = vadd.f32 %v10970, %v11048
        %v11054 = vld [vmem:[%s10826] sm:$0x2]
        %s11055 = scalar_lea.vmem %s5, 264
        %v11056 = vld [vmem:[%s11055] sm:$0xf]
        %v11057 = vld [vmem:[%s11055 + $0x4] sm:$0xf]
        %v11058 = vld [vmem:[%s11055 + $0x8] sm:$0xf]
        %v11059 = vld [vmem:[%s11055 + $0xc] sm:$0xf]
        %v11060 = vld [vmem:[%s11055 + $0x10] sm:$0xf]
        %v11061 = vld [vmem:[%s11055 + $0x14] sm:$0xf]
        %v11064 = vunpack.c.l.s4 1983009808
        %v11065 = vunpack.c.0.s8 %v11064
        %v11066 = vlaneseq
        %v11067 = vshrl.u32 %v11066, 7
        %v11068 = vsub.s32 %v11065, %v11067
        %v11069 = vrot.slane %v11054, %v11068
        %v11071 = vshrl.u32 %v11069, 16
        %v11073 = vrot.slane %v11071, 1
        %v11080 = vunpack.c.l.b16 %v11056
        %v11081 = vunpack.c.l.b16 %v11057
        %v11082 = vunpack.c.l.b16 %v11058
        %v11083 = vunpack.c.l.b16 %v11059
        %v11084 = vunpack.c.l.b16 %v11060
        %v11085 = vunpack.c.l.b16 %v11061
        %v11086 = vpack.c.b16 %v11081, %v11080
        %v11087 = vpack.c.b16 %v11083, %v11082
        %v11088 = vpack.c.b16 %v11085, %v11084
        %v11093 = vsel %vm10250, %v11073, 0
        %11095 = vmatprep.subr.bf16.mxu0 0
        %11096 = vmatpush1.bf16.msra.mxu0 %v11086
        %11097 = vmatprep.subr.bf16.mxu0 0
        %11098 = vmatpush1.bf16.msra.mxu0 %v11087
        %11099 = vmatprep.subr.bf16.mxu0 0
        %11100 = vmatpush1.bf16.msra.mxu0 %v11088
        %11101 = vmatprep.subr.bf16.mxu0 0
        %11102 = vmatpush1.bf16.msra.mxu0 0
        %11103 = vmatprep.subr.bf16.mxu0 0
        %11104 = vmatpush1.bf16.msra.mxu0 0
        %11105 = vmatprep.subr.bf16.mxu0 0
        %11106 = vmatpush1.bf16.msra.mxu0 0
        %11107 = vmatprep.subr.bf16.mxu0 0
        %11108 = vmatpush1.bf16.msra.mxu0 0
        %11109 = vmatprep.subr.bf16.mxu0 0
        %11110 = vmatpush1.bf16.msra.mxu0 0
        %11111 = vmatprep.subr.bf16.mxu0 0
        %11112 = vmatpush1.bf16.msra.mxu0 0
        %11113 = vmatprep.subr.bf16.mxu0 0
        %11114 = vmatpush1.bf16.msra.mxu0 0
        %11115 = vmatprep.subr.bf16.mxu0 0
        %11116 = vmatpush1.bf16.msra.mxu0 0
        %11117 = vmatprep.subr.bf16.mxu0 0
        %11118 = vmatpush1.bf16.msra.mxu0 0
        %11119 = vmatprep.subr.bf16.mxu0 0
        %11120 = vmatpush1.bf16.msra.mxu0 0
        %11121 = vmatprep.subr.bf16.mxu0 0
        %11122 = vmatpush1.bf16.msra.mxu0 0
        %11123 = vmatprep.subr.bf16.mxu0 0
        %11124 = vmatpush1.bf16.msra.mxu0 0
        %11125 = vmatprep.subr.bf16.mxu0 0
        %11126 = vmatpush1.bf16.msra.mxu0 0
        %11127 = vmatprep.mubr.bf16.mxu0 0
        %11128 = vmatmul.mubr.bf16.gmra.mrb[0].mxu0 %v11093
        %v11129 = vpop.f32.mrb[0].mxu0
        %v11130 = vadd.f32 0.0, %v11129
        %v11131 = vpop.f32.mrb[0].mxu0
        %v11132 = vpop.f32.mrb[0].mxu0
        %v11133 = vpop.f32.mrb[0].mxu0
        %11134 = vdwg.mxu0
        %v11135 = vadd.f32 %v11053, %v11130
        %s11136 = scalar_lea.vmem [#allocation3], 6
        %v11137 = vld [vmem:[%s11136] sm:$0x1]
        %s11138 = scalar_lea.vmem %s5, 288
        %v11139 = vld [vmem:[%s11138] sm:$0xf]
        %v11140 = vld [vmem:[%s11138 + $0x4] sm:$0xf]
        %v11141 = vld [vmem:[%s11138 + $0x8] sm:$0xf]
        %v11142 = vld [vmem:[%s11138 + $0xc] sm:$0xf]
        %v11143 = vld [vmem:[%s11138 + $0x10] sm:$0xf]
        %v11144 = vld [vmem:[%s11138 + $0x14] sm:$0xf]
        %s11145 = scalar_lea.vmem %s5, 312
        %v11146 = vld [vmem:[%s11145] sm:$0xf]
        %v11147 = vld [vmem:[%s11145 + $0x4] sm:$0xf]
        %v11148 = vld [vmem:[%s11145 + $0x8] sm:$0xf]
        %v11149 = vld [vmem:[%s11145 + $0xc] sm:$0xf]
        %v11150 = vld [vmem:[%s11145 + $0x10] sm:$0xf]
        %v11151 = vld [vmem:[%s11145 + $0x14] sm:$0xf]
        %v11154 = vunpack.c.l.s4 1983009808
        %v11155 = vunpack.c.0.s8 %v11154
        %v11156 = vlaneseq
        %v11157 = vshrl.u32 %v11156, 7
        %v11158 = vsub.s32 %v11155, %v11157
        %v11159 = vrot.slane %v11137, %v11158
        %v11161 = vshrl.u32 %v11159, 16
        %v11169 = vunpack.c.l.b16 %v11146
        %v11170 = vunpack.c.l.b16 %v11147
        %v11171 = vunpack.c.l.b16 %v11148
        %v11172 = vunpack.c.l.b16 %v11149
        %v11173 = vunpack.c.l.b16 %v11150
        %v11174 = vunpack.c.l.b16 %v11151
        %v11175 = vpack.c.b16 %v11170, %v11169
        %v11176 = vpack.c.b16 %v11172, %v11171
        %v11177 = vpack.c.b16 %v11174, %v11173
        %v11182 = vsel %vm10250, %v11161, 0
        %11184 = vmatprep.subr.bf16.mxu0 0
        %11185 = vmatpush1.bf16.msra.mxu0 %v11175
        %11186 = vmatprep.subr.bf16.mxu0 0
        %11187 = vmatpush1.bf16.msra.mxu0 %v11176
        %11188 = vmatprep.subr.bf16.mxu0 0
        %11189 = vmatpush1.bf16.msra.mxu0 %v11177
        %11190 = vmatprep.subr.bf16.mxu0 0
        %11191 = vmatpush1.bf16.msra.mxu0 0
        %11192 = vmatprep.subr.bf16.mxu0 0
        %11193 = vmatpush1.bf16.msra.mxu0 0
        %11194 = vmatprep.subr.bf16.mxu0 0
        %11195 = vmatpush1.bf16.msra.mxu0 0
        %11196 = vmatprep.subr.bf16.mxu0 0
        %11197 = vmatpush1.bf16.msra.mxu0 0
        %11198 = vmatprep.subr.bf16.mxu0 0
        %11199 = vmatpush1.bf16.msra.mxu0 0
        %11200 = vmatprep.subr.bf16.mxu0 0
        %11201 = vmatpush1.bf16.msra.mxu0 0
        %11202 = vmatprep.subr.bf16.mxu0 0
        %11203 = vmatpush1.bf16.msra.mxu0 0
        %11204 = vmatprep.subr.bf16.mxu0 0
        %11205 = vmatpush1.bf16.msra.mxu0 0
        %11206 = vmatprep.subr.bf16.mxu0 0
        %11207 = vmatpush1.bf16.msra.mxu0 0
        %11208 = vmatprep.subr.bf16.mxu0 0
        %11209 = vmatpush1.bf16.msra.mxu0 0
        %11210 = vmatprep.subr.bf16.mxu0 0
        %11211 = vmatpush1.bf16.msra.mxu0 0
        %11212 = vmatprep.subr.bf16.mxu0 0
        %11213 = vmatpush1.bf16.msra.mxu0 0
        %11214 = vmatprep.subr.bf16.mxu0 0
        %11215 = vmatpush1.bf16.msra.mxu0 0
        %11216 = vmatprep.mubr.bf16.mxu0 0
        %11217 = vmatmul.mubr.bf16.gmra.mrb[0].mxu0 %v11182
        %v11218 = vpop.f32.mrb[0].mxu0
        %v11219 = vadd.f32 0.0, %v11218
        %v11220 = vpop.f32.mrb[0].mxu0
        %v11221 = vpop.f32.mrb[0].mxu0
        %v11222 = vpop.f32.mrb[0].mxu0
        %11223 = vdwg.mxu0
        %v11230 = vunpack.c.l.b16 %v11139
        %v11231 = vunpack.c.l.b16 %v11140
        %v11232 = vunpack.c.l.b16 %v11141
        %v11233 = vunpack.c.l.b16 %v11142
        %v11234 = vunpack.c.l.b16 %v11143
        %v11235 = vunpack.c.l.b16 %v11144
        %v11236 = vpack.c.b16 %v11231, %v11230
        %v11237 = vpack.c.b16 %v11233, %v11232
        %v11238 = vpack.c.b16 %v11235, %v11234
        %v11243 = vsel %vm10250, %v11137, 0
        %11245 = vmatprep.subr.bf16.mxu0 0
        %11246 = vmatpush1.bf16.msra.mxu0 %v11236
        %11247 = vmatprep.subr.bf16.mxu0 0
        %11248 = vmatpush1.bf16.msra.mxu0 %v11237
        %11249 = vmatprep.subr.bf16.mxu0 0
        %11250 = vmatpush1.bf16.msra.mxu0 %v11238
        %11251 = vmatprep.subr.bf16.mxu0 0
        %11252 = vmatpush1.bf16.msra.mxu0 0
        %11253 = vmatprep.subr.bf16.mxu0 0
        %11254 = vmatpush1.bf16.msra.mxu0 0
        %11255 = vmatprep.subr.bf16.mxu0 0
        %11256 = vmatpush1.bf16.msra.mxu0 0
        %11257 = vmatprep.subr.bf16.mxu0 0
        %11258 = vmatpush1.bf16.msra.mxu0 0
        %11259 = vmatprep.subr.bf16.mxu0 0
        %11260 = vmatpush1.bf16.msra.mxu0 0
        %11261 = vmatprep.subr.bf16.mxu0 0
        %11262 = vmatpush1.bf16.msra.mxu0 0
        %11263 = vmatprep.subr.bf16.mxu0 0
        %11264 = vmatpush1.bf16.msra.mxu0 0
        %11265 = vmatprep.subr.bf16.mxu0 0
        %11266 = vmatpush1.bf16.msra.mxu0 0
        %11267 = vmatprep.subr.bf16.mxu0 0
        %11268 = vmatpush1.bf16.msra.mxu0 0
        %11269 = vmatprep.subr.bf16.mxu0 0
        %11270 = vmatpush1.bf16.msra.mxu0 0
        %11271 = vmatprep.subr.bf16.mxu0 0
        %11272 = vmatpush1.bf16.msra.mxu0 0
        %11273 = vmatprep.subr.bf16.mxu0 0
        %11274 = vmatpush1.bf16.msra.mxu0 0
        %11275 = vmatprep.subr.bf16.mxu0 0
        %11276 = vmatpush1.bf16.msra.mxu0 0
        %11277 = vmatprep.mubr.bf16.mxu0 0
        %11278 = vmatmul.mubr.bf16.gmra.mrb[0].mxu0 %v11243
        %v11279 = vpop.f32.mrb[0].mxu0
        %v11280 = vadd.f32 %v11219, %v11279
        %v11281 = vpop.f32.mrb[0].mxu0
        %v11282 = vpop.f32.mrb[0].mxu0
        %v11283 = vpop.f32.mrb[0].mxu0
        %11284 = vdwg.mxu0
        %v11285 = vld [vmem:[%s11136] sm:$0x2]
        %s11286 = scalar_lea.vmem %s5, 336
        %v11287 = vld [vmem:[%s11286] sm:$0xf]
        %v11288 = vld [vmem:[%s11286 + $0x4] sm:$0xf]
        %v11289 = vld [vmem:[%s11286 + $0x8] sm:$0xf]
        %v11290 = vld [vmem:[%s11286 + $0xc] sm:$0xf]
        %v11291 = vld [vmem:[%s11286 + $0x10] sm:$0xf]
        %v11292 = vld [vmem:[%s11286 + $0x14] sm:$0xf]
        %v11295 = vunpack.c.l.s4 1983009808
        %v11296 = vunpack.c.0.s8 %v11295
        %v11297 = vlaneseq
        %v11298 = vshrl.u32 %v11297, 7
        %v11299 = vsub.s32 %v11296, %v11298
        %v11300 = vrot.slane %v11285, %v11299
        %v11301 = vrot.slane %v11300, 1
        %v11308 = vunpack.c.l.b16 %v11287
        %v11309 = vunpack.c.l.b16 %v11288
        %v11310 = vunpack.c.l.b16 %v11289
        %v11311 = vunpack.c.l.b16 %v11290
        %v11312 = vunpack.c.l.b16 %v11291
        %v11313 = vunpack.c.l.b16 %v11292
        %v11314 = vpack.c.b16 %v11309, %v11308
        %v11315 = vpack.c.b16 %v11311, %v11310
        %v11316 = vpack.c.b16 %v11313, %v11312
        %v11321 = vsel %vm10250, %v11301, 0
        %11323 = vmatprep.subr.bf16.mxu0 0
        %11324 = vmatpush1.bf16.msra.mxu0 %v11314
        %11325 = vmatprep.subr.bf16.mxu0 0
        %11326 = vmatpush1.bf16.msra.mxu0 %v11315
        %11327 = vmatprep.subr.bf16.mxu0 0
        %11328 = vmatpush1.bf16.msra.mxu0 %v11316
        %11329 = vmatprep.subr.bf16.mxu0 0
        %11330 = vmatpush1.bf16.msra.mxu0 0
        %11331 = vmatprep.subr.bf16.mxu0 0
        %11332 = vmatpush1.bf16.msra.mxu0 0
        %11333 = vmatprep.subr.bf16.mxu0 0
        %11334 = vmatpush1.bf16.msra.mxu0 0
        %11335 = vmatprep.subr.bf16.mxu0 0
        %11336 = vmatpush1.bf16.msra.mxu0 0
        %11337 = vmatprep.subr.bf16.mxu0 0
        %11338 = vmatpush1.bf16.msra.mxu0 0
        %11339 = vmatprep.subr.bf16.mxu0 0
        %11340 = vmatpush1.bf16.msra.mxu0 0
        %11341 = vmatprep.subr.bf16.mxu0 0
        %11342 = vmatpush1.bf16.msra.mxu0 0
        %11343 = vmatprep.subr.bf16.mxu0 0
        %11344 = vmatpush1.bf16.msra.mxu0 0
        %11345 = vmatprep.subr.bf16.mxu0 0
        %11346 = vmatpush1.bf16.msra.mxu0 0
        %11347 = vmatprep.subr.bf16.mxu0 0
        %11348 = vmatpush1.bf16.msra.mxu0 0
        %11349 = vmatprep.subr.bf16.mxu0 0
        %11350 = vmatpush1.bf16.msra.mxu0 0
        %11351 = vmatprep.subr.bf16.mxu0 0
        %11352 = vmatpush1.bf16.msra.mxu0 0
        %11353 = vmatprep.subr.bf16.mxu0 0
        %11354 = vmatpush1.bf16.msra.mxu0 0
        %11355 = vmatprep.mubr.bf16.mxu0 0
        %11356 = vmatmul.mubr.bf16.gmra.mrb[0].mxu0 %v11321
        %v11357 = vpop.f32.mrb[0].mxu0
        %v11358 = vadd.f32 0.0, %v11357
        %v11359 = vpop.f32.mrb[0].mxu0
        %v11360 = vpop.f32.mrb[0].mxu0
        %v11361 = vpop.f32.mrb[0].mxu0
        %11362 = vdwg.mxu0
        %v11363 = vadd.f32 %v11280, %v11358
        %v11364 = vld [vmem:[%s11136] sm:$0x2]
        %s11365 = scalar_lea.vmem %s5, 360
        %v11366 = vld [vmem:[%s11365] sm:$0xf]
        %v11367 = vld [vmem:[%s11365 + $0x4] sm:$0xf]
        %v11368 = vld [vmem:[%s11365 + $0x8] sm:$0xf]
        %v11369 = vld [vmem:[%s11365 + $0xc] sm:$0xf]
        %v11370 = vld [vmem:[%s11365 + $0x10] sm:$0xf]
        %v11371 = vld [vmem:[%s11365 + $0x14] sm:$0xf]
        %v11374 = vunpack.c.l.s4 1983009808
        %v11375 = vunpack.c.0.s8 %v11374
        %v11376 = vlaneseq
        %v11377 = vshrl.u32 %v11376, 7
        %v11378 = vsub.s32 %v11375, %v11377
        %v11379 = vrot.slane %v11364, %v11378
        %v11381 = vshrl.u32 %v11379, 16
        %v11383 = vrot.slane %v11381, 1
        %v11390 = vunpack.c.l.b16 %v11366
        %v11391 = vunpack.c.l.b16 %v11367
        %v11392 = vunpack.c.l.b16 %v11368
        %v11393 = vunpack.c.l.b16 %v11369
        %v11394 = vunpack.c.l.b16 %v11370
        %v11395 = vunpack.c.l.b16 %v11371
        %v11396 = vpack.c.b16 %v11391, %v11390
        %v11397 = vpack.c.b16 %v11393, %v11392
        %v11398 = vpack.c.b16 %v11395, %v11394
        %v11403 = vsel %vm10250, %v11383, 0
        %11405 = vmatprep.subr.bf16.mxu0 0
        %11406 = vmatpush1.bf16.msra.mxu0 %v11396
        %11407 = vmatprep.subr.bf16.mxu0 0
        %11408 = vmatpush1.bf16.msra.mxu0 %v11397
        %11409 = vmatprep.subr.bf16.mxu0 0
        %11410 = vmatpush1.bf16.msra.mxu0 %v11398
        %11411 = vmatprep.subr.bf16.mxu0 0
        %11412 = vmatpush1.bf16.msra.mxu0 0
        %11413 = vmatprep.subr.bf16.mxu0 0
        %11414 = vmatpush1.bf16.msra.mxu0 0
        %11415 = vmatprep.subr.bf16.mxu0 0
        %11416 = vmatpush1.bf16.msra.mxu0 0
        %11417 = vmatprep.subr.bf16.mxu0 0
        %11418 = vmatpush1.bf16.msra.mxu0 0
        %11419 = vmatprep.subr.bf16.mxu0 0
        %11420 = vmatpush1.bf16.msra.mxu0 0
        %11421 = vmatprep.subr.bf16.mxu0 0
        %11422 = vmatpush1.bf16.msra.mxu0 0
        %11423 = vmatprep.subr.bf16.mxu0 0
        %11424 = vmatpush1.bf16.msra.mxu0 0
        %11425 = vmatprep.subr.bf16.mxu0 0
        %11426 = vmatpush1.bf16.msra.mxu0 0
        %11427 = vmatprep.subr.bf16.mxu0 0
        %11428 = vmatpush1.bf16.msra.mxu0 0
        %11429 = vmatprep.subr.bf16.mxu0 0
        %11430 = vmatpush1.bf16.msra.mxu0 0
        %11431 = vmatprep.subr.bf16.mxu0 0
        %11432 = vmatpush1.bf16.msra.mxu0 0
        %11433 = vmatprep.subr.bf16.mxu0 0
        %11434 = vmatpush1.bf16.msra.mxu0 0
        %11435 = vmatprep.subr.bf16.mxu0 0
        %11436 = vmatpush1.bf16.msra.mxu0 0
        %11437 = vmatprep.mubr.bf16.mxu0 0
        %11438 = vmatmul.mubr.bf16.gmra.mrb[0].mxu0 %v11403
        %v11439 = vpop.f32.mrb[0].mxu0
        %v11440 = vadd.f32 0.0, %v11439
        %v11441 = vpop.f32.mrb[0].mxu0
        %v11442 = vpop.f32.mrb[0].mxu0
        %v11443 = vpop.f32.mrb[0].mxu0
        %11444 = vdwg.mxu0
        %v11445 = vadd.f32 %v11363, %v11440
        %v11446 = vadd.f32 %v10515, %v10825
        %v11447 = vadd.f32 %v11135, %v11445
        %v11448 = vadd.f32 %v11446, %v11447
        %v11449 = vld [vmem:[%s6] sm:$0x1]
        %v11450 = vadd.f32 %v11448, %v11449
        %v11451 = vmax.f32 %v11450, 0.0
        %v11452 = vpack.c.bf16 %v11451, %v11451
        %v11453 = vld [vmem:[%s7] sm:$0xf]
        %v11454 = vld [vmem:[%s7 + $0x4] sm:$0xf]
        %v11455 = vld [vmem:[%s7 + $0x8] sm:$0xf]
        %v11456 = vld [vmem:[%s7 + $0xc] sm:$0xf]
        %v11457 = vld [vmem:[%s7 + $0x10] sm:$0xf]
        %v11458 = vld [vmem:[%s7 + $0x14] sm:$0xf]
        %v11459 = vld [vmem:[%s7 + $0x18] sm:$0xf]
        %v11460 = vld [vmem:[%s7 + $0x1c] sm:$0xf]
        %v11461 = vld [vmem:[%s7 + $0x20] sm:$0xf]
        %v11462 = vld [vmem:[%s7 + $0x24] sm:$0xf]
        %v11463 = vld [vmem:[%s7 + $0x28] sm:$0xf]
        %v11464 = vld [vmem:[%s7 + $0x2c] sm:$0xf]
        %v11465 = vld [vmem:[%s7 + $0x30] sm:$0xf]
        %v11466 = vld [vmem:[%s7 + $0x34] sm:$0xf]
        %v11467 = vld [vmem:[%s7 + $0x38] sm:$0xf]
        %v11468 = vld [vmem:[%s7 + $0x3c] sm:$0xf]
        %v11469 = vld [vmem:[%s8] sm:$0x1]
        %v11486 = vunpack.c.l.b16 %v11453
        %v11487 = vunpack.c.l.b16 %v11454
        %v11488 = vunpack.c.l.b16 %v11455
        %v11489 = vunpack.c.l.b16 %v11456
        %v11490 = vunpack.c.l.b16 %v11457
        %v11491 = vunpack.c.l.b16 %v11458
        %v11492 = vunpack.c.l.b16 %v11459
        %v11493 = vunpack.c.l.b16 %v11460
        %v11494 = vunpack.c.l.b16 %v11461
        %v11495 = vunpack.c.l.b16 %v11462
        %v11496 = vunpack.c.l.b16 %v11463
        %v11497 = vunpack.c.l.b16 %v11464
        %v11498 = vunpack.c.l.b16 %v11465
        %v11499 = vunpack.c.l.b16 %v11466
        %v11500 = vunpack.c.l.b16 %v11467
        %v11501 = vunpack.c.l.b16 %v11468
        %v11502 = vpack.c.b16 %v11487, %v11486
        %v11503 = vpack.c.b16 %v11489, %v11488
        %v11504 = vpack.c.b16 %v11491, %v11490
        %v11505 = vpack.c.b16 %v11493, %v11492
        %v11506 = vpack.c.b16 %v11495, %v11494
        %v11507 = vpack.c.b16 %v11497, %v11496
        %v11508 = vpack.c.b16 %v11499, %v11498
        %v11509 = vpack.c.b16 %v11501, %v11500
        %11518 = vmatprep.subr.bf16.mxu0 0
        %11519 = vmatpush1.bf16.msra.mxu0 %v11502
        %11520 = vmatprep.subr.bf16.mxu0 0
        %11521 = vmatpush1.bf16.msra.mxu0 %v11503
        %11522 = vmatprep.subr.bf16.mxu0 0
        %11523 = vmatpush1.bf16.msra.mxu0 %v11504
        %11524 = vmatprep.subr.bf16.mxu0 0
        %11525 = vmatpush1.bf16.msra.mxu0 %v11505
        %11526 = vmatprep.subr.bf16.mxu0 0
        %11527 = vmatpush1.bf16.msra.mxu0 %v11506
        %11528 = vmatprep.subr.bf16.mxu0 0
        %11529 = vmatpush1.bf16.msra.mxu0 %v11507
        %11530 = vmatprep.subr.bf16.mxu0 0
        %11531 = vmatpush1.bf16.msra.mxu0 %v11508
        %11532 = vmatprep.subr.bf16.mxu0 0
        %11533 = vmatpush1.bf16.msra.mxu0 %v11509
        %11534 = vmatprep.subr.bf16.mxu0 0
        %11535 = vmatpush1.bf16.msra.mxu0 0
        %11536 = vmatprep.subr.bf16.mxu0 0
        %11537 = vmatpush1.bf16.msra.mxu0 0
        %11538 = vmatprep.subr.bf16.mxu0 0
        %11539 = vmatpush1.bf16.msra.mxu0 0
        %11540 = vmatprep.subr.bf16.mxu0 0
        %11541 = vmatpush1.bf16.msra.mxu0 0
        %11542 = vmatprep.subr.bf16.mxu0 0
        %11543 = vmatpush1.bf16.msra.mxu0 0
        %11544 = vmatprep.subr.bf16.mxu0 0
        %11545 = vmatpush1.bf16.msra.mxu0 0
        %11546 = vmatprep.subr.bf16.mxu0 0
        %11547 = vmatpush1.bf16.msra.mxu0 0
        %11548 = vmatprep.subr.bf16.mxu0 0
        %11549 = vmatpush1.bf16.msra.mxu0 0
        %11550 = vmatprep.mubr.bf16.mxu0 0
        %11551 = vmatmul.mubr.bf16.gmra.mrb[0].mxu0 %v11452
        %v11552 = vpop.f32.mrb[0].mxu0
        %v11553 = vadd.f32 %v11469, %v11552
        %v11554 = vpop.f32.mrb[0].mxu0
        %v11555 = vpop.f32.mrb[0].mxu0
        %v11556 = vpop.f32.mrb[0].mxu0
        %11557 = vdwg.mxu0
        %v11558 = vmax.f32 %v11553, 0.0
        %v11559 = vpack.c.bf16 %v11558, %v11558
        %v11560 = vld [vmem:[%s9] sm:$0xf]
        %v11561 = vld [vmem:[%s9 + $0x4] sm:$0xf]
        %v11562 = vld [vmem:[%s9 + $0x8] sm:$0xf]
        %v11563 = vld [vmem:[%s9 + $0xc] sm:$0xf]
        %v11564 = vld [vmem:[%s9 + $0x10] sm:$0xf]
        %v11565 = vld [vmem:[%s9 + $0x14] sm:$0xf]
        %v11566 = vld [vmem:[%s9 + $0x18] sm:$0xf]
        %v11567 = vld [vmem:[%s9 + $0x1c] sm:$0xf]
        %v11568 = vld [vmem:[%s9 + $0x20] sm:$0xf]
        %v11569 = vld [vmem:[%s9 + $0x24] sm:$0xf]
        %v11570 = vld [vmem:[%s9 + $0x28] sm:$0xf]
        %v11571 = vld [vmem:[%s9 + $0x2c] sm:$0xf]
        %v11572 = vld [vmem:[%s9 + $0x30] sm:$0xf]
        %v11573 = vld [vmem:[%s9 + $0x34] sm:$0xf]
        %v11574 = vld [vmem:[%s9 + $0x38] sm:$0xf]
        %v11575 = vld [vmem:[%s9 + $0x3c] sm:$0xf]
        %v11576 = vld [vmem:[%s10] sm:$0x1]
        %v11593 = vunpack.c.l.b16 %v11560
        %v11594 = vunpack.c.l.b16 %v11561
        %v11595 = vunpack.c.l.b16 %v11562
        %v11596 = vunpack.c.l.b16 %v11563
        %v11597 = vunpack.c.l.b16 %v11564
        %v11598 = vunpack.c.l.b16 %v11565
        %v11599 = vunpack.c.l.b16 %v11566
        %v11600 = vunpack.c.l.b16 %v11567
        %v11601 = vunpack.c.l.b16 %v11568
        %v11602 = vunpack.c.l.b16 %v11569
        %v11603 = vunpack.c.l.b16 %v11570
        %v11604 = vunpack.c.l.b16 %v11571
        %v11605 = vunpack.c.l.b16 %v11572
        %v11606 = vunpack.c.l.b16 %v11573
        %v11607 = vunpack.c.l.b16 %v11574
        %v11608 = vunpack.c.l.b16 %v11575
        %v11609 = vpack.c.b16 %v11594, %v11593
        %v11610 = vpack.c.b16 %v11596, %v11595
        %v11611 = vpack.c.b16 %v11598, %v11597
        %v11612 = vpack.c.b16 %v11600, %v11599
        %v11613 = vpack.c.b16 %v11602, %v11601
        %v11614 = vpack.c.b16 %v11604, %v11603
        %v11615 = vpack.c.b16 %v11606, %v11605
        %v11616 = vpack.c.b16 %v11608, %v11607
        %11625 = vmatprep.subr.bf16.mxu0 0
        %11626 = vmatpush1.bf16.msra.mxu0 %v11609
        %11627 = vmatprep.subr.bf16.mxu0 0
        %11628 = vmatpush1.bf16.msra.mxu0 %v11610
        %11629 = vmatprep.subr.bf16.mxu0 0
        %11630 = vmatpush1.bf16.msra.mxu0 %v11611
        %11631 = vmatprep.subr.bf16.mxu0 0
        %11632 = vmatpush1.bf16.msra.mxu0 %v11612
        %11633 = vmatprep.subr.bf16.mxu0 0
        %11634 = vmatpush1.bf16.msra.mxu0 %v11613
        %11635 = vmatprep.subr.bf16.mxu0 0
        %11636 = vmatpush1.bf16.msra.mxu0 %v11614
        %11637 = vmatprep.subr.bf16.mxu0 0
        %11638 = vmatpush1.bf16.msra.mxu0 %v11615
        %11639 = vmatprep.subr.bf16.mxu0 0
        %11640 = vmatpush1.bf16.msra.mxu0 %v11616
        %11641 = vmatprep.subr.bf16.mxu0 0
        %11642 = vmatpush1.bf16.msra.mxu0 0
        %11643 = vmatprep.subr.bf16.mxu0 0
        %11644 = vmatpush1.bf16.msra.mxu0 0
        %11645 = vmatprep.subr.bf16.mxu0 0
        %11646 = vmatpush1.bf16.msra.mxu0 0
        %11647 = vmatprep.subr.bf16.mxu0 0
        %11648 = vmatpush1.bf16.msra.mxu0 0
        %11649 = vmatprep.subr.bf16.mxu0 0
        %11650 = vmatpush1.bf16.msra.mxu0 0
        %11651 = vmatprep.subr.bf16.mxu0 0
        %11652 = vmatpush1.bf16.msra.mxu0 0
        %11653 = vmatprep.subr.bf16.mxu0 0
        %11654 = vmatpush1.bf16.msra.mxu0 0
        %11655 = vmatprep.subr.bf16.mxu0 0
        %11656 = vmatpush1.bf16.msra.mxu0 0
        %11657 = vmatprep.mubr.bf16.mxu0 0
        %11658 = vmatmul.mubr.bf16.gmra.mrb[0].mxu0 %v11559
        %v11659 = vpop.f32.mrb[0].mxu0
        %v11660 = vadd.f32 %v11576, %v11659
        %v11661 = vpop.f32.mrb[0].mxu0
        %v11662 = vpop.f32.mrb[0].mxu0
        %v11663 = vpop.f32.mrb[0].mxu0
        %11664 = vdwg.mxu0
        %11665 = vst [vmem:[%s378] sm:$0x1] %v11660
        %s11666 = sand.u32 %s269, 1
        %s11667 = scalar_lea.sflag [#allocation5], %s11666
        %s11668 = sand.u32 %s269, 1
        %s11669 = scalar_lea.vmem [#allocation4], %s11668
        // Predicated region
        $region65: #{mnist_classifier_forward.1} parent=63 // pred_check
          %p11670 = pneg %p279
        $region66: #{mnist_classifier_forward.1} parent=63 // pred_check_branch
          %11672 = sbr.rel (%p11670) target = $region68
        $region67: #{mnist_classifier_forward.1} parent=63 // pred_region
          %s11674 = ssub.s32 16, 16
          %11675 = vsyncadd %s11667, %s11674
          %s11676 = smul.addr %s25, 16
          %s11677 = scalar_lea.hbm %s11, %s11676
          %s11679 = sshll.u32 %s11669, 4
          %s11680 = int_to_ptr.vmem [resolvable:$true] %s11679
          %11682 = dma.vmem_to_hbm [thread:$0]  %s11680, 16, %s11677, %s11667
        $region68: #{mnist_classifier_forward.1} parent=63 // pred_fallthru
          _
      $region64: #{mnist_classifier_forward.1} parent=5 // pred_fallthru
        _
      %p11683 = scmp.le.s32.totalorder 2, %s20
      // Predicated region
      $region69: #{mnist_classifier_forward.1} parent=5 // pred_check
        %p11684 = pneg %p11683
      $region70: #{mnist_classifier_forward.1} parent=5 // pred_check_branch
        %11686 = sbr.rel (%p11684) target = $region72
      $region71: #{mnist_classifier_forward.1} parent=5 // pred_region
        %s11687 = ssub.s32 %s20, 2
        // Predicated region
        $region73: #{mnist_classifier_forward.1} parent=71 // pred_check
          %p11688 = pneg %p285
        $region74: #{mnist_classifier_forward.1} parent=71 // pred_check_branch
          %11690 = sbr.rel (%p11688) target = $region76
        $region75: #{mnist_classifier_forward.1} parent=71 // pred_region
          %s11691 = sand.u32 %s270, 1
          %s11692 = scalar_lea.sflag [#allocation5], %s11691
          %s11693 = sand.u32 %s270, 1
          %s11694 = scalar_lea.vmem [#allocation4], %s11693
          %11695 = dma.done %s11692, 16
        $region76: #{mnist_classifier_forward.1} parent=71 // pred_fallthru
          _
      $region72: #{mnist_classifier_forward.1} parent=5 // pred_fallthru
        _
    $region6: #{mnist_classifier_forward.1} parent=1 // loop_footer
      %s24 = sadd.s32 1, %s20
    $region7: #{mnist_classifier_forward.1} parent=1 // loop_footer_branch
      %19 = sbr.rel target = $region3
    $region8: #{mnist_classifier_forward.1} parent=1 // loop_exit
      _
    %11696 = vsyncpa [#allocation5], 1
    %s11697 = scalar_lea.sflag [#allocation5], 1
    %11698 = vsyncpa %s11697, 1

</llo_original>
